<compile_context>
chip_gen: v7x
topology: tpu7x:2x2x1
jax: 0.10.0
libtpu: 0.0.40
codegen_flags: <defaults>
</compile_context>

<pallas_src>
import functools
import numpy as np
import jax
import jax.numpy as jnp
from jax.experimental import pallas as pl
from jax.experimental.pallas import tpu as pltpu


def _resblock_cbam_kernel(x_ref, w1_ref, b1_ref, w2_ref, b2_ref,
                          caw1_ref, caw2_ref, saw_ref, o_ref, h1_ref,
                          *, H, W, BB, res_scale, compute_dtype):
    HW = H * W
    N = BB * HW                       # folded lane axis (BB images side by side)
    cdt = compute_dtype

    # ---- boundary masks on per-image pixel index (no cross-image leakage) ----
    g_idx = jax.lax.broadcasted_iota(jnp.int32, (1, N), 1)
    p_idx = g_idx % HW                                      # index within image
    pcol = p_idx % W
    row_ok = [p_idx >= W, None, p_idx < (H - 1) * W]        # dy = 0, 1, 2
    col_ok = [pcol != 0, None, pcol != (W - 1)]             # dx = 0, 1, 2
    masks, offs = [], []
    for dy in range(3):
        for dx in range(3):
            r, c = row_ok[dy], col_ok[dx]
            if r is None:
                m = c
            elif c is None:
                m = r
            else:
                m = jnp.logical_and(r, c)
            masks.append(m)
            offs.append((dy - 1) * W + (dx - 1))

    def tap(a, t):
        # shifted+masked 3x3 tap; lane rolls run on the XLU slot.
        off = offs[t]
        s = a if off == 0 else pltpu.roll(a, (-off) % N, axis=1)
        return s if masks[t] is None else jnp.where(masks[t], s, 0.0)

    def conv3x3(src, w_ref):
        # accumulate form: one (Co, Ci) x (Ci, N) MXU push per tap; at most one
        # tap + the accumulator live -> no (9*C, N) materialization, no spills.
        acc = None
        for t in range(9):
            d = jnp.dot(w_ref[t].astype(cdt), tap(src, t).astype(cdt),
                        preferred_element_type=jnp.float32)
            acc = d if acc is None else acc + d
        return acc

    # ---- conv1 (+bias, ReLU): im2col done in-kernel via rolls ----
    h1 = jnp.maximum(conv3x3(x_ref[...], w1_ref) + b1_ref[...], 0.0)  # (Co, N)
    h1_ref[...] = h1            # stage in VMEM; reloaded for the residual tail

    # ---- conv2 (+bias, ReLU) ----
    h2 = jnp.maximum(conv3x3(h1, w2_ref) + b2_ref[...], 0.0)          # (Co, N)

    # ---- channel attention: per-image spatial mean/max, shared MLP once ----
    avg_cols, max_cols = [], []
    for bb in range(BB):                                    # static, BB small
        sl = h2[:, bb * HW:(bb + 1) * HW]
        avg_cols.append(jnp.mean(sl, axis=1, keepdims=True))
        max_cols.append(jnp.max(sl, axis=1, keepdims=True))
    am = jnp.concatenate(avg_cols + max_cols, axis=1)       # (Co, 2*BB)
    hid = jnp.maximum(jnp.dot(caw1_ref[...], am,
                              preferred_element_type=jnp.float32), 0.0)
    o2 = jnp.dot(caw2_ref[...], hid,
                 preferred_element_type=jnp.float32)        # (Co, 2*BB)
    ca = jax.nn.sigmoid(o2[:, :BB] + o2[:, BB:2 * BB])      # (Co, BB)

    if BB == 1:
        y = h2 * ca
    else:
        y = jnp.concatenate(
            [h2[:, bb * HW:(bb + 1) * HW] * ca[:, bb:bb + 1] for bb in range(BB)],
            axis=1)                                         # (Co, N)

    # ---- spatial attention: one taps pass on stacked [mean; max] maps ----
    sa_in = jnp.concatenate([jnp.mean(y, axis=0, keepdims=True),
                             jnp.max(y, axis=0, keepdims=True)], axis=0)  # (2, N)
    sa = jax.nn.sigmoid(conv3x3(sa_in, saw_ref))            # (1, N)
    cbam = y * sa                                           # (Co, N)

    # ---- fused residual tail: h1 + (rs*cbam + h1)*rs ----
    final = (1.0 + res_scale) * h1_ref[...] + (res_scale * res_scale) * cbam
    o_ref[...] = final.astype(o_ref.dtype)


def res_conv_block_cbam(x, w1, b1, w2, b2, caw1, caw2, saw, *,
                        res_scale=1.0, batch_block=None,
                        compute_dtype=jnp.float32):
    """x: (B, Cin, H, W) NCHW; weights in PyTorch layouts:
       w1 (Cout,Cin,3,3), b1 (Cout,), w2 (Cout,Cout,3,3), b2 (Cout,),
       caw1 (hidden,Cout,1,1), caw2 (Cout,hidden,1,1), saw (1,2,3,3).

       batch_block: images folded into the lane axis per grid step.
         Default = B (fewest, fattest steps). On v7x set batch_block=B//2 to
         keep a 2-wide parallel grid so both TensorCores are busy.
       compute_dtype: jnp.bfloat16 enables the fast MXU path on v6e/v7x
         (f32 accumulation); default f32 for bit-tight accuracy."""
    B, Cin, H, W = x.shape
    Cout = w1.shape[0]
    hidden = caw1.shape[0]
    HW = H * W

    BB = B if batch_block is None else int(batch_block)
    assert B % BB == 0, "batch_block must divide B"
    assert (BB * HW) % 128 == 0, "BB*H*W must be a multiple of 128 lanes"

    # Channel-major, batch-folded lane layout (tiny relayout, wrapper side).
    x2d = jnp.transpose(x, (1, 0, 2, 3)).reshape(Cin, B * HW)

    # Weights tap-major on a leading (untiled) axis: w[t] is the (Co, Ci) slice
    # for 3x3 offset t -> free static indexing in-kernel, no lane slicing.
    w1s = jnp.transpose(w1, (2, 3, 0, 1)).reshape(9, Cout, Cin).astype(compute_dtype)
    w2s = jnp.transpose(w2, (2, 3, 0, 1)).reshape(9, Cout, Cout).astype(compute_dtype)
    saws = jnp.transpose(saw, (2, 3, 0, 1)).reshape(9, 1, 2).astype(compute_dtype)
    b1c = b1.reshape(Cout, 1).astype(jnp.float32)
    b2c = b2.reshape(Cout, 1).astype(jnp.float32)
    wca1 = caw1.reshape(hidden, Cout).astype(jnp.float32)
    wca2 = caw2.reshape(Cout, hidden).astype(jnp.float32)

    kernel = functools.partial(_resblock_cbam_kernel,
                               H=H, W=W, BB=BB,
                               res_scale=float(res_scale),
                               compute_dtype=compute_dtype)

    out2d = pl.pallas_call(
        kernel,
        out_shape=jax.ShapeDtypeStruct((Cout, B * HW), jnp.float32),
        grid_spec=pltpu.PrefetchScalarGridSpec(
            num_scalar_prefetch=0,
            grid=(B // BB,),
            in_specs=[
                pl.BlockSpec((Cin, BB * HW), lambda g: (0, g)),      # x
                pl.BlockSpec((9, Cout, Cin), lambda g: (0, 0, 0)),   # w1 taps
                pl.BlockSpec((Cout, 1), lambda g: (0, 0)),           # b1
                pl.BlockSpec((9, Cout, Cout), lambda g: (0, 0, 0)),  # w2 taps
                pl.BlockSpec((Cout, 1), lambda g: (0, 0)),           # b2
                pl.BlockSpec((hidden, Cout), lambda g: (0, 0)),      # CA mlp 1
                pl.BlockSpec((Cout, hidden), lambda g: (0, 0)),      # CA mlp 2
                pl.BlockSpec((9, 1, 2), lambda g: (0, 0, 0)),        # SA taps
            ],
            out_specs=pl.BlockSpec((Cout, BB * HW), lambda g: (0, g)),
            scratch_shapes=[pltpu.VMEM((Cout, BB * HW), jnp.float32)],
        ),
        compiler_params=pltpu.CompilerParams(
            dimension_semantics=("parallel",)),
    )(x2d, w1s, b1c, w2s, b2c, wca1, wca2, saws)

    return jnp.transpose(out2d.reshape(Cout, B, H, W), (1, 0, 2, 3))


# ---------------- pure-JAX reference (for correctness check) ----------------
def _conv_nchw(x, w, b=None):
    out = jax.lax.conv_general_dilated(
        x, w, (1, 1), "SAME",
        dimension_numbers=("NCHW", "OIHW", "NCHW"),
        precision=jax.lax.Precision.HIGHEST)
    if b is not None:
        out = out + b.reshape(1, -1, 1, 1)
    return out


def reference_forward(x, w1, b1, w2, b2, caw1, caw2, saw, res_scale=1.0):
    h1 = jax.nn.relu(_conv_nchw(x, w1, b1))
    h2 = jax.nn.relu(_conv_nchw(h1, w2, b2))

    # channel attention (shared MLP, bias-free 1x1 convs)
    avg = jnp.mean(h2, axis=(2, 3))                 # (B, C)
    mx = jnp.max(h2, axis=(2, 3))                   # (B, C)
    wa = caw1[:, :, 0, 0]                           # (hidden, C)
    wb = caw2[:, :, 0, 0]                           # (C, hidden)

    def mlp(v):
        return jax.nn.relu(v @ wa.T) @ wb.T

    ca = jax.nn.sigmoid(mlp(avg) + mlp(mx))[:, :, None, None]
    y = h2 * ca

    # spatial attention
    avg_c = jnp.mean(y, axis=1, keepdims=True)
    max_c = jnp.max(y, axis=1, keepdims=True)
    sa = jax.nn.sigmoid(_conv_nchw(jnp.concatenate([avg_c, max_c], axis=1), saw))
    cbam = y * sa

    out = res_scale * cbam + h1
    return h1 + out * res_scale


if __name__ == "__main__":
    key = jax.random.PRNGKey(0)
    B, H, W = 2, 16, 16
    in_nc, nf, ratio = 4, 32, 16
    hidden = nf // ratio
    res_scale = 1.0

    keys = jax.random.split(key, 8)
    x = jax.random.normal(keys[0], (B, in_nc, H, W), jnp.float32)
    w1 = jax.random.normal(keys[1], (nf, in_nc, 3, 3), jnp.float32) * 0.1
    b1 = jax.random.normal(keys[2], (nf,), jnp.float32) * 0.1
    w2 = jax.random.normal(keys[3], (nf, nf, 3, 3), jnp.float32) * 0.05
    b2 = jax.random.normal(keys[4], (nf,), jnp.float32) * 0.1
    caw1 = jax.random.normal(keys[5], (hidden, nf, 1, 1), jnp.float32) * 0.1
    caw2 = jax.random.normal(keys[6], (nf, hidden, 1, 1), jnp.float32) * 0.1
    saw = jax.random.normal(keys[7], (1, 2, 3, 3), jnp.float32) * 0.1

    out = res_conv_block_cbam(x, w1, b1, w2, b2, caw1, caw2, saw,
                              res_scale=res_scale)
    out = jax.block_until_ready(out)

    ref = reference_forward(x, w1, b1, w2, b2, caw1, caw2, saw, res_scale)
    ref = jax.block_until_ready(ref)

    assert out.shape == (B, nf, H, W)
    err = np.max(np.abs(np.asarray(out) - np.asarray(ref)))
    assert np.allclose(np.asarray(out), np.asarray(ref), atol=2e-3, rtol=2e-3), \
        f"max abs diff {err}"
    print("KERNEL_OK")
</pallas_src>

<mosaic_0001>
module attributes {stable_mosaic.version = 11 : i64} {
  func.func @_resblock_cbam_kernel(%arg0: i32, %arg1: memref<4x512xf32, #tpu.memory_space<vmem>>, %arg2: memref<9x32x4xf32, #tpu.memory_space<vmem>>, %arg3: memref<32x1xf32, #tpu.memory_space<vmem>>, %arg4: memref<9x32x32xf32, #tpu.memory_space<vmem>>, %arg5: memref<32x1xf32, #tpu.memory_space<vmem>>, %arg6: memref<2x32xf32, #tpu.memory_space<vmem>>, %arg7: memref<32x2xf32, #tpu.memory_space<vmem>>, %arg8: memref<9x1x2xf32, #tpu.memory_space<vmem>>, %arg9: memref<32x512xf32, #tpu.memory_space<vmem>>, %arg10: memref<32x512xf32, #tpu.memory_space<vmem>>) attributes {dimension_semantics = [#tpu.dimension_semantics<parallel>], iteration_bounds = array<i64: 1>, scalar_prefetch = 0 : i64, scratch_operands = 1 : i64, tpu.core_type = #tpu.core_type<tc>, window_params = [{transform_indices = @transform_0, window_bounds = array<i64: 4, 512>}, {pipeline_mode = #tpu.pipeline_mode<synchronous>, transform_indices = @transform_1, window_bounds = array<i64: 9, 32, 4>}, {pipeline_mode = #tpu.pipeline_mode<synchronous>, transform_indices = @transform_2, window_bounds = array<i64: 32, 1>}, {pipeline_mode = #tpu.pipeline_mode<synchronous>, transform_indices = @transform_3, window_bounds = array<i64: 9, 32, 32>}, {pipeline_mode = #tpu.pipeline_mode<synchronous>, transform_indices = @transform_4, window_bounds = array<i64: 32, 1>}, {pipeline_mode = #tpu.pipeline_mode<synchronous>, transform_indices = @transform_5, window_bounds = array<i64: 2, 32>}, {pipeline_mode = #tpu.pipeline_mode<synchronous>, transform_indices = @transform_6, window_bounds = array<i64: 32, 2>}, {pipeline_mode = #tpu.pipeline_mode<synchronous>, transform_indices = @transform_7, window_bounds = array<i64: 9, 1, 2>}, {transform_indices = @transform_8, window_bounds = array<i64: 32, 512>}]} {
    %0 = tpu.iota {dimensions = array<i32: 1>} : vector<1x512xi32>
    %c256_i32 = arith.constant 256 : i32
    %c0_i32 = arith.constant 0 : i32
    %1 = arith.cmpi eq, %c256_i32, %c0_i32 : i32
    %c1_i32 = arith.constant 1 : i32
    %2 = arith.select %1, %c1_i32, %c256_i32 : i32
    %3 = vector.broadcast %2 : i32 to vector<1x512xi32>
    %4 = arith.remsi %0, %3 : vector<1x512xi32>
    %c0_i32_0 = arith.constant 0 : i32
    %5 = vector.broadcast %c0_i32_0 : i32 to vector<1x512xi32>
    %6 = arith.cmpi ne, %4, %5 : vector<1x512xi32>
    %c0_i32_1 = arith.constant 0 : i32
    %7 = vector.broadcast %c0_i32_1 : i32 to vector<1x512xi32>
    %8 = arith.cmpi slt, %4, %7 : vector<1x512xi32>
    %c0_i32_2 = arith.constant 0 : i32
    %9 = arith.cmpi slt, %2, %c0_i32_2 : i32
    %10 = vector.broadcast %9 : i1 to vector<1x512xi1>
    %11 = vector.broadcast %10 : vector<1x512xi1> to vector<1x512xi1>
    %12 = arith.xori %8, %11 : vector<1x512xi1>
    %13 = arith.andi %12, %6 : vector<1x512xi1>
    %14 = vector.broadcast %2 : i32 to vector<1x512xi32>
    %15 = arith.addi %4, %14 : vector<1x512xi32>
    %16 = arith.select %13, %15, %4 : vector<1x512xi1>, vector<1x512xi32>
    %c16_i32 = arith.constant 16 : i32
    %c0_i32_3 = arith.constant 0 : i32
    %17 = arith.cmpi eq, %c16_i32, %c0_i32_3 : i32
    %c1_i32_4 = arith.constant 1 : i32
    %18 = arith.select %17, %c1_i32_4, %c16_i32 : i32
    %19 = vector.broadcast %18 : i32 to vector<1x512xi32>
    %20 = arith.remsi %16, %19 : vector<1x512xi32>
    %c0_i32_5 = arith.constant 0 : i32
    %21 = vector.broadcast %c0_i32_5 : i32 to vector<1x512xi32>
    %22 = arith.cmpi ne, %20, %21 : vector<1x512xi32>
    %c0_i32_6 = arith.constant 0 : i32
    %23 = vector.broadcast %c0_i32_6 : i32 to vector<1x512xi32>
    %24 = arith.cmpi slt, %20, %23 : vector<1x512xi32>
    %c0_i32_7 = arith.constant 0 : i32
    %25 = arith.cmpi slt, %18, %c0_i32_7 : i32
    %26 = vector.broadcast %25 : i1 to vector<1x512xi1>
    %27 = vector.broadcast %26 : vector<1x512xi1> to vector<1x512xi1>
    %28 = arith.xori %24, %27 : vector<1x512xi1>
    %29 = arith.andi %28, %22 : vector<1x512xi1>
    %30 = vector.broadcast %18 : i32 to vector<1x512xi32>
    %31 = arith.addi %20, %30 : vector<1x512xi32>
    %32 = arith.select %29, %31, %20 : vector<1x512xi1>, vector<1x512xi32>
    %c16_i32_8 = arith.constant 16 : i32
    %33 = vector.broadcast %c16_i32_8 : i32 to vector<1x512xi32>
    %34 = arith.cmpi sge, %16, %33 : vector<1x512xi32>
    %c240_i32 = arith.constant 240 : i32
    %35 = vector.broadcast %c240_i32 : i32 to vector<1x512xi32>
    %36 = arith.cmpi slt, %16, %35 : vector<1x512xi32>
    %c0_i32_9 = arith.constant 0 : i32
    %37 = vector.broadcast %c0_i32_9 : i32 to vector<1x512xi32>
    %38 = arith.cmpi ne, %32, %37 : vector<1x512xi32>
    %c15_i32 = arith.constant 15 : i32
    %39 = vector.broadcast %c15_i32 : i32 to vector<1x512xi32>
    %40 = arith.cmpi ne, %32, %39 : vector<1x512xi32>
    %41 = arith.andi %34, %38 : vector<1x512xi1>
    %42 = arith.andi %34, %40 : vector<1x512xi1>
    %43 = arith.andi %36, %38 : vector<1x512xi1>
    %44 = arith.andi %36, %40 : vector<1x512xi1>
    %c0 = arith.constant 0 : index
    %c0_10 = arith.constant 0 : index
    %45 = vector.load %arg1[%c0, %c0_10] : memref<4x512xf32, #tpu.memory_space<vmem>>, vector<4x512xf32>
    %c0_11 = arith.constant 0 : index
    %c0_12 = arith.constant 0 : index
    %c0_13 = arith.constant 0 : index
    %46 = vector.load %arg2[%c0_11, %c0_12, %c0_13] : memref<9x32x4xf32, #tpu.memory_space<vmem>>, vector<1x32x4xf32>
    %47 = vector.shape_cast %46 : vector<1x32x4xf32> to vector<32x4xf32>
    %c17_i32 = arith.constant 17 : i32
    %48 = tpu.dynamic_rotate %45 by %c17_i32 dim 1 : vector<4x512xf32>, i32 -> vector<4x512xf32>
    %cst = arith.constant 0.000000e+00 : f32
    %49 = vector.shape_cast %41 : vector<1x512xi1> to vector<1x512xi1>
    %50 = vector.broadcast %49 : vector<1x512xi1> to vector<4x512xi1>
    %51 = vector.broadcast %cst : f32 to vector<4x512xf32>
    %52 = arith.select %50, %48, %51 : vector<4x512xi1>, vector<4x512xf32>
    %cst_14 = arith.constant dense<0.000000e+00> : vector<32x512xf32>
    %53 = tpu.matmul %47, %52, %cst_14 {dimension_numbers = #tpu.dot_dimension_numbers<[1], [0], [0], [1], [0, 0, 1, 1], [], []>} : vector<32x4xf32>, vector<4x512xf32>, vector<32x512xf32> -> vector<32x512xf32>
    %c1 = arith.constant 1 : index
    %c0_15 = arith.constant 0 : index
    %c0_16 = arith.constant 0 : index
    %54 = vector.load %arg2[%c1, %c0_15, %c0_16] : memref<9x32x4xf32, #tpu.memory_space<vmem>>, vector<1x32x4xf32>
    %55 = vector.shape_cast %54 : vector<1x32x4xf32> to vector<32x4xf32>
    %c16_i32_17 = arith.constant 16 : i32
    %56 = tpu.dynamic_rotate %45 by %c16_i32_17 dim 1 : vector<4x512xf32>, i32 -> vector<4x512xf32>
    %cst_18 = arith.constant 0.000000e+00 : f32
    %57 = vector.shape_cast %34 : vector<1x512xi1> to vector<1x512xi1>
    %58 = vector.broadcast %57 : vector<1x512xi1> to vector<4x512xi1>
    %59 = vector.broadcast %cst_18 : f32 to vector<4x512xf32>
    %60 = arith.select %58, %56, %59 : vector<4x512xi1>, vector<4x512xf32>
    %cst_19 = arith.constant dense<0.000000e+00> : vector<32x512xf32>
    %61 = tpu.matmul %55, %60, %cst_19 {dimension_numbers = #tpu.dot_dimension_numbers<[1], [0], [0], [1], [0, 0, 1, 1], [], []>} : vector<32x4xf32>, vector<4x512xf32>, vector<32x512xf32> -> vector<32x512xf32>
    %62 = arith.addf %53, %61 : vector<32x512xf32>
    %c2 = arith.constant 2 : index
    %c0_20 = arith.constant 0 : index
    %c0_21 = arith.constant 0 : index
    %63 = vector.load %arg2[%c2, %c0_20, %c0_21] : memref<9x32x4xf32, #tpu.memory_space<vmem>>, vector<1x32x4xf32>
    %64 = vector.shape_cast %63 : vector<1x32x4xf32> to vector<32x4xf32>
    %c15_i32_22 = arith.constant 15 : i32
    %65 = tpu.dynamic_rotate %45 by %c15_i32_22 dim 1 : vector<4x512xf32>, i32 -> vector<4x512xf32>
    %cst_23 = arith.constant 0.000000e+00 : f32
    %66 = vector.shape_cast %42 : vector<1x512xi1> to vector<1x512xi1>
    %67 = vector.broadcast %66 : vector<1x512xi1> to vector<4x512xi1>
    %68 = vector.broadcast %cst_23 : f32 to vector<4x512xf32>
    %69 = arith.select %67, %65, %68 : vector<4x512xi1>, vector<4x512xf32>
    %cst_24 = arith.constant dense<0.000000e+00> : vector<32x512xf32>
    %70 = tpu.matmul %64, %69, %cst_24 {dimension_numbers = #tpu.dot_dimension_numbers<[1], [0], [0], [1], [0, 0, 1, 1], [], []>} : vector<32x4xf32>, vector<4x512xf32>, vector<32x512xf32> -> vector<32x512xf32>
    %71 = arith.addf %62, %70 : vector<32x512xf32>
    %c3 = arith.constant 3 : index
    %c0_25 = arith.constant 0 : index
    %c0_26 = arith.constant 0 : index
    %72 = vector.load %arg2[%c3, %c0_25, %c0_26] : memref<9x32x4xf32, #tpu.memory_space<vmem>>, vector<1x32x4xf32>
    %73 = vector.shape_cast %72 : vector<1x32x4xf32> to vector<32x4xf32>
    %c1_i32_27 = arith.constant 1 : i32
    %74 = tpu.dynamic_rotate %45 by %c1_i32_27 dim 1 : vector<4x512xf32>, i32 -> vector<4x512xf32>
    %cst_28 = arith.constant 0.000000e+00 : f32
    %75 = vector.shape_cast %38 : vector<1x512xi1> to vector<1x512xi1>
    %76 = vector.broadcast %75 : vector<1x512xi1> to vector<4x512xi1>
    %77 = vector.broadcast %cst_28 : f32 to vector<4x512xf32>
    %78 = arith.select %76, %74, %77 : vector<4x512xi1>, vector<4x512xf32>
    %cst_29 = arith.constant dense<0.000000e+00> : vector<32x512xf32>
    %79 = tpu.matmul %73, %78, %cst_29 {dimension_numbers = #tpu.dot_dimension_numbers<[1], [0], [0], [1], [0, 0, 1, 1], [], []>} : vector<32x4xf32>, vector<4x512xf32>, vector<32x512xf32> -> vector<32x512xf32>
    %80 = arith.addf %71, %79 : vector<32x512xf32>
    %c4 = arith.constant 4 : index
    %c0_30 = arith.constant 0 : index
    %c0_31 = arith.constant 0 : index
    %81 = vector.load %arg2[%c4, %c0_30, %c0_31] : memref<9x32x4xf32, #tpu.memory_space<vmem>>, vector<1x32x4xf32>
    %82 = vector.shape_cast %81 : vector<1x32x4xf32> to vector<32x4xf32>
    %cst_32 = arith.constant dense<0.000000e+00> : vector<32x512xf32>
    %83 = tpu.matmul %82, %45, %cst_32 {dimension_numbers = #tpu.dot_dimension_numbers<[1], [0], [0], [1], [0, 0, 1, 1], [], []>} : vector<32x4xf32>, vector<4x512xf32>, vector<32x512xf32> -> vector<32x512xf32>
    %84 = arith.addf %80, %83 : vector<32x512xf32>
    %c5 = arith.constant 5 : index
    %c0_33 = arith.constant 0 : index
    %c0_34 = arith.constant 0 : index
    %85 = vector.load %arg2[%c5, %c0_33, %c0_34] : memref<9x32x4xf32, #tpu.memory_space<vmem>>, vector<1x32x4xf32>
    %86 = vector.shape_cast %85 : vector<1x32x4xf32> to vector<32x4xf32>
    %c511_i32 = arith.constant 511 : i32
    %87 = tpu.dynamic_rotate %45 by %c511_i32 dim 1 : vector<4x512xf32>, i32 -> vector<4x512xf32>
    %cst_35 = arith.constant 0.000000e+00 : f32
    %88 = vector.shape_cast %40 : vector<1x512xi1> to vector<1x512xi1>
    %89 = vector.broadcast %88 : vector<1x512xi1> to vector<4x512xi1>
    %90 = vector.broadcast %cst_35 : f32 to vector<4x512xf32>
    %91 = arith.select %89, %87, %90 : vector<4x512xi1>, vector<4x512xf32>
    %cst_36 = arith.constant dense<0.000000e+00> : vector<32x512xf32>
    %92 = tpu.matmul %86, %91, %cst_36 {dimension_numbers = #tpu.dot_dimension_numbers<[1], [0], [0], [1], [0, 0, 1, 1], [], []>} : vector<32x4xf32>, vector<4x512xf32>, vector<32x512xf32> -> vector<32x512xf32>
    %93 = arith.addf %84, %92 : vector<32x512xf32>
    %c6 = arith.constant 6 : index
    %c0_37 = arith.constant 0 : index
    %c0_38 = arith.constant 0 : index
    %94 = vector.load %arg2[%c6, %c0_37, %c0_38] : memref<9x32x4xf32, #tpu.memory_space<vmem>>, vector<1x32x4xf32>
    %95 = vector.shape_cast %94 : vector<1x32x4xf32> to vector<32x4xf32>
    %c497_i32 = arith.constant 497 : i32
    %96 = tpu.dynamic_rotate %45 by %c497_i32 dim 1 : vector<4x512xf32>, i32 -> vector<4x512xf32>
    %cst_39 = arith.constant 0.000000e+00 : f32
    %97 = vector.shape_cast %43 : vector<1x512xi1> to vector<1x512xi1>
    %98 = vector.broadcast %97 : vector<1x512xi1> to vector<4x512xi1>
    %99 = vector.broadcast %cst_39 : f32 to vector<4x512xf32>
    %100 = arith.select %98, %96, %99 : vector<4x512xi1>, vector<4x512xf32>
    %cst_40 = arith.constant dense<0.000000e+00> : vector<32x512xf32>
    %101 = tpu.matmul %95, %100, %cst_40 {dimension_numbers = #tpu.dot_dimension_numbers<[1], [0], [0], [1], [0, 0, 1, 1], [], []>} : vector<32x4xf32>, vector<4x512xf32>, vector<32x512xf32> -> vector<32x512xf32>
    %102 = arith.addf %93, %101 : vector<32x512xf32>
    %c7 = arith.constant 7 : index
    %c0_41 = arith.constant 0 : index
    %c0_42 = arith.constant 0 : index
    %103 = vector.load %arg2[%c7, %c0_41, %c0_42] : memref<9x32x4xf32, #tpu.memory_space<vmem>>, vector<1x32x4xf32>
    %104 = vector.shape_cast %103 : vector<1x32x4xf32> to vector<32x4xf32>
    %c496_i32 = arith.constant 496 : i32
    %105 = tpu.dynamic_rotate %45 by %c496_i32 dim 1 : vector<4x512xf32>, i32 -> vector<4x512xf32>
    %cst_43 = arith.constant 0.000000e+00 : f32
    %106 = vector.shape_cast %36 : vector<1x512xi1> to vector<1x512xi1>
    %107 = vector.broadcast %106 : vector<1x512xi1> to vector<4x512xi1>
    %108 = vector.broadcast %cst_43 : f32 to vector<4x512xf32>
    %109 = arith.select %107, %105, %108 : vector<4x512xi1>, vector<4x512xf32>
    %cst_44 = arith.constant dense<0.000000e+00> : vector<32x512xf32>
    %110 = tpu.matmul %104, %109, %cst_44 {dimension_numbers = #tpu.dot_dimension_numbers<[1], [0], [0], [1], [0, 0, 1, 1], [], []>} : vector<32x4xf32>, vector<4x512xf32>, vector<32x512xf32> -> vector<32x512xf32>
    %111 = arith.addf %102, %110 : vector<32x512xf32>
    %c8 = arith.constant 8 : index
    %c0_45 = arith.constant 0 : index
    %c0_46 = arith.constant 0 : index
    %112 = vector.load %arg2[%c8, %c0_45, %c0_46] : memref<9x32x4xf32, #tpu.memory_space<vmem>>, vector<1x32x4xf32>
    %113 = vector.shape_cast %112 : vector<1x32x4xf32> to vector<32x4xf32>
    %c495_i32 = arith.constant 495 : i32
    %114 = tpu.dynamic_rotate %45 by %c495_i32 dim 1 : vector<4x512xf32>, i32 -> vector<4x512xf32>
    %cst_47 = arith.constant 0.000000e+00 : f32
    %115 = vector.shape_cast %44 : vector<1x512xi1> to vector<1x512xi1>
    %116 = vector.broadcast %115 : vector<1x512xi1> to vector<4x512xi1>
    %117 = vector.broadcast %cst_47 : f32 to vector<4x512xf32>
    %118 = arith.select %116, %114, %117 : vector<4x512xi1>, vector<4x512xf32>
    %cst_48 = arith.constant dense<0.000000e+00> : vector<32x512xf32>
    %119 = tpu.matmul %113, %118, %cst_48 {dimension_numbers = #tpu.dot_dimension_numbers<[1], [0], [0], [1], [0, 0, 1, 1], [], []>} : vector<32x4xf32>, vector<4x512xf32>, vector<32x512xf32> -> vector<32x512xf32>
    %120 = arith.addf %111, %119 : vector<32x512xf32>
    %c0_49 = arith.constant 0 : index
    %c0_50 = arith.constant 0 : index
    %121 = vector.load %arg3[%c0_49, %c0_50] : memref<32x1xf32, #tpu.memory_space<vmem>>, vector<32x1xf32>
    %122 = vector.broadcast %121 : vector<32x1xf32> to vector<32x512xf32>
    %123 = arith.addf %120, %122 : vector<32x512xf32>
    %cst_51 = arith.constant 0.000000e+00 : f32
    %124 = vector.broadcast %cst_51 : f32 to vector<32x512xf32>
    %125 = arith.maximumf %123, %124 : vector<32x512xf32>
    %c0_52 = arith.constant 0 : index
    %c0_53 = arith.constant 0 : index
    %126 = vector.load %arg10[%c0_52, %c0_53] : memref<32x512xf32, #tpu.memory_space<vmem>>, vector<32x512xf32>
    tpu.vector_store %arg10[%c0_52, %c0_53], %125 {strides = array<i32>} : memref<32x512xf32, #tpu.memory_space<vmem>>, vector<32x512xf32>,
    %c0_54 = arith.constant 0 : index
    %c0_55 = arith.constant 0 : index
    %c0_56 = arith.constant 0 : index
    %127 = vector.load %arg4[%c0_54, %c0_55, %c0_56] : memref<9x32x32xf32, #tpu.memory_space<vmem>>, vector<1x32x32xf32>
    %128 = vector.shape_cast %127 : vector<1x32x32xf32> to vector<32x32xf32>
    %c17_i32_57 = arith.constant 17 : i32
    %129 = tpu.dynamic_rotate %125 by %c17_i32_57 dim 1 : vector<32x512xf32>, i32 -> vector<32x512xf32>
    %cst_58 = arith.constant 0.000000e+00 : f32
    %130 = vector.shape_cast %41 : vector<1x512xi1> to vector<1x512xi1>
    %131 = vector.broadcast %130 : vector<1x512xi1> to vector<32x512xi1>
    %132 = vector.broadcast %cst_58 : f32 to vector<32x512xf32>
    %133 = arith.select %131, %129, %132 : vector<32x512xi1>, vector<32x512xf32>
    %cst_59 = arith.constant dense<0.000000e+00> : vector<32x512xf32>
    %134 = tpu.matmul %128, %133, %cst_59 {dimension_numbers = #tpu.dot_dimension_numbers<[1], [0], [0], [1], [0, 0, 1, 1], [], []>} : vector<32x32xf32>, vector<32x512xf32>, vector<32x512xf32> -> vector<32x512xf32>
    %c1_60 = arith.constant 1 : index
    %c0_61 = arith.constant 0 : index
    %c0_62 = arith.constant 0 : index
    %135 = vector.load %arg4[%c1_60, %c0_61, %c0_62] : memref<9x32x32xf32, #tpu.memory_space<vmem>>, vector<1x32x32xf32>
    %136 = vector.shape_cast %135 : vector<1x32x32xf32> to vector<32x32xf32>
    %c16_i32_63 = arith.constant 16 : i32
    %137 = tpu.dynamic_rotate %125 by %c16_i32_63 dim 1 : vector<32x512xf32>, i32 -> vector<32x512xf32>
    %cst_64 = arith.constant 0.000000e+00 : f32
    %138 = vector.shape_cast %34 : vector<1x512xi1> to vector<1x512xi1>
    %139 = vector.broadcast %138 : vector<1x512xi1> to vector<32x512xi1>
    %140 = vector.broadcast %cst_64 : f32 to vector<32x512xf32>
    %141 = arith.select %139, %137, %140 : vector<32x512xi1>, vector<32x512xf32>
    %cst_65 = arith.constant dense<0.000000e+00> : vector<32x512xf32>
    %142 = tpu.matmul %136, %141, %cst_65 {dimension_numbers = #tpu.dot_dimension_numbers<[1], [0], [0], [1], [0, 0, 1, 1], [], []>} : vector<32x32xf32>, vector<32x512xf32>, vector<32x512xf32> -> vector<32x512xf32>
    %143 = arith.addf %134, %142 : vector<32x512xf32>
    %c2_66 = arith.constant 2 : index
    %c0_67 = arith.constant 0 : index
    %c0_68 = arith.constant 0 : index
    %144 = vector.load %arg4[%c2_66, %c0_67, %c0_68] : memref<9x32x32xf32, #tpu.memory_space<vmem>>, vector<1x32x32xf32>
    %145 = vector.shape_cast %144 : vector<1x32x32xf32> to vector<32x32xf32>
    %c15_i32_69 = arith.constant 15 : i32
    %146 = tpu.dynamic_rotate %125 by %c15_i32_69 dim 1 : vector<32x512xf32>, i32 -> vector<32x512xf32>
    %cst_70 = arith.constant 0.000000e+00 : f32
    %147 = vector.shape_cast %42 : vector<1x512xi1> to vector<1x512xi1>
    %148 = vector.broadcast %147 : vector<1x512xi1> to vector<32x512xi1>
    %149 = vector.broadcast %cst_70 : f32 to vector<32x512xf32>
    %150 = arith.select %148, %146, %149 : vector<32x512xi1>, vector<32x512xf32>
    %cst_71 = arith.constant dense<0.000000e+00> : vector<32x512xf32>
    %151 = tpu.matmul %145, %150, %cst_71 {dimension_numbers = #tpu.dot_dimension_numbers<[1], [0], [0], [1], [0, 0, 1, 1], [], []>} : vector<32x32xf32>, vector<32x512xf32>, vector<32x512xf32> -> vector<32x512xf32>
    %152 = arith.addf %143, %151 : vector<32x512xf32>
    %c3_72 = arith.constant 3 : index
    %c0_73 = arith.constant 0 : index
    %c0_74 = arith.constant 0 : index
    %153 = vector.load %arg4[%c3_72, %c0_73, %c0_74] : memref<9x32x32xf32, #tpu.memory_space<vmem>>, vector<1x32x32xf32>
    %154 = vector.shape_cast %153 : vector<1x32x32xf32> to vector<32x32xf32>
    %c1_i32_75 = arith.constant 1 : i32
    %155 = tpu.dynamic_rotate %125 by %c1_i32_75 dim 1 : vector<32x512xf32>, i32 -> vector<32x512xf32>
    %cst_76 = arith.constant 0.000000e+00 : f32
    %156 = vector.shape_cast %38 : vector<1x512xi1> to vector<1x512xi1>
    %157 = vector.broadcast %156 : vector<1x512xi1> to vector<32x512xi1>
    %158 = vector.broadcast %cst_76 : f32 to vector<32x512xf32>
    %159 = arith.select %157, %155, %158 : vector<32x512xi1>, vector<32x512xf32>
    %cst_77 = arith.constant dense<0.000000e+00> : vector<32x512xf32>
    %160 = tpu.matmul %154, %159, %cst_77 {dimension_numbers = #tpu.dot_dimension_numbers<[1], [0], [0], [1], [0, 0, 1, 1], [], []>} : vector<32x32xf32>, vector<32x512xf32>, vector<32x512xf32> -> vector<32x512xf32>
    %161 = arith.addf %152, %160 : vector<32x512xf32>
    %c4_78 = arith.constant 4 : index
    %c0_79 = arith.constant 0 : index
    %c0_80 = arith.constant 0 : index
    %162 = vector.load %arg4[%c4_78, %c0_79, %c0_80] : memref<9x32x32xf32, #tpu.memory_space<vmem>>, vector<1x32x32xf32>
    %163 = vector.shape_cast %162 : vector<1x32x32xf32> to vector<32x32xf32>
    %cst_81 = arith.constant dense<0.000000e+00> : vector<32x512xf32>
    %164 = tpu.matmul %163, %125, %cst_81 {dimension_numbers = #tpu.dot_dimension_numbers<[1], [0], [0], [1], [0, 0, 1, 1], [], []>} : vector<32x32xf32>, vector<32x512xf32>, vector<32x512xf32> -> vector<32x512xf32>
    %165 = arith.addf %161, %164 : vector<32x512xf32>
    %c5_82 = arith.constant 5 : index
    %c0_83 = arith.constant 0 : index
    %c0_84 = arith.constant 0 : index
    %166 = vector.load %arg4[%c5_82, %c0_83, %c0_84] : memref<9x32x32xf32, #tpu.memory_space<vmem>>, vector<1x32x32xf32>
    %167 = vector.shape_cast %166 : vector<1x32x32xf32> to vector<32x32xf32>
    %c511_i32_85 = arith.constant 511 : i32
    %168 = tpu.dynamic_rotate %125 by %c511_i32_85 dim 1 : vector<32x512xf32>, i32 -> vector<32x512xf32>
    %cst_86 = arith.constant 0.000000e+00 : f32
    %169 = vector.shape_cast %40 : vector<1x512xi1> to vector<1x512xi1>
    %170 = vector.broadcast %169 : vector<1x512xi1> to vector<32x512xi1>
    %171 = vector.broadcast %cst_86 : f32 to vector<32x512xf32>
    %172 = arith.select %170, %168, %171 : vector<32x512xi1>, vector<32x512xf32>
    %cst_87 = arith.constant dense<0.000000e+00> : vector<32x512xf32>
    %173 = tpu.matmul %167, %172, %cst_87 {dimension_numbers = #tpu.dot_dimension_numbers<[1], [0], [0], [1], [0, 0, 1, 1], [], []>} : vector<32x32xf32>, vector<32x512xf32>, vector<32x512xf32> -> vector<32x512xf32>
    %174 = arith.addf %165, %173 : vector<32x512xf32>
    %c6_88 = arith.constant 6 : index
    %c0_89 = arith.constant 0 : index
    %c0_90 = arith.constant 0 : index
    %175 = vector.load %arg4[%c6_88, %c0_89, %c0_90] : memref<9x32x32xf32, #tpu.memory_space<vmem>>, vector<1x32x32xf32>
    %176 = vector.shape_cast %175 : vector<1x32x32xf32> to vector<32x32xf32>
    %c497_i32_91 = arith.constant 497 : i32
    %177 = tpu.dynamic_rotate %125 by %c497_i32_91 dim 1 : vector<32x512xf32>, i32 -> vector<32x512xf32>
    %cst_92 = arith.constant 0.000000e+00 : f32
    %178 = vector.shape_cast %43 : vector<1x512xi1> to vector<1x512xi1>
    %179 = vector.broadcast %178 : vector<1x512xi1> to vector<32x512xi1>
    %180 = vector.broadcast %cst_92 : f32 to vector<32x512xf32>
    %181 = arith.select %179, %177, %180 : vector<32x512xi1>, vector<32x512xf32>
    %cst_93 = arith.constant dense<0.000000e+00> : vector<32x512xf32>
    %182 = tpu.matmul %176, %181, %cst_93 {dimension_numbers = #tpu.dot_dimension_numbers<[1], [0], [0], [1], [0, 0, 1, 1], [], []>} : vector<32x32xf32>, vector<32x512xf32>, vector<32x512xf32> -> vector<32x512xf32>
    %183 = arith.addf %174, %182 : vector<32x512xf32>
    %c7_94 = arith.constant 7 : index
    %c0_95 = arith.constant 0 : index
    %c0_96 = arith.constant 0 : index
    %184 = vector.load %arg4[%c7_94, %c0_95, %c0_96] : memref<9x32x32xf32, #tpu.memory_space<vmem>>, vector<1x32x32xf32>
    %185 = vector.shape_cast %184 : vector<1x32x32xf32> to vector<32x32xf32>
    %c496_i32_97 = arith.constant 496 : i32
    %186 = tpu.dynamic_rotate %125 by %c496_i32_97 dim 1 : vector<32x512xf32>, i32 -> vector<32x512xf32>
    %cst_98 = arith.constant 0.000000e+00 : f32
    %187 = vector.shape_cast %36 : vector<1x512xi1> to vector<1x512xi1>
    %188 = vector.broadcast %187 : vector<1x512xi1> to vector<32x512xi1>
    %189 = vector.broadcast %cst_98 : f32 to vector<32x512xf32>
    %190 = arith.select %188, %186, %189 : vector<32x512xi1>, vector<32x512xf32>
    %cst_99 = arith.constant dense<0.000000e+00> : vector<32x512xf32>
    %191 = tpu.matmul %185, %190, %cst_99 {dimension_numbers = #tpu.dot_dimension_numbers<[1], [0], [0], [1], [0, 0, 1, 1], [], []>} : vector<32x32xf32>, vector<32x512xf32>, vector<32x512xf32> -> vector<32x512xf32>
    %192 = arith.addf %183, %191 : vector<32x512xf32>
    %c8_100 = arith.constant 8 : index
    %c0_101 = arith.constant 0 : index
    %c0_102 = arith.constant 0 : index
    %193 = vector.load %arg4[%c8_100, %c0_101, %c0_102] : memref<9x32x32xf32, #tpu.memory_space<vmem>>, vector<1x32x32xf32>
    %194 = vector.shape_cast %193 : vector<1x32x32xf32> to vector<32x32xf32>
    %c495_i32_103 = arith.constant 495 : i32
    %195 = tpu.dynamic_rotate %125 by %c495_i32_103 dim 1 : vector<32x512xf32>, i32 -> vector<32x512xf32>
    %cst_104 = arith.constant 0.000000e+00 : f32
    %196 = vector.shape_cast %44 : vector<1x512xi1> to vector<1x512xi1>
    %197 = vector.broadcast %196 : vector<1x512xi1> to vector<32x512xi1>
    %198 = vector.broadcast %cst_104 : f32 to vector<32x512xf32>
    %199 = arith.select %197, %195, %198 : vector<32x512xi1>, vector<32x512xf32>
    %cst_105 = arith.constant dense<0.000000e+00> : vector<32x512xf32>
    %200 = tpu.matmul %194, %199, %cst_105 {dimension_numbers = #tpu.dot_dimension_numbers<[1], [0], [0], [1], [0, 0, 1, 1], [], []>} : vector<32x32xf32>, vector<32x512xf32>, vector<32x512xf32> -> vector<32x512xf32>
    %201 = arith.addf %192, %200 : vector<32x512xf32>
    %c0_106 = arith.constant 0 : index
    %c0_107 = arith.constant 0 : index
    %202 = vector.load %arg5[%c0_106, %c0_107] : memref<32x1xf32, #tpu.memory_space<vmem>>, vector<32x1xf32>
    %203 = vector.broadcast %202 : vector<32x1xf32> to vector<32x512xf32>
    %204 = arith.addf %201, %203 : vector<32x512xf32>
    %cst_108 = arith.constant 0.000000e+00 : f32
    %205 = vector.broadcast %cst_108 : f32 to vector<32x512xf32>
    %206 = arith.maximumf %204, %205 : vector<32x512xf32>
    %207 = vector.extract_strided_slice %206 {offsets = [0, 0], sizes = [32, 256], strides = [1, 1]} : vector<32x512xf32> to vector<32x256xf32>
    %cst_109 = arith.constant dense<0.000000e+00> : vector<32xf32>
    %208 = vector.multi_reduction <add>, %207, %cst_109 [1] : vector<32x256xf32> to vector<32xf32>
    %209 = vector.shape_cast %208 : vector<32xf32> to vector<32x1xf32>
    %cst_110 = arith.constant 2.560000e+02 : f32
    %210 = vector.broadcast %cst_110 : f32 to vector<32x1xf32>
    %211 = arith.divf %209, %210 : vector<32x1xf32>
    %cst_111 = arith.constant dense<0xFF800000> : vector<32xf32>
    %212 = vector.multi_reduction <maximumf>, %207, %cst_111 [1] : vector<32x256xf32> to vector<32xf32>
    %213 = vector.shape_cast %212 : vector<32xf32> to vector<32x1xf32>
    %214 = vector.extract_strided_slice %206 {offsets = [0, 256], sizes = [32, 256], strides = [1, 1]} : vector<32x512xf32> to vector<32x256xf32>
    %cst_112 = arith.constant dense<0.000000e+00> : vector<32xf32>
    %215 = vector.multi_reduction <add>, %214, %cst_112 [1] : vector<32x256xf32> to vector<32xf32>
    %216 = vector.shape_cast %215 : vector<32xf32> to vector<32x1xf32>
    %cst_113 = arith.constant 2.560000e+02 : f32
    %217 = vector.broadcast %cst_113 : f32 to vector<32x1xf32>
    %218 = arith.divf %216, %217 : vector<32x1xf32>
    %cst_114 = arith.constant dense<0xFF800000> : vector<32xf32>
    %219 = vector.multi_reduction <maximumf>, %214, %cst_114 [1] : vector<32x256xf32> to vector<32xf32>
    %220 = vector.shape_cast %219 : vector<32xf32> to vector<32x1xf32>
    %221 = tpu.concatenate %211, %218, %213, %220 in 1 : vector<32x1xf32>, vector<32x1xf32>, vector<32x1xf32>, vector<32x1xf32> -> vector<32x4xf32>
    %c0_115 = arith.constant 0 : index
    %c0_116 = arith.constant 0 : index
    %222 = vector.load %arg6[%c0_115, %c0_116] : memref<2x32xf32, #tpu.memory_space<vmem>>, vector<2x32xf32>
    %cst_117 = arith.constant dense<0.000000e+00> : vector<2x4xf32>
    %223 = tpu.matmul %222, %221, %cst_117 {dimension_numbers = #tpu.dot_dimension_numbers<[1], [0], [0], [1], [0, 0, 1, 1], [], []>} : vector<2x32xf32>, vector<32x4xf32>, vector<2x4xf32> -> vector<2x4xf32>
    %cst_118 = arith.constant 0.000000e+00 : f32
    %224 = vector.broadcast %cst_118 : f32 to vector<2x4xf32>
    %225 = arith.maximumf %223, %224 : vector<2x4xf32>
    %c0_119 = arith.constant 0 : index
    %c0_120 = arith.constant 0 : index
    %226 = vector.load %arg7[%c0_119, %c0_120] : memref<32x2xf32, #tpu.memory_space<vmem>>, vector<32x2xf32>
    %cst_121 = arith.constant dense<0.000000e+00> : vector<32x4xf32>
    %227 = tpu.matmul %226, %225, %cst_121 {dimension_numbers = #tpu.dot_dimension_numbers<[1], [0], [0], [1], [0, 0, 1, 1], [], []>} : vector<32x2xf32>, vector<2x4xf32>, vector<32x4xf32> -> vector<32x4xf32>
    %228 = vector.extract_strided_slice %227 {offsets = [0, 0], sizes = [32, 2], strides = [1, 1]} : vector<32x4xf32> to vector<32x2xf32>
    %229 = vector.extract_strided_slice %227 {offsets = [0, 2], sizes = [32, 2], strides = [1, 1]} : vector<32x4xf32> to vector<32x2xf32>
    %230 = arith.addf %228, %229 : vector<32x2xf32>
    %231 = arith.negf %230 : vector<32x2xf32>
    %232 = math.exp %231 : vector<32x2xf32>
    %cst_122 = arith.constant 1.000000e+00 : f32
    %233 = vector.broadcast %cst_122 : f32 to vector<32x2xf32>
    %234 = arith.addf %233, %232 : vector<32x2xf32>
    %235 = arith.divf %233, %234 : vector<32x2xf32>
    %236 = vector.extract_strided_slice %206 {offsets = [0, 0], sizes = [32, 256], strides = [1, 1]} : vector<32x512xf32> to vector<32x256xf32>
    %237 = vector.extract_strided_slice %235 {offsets = [0, 0], sizes = [32, 1], strides = [1, 1]} : vector<32x2xf32> to vector<32x1xf32>
    %238 = vector.broadcast %237 : vector<32x1xf32> to vector<32x256xf32>
    %239 = arith.mulf %236, %238 : vector<32x256xf32>
    %240 = vector.extract_strided_slice %206 {offsets = [0, 256], sizes = [32, 256], strides = [1, 1]} : vector<32x512xf32> to vector<32x256xf32>
    %241 = vector.extract_strided_slice %235 {offsets = [0, 1], sizes = [32, 1], strides = [1, 1]} : vector<32x2xf32> to vector<32x1xf32>
    %242 = vector.broadcast %241 : vector<32x1xf32> to vector<32x256xf32>
    %243 = arith.mulf %240, %242 : vector<32x256xf32>
    %244 = tpu.concatenate %239, %243 in 1 : vector<32x256xf32>, vector<32x256xf32> -> vector<32x512xf32>
    %cst_123 = arith.constant dense<0.000000e+00> : vector<512xf32>
    %245 = vector.multi_reduction <add>, %244, %cst_123 [0] : vector<32x512xf32> to vector<512xf32>
    %246 = vector.shape_cast %245 : vector<512xf32> to vector<1x512xf32>
    %cst_124 = arith.constant 3.200000e+01 : f32
    %247 = vector.broadcast %cst_124 : f32 to vector<1x512xf32>
    %248 = arith.divf %246, %247 : vector<1x512xf32>
    %cst_125 = arith.constant dense<0xFF800000> : vector<512xf32>
    %249 = vector.multi_reduction <maximumf>, %244, %cst_125 [0] : vector<32x512xf32> to vector<512xf32>
    %250 = vector.shape_cast %249 : vector<512xf32> to vector<1x512xf32>
    %251 = tpu.concatenate %248, %250 in 0 : vector<1x512xf32>, vector<1x512xf32> -> vector<2x512xf32>
    %c0_126 = arith.constant 0 : index
    %c0_127 = arith.constant 0 : index
    %c0_128 = arith.constant 0 : index
    %252 = vector.load %arg8[%c0_126, %c0_127, %c0_128] : memref<9x1x2xf32, #tpu.memory_space<vmem>>, vector<1x1x2xf32>
    %253 = vector.shape_cast %252 : vector<1x1x2xf32> to vector<1x2xf32>
    %c17_i32_129 = arith.constant 17 : i32
    %254 = tpu.dynamic_rotate %251 by %c17_i32_129 dim 1 : vector<2x512xf32>, i32 -> vector<2x512xf32>
    %cst_130 = arith.constant 0.000000e+00 : f32
    %255 = vector.shape_cast %41 : vector<1x512xi1> to vector<1x512xi1>
    %256 = vector.broadcast %255 : vector<1x512xi1> to vector<2x512xi1>
    %257 = vector.broadcast %cst_130 : f32 to vector<2x512xf32>
    %258 = arith.select %256, %254, %257 : vector<2x512xi1>, vector<2x512xf32>
    %cst_131 = arith.constant dense<0.000000e+00> : vector<1x512xf32>
    %259 = tpu.matmul %253, %258, %cst_131 {dimension_numbers = #tpu.dot_dimension_numbers<[1], [0], [0], [1], [0, 0, 1, 1], [], []>} : vector<1x2xf32>, vector<2x512xf32>, vector<1x512xf32> -> vector<1x512xf32>
    %c1_132 = arith.constant 1 : index
    %c0_133 = arith.constant 0 : index
    %c0_134 = arith.constant 0 : index
    %260 = vector.load %arg8[%c1_132, %c0_133, %c0_134] : memref<9x1x2xf32, #tpu.memory_space<vmem>>, vector<1x1x2xf32>
    %261 = vector.shape_cast %260 : vector<1x1x2xf32> to vector<1x2xf32>
    %c16_i32_135 = arith.constant 16 : i32
    %262 = tpu.dynamic_rotate %251 by %c16_i32_135 dim 1 : vector<2x512xf32>, i32 -> vector<2x512xf32>
    %cst_136 = arith.constant 0.000000e+00 : f32
    %263 = vector.shape_cast %34 : vector<1x512xi1> to vector<1x512xi1>
    %264 = vector.broadcast %263 : vector<1x512xi1> to vector<2x512xi1>
    %265 = vector.broadcast %cst_136 : f32 to vector<2x512xf32>
    %266 = arith.select %264, %262, %265 : vector<2x512xi1>, vector<2x512xf32>
    %cst_137 = arith.constant dense<0.000000e+00> : vector<1x512xf32>
    %267 = tpu.matmul %261, %266, %cst_137 {dimension_numbers = #tpu.dot_dimension_numbers<[1], [0], [0], [1], [0, 0, 1, 1], [], []>} : vector<1x2xf32>, vector<2x512xf32>, vector<1x512xf32> -> vector<1x512xf32>
    %268 = arith.addf %259, %267 : vector<1x512xf32>
    %c2_138 = arith.constant 2 : index
    %c0_139 = arith.constant 0 : index
    %c0_140 = arith.constant 0 : index
    %269 = vector.load %arg8[%c2_138, %c0_139, %c0_140] : memref<9x1x2xf32, #tpu.memory_space<vmem>>, vector<1x1x2xf32>
    %270 = vector.shape_cast %269 : vector<1x1x2xf32> to vector<1x2xf32>
    %c15_i32_141 = arith.constant 15 : i32
    %271 = tpu.dynamic_rotate %251 by %c15_i32_141 dim 1 : vector<2x512xf32>, i32 -> vector<2x512xf32>
    %cst_142 = arith.constant 0.000000e+00 : f32
    %272 = vector.shape_cast %42 : vector<1x512xi1> to vector<1x512xi1>
    %273 = vector.broadcast %272 : vector<1x512xi1> to vector<2x512xi1>
    %274 = vector.broadcast %cst_142 : f32 to vector<2x512xf32>
    %275 = arith.select %273, %271, %274 : vector<2x512xi1>, vector<2x512xf32>
    %cst_143 = arith.constant dense<0.000000e+00> : vector<1x512xf32>
    %276 = tpu.matmul %270, %275, %cst_143 {dimension_numbers = #tpu.dot_dimension_numbers<[1], [0], [0], [1], [0, 0, 1, 1], [], []>} : vector<1x2xf32>, vector<2x512xf32>, vector<1x512xf32> -> vector<1x512xf32>
    %277 = arith.addf %268, %276 : vector<1x512xf32>
    %c3_144 = arith.constant 3 : index
    %c0_145 = arith.constant 0 : index
    %c0_146 = arith.constant 0 : index
    %278 = vector.load %arg8[%c3_144, %c0_145, %c0_146] : memref<9x1x2xf32, #tpu.memory_space<vmem>>, vector<1x1x2xf32>
    %279 = vector.shape_cast %278 : vector<1x1x2xf32> to vector<1x2xf32>
    %c1_i32_147 = arith.constant 1 : i32
    %280 = tpu.dynamic_rotate %251 by %c1_i32_147 dim 1 : vector<2x512xf32>, i32 -> vector<2x512xf32>
    %cst_148 = arith.constant 0.000000e+00 : f32
    %281 = vector.shape_cast %38 : vector<1x512xi1> to vector<1x512xi1>
    %282 = vector.broadcast %281 : vector<1x512xi1> to vector<2x512xi1>
    %283 = vector.broadcast %cst_148 : f32 to vector<2x512xf32>
    %284 = arith.select %282, %280, %283 : vector<2x512xi1>, vector<2x512xf32>
    %cst_149 = arith.constant dense<0.000000e+00> : vector<1x512xf32>
    %285 = tpu.matmul %279, %284, %cst_149 {dimension_numbers = #tpu.dot_dimension_numbers<[1], [0], [0], [1], [0, 0, 1, 1], [], []>} : vector<1x2xf32>, vector<2x512xf32>, vector<1x512xf32> -> vector<1x512xf32>
    %286 = arith.addf %277, %285 : vector<1x512xf32>
    %c4_150 = arith.constant 4 : index
    %c0_151 = arith.constant 0 : index
    %c0_152 = arith.constant 0 : index
    %287 = vector.load %arg8[%c4_150, %c0_151, %c0_152] : memref<9x1x2xf32, #tpu.memory_space<vmem>>, vector<1x1x2xf32>
    %288 = vector.shape_cast %287 : vector<1x1x2xf32> to vector<1x2xf32>
    %cst_153 = arith.constant dense<0.000000e+00> : vector<1x512xf32>
    %289 = tpu.matmul %288, %251, %cst_153 {dimension_numbers = #tpu.dot_dimension_numbers<[1], [0], [0], [1], [0, 0, 1, 1], [], []>} : vector<1x2xf32>, vector<2x512xf32>, vector<1x512xf32> -> vector<1x512xf32>
    %290 = arith.addf %286, %289 : vector<1x512xf32>
    %c5_154 = arith.constant 5 : index
    %c0_155 = arith.constant 0 : index
    %c0_156 = arith.constant 0 : index
    %291 = vector.load %arg8[%c5_154, %c0_155, %c0_156] : memref<9x1x2xf32, #tpu.memory_space<vmem>>, vector<1x1x2xf32>
    %292 = vector.shape_cast %291 : vector<1x1x2xf32> to vector<1x2xf32>
    %c511_i32_157 = arith.constant 511 : i32
    %293 = tpu.dynamic_rotate %251 by %c511_i32_157 dim 1 : vector<2x512xf32>, i32 -> vector<2x512xf32>
    %cst_158 = arith.constant 0.000000e+00 : f32
    %294 = vector.shape_cast %40 : vector<1x512xi1> to vector<1x512xi1>
    %295 = vector.broadcast %294 : vector<1x512xi1> to vector<2x512xi1>
    %296 = vector.broadcast %cst_158 : f32 to vector<2x512xf32>
    %297 = arith.select %295, %293, %296 : vector<2x512xi1>, vector<2x512xf32>
    %cst_159 = arith.constant dense<0.000000e+00> : vector<1x512xf32>
    %298 = tpu.matmul %292, %297, %cst_159 {dimension_numbers = #tpu.dot_dimension_numbers<[1], [0], [0], [1], [0, 0, 1, 1], [], []>} : vector<1x2xf32>, vector<2x512xf32>, vector<1x512xf32> -> vector<1x512xf32>
    %299 = arith.addf %290, %298 : vector<1x512xf32>
    %c6_160 = arith.constant 6 : index
    %c0_161 = arith.constant 0 : index
    %c0_162 = arith.constant 0 : index
    %300 = vector.load %arg8[%c6_160, %c0_161, %c0_162] : memref<9x1x2xf32, #tpu.memory_space<vmem>>, vector<1x1x2xf32>
    %301 = vector.shape_cast %300 : vector<1x1x2xf32> to vector<1x2xf32>
    %c497_i32_163 = arith.constant 497 : i32
    %302 = tpu.dynamic_rotate %251 by %c497_i32_163 dim 1 : vector<2x512xf32>, i32 -> vector<2x512xf32>
    %cst_164 = arith.constant 0.000000e+00 : f32
    %303 = vector.shape_cast %43 : vector<1x512xi1> to vector<1x512xi1>
    %304 = vector.broadcast %303 : vector<1x512xi1> to vector<2x512xi1>
    %305 = vector.broadcast %cst_164 : f32 to vector<2x512xf32>
    %306 = arith.select %304, %302, %305 : vector<2x512xi1>, vector<2x512xf32>
    %cst_165 = arith.constant dense<0.000000e+00> : vector<1x512xf32>
    %307 = tpu.matmul %301, %306, %cst_165 {dimension_numbers = #tpu.dot_dimension_numbers<[1], [0], [0], [1], [0, 0, 1, 1], [], []>} : vector<1x2xf32>, vector<2x512xf32>, vector<1x512xf32> -> vector<1x512xf32>
    %308 = arith.addf %299, %307 : vector<1x512xf32>
    %c7_166 = arith.constant 7 : index
    %c0_167 = arith.constant 0 : index
    %c0_168 = arith.constant 0 : index
    %309 = vector.load %arg8[%c7_166, %c0_167, %c0_168] : memref<9x1x2xf32, #tpu.memory_space<vmem>>, vector<1x1x2xf32>
    %310 = vector.shape_cast %309 : vector<1x1x2xf32> to vector<1x2xf32>
    %c496_i32_169 = arith.constant 496 : i32
    %311 = tpu.dynamic_rotate %251 by %c496_i32_169 dim 1 : vector<2x512xf32>, i32 -> vector<2x512xf32>
    %cst_170 = arith.constant 0.000000e+00 : f32
    %312 = vector.shape_cast %36 : vector<1x512xi1> to vector<1x512xi1>
    %313 = vector.broadcast %312 : vector<1x512xi1> to vector<2x512xi1>
    %314 = vector.broadcast %cst_170 : f32 to vector<2x512xf32>
    %315 = arith.select %313, %311, %314 : vector<2x512xi1>, vector<2x512xf32>
    %cst_171 = arith.constant dense<0.000000e+00> : vector<1x512xf32>
    %316 = tpu.matmul %310, %315, %cst_171 {dimension_numbers = #tpu.dot_dimension_numbers<[1], [0], [0], [1], [0, 0, 1, 1], [], []>} : vector<1x2xf32>, vector<2x512xf32>, vector<1x512xf32> -> vector<1x512xf32>
    %317 = arith.addf %308, %316 : vector<1x512xf32>
    %c8_172 = arith.constant 8 : index
    %c0_173 = arith.constant 0 : index
    %c0_174 = arith.constant 0 : index
    %318 = vector.load %arg8[%c8_172, %c0_173, %c0_174] : memref<9x1x2xf32, #tpu.memory_space<vmem>>, vector<1x1x2xf32>
    %319 = vector.shape_cast %318 : vector<1x1x2xf32> to vector<1x2xf32>
    %c495_i32_175 = arith.constant 495 : i32
    %320 = tpu.dynamic_rotate %251 by %c495_i32_175 dim 1 : vector<2x512xf32>, i32 -> vector<2x512xf32>
    %cst_176 = arith.constant 0.000000e+00 : f32
    %321 = vector.shape_cast %44 : vector<1x512xi1> to vector<1x512xi1>
    %322 = vector.broadcast %321 : vector<1x512xi1> to vector<2x512xi1>
    %323 = vector.broadcast %cst_176 : f32 to vector<2x512xf32>
    %324 = arith.select %322, %320, %323 : vector<2x512xi1>, vector<2x512xf32>
    %cst_177 = arith.constant dense<0.000000e+00> : vector<1x512xf32>
    %325 = tpu.matmul %319, %324, %cst_177 {dimension_numbers = #tpu.dot_dimension_numbers<[1], [0], [0], [1], [0, 0, 1, 1], [], []>} : vector<1x2xf32>, vector<2x512xf32>, vector<1x512xf32> -> vector<1x512xf32>
    %326 = arith.addf %317, %325 : vector<1x512xf32>
    %327 = arith.negf %326 : vector<1x512xf32>
    %328 = math.exp %327 : vector<1x512xf32>
    %cst_178 = arith.constant 1.000000e+00 : f32
    %329 = vector.broadcast %cst_178 : f32 to vector<1x512xf32>
    %330 = arith.addf %329, %328 : vector<1x512xf32>
    %331 = arith.divf %329, %330 : vector<1x512xf32>
    %332 = vector.broadcast %331 : vector<1x512xf32> to vector<32x512xf32>
    %333 = arith.mulf %244, %332 : vector<32x512xf32>
    %c0_179 = arith.constant 0 : index
    %c0_180 = arith.constant 0 : index
    %334 = vector.load %arg10[%c0_179, %c0_180] : memref<32x512xf32, #tpu.memory_space<vmem>>, vector<32x512xf32>
    %cst_181 = arith.constant 2.000000e+00 : f32
    %335 = vector.broadcast %cst_181 : f32 to vector<32x512xf32>
    %336 = arith.mulf %335, %334 : vector<32x512xf32>
    %cst_182 = arith.constant 1.000000e+00 : f32
    %337 = vector.broadcast %cst_182 : f32 to vector<32x512xf32>
    %338 = arith.mulf %337, %333 : vector<32x512xf32>
    %339 = arith.addf %336, %338 : vector<32x512xf32>
    %c0_183 = arith.constant 0 : index
    %c0_184 = arith.constant 0 : index
    %340 = vector.load %arg9[%c0_183, %c0_184] : memref<32x512xf32, #tpu.memory_space<vmem>>, vector<32x512xf32>
    tpu.vector_store %arg9[%c0_183, %c0_184], %339 {strides = array<i32>} : memref<32x512xf32, #tpu.memory_space<vmem>>, vector<32x512xf32>,
    return
  }
  func.func @transform_0(%arg0: i32) -> (i32, i32) {
    %c0_i32 = arith.constant 0 : i32
    %c0_i32_0 = arith.constant 0 : i32
    return %c0_i32, %arg0 : i32, i32
  }
  func.func @transform_1(%arg0: i32) -> (i32, i32, i32) {
    %c0_i32 = arith.constant 0 : i32
    %c0_i32_0 = arith.constant 0 : i32
    %c0_i32_1 = arith.constant 0 : i32
    %c0_i32_2 = arith.constant 0 : i32
    return %c0_i32, %c0_i32_0, %c0_i32_1 : i32, i32, i32
  }
  func.func @transform_2(%arg0: i32) -> (i32, i32) {
    %c0_i32 = arith.constant 0 : i32
    %c0_i32_0 = arith.constant 0 : i32
    %c0_i32_1 = arith.constant 0 : i32
    return %c0_i32, %c0_i32_0 : i32, i32
  }
  func.func @transform_3(%arg0: i32) -> (i32, i32, i32) {
    %c0_i32 = arith.constant 0 : i32
    %c0_i32_0 = arith.constant 0 : i32
    %c0_i32_1 = arith.constant 0 : i32
    %c0_i32_2 = arith.constant 0 : i32
    return %c0_i32, %c0_i32_0, %c0_i32_1 : i32, i32, i32
  }
  func.func @transform_4(%arg0: i32) -> (i32, i32) {
    %c0_i32 = arith.constant 0 : i32
    %c0_i32_0 = arith.constant 0 : i32
    %c0_i32_1 = arith.constant 0 : i32
    return %c0_i32, %c0_i32_0 : i32, i32
  }
  func.func @transform_5(%arg0: i32) -> (i32, i32) {
    %c0_i32 = arith.constant 0 : i32
    %c0_i32_0 = arith.constant 0 : i32
    %c0_i32_1 = arith.constant 0 : i32
    return %c0_i32, %c0_i32_0 : i32, i32
  }
  func.func @transform_6(%arg0: i32) -> (i32, i32) {
    %c0_i32 = arith.constant 0 : i32
    %c0_i32_0 = arith.constant 0 : i32
    %c0_i32_1 = arith.constant 0 : i32
    return %c0_i32, %c0_i32_0 : i32, i32
  }
  func.func @transform_7(%arg0: i32) -> (i32, i32, i32) {
    %c0_i32 = arith.constant 0 : i32
    %c0_i32_0 = arith.constant 0 : i32
    %c0_i32_1 = arith.constant 0 : i32
    %c0_i32_2 = arith.constant 0 : i32
    return %c0_i32, %c0_i32_0, %c0_i32_1 : i32, i32, i32
  }
  func.func @transform_8(%arg0: i32) -> (i32, i32) {
    %c0_i32 = arith.constant 0 : i32
    %c0_i32_0 = arith.constant 0 : i32
    return %c0_i32, %arg0 : i32, i32
  }
}

</mosaic_0001>

<llo_original>
// kernel: tpu_custom_call.1
$region0: #{tpu_custom_call.1}
  #allocation0 [shape = 'u32[]', space=smem, size = 0x4, offset = 0x4, fixed_abs, tag = 'smem constant byte address 0x4 - core index']
  #allocation1 [shape = 'u32[144,128]{1,0:T(1,128)}', space=vmem, size = 0x12000, scoped, tag = 'internal scratch']
  #allocation2 [shape = 'f32[32,512]{1,0:T(8,128)}', space=vmem, size = 0x10000, scoped, tag = 'scratch operand']
  %s0 = inlined_call_operand.vmem [shape: f32[4,512], index: 0, kind: input, shape index: {}]
  %s1 = inlined_call_operand.vmem [shape: f32[9,32,4], index: 1, kind: input, shape index: {}]
  %s2 = inlined_call_operand.vmem [shape: f32[32,1], index: 2, kind: input, shape index: {}]
  %s3 = inlined_call_operand.vmem [shape: f32[9,32,32], index: 3, kind: input, shape index: {}]
  %s4 = inlined_call_operand.vmem [shape: f32[32,1], index: 4, kind: input, shape index: {}]
  %s5 = inlined_call_operand.vmem [shape: f32[2,32], index: 5, kind: input, shape index: {}]
  %s6 = inlined_call_operand.vmem [shape: f32[32,2], index: 6, kind: input, shape index: {}]
  %s7 = inlined_call_operand.vmem [shape: f32[9,1,2], index: 7, kind: input, shape index: {}]
  %s8 = inlined_call_operand.hbm [shape: f32[32,512], index: 8, kind: output, shape index: {}]
  %s9 = sld [smem:[#allocation0]]
  $region42: #{tpu_custom_call.1} parent=0
    _
  %s11 = ssub.s32 1, %s9
  %s12 = scalar_select 0, %s11, %s9
  $region1: #{tpu_custom_call.1} parent=0
    #allocation3 [shape = 'u8[65536]{0}', space=vmem, size = 0x10000, scoped, tag = 'output window, operand 0, single buffered']
    #allocation4 [shape = 's32[1]{0}', space=sflag, size = 0x4, scoped, tag = 'scoped memory for tpu_custom_call.1']
    %13 = vsyncpa [#allocation4], 0
    // Predicated region
    $region2: #{tpu_custom_call.1} parent=1 // pred_check
      _
    $region3: #{tpu_custom_call.1} parent=1 // pred_check_branch
      %15 = sbr.rel (0) target = $region5
    $region4: #{tpu_custom_call.1} parent=1 // pred_region
      _
    $region5: #{tpu_custom_call.1} parent=1 // pred_fallthru
      _
    // Predicated region
    $region6: #{tpu_custom_call.1} parent=1 // pred_check
      _
    $region7: #{tpu_custom_call.1} parent=1 // pred_check_branch
      %17 = sbr.rel (0) target = $region9
    $region8: #{tpu_custom_call.1} parent=1 // pred_region
      _
    $region9: #{tpu_custom_call.1} parent=1 // pred_fallthru
      _
    // Predicated region
    $region10: #{tpu_custom_call.1} parent=1 // pred_check
      _
    $region11: #{tpu_custom_call.1} parent=1 // pred_check_branch
      %19 = sbr.rel (0) target = $region13
    $region12: #{tpu_custom_call.1} parent=1 // pred_region
      _
    $region13: #{tpu_custom_call.1} parent=1 // pred_fallthru
      _
    // Predicated region
    $region14: #{tpu_custom_call.1} parent=1 // pred_check
      _
    $region15: #{tpu_custom_call.1} parent=1 // pred_check_branch
      %21 = sbr.rel (0) target = $region17
    $region16: #{tpu_custom_call.1} parent=1 // pred_region
      _
    $region17: #{tpu_custom_call.1} parent=1 // pred_fallthru
      _
    // Predicated region
    $region18: #{tpu_custom_call.1} parent=1 // pred_check
      _
    $region19: #{tpu_custom_call.1} parent=1 // pred_check_branch
      %23 = sbr.rel (0) target = $region21
    $region20: #{tpu_custom_call.1} parent=1 // pred_region
      _
    $region21: #{tpu_custom_call.1} parent=1 // pred_fallthru
      _
    // Predicated region
    $region22: #{tpu_custom_call.1} parent=1 // pred_check
      _
    $region23: #{tpu_custom_call.1} parent=1 // pred_check_branch
      %25 = sbr.rel (0) target = $region25
    $region24: #{tpu_custom_call.1} parent=1 // pred_region
      _
    $region25: #{tpu_custom_call.1} parent=1 // pred_fallthru
      _
    // Predicated region
    $region26: #{tpu_custom_call.1} parent=1 // pred_check
      _
    $region27: #{tpu_custom_call.1} parent=1 // pred_check_branch
      %27 = sbr.rel (0) target = $region29
    $region28: #{tpu_custom_call.1} parent=1 // pred_region
      _
    $region29: #{tpu_custom_call.1} parent=1 // pred_fallthru
      _
    // Predicated region
    $region30: #{tpu_custom_call.1} parent=1 // pred_check
      _
    $region31: #{tpu_custom_call.1} parent=1 // pred_check_branch
      %29 = sbr.rel (0) target = $region33
    $region32: #{tpu_custom_call.1} parent=1 // pred_region
      _
    $region33: #{tpu_custom_call.1} parent=1 // pred_fallthru
      _
    %v30 = vlaneseq
    %v31 = vand.u32 %v30, 127
    %v32 = vadd.s32 %v31, 128
    %v33 = vadd.s32 %v31, 256
    %v34 = vadd.s32 %v31, 384
    %vm35 = vcmp.lt.s32.totalorder %v31, 0
    %v36 = vsub.s32 0, %v31
    %v37 = vsel %vm35, %v36, %v31
    %v38 = vshrl.u32 %v37, 8
    %v39 = vand.u32 %v37, 255
    %v40 = vsub.s32 0, %v39
    %v41 = vsel %vm35, %v40, %v39
    %vm42 = vcmp.lt.s32.totalorder %v32, 0
    %v43 = vsub.s32 0, %v32
    %v44 = vsel %vm42, %v43, %v32
    %v45 = vshrl.u32 %v44, 8
    %v46 = vand.u32 %v44, 255
    %v47 = vsub.s32 0, %v46
    %v48 = vsel %vm42, %v47, %v46
    %vm49 = vcmp.lt.s32.totalorder %v33, 0
    %v50 = vsub.s32 0, %v33
    %v51 = vsel %vm49, %v50, %v33
    %v52 = vshrl.u32 %v51, 8
    %v53 = vand.u32 %v51, 255
    %v54 = vsub.s32 0, %v53
    %v55 = vsel %vm49, %v54, %v53
    %vm56 = vcmp.lt.s32.totalorder %v34, 0
    %v57 = vsub.s32 0, %v34
    %v58 = vsel %vm56, %v57, %v34
    %v59 = vshrl.u32 %v58, 8
    %v60 = vand.u32 %v58, 255
    %v61 = vsub.s32 0, %v60
    %v62 = vsel %vm56, %v61, %v60
    %vm63 = vcmp.ne.s32.totalorder %v41, 0
    %vm64 = vcmp.ne.s32.totalorder %v48, 0
    %vm65 = vcmp.ne.s32.totalorder %v55, 0
    %vm66 = vcmp.ne.s32.totalorder %v62, 0
    %vm67 = vcmp.lt.s32.totalorder %v41, 0
    %vm68 = vcmp.lt.s32.totalorder %v48, 0
    %vm69 = vcmp.lt.s32.totalorder %v55, 0
    %vm70 = vcmp.lt.s32.totalorder %v62, 0
    %vm71 = vmand %vm67, %vm63
    %vm72 = vmand %vm68, %vm64
    %vm73 = vmand %vm69, %vm65
    %vm74 = vmand %vm70, %vm66
    %v75 = vadd.s32 %v41, 256
    %v76 = vadd.s32 %v48, 256
    %v77 = vadd.s32 %v55, 256
    %v78 = vadd.s32 %v62, 256
    %v79 = vsel %vm71, %v75, %v41
    %v80 = vsel %vm72, %v76, %v48
    %v81 = vsel %vm73, %v77, %v55
    %v82 = vsel %vm74, %v78, %v62
    %vm83 = vcmp.lt.s32.totalorder %v79, 0
    %v84 = vsub.s32 0, %v79
    %v85 = vsel %vm83, %v84, %v79
    %v86 = vshrl.u32 %v85, 4
    %v87 = vand.u32 %v85, 15
    %v88 = vsub.s32 0, %v87
    %v89 = vsel %vm83, %v88, %v87
    %vm90 = vcmp.lt.s32.totalorder %v80, 0
    %v91 = vsub.s32 0, %v80
    %v92 = vsel %vm90, %v91, %v80
    %v93 = vshrl.u32 %v92, 4
    %v94 = vand.u32 %v92, 15
    %v95 = vsub.s32 0, %v94
    %v96 = vsel %vm90, %v95, %v94
    %vm97 = vcmp.lt.s32.totalorder %v81, 0
    %v98 = vsub.s32 0, %v81
    %v99 = vsel %vm97, %v98, %v81
    %v100 = vshrl.u32 %v99, 4
    %v101 = vand.u32 %v99, 15
    %v102 = vsub.s32 0, %v101
    %v103 = vsel %vm97, %v102, %v101
    %vm104 = vcmp.lt.s32.totalorder %v82, 0
    %v105 = vsub.s32 0, %v82
    %v106 = vsel %vm104, %v105, %v82
    %v107 = vshrl.u32 %v106, 4
    %v108 = vand.u32 %v106, 15
    %v109 = vsub.s32 0, %v108
    %v110 = vsel %vm104, %v109, %v108
    %vm111 = vcmp.ne.s32.totalorder %v89, 0
    %vm112 = vcmp.ne.s32.totalorder %v96, 0
    %vm113 = vcmp.ne.s32.totalorder %v103, 0
    %vm114 = vcmp.ne.s32.totalorder %v110, 0
    %vm115 = vcmp.lt.s32.totalorder %v89, 0
    %vm116 = vcmp.lt.s32.totalorder %v96, 0
    %vm117 = vcmp.lt.s32.totalorder %v103, 0
    %vm118 = vcmp.lt.s32.totalorder %v110, 0
    %vm119 = vmand %vm115, %vm111
    %vm120 = vmand %vm116, %vm112
    %vm121 = vmand %vm117, %vm113
    %vm122 = vmand %vm118, %vm114
    %v123 = vadd.s32 %v89, 16
    %v124 = vadd.s32 %v96, 16
    %v125 = vadd.s32 %v103, 16
    %v126 = vadd.s32 %v110, 16
    %v127 = vsel %vm119, %v123, %v89
    %v128 = vsel %vm120, %v124, %v96
    %v129 = vsel %vm121, %v125, %v103
    %v130 = vsel %vm122, %v126, %v110
    %vm131 = vcmp.ge.s32.totalorder %v79, 16
    %vm132 = vcmp.ge.s32.totalorder %v80, 16
    %vm133 = vcmp.ge.s32.totalorder %v81, 16
    %vm134 = vcmp.ge.s32.totalorder %v82, 16
    %vm135 = vcmp.lt.s32.totalorder %v79, 240
    %vm136 = vcmp.lt.s32.totalorder %v80, 240
    %vm137 = vcmp.lt.s32.totalorder %v81, 240
    %vm138 = vcmp.lt.s32.totalorder %v82, 240
    %vm139 = vcmp.ne.s32.totalorder %v127, 0
    %vm140 = vcmp.ne.s32.totalorder %v128, 0
    %vm141 = vcmp.ne.s32.totalorder %v129, 0
    %vm142 = vcmp.ne.s32.totalorder %v130, 0
    %vm143 = vcmp.ne.s32.totalorder %v127, 15
    %vm144 = vcmp.ne.s32.totalorder %v128, 15
    %vm145 = vcmp.ne.s32.totalorder %v129, 15
    %vm146 = vcmp.ne.s32.totalorder %v130, 15
    %vm147 = vmand %vm131, %vm139
    %vm148 = vmand %vm132, %vm140
    %vm149 = vmand %vm133, %vm141
    %vm150 = vmand %vm134, %vm142
    %vm151 = vmand %vm131, %vm143
    %vm152 = vmand %vm132, %vm144
    %vm153 = vmand %vm133, %vm145
    %vm154 = vmand %vm134, %vm146
    %vm155 = vmand %vm135, %vm139
    %vm156 = vmand %vm136, %vm140
    %vm157 = vmand %vm137, %vm141
    %vm158 = vmand %vm138, %vm142
    %vm159 = vmand %vm135, %vm143
    %vm160 = vmand %vm136, %vm144
    %vm161 = vmand %vm137, %vm145
    %vm162 = vmand %vm138, %vm146
    %v163 = vld [vmem:[%s0] sm:$0xff]
    %v164 = vld [vmem:[%s0 + $0x8] sm:$0xff]
    %v165 = vld [vmem:[%s1] sm:$0xff]
    %v166 = vld [vmem:[%s1 + $0x8] sm:$0xff]
    %v167 = vld [vmem:[%s1 + $0x10] sm:$0xff]
    %v168 = vld [vmem:[%s1 + $0x18] sm:$0xff]
    %v171 = vcombine.high %v163, %v163
    %v172 = vcombine.high %v164, %v164
    %175 = vrot.lane.b32.xlu0 %v163, 17
    %v176 = vpop.permute.xlu0 %175
    %177 = vrot.lane.b32.xlu0 %v171, 17
    %v178 = vpop.permute.xlu0 %177
    %179 = vrot.lane.b32.xlu0 %v164, 17
    %v180 = vpop.permute.xlu0 %179
    %181 = vrot.lane.b32.xlu0 %v172, 17
    %v182 = vpop.permute.xlu0 %181
    %vm183 = vcmp.lt.s32.totalorder %v31, 17
    %v184 = vsel %vm183, %v180, %v182
    %v185 = vsel %vm183, %v178, %v180
    %v186 = vsel %vm183, %v176, %v178
    %v187 = vsel %vm183, %v182, %v176
    %v188 = vsel %vm147, 1, 0
    %v189 = vsel %vm148, 1, 0
    %v190 = vsel %vm149, 1, 0
    %v191 = vsel %vm150, 1, 0
    %vm192 = vcmp.eq.s32.totalorder %v188, 1
    %vm193 = vcmp.eq.s32.totalorder %v189, 1
    %vm194 = vcmp.eq.s32.totalorder %v190, 1
    %vm195 = vcmp.eq.s32.totalorder %v191, 1
    %v196 = vsel %vm192, %v187, 0.0
    %v197 = vsel %vm193, %v186, 0.0
    %v198 = vsel %vm194, %v185, 0.0
    %v199 = vsel %vm195, %v184, 0.0
    %s200 = scalar_lea.vmem %s1, 32
    %v201 = vld [vmem:[%s200] sm:$0xff]
    %v202 = vld [vmem:[%s200 + $0x8] sm:$0xff]
    %v203 = vld [vmem:[%s200 + $0x10] sm:$0xff]
    %v204 = vld [vmem:[%s200 + $0x18] sm:$0xff]
    %205 = vrot.lane.b32.xlu0 %v163, 16
    %v206 = vpop.permute.xlu0 %205
    %207 = vrot.lane.b32.xlu0 %v171, 16
    %v208 = vpop.permute.xlu0 %207
    %209 = vrot.lane.b32.xlu0 %v164, 16
    %v210 = vpop.permute.xlu0 %209
    %211 = vrot.lane.b32.xlu0 %v172, 16
    %v212 = vpop.permute.xlu0 %211
    %vm213 = vcmp.lt.s32.totalorder %v31, 16
    %v214 = vsel %vm213, %v210, %v212
    %v215 = vsel %vm213, %v208, %v210
    %v216 = vsel %vm213, %v206, %v208
    %v217 = vsel %vm213, %v212, %v206
    %v218 = vsel %vm131, 1, 0
    %v219 = vsel %vm132, 1, 0
    %v220 = vsel %vm133, 1, 0
    %v221 = vsel %vm134, 1, 0
    %vm222 = vcmp.eq.s32.totalorder %v218, 1
    %vm223 = vcmp.eq.s32.totalorder %v219, 1
    %vm224 = vcmp.eq.s32.totalorder %v220, 1
    %vm225 = vcmp.eq.s32.totalorder %v221, 1
    %v226 = vsel %vm222, %v217, 0.0
    %v227 = vsel %vm223, %v216, 0.0
    %v228 = vsel %vm224, %v215, 0.0
    %v229 = vsel %vm225, %v214, 0.0
    %vm230 = vcmask 31744
    %v232 = vsel %vm230, %v201, 0
    %v235 = vsel %vm230, %v202, 0
    %v238 = vsel %vm230, %v203, 0
    %v241 = vsel %vm230, %v204, 0
    %vm243 = vcmask 1043456
    %v245 = vsel %vm243, %v226, 0
    %v248 = vsel %vm243, %v227, 0
    %v251 = vsel %vm243, %v228, 0
    %v254 = vsel %vm243, %v229, 0
    %256 = vmatprep.subr.mxu0 %v248
    %257 = vmatpush1.msra.mxu0 %v245
    %258 = vmatprep.subr.mxu0 0.0
    %259 = vmatpush1.msra.mxu0 0.0
    %260 = vmatprep.subr.mxu0 0.0
    %261 = vmatpush1.msra.mxu0 0.0
    %262 = vmatprep.subr.mxu0 0.0
    %263 = vmatpush1.msra.mxu0 0.0
    %264 = vmatprep.subr.mxu0 0.0
    %265 = vmatpush1.msra.mxu0 0.0
    %266 = vmatprep.subr.mxu0 0.0
    %267 = vmatpush1.msra.mxu0 0.0
    %268 = vmatprep.subr.mxu0 0.0
    %269 = vmatpush1.msra.mxu0 0.0
    %270 = vmatprep.subr.mxu0 0.0
    %271 = vmatpush1.msra.mxu0 0.0
    %272 = vmatprep.subr.mxu0 0.0
    %273 = vmatpush1.msra.mxu0 0.0
    %274 = vmatprep.subr.mxu0 0.0
    %275 = vmatpush1.msra.mxu0 0.0
    %276 = vmatprep.subr.mxu0 0.0
    %277 = vmatpush1.msra.mxu0 0.0
    %278 = vmatprep.subr.mxu0 0.0
    %279 = vmatpush1.msra.mxu0 0.0
    %280 = vmatprep.subr.mxu0 0.0
    %281 = vmatpush1.msra.mxu0 0.0
    %282 = vmatprep.subr.mxu0 0.0
    %283 = vmatpush1.msra.mxu0 0.0
    %284 = vmatprep.subr.mxu0 0.0
    %285 = vmatpush1.msra.mxu0 0.0
    %286 = vmatprep.subr.mxu0 0.0
    %287 = vmatpush1.msra.mxu0 0.0
    %288 = vmatprep.subr.mxu0 0.0
    %289 = vmatpush1.msra.mxu0 0.0
    %290 = vmatprep.subr.mxu0 0.0
    %291 = vmatpush1.msra.mxu0 0.0
    %292 = vmatprep.subr.mxu0 0.0
    %293 = vmatpush1.msra.mxu0 0.0
    %294 = vmatprep.subr.mxu0 0.0
    %295 = vmatpush1.msra.mxu0 0.0
    %296 = vmatprep.subr.mxu0 0.0
    %297 = vmatpush1.msra.mxu0 0.0
    %298 = vmatprep.subr.mxu0 0.0
    %299 = vmatpush1.msra.mxu0 0.0
    %300 = vmatprep.subr.mxu0 0.0
    %301 = vmatpush1.msra.mxu0 0.0
    %302 = vmatprep.subr.mxu0 0.0
    %303 = vmatpush1.msra.mxu0 0.0
    %304 = vmatprep.subr.mxu0 0.0
    %305 = vmatpush1.msra.mxu0 0.0
    %306 = vmatprep.subr.mxu0 0.0
    %307 = vmatpush1.msra.mxu0 0.0
    %308 = vmatprep.subr.mxu0 0.0
    %309 = vmatpush1.msra.mxu0 0.0
    %310 = vmatprep.subr.mxu0 0.0
    %311 = vmatpush1.msra.mxu0 0.0
    %312 = vmatprep.subr.mxu0 0.0
    %313 = vmatpush1.msra.mxu0 0.0
    %314 = vmatprep.subr.mxu0 0.0
    %315 = vmatpush1.msra.mxu0 0.0
    %316 = vmatprep.subr.mxu0 0.0
    %317 = vmatpush1.msra.mxu0 0.0
    %318 = vmatprep.subr.mxu0 0.0
    %319 = vmatpush1.msra.mxu0 0.0
    %320 = vmatprep.mubr.f32.mxu0 0.0
    %321 = vmatmul.mubr.f32.gmra.mrb[0].mxu0 %v232
    %v322 = vpop.f32.mrb[0].mxu0
    %v323 = vadd.f32 0.0, %v322
    %v324 = vpop.f32.mrb[0].mxu0
    %v325 = vadd.f32 0.0, %v324
    %326 = vmatprep.mubr.f32.mxu0 0.0
    %327 = vmatmul.mubr.f32.gmra.mrb[0].mxu0 %v235
    %v328 = vpop.f32.mrb[0].mxu0
    %v329 = vadd.f32 0.0, %v328
    %v330 = vpop.f32.mrb[0].mxu0
    %v331 = vadd.f32 0.0, %v330
    %332 = vmatprep.mubr.f32.mxu0 0.0
    %333 = vmatmul.mubr.f32.gmra.mrb[0].mxu0 %v238
    %v334 = vpop.f32.mrb[0].mxu0
    %v335 = vadd.f32 0.0, %v334
    %v336 = vpop.f32.mrb[0].mxu0
    %v337 = vadd.f32 0.0, %v336
    %338 = vmatprep.mubr.f32.mxu0 0.0
    %339 = vmatmul.mubr.f32.gmra.mrb[0].mxu0 %v241
    %v340 = vpop.f32.mrb[0].mxu0
    %v341 = vadd.f32 0.0, %v340
    %v342 = vpop.f32.mrb[0].mxu0
    %v343 = vadd.f32 0.0, %v342
    %344 = vdwg.mxu0
    %345 = vmatprep.subr.mxu0 %v254
    %346 = vmatpush1.msra.mxu0 %v251
    %347 = vmatprep.subr.mxu0 0.0
    %348 = vmatpush1.msra.mxu0 0.0
    %349 = vmatprep.subr.mxu0 0.0
    %350 = vmatpush1.msra.mxu0 0.0
    %351 = vmatprep.subr.mxu0 0.0
    %352 = vmatpush1.msra.mxu0 0.0
    %353 = vmatprep.subr.mxu0 0.0
    %354 = vmatpush1.msra.mxu0 0.0
    %355 = vmatprep.subr.mxu0 0.0
    %356 = vmatpush1.msra.mxu0 0.0
    %357 = vmatprep.subr.mxu0 0.0
    %358 = vmatpush1.msra.mxu0 0.0
    %359 = vmatprep.subr.mxu0 0.0
    %360 = vmatpush1.msra.mxu0 0.0
    %361 = vmatprep.subr.mxu0 0.0
    %362 = vmatpush1.msra.mxu0 0.0
    %363 = vmatprep.subr.mxu0 0.0
    %364 = vmatpush1.msra.mxu0 0.0
    %365 = vmatprep.subr.mxu0 0.0
    %366 = vmatpush1.msra.mxu0 0.0
    %367 = vmatprep.subr.mxu0 0.0
    %368 = vmatpush1.msra.mxu0 0.0
    %369 = vmatprep.subr.mxu0 0.0
    %370 = vmatpush1.msra.mxu0 0.0
    %371 = vmatprep.subr.mxu0 0.0
    %372 = vmatpush1.msra.mxu0 0.0
    %373 = vmatprep.subr.mxu0 0.0
    %374 = vmatpush1.msra.mxu0 0.0
    %375 = vmatprep.subr.mxu0 0.0
    %376 = vmatpush1.msra.mxu0 0.0
    %377 = vmatprep.subr.mxu0 0.0
    %378 = vmatpush1.msra.mxu0 0.0
    %379 = vmatprep.subr.mxu0 0.0
    %380 = vmatpush1.msra.mxu0 0.0
    %381 = vmatprep.subr.mxu0 0.0
    %382 = vmatpush1.msra.mxu0 0.0
    %383 = vmatprep.subr.mxu0 0.0
    %384 = vmatpush1.msra.mxu0 0.0
    %385 = vmatprep.subr.mxu0 0.0
    %386 = vmatpush1.msra.mxu0 0.0
    %387 = vmatprep.subr.mxu0 0.0
    %388 = vmatpush1.msra.mxu0 0.0
    %389 = vmatprep.subr.mxu0 0.0
    %390 = vmatpush1.msra.mxu0 0.0
    %391 = vmatprep.subr.mxu0 0.0
    %392 = vmatpush1.msra.mxu0 0.0
    %393 = vmatprep.subr.mxu0 0.0
    %394 = vmatpush1.msra.mxu0 0.0
    %395 = vmatprep.subr.mxu0 0.0
    %396 = vmatpush1.msra.mxu0 0.0
    %397 = vmatprep.subr.mxu0 0.0
    %398 = vmatpush1.msra.mxu0 0.0
    %399 = vmatprep.subr.mxu0 0.0
    %400 = vmatpush1.msra.mxu0 0.0
    %401 = vmatprep.subr.mxu0 0.0
    %402 = vmatpush1.msra.mxu0 0.0
    %403 = vmatprep.subr.mxu0 0.0
    %404 = vmatpush1.msra.mxu0 0.0
    %405 = vmatprep.subr.mxu0 0.0
    %406 = vmatpush1.msra.mxu0 0.0
    %407 = vmatprep.subr.mxu0 0.0
    %408 = vmatpush1.msra.mxu0 0.0
    %409 = vmatprep.mubr.f32.mxu0 0.0
    %410 = vmatmul.mubr.f32.gmra.mrb[0].mxu0 %v232
    %v411 = vpop.f32.mrb[0].mxu0
    %v412 = vadd.f32 0.0, %v411
    %v413 = vpop.f32.mrb[0].mxu0
    %v414 = vadd.f32 0.0, %v413
    %415 = vmatprep.mubr.f32.mxu0 0.0
    %416 = vmatmul.mubr.f32.gmra.mrb[0].mxu0 %v235
    %v417 = vpop.f32.mrb[0].mxu0
    %v418 = vadd.f32 0.0, %v417
    %v419 = vpop.f32.mrb[0].mxu0
    %v420 = vadd.f32 0.0, %v419
    %421 = vmatprep.mubr.f32.mxu0 0.0
    %422 = vmatmul.mubr.f32.gmra.mrb[0].mxu0 %v238
    %v423 = vpop.f32.mrb[0].mxu0
    %v424 = vadd.f32 0.0, %v423
    %v425 = vpop.f32.mrb[0].mxu0
    %v426 = vadd.f32 0.0, %v425
    %427 = vmatprep.mubr.f32.mxu0 0.0
    %428 = vmatmul.mubr.f32.gmra.mrb[0].mxu0 %v241
    %v429 = vpop.f32.mrb[0].mxu0
    %v430 = vadd.f32 0.0, %v429
    %v431 = vpop.f32.mrb[0].mxu0
    %v432 = vadd.f32 0.0, %v431
    %433 = vdwg.mxu0
    %v435 = vsel %vm230, %v165, 0
    %v438 = vsel %vm230, %v166, 0
    %v441 = vsel %vm230, %v167, 0
    %v444 = vsel %vm230, %v168, 0
    %v447 = vsel %vm243, %v196, 0
    %v450 = vsel %vm243, %v197, 0
    %v453 = vsel %vm243, %v198, 0
    %v456 = vsel %vm243, %v199, 0
    %458 = vmatprep.subr.mxu0 %v450
    %459 = vmatpush1.msra.mxu0 %v447
    %460 = vmatprep.subr.mxu0 0.0
    %461 = vmatpush1.msra.mxu0 0.0
    %462 = vmatprep.subr.mxu0 0.0
    %463 = vmatpush1.msra.mxu0 0.0
    %464 = vmatprep.subr.mxu0 0.0
    %465 = vmatpush1.msra.mxu0 0.0
    %466 = vmatprep.subr.mxu0 0.0
    %467 = vmatpush1.msra.mxu0 0.0
    %468 = vmatprep.subr.mxu0 0.0
    %469 = vmatpush1.msra.mxu0 0.0
    %470 = vmatprep.subr.mxu0 0.0
    %471 = vmatpush1.msra.mxu0 0.0
    %472 = vmatprep.subr.mxu0 0.0
    %473 = vmatpush1.msra.mxu0 0.0
    %474 = vmatprep.subr.mxu0 0.0
    %475 = vmatpush1.msra.mxu0 0.0
    %476 = vmatprep.subr.mxu0 0.0
    %477 = vmatpush1.msra.mxu0 0.0
    %478 = vmatprep.subr.mxu0 0.0
    %479 = vmatpush1.msra.mxu0 0.0
    %480 = vmatprep.subr.mxu0 0.0
    %481 = vmatpush1.msra.mxu0 0.0
    %482 = vmatprep.subr.mxu0 0.0
    %483 = vmatpush1.msra.mxu0 0.0
    %484 = vmatprep.subr.mxu0 0.0
    %485 = vmatpush1.msra.mxu0 0.0
    %486 = vmatprep.subr.mxu0 0.0
    %487 = vmatpush1.msra.mxu0 0.0
    %488 = vmatprep.subr.mxu0 0.0
    %489 = vmatpush1.msra.mxu0 0.0
    %490 = vmatprep.subr.mxu0 0.0
    %491 = vmatpush1.msra.mxu0 0.0
    %492 = vmatprep.subr.mxu0 0.0
    %493 = vmatpush1.msra.mxu0 0.0
    %494 = vmatprep.subr.mxu0 0.0
    %495 = vmatpush1.msra.mxu0 0.0
    %496 = vmatprep.subr.mxu0 0.0
    %497 = vmatpush1.msra.mxu0 0.0
    %498 = vmatprep.subr.mxu0 0.0
    %499 = vmatpush1.msra.mxu0 0.0
    %500 = vmatprep.subr.mxu0 0.0
    %501 = vmatpush1.msra.mxu0 0.0
    %502 = vmatprep.subr.mxu0 0.0
    %503 = vmatpush1.msra.mxu0 0.0
    %504 = vmatprep.subr.mxu0 0.0
    %505 = vmatpush1.msra.mxu0 0.0
    %506 = vmatprep.subr.mxu0 0.0
    %507 = vmatpush1.msra.mxu0 0.0
    %508 = vmatprep.subr.mxu0 0.0
    %509 = vmatpush1.msra.mxu0 0.0
    %510 = vmatprep.subr.mxu0 0.0
    %511 = vmatpush1.msra.mxu0 0.0
    %512 = vmatprep.subr.mxu0 0.0
    %513 = vmatpush1.msra.mxu0 0.0
    %514 = vmatprep.subr.mxu0 0.0
    %515 = vmatpush1.msra.mxu0 0.0
    %516 = vmatprep.subr.mxu0 0.0
    %517 = vmatpush1.msra.mxu0 0.0
    %518 = vmatprep.subr.mxu0 0.0
    %519 = vmatpush1.msra.mxu0 0.0
    %520 = vmatprep.subr.mxu0 0.0
    %521 = vmatpush1.msra.mxu0 0.0
    %522 = vmatprep.mubr.f32.mxu0 0.0
    %523 = vmatmul.mubr.f32.gmra.mrb[0].mxu0 %v435
    %v524 = vpop.f32.mrb[0].mxu0
    %v525 = vadd.f32 %v323, %v524
    %v526 = vpop.f32.mrb[0].mxu0
    %v527 = vadd.f32 %v325, %v526
    %528 = vmatprep.mubr.f32.mxu0 0.0
    %529 = vmatmul.mubr.f32.gmra.mrb[0].mxu0 %v438
    %v530 = vpop.f32.mrb[0].mxu0
    %v531 = vadd.f32 %v329, %v530
    %v532 = vpop.f32.mrb[0].mxu0
    %v533 = vadd.f32 %v331, %v532
    %534 = vmatprep.mubr.f32.mxu0 0.0
    %535 = vmatmul.mubr.f32.gmra.mrb[0].mxu0 %v441
    %v536 = vpop.f32.mrb[0].mxu0
    %v537 = vadd.f32 %v335, %v536
    %v538 = vpop.f32.mrb[0].mxu0
    %v539 = vadd.f32 %v337, %v538
    %540 = vmatprep.mubr.f32.mxu0 0.0
    %541 = vmatmul.mubr.f32.gmra.mrb[0].mxu0 %v444
    %v542 = vpop.f32.mrb[0].mxu0
    %v543 = vadd.f32 %v341, %v542
    %v544 = vpop.f32.mrb[0].mxu0
    %v545 = vadd.f32 %v343, %v544
    %546 = vdwg.mxu0
    %547 = vmatprep.subr.mxu0 %v456
    %548 = vmatpush1.msra.mxu0 %v453
    %549 = vmatprep.subr.mxu0 0.0
    %550 = vmatpush1.msra.mxu0 0.0
    %551 = vmatprep.subr.mxu0 0.0
    %552 = vmatpush1.msra.mxu0 0.0
    %553 = vmatprep.subr.mxu0 0.0
    %554 = vmatpush1.msra.mxu0 0.0
    %555 = vmatprep.subr.mxu0 0.0
    %556 = vmatpush1.msra.mxu0 0.0
    %557 = vmatprep.subr.mxu0 0.0
    %558 = vmatpush1.msra.mxu0 0.0
    %559 = vmatprep.subr.mxu0 0.0
    %560 = vmatpush1.msra.mxu0 0.0
    %561 = vmatprep.subr.mxu0 0.0
    %562 = vmatpush1.msra.mxu0 0.0
    %563 = vmatprep.subr.mxu0 0.0
    %564 = vmatpush1.msra.mxu0 0.0
    %565 = vmatprep.subr.mxu0 0.0
    %566 = vmatpush1.msra.mxu0 0.0
    %567 = vmatprep.subr.mxu0 0.0
    %568 = vmatpush1.msra.mxu0 0.0
    %569 = vmatprep.subr.mxu0 0.0
    %570 = vmatpush1.msra.mxu0 0.0
    %571 = vmatprep.subr.mxu0 0.0
    %572 = vmatpush1.msra.mxu0 0.0
    %573 = vmatprep.subr.mxu0 0.0
    %574 = vmatpush1.msra.mxu0 0.0
    %575 = vmatprep.subr.mxu0 0.0
    %576 = vmatpush1.msra.mxu0 0.0
    %577 = vmatprep.subr.mxu0 0.0
    %578 = vmatpush1.msra.mxu0 0.0
    %579 = vmatprep.subr.mxu0 0.0
    %580 = vmatpush1.msra.mxu0 0.0
    %581 = vmatprep.subr.mxu0 0.0
    %582 = vmatpush1.msra.mxu0 0.0
    %583 = vmatprep.subr.mxu0 0.0
    %584 = vmatpush1.msra.mxu0 0.0
    %585 = vmatprep.subr.mxu0 0.0
    %586 = vmatpush1.msra.mxu0 0.0
    %587 = vmatprep.subr.mxu0 0.0
    %588 = vmatpush1.msra.mxu0 0.0
    %589 = vmatprep.subr.mxu0 0.0
    %590 = vmatpush1.msra.mxu0 0.0
    %591 = vmatprep.subr.mxu0 0.0
    %592 = vmatpush1.msra.mxu0 0.0
    %593 = vmatprep.subr.mxu0 0.0
    %594 = vmatpush1.msra.mxu0 0.0
    %595 = vmatprep.subr.mxu0 0.0
    %596 = vmatpush1.msra.mxu0 0.0
    %597 = vmatprep.subr.mxu0 0.0
    %598 = vmatpush1.msra.mxu0 0.0
    %599 = vmatprep.subr.mxu0 0.0
    %600 = vmatpush1.msra.mxu0 0.0
    %601 = vmatprep.subr.mxu0 0.0
    %602 = vmatpush1.msra.mxu0 0.0
    %603 = vmatprep.subr.mxu0 0.0
    %604 = vmatpush1.msra.mxu0 0.0
    %605 = vmatprep.subr.mxu0 0.0
    %606 = vmatpush1.msra.mxu0 0.0
    %607 = vmatprep.subr.mxu0 0.0
    %608 = vmatpush1.msra.mxu0 0.0
    %609 = vmatprep.subr.mxu0 0.0
    %610 = vmatpush1.msra.mxu0 0.0
    %611 = vmatprep.mubr.f32.mxu0 0.0
    %612 = vmatmul.mubr.f32.gmra.mrb[0].mxu0 %v435
    %v613 = vpop.f32.mrb[0].mxu0
    %v614 = vadd.f32 %v412, %v613
    %v615 = vpop.f32.mrb[0].mxu0
    %v616 = vadd.f32 %v414, %v615
    %617 = vmatprep.mubr.f32.mxu0 0.0
    %618 = vmatmul.mubr.f32.gmra.mrb[0].mxu0 %v438
    %v619 = vpop.f32.mrb[0].mxu0
    %v620 = vadd.f32 %v418, %v619
    %v621 = vpop.f32.mrb[0].mxu0
    %v622 = vadd.f32 %v420, %v621
    %623 = vmatprep.mubr.f32.mxu0 0.0
    %624 = vmatmul.mubr.f32.gmra.mrb[0].mxu0 %v441
    %v625 = vpop.f32.mrb[0].mxu0
    %v626 = vadd.f32 %v424, %v625
    %v627 = vpop.f32.mrb[0].mxu0
    %v628 = vadd.f32 %v426, %v627
    %629 = vmatprep.mubr.f32.mxu0 0.0
    %630 = vmatmul.mubr.f32.gmra.mrb[0].mxu0 %v444
    %v631 = vpop.f32.mrb[0].mxu0
    %v632 = vadd.f32 %v430, %v631
    %v633 = vpop.f32.mrb[0].mxu0
    %v634 = vadd.f32 %v432, %v633
    %635 = vdwg.mxu0
    %s636 = scalar_lea.vmem %s1, 64
    %v637 = vld [vmem:[%s636] sm:$0xff]
    %v638 = vld [vmem:[%s636 + $0x8] sm:$0xff]
    %v639 = vld [vmem:[%s636 + $0x10] sm:$0xff]
    %v640 = vld [vmem:[%s636 + $0x18] sm:$0xff]
    %641 = vrot.lane.b32.xlu0 %v163, 15
    %v642 = vpop.permute.xlu0 %641
    %643 = vrot.lane.b32.xlu0 %v171, 15
    %v644 = vpop.permute.xlu0 %643
    %645 = vrot.lane.b32.xlu0 %v164, 15
    %v646 = vpop.permute.xlu0 %645
    %647 = vrot.lane.b32.xlu0 %v172, 15
    %v648 = vpop.permute.xlu0 %647
    %vm649 = vcmp.lt.s32.totalorder %v31, 15
    %v650 = vsel %vm649, %v646, %v648
    %v651 = vsel %vm649, %v644, %v646
    %v652 = vsel %vm649, %v642, %v644
    %v653 = vsel %vm649, %v648, %v642
    %v654 = vsel %vm151, 1, 0
    %v655 = vsel %vm152, 1, 0
    %v656 = vsel %vm153, 1, 0
    %v657 = vsel %vm154, 1, 0
    %vm658 = vcmp.eq.s32.totalorder %v654, 1
    %vm659 = vcmp.eq.s32.totalorder %v655, 1
    %vm660 = vcmp.eq.s32.totalorder %v656, 1
    %vm661 = vcmp.eq.s32.totalorder %v657, 1
    %v662 = vsel %vm658, %v653, 0.0
    %v663 = vsel %vm659, %v652, 0.0
    %v664 = vsel %vm660, %v651, 0.0
    %v665 = vsel %vm661, %v650, 0.0
    %v667 = vsel %vm230, %v637, 0
    %v670 = vsel %vm230, %v638, 0
    %v673 = vsel %vm230, %v639, 0
    %v676 = vsel %vm230, %v640, 0
    %v679 = vsel %vm243, %v662, 0
    %v682 = vsel %vm243, %v663, 0
    %v685 = vsel %vm243, %v664, 0
    %v688 = vsel %vm243, %v665, 0
    %690 = vmatprep.subr.mxu0 %v682
    %691 = vmatpush1.msra.mxu0 %v679
    %692 = vmatprep.subr.mxu0 0.0
    %693 = vmatpush1.msra.mxu0 0.0
    %694 = vmatprep.subr.mxu0 0.0
    %695 = vmatpush1.msra.mxu0 0.0
    %696 = vmatprep.subr.mxu0 0.0
    %697 = vmatpush1.msra.mxu0 0.0
    %698 = vmatprep.subr.mxu0 0.0
    %699 = vmatpush1.msra.mxu0 0.0
    %700 = vmatprep.subr.mxu0 0.0
    %701 = vmatpush1.msra.mxu0 0.0
    %702 = vmatprep.subr.mxu0 0.0
    %703 = vmatpush1.msra.mxu0 0.0
    %704 = vmatprep.subr.mxu0 0.0
    %705 = vmatpush1.msra.mxu0 0.0
    %706 = vmatprep.subr.mxu0 0.0
    %707 = vmatpush1.msra.mxu0 0.0
    %708 = vmatprep.subr.mxu0 0.0
    %709 = vmatpush1.msra.mxu0 0.0
    %710 = vmatprep.subr.mxu0 0.0
    %711 = vmatpush1.msra.mxu0 0.0
    %712 = vmatprep.subr.mxu0 0.0
    %713 = vmatpush1.msra.mxu0 0.0
    %714 = vmatprep.subr.mxu0 0.0
    %715 = vmatpush1.msra.mxu0 0.0
    %716 = vmatprep.subr.mxu0 0.0
    %717 = vmatpush1.msra.mxu0 0.0
    %718 = vmatprep.subr.mxu0 0.0
    %719 = vmatpush1.msra.mxu0 0.0
    %720 = vmatprep.subr.mxu0 0.0
    %721 = vmatpush1.msra.mxu0 0.0
    %722 = vmatprep.subr.mxu0 0.0
    %723 = vmatpush1.msra.mxu0 0.0
    %724 = vmatprep.subr.mxu0 0.0
    %725 = vmatpush1.msra.mxu0 0.0
    %726 = vmatprep.subr.mxu0 0.0
    %727 = vmatpush1.msra.mxu0 0.0
    %728 = vmatprep.subr.mxu0 0.0
    %729 = vmatpush1.msra.mxu0 0.0
    %730 = vmatprep.subr.mxu0 0.0
    %731 = vmatpush1.msra.mxu0 0.0
    %732 = vmatprep.subr.mxu0 0.0
    %733 = vmatpush1.msra.mxu0 0.0
    %734 = vmatprep.subr.mxu0 0.0
    %735 = vmatpush1.msra.mxu0 0.0
    %736 = vmatprep.subr.mxu0 0.0
    %737 = vmatpush1.msra.mxu0 0.0
    %738 = vmatprep.subr.mxu0 0.0
    %739 = vmatpush1.msra.mxu0 0.0
    %740 = vmatprep.subr.mxu0 0.0
    %741 = vmatpush1.msra.mxu0 0.0
    %742 = vmatprep.subr.mxu0 0.0
    %743 = vmatpush1.msra.mxu0 0.0
    %744 = vmatprep.subr.mxu0 0.0
    %745 = vmatpush1.msra.mxu0 0.0
    %746 = vmatprep.subr.mxu0 0.0
    %747 = vmatpush1.msra.mxu0 0.0
    %748 = vmatprep.subr.mxu0 0.0
    %749 = vmatpush1.msra.mxu0 0.0
    %750 = vmatprep.subr.mxu0 0.0
    %751 = vmatpush1.msra.mxu0 0.0
    %752 = vmatprep.subr.mxu0 0.0
    %753 = vmatpush1.msra.mxu0 0.0
    %754 = vmatprep.mubr.f32.mxu0 0.0
    %755 = vmatmul.mubr.f32.gmra.mrb[0].mxu0 %v667
    %v756 = vpop.f32.mrb[0].mxu0
    %v757 = vadd.f32 0.0, %v756
    %v758 = vpop.f32.mrb[0].mxu0
    %v759 = vadd.f32 0.0, %v758
    %760 = vmatprep.mubr.f32.mxu0 0.0
    %761 = vmatmul.mubr.f32.gmra.mrb[0].mxu0 %v670
    %v762 = vpop.f32.mrb[0].mxu0
    %v763 = vadd.f32 0.0, %v762
    %v764 = vpop.f32.mrb[0].mxu0
    %v765 = vadd.f32 0.0, %v764
    %766 = vmatprep.mubr.f32.mxu0 0.0
    %767 = vmatmul.mubr.f32.gmra.mrb[0].mxu0 %v673
    %v768 = vpop.f32.mrb[0].mxu0
    %v769 = vadd.f32 0.0, %v768
    %v770 = vpop.f32.mrb[0].mxu0
    %v771 = vadd.f32 0.0, %v770
    %772 = vmatprep.mubr.f32.mxu0 0.0
    %773 = vmatmul.mubr.f32.gmra.mrb[0].mxu0 %v676
    %v774 = vpop.f32.mrb[0].mxu0
    %v775 = vadd.f32 0.0, %v774
    %v776 = vpop.f32.mrb[0].mxu0
    %v777 = vadd.f32 0.0, %v776
    %778 = vdwg.mxu0
    %779 = vmatprep.subr.mxu0 %v688
    %780 = vmatpush1.msra.mxu0 %v685
    %781 = vmatprep.subr.mxu0 0.0
    %782 = vmatpush1.msra.mxu0 0.0
    %783 = vmatprep.subr.mxu0 0.0
    %784 = vmatpush1.msra.mxu0 0.0
    %785 = vmatprep.subr.mxu0 0.0
    %786 = vmatpush1.msra.mxu0 0.0
    %787 = vmatprep.subr.mxu0 0.0
    %788 = vmatpush1.msra.mxu0 0.0
    %789 = vmatprep.subr.mxu0 0.0
    %790 = vmatpush1.msra.mxu0 0.0
    %791 = vmatprep.subr.mxu0 0.0
    %792 = vmatpush1.msra.mxu0 0.0
    %793 = vmatprep.subr.mxu0 0.0
    %794 = vmatpush1.msra.mxu0 0.0
    %795 = vmatprep.subr.mxu0 0.0
    %796 = vmatpush1.msra.mxu0 0.0
    %797 = vmatprep.subr.mxu0 0.0
    %798 = vmatpush1.msra.mxu0 0.0
    %799 = vmatprep.subr.mxu0 0.0
    %800 = vmatpush1.msra.mxu0 0.0
    %801 = vmatprep.subr.mxu0 0.0
    %802 = vmatpush1.msra.mxu0 0.0
    %803 = vmatprep.subr.mxu0 0.0
    %804 = vmatpush1.msra.mxu0 0.0
    %805 = vmatprep.subr.mxu0 0.0
    %806 = vmatpush1.msra.mxu0 0.0
    %807 = vmatprep.subr.mxu0 0.0
    %808 = vmatpush1.msra.mxu0 0.0
    %809 = vmatprep.subr.mxu0 0.0
    %810 = vmatpush1.msra.mxu0 0.0
    %811 = vmatprep.subr.mxu0 0.0
    %812 = vmatpush1.msra.mxu0 0.0
    %813 = vmatprep.subr.mxu0 0.0
    %814 = vmatpush1.msra.mxu0 0.0
    %815 = vmatprep.subr.mxu0 0.0
    %816 = vmatpush1.msra.mxu0 0.0
    %817 = vmatprep.subr.mxu0 0.0
    %818 = vmatpush1.msra.mxu0 0.0
    %819 = vmatprep.subr.mxu0 0.0
    %820 = vmatpush1.msra.mxu0 0.0
    %821 = vmatprep.subr.mxu0 0.0
    %822 = vmatpush1.msra.mxu0 0.0
    %823 = vmatprep.subr.mxu0 0.0
    %824 = vmatpush1.msra.mxu0 0.0
    %825 = vmatprep.subr.mxu0 0.0
    %826 = vmatpush1.msra.mxu0 0.0
    %827 = vmatprep.subr.mxu0 0.0
    %828 = vmatpush1.msra.mxu0 0.0
    %829 = vmatprep.subr.mxu0 0.0
    %830 = vmatpush1.msra.mxu0 0.0
    %831 = vmatprep.subr.mxu0 0.0
    %832 = vmatpush1.msra.mxu0 0.0
    %833 = vmatprep.subr.mxu0 0.0
    %834 = vmatpush1.msra.mxu0 0.0
    %835 = vmatprep.subr.mxu0 0.0
    %836 = vmatpush1.msra.mxu0 0.0
    %837 = vmatprep.subr.mxu0 0.0
    %838 = vmatpush1.msra.mxu0 0.0
    %839 = vmatprep.subr.mxu0 0.0
    %840 = vmatpush1.msra.mxu0 0.0
    %841 = vmatprep.subr.mxu0 0.0
    %842 = vmatpush1.msra.mxu0 0.0
    %843 = vmatprep.mubr.f32.mxu0 0.0
    %844 = vmatmul.mubr.f32.gmra.mrb[0].mxu0 %v667
    %v845 = vpop.f32.mrb[0].mxu0
    %v846 = vadd.f32 0.0, %v845
    %v847 = vpop.f32.mrb[0].mxu0
    %v848 = vadd.f32 0.0, %v847
    %849 = vmatprep.mubr.f32.mxu0 0.0
    %850 = vmatmul.mubr.f32.gmra.mrb[0].mxu0 %v670
    %v851 = vpop.f32.mrb[0].mxu0
    %v852 = vadd.f32 0.0, %v851
    %v853 = vpop.f32.mrb[0].mxu0
    %v854 = vadd.f32 0.0, %v853
    %855 = vmatprep.mubr.f32.mxu0 0.0
    %856 = vmatmul.mubr.f32.gmra.mrb[0].mxu0 %v673
    %v857 = vpop.f32.mrb[0].mxu0
    %v858 = vadd.f32 0.0, %v857
    %v859 = vpop.f32.mrb[0].mxu0
    %v860 = vadd.f32 0.0, %v859
    %861 = vmatprep.mubr.f32.mxu0 0.0
    %862 = vmatmul.mubr.f32.gmra.mrb[0].mxu0 %v676
    %v863 = vpop.f32.mrb[0].mxu0
    %v864 = vadd.f32 0.0, %v863
    %v865 = vpop.f32.mrb[0].mxu0
    %v866 = vadd.f32 0.0, %v865
    %867 = vdwg.mxu0
    %v868 = vadd.f32 %v525, %v757
    %v869 = vadd.f32 %v527, %v759
    %v870 = vadd.f32 %v614, %v846
    %v871 = vadd.f32 %v616, %v848
    %v872 = vadd.f32 %v531, %v763
    %v873 = vadd.f32 %v533, %v765
    %v874 = vadd.f32 %v620, %v852
    %v875 = vadd.f32 %v622, %v854
    %v876 = vadd.f32 %v537, %v769
    %v877 = vadd.f32 %v539, %v771
    %v878 = vadd.f32 %v626, %v858
    %v879 = vadd.f32 %v628, %v860
    %v880 = vadd.f32 %v543, %v775
    %v881 = vadd.f32 %v545, %v777
    %v882 = vadd.f32 %v632, %v864
    %v883 = vadd.f32 %v634, %v866
    %s884 = scalar_lea.vmem %s1, 96
    %v885 = vld [vmem:[%s884] sm:$0xff]
    %v886 = vld [vmem:[%s884 + $0x8] sm:$0xff]
    %v887 = vld [vmem:[%s884 + $0x10] sm:$0xff]
    %v888 = vld [vmem:[%s884 + $0x18] sm:$0xff]
    %889 = vrot.lane.b32.xlu0 %v163, 1
    %v890 = vpop.permute.xlu0 %889
    %891 = vrot.lane.b32.xlu0 %v171, 1
    %v892 = vpop.permute.xlu0 %891
    %893 = vrot.lane.b32.xlu0 %v164, 1
    %v894 = vpop.permute.xlu0 %893
    %895 = vrot.lane.b32.xlu0 %v172, 1
    %v896 = vpop.permute.xlu0 %895
    %vm897 = vcmp.lt.s32.totalorder %v31, 1
    %v898 = vsel %vm897, %v894, %v896
    %v899 = vsel %vm897, %v892, %v894
    %v900 = vsel %vm897, %v890, %v892
    %v901 = vsel %vm897, %v896, %v890
    %v902 = vsel %vm139, 1, 0
    %v903 = vsel %vm140, 1, 0
    %v904 = vsel %vm141, 1, 0
    %v905 = vsel %vm142, 1, 0
    %vm906 = vcmp.eq.s32.totalorder %v902, 1
    %vm907 = vcmp.eq.s32.totalorder %v903, 1
    %vm908 = vcmp.eq.s32.totalorder %v904, 1
    %vm909 = vcmp.eq.s32.totalorder %v905, 1
    %v910 = vsel %vm906, %v901, 0.0
    %v911 = vsel %vm907, %v900, 0.0
    %v912 = vsel %vm908, %v899, 0.0
    %v913 = vsel %vm909, %v898, 0.0
    %v915 = vsel %vm230, %v885, 0
    %v918 = vsel %vm230, %v886, 0
    %v921 = vsel %vm230, %v887, 0
    %v924 = vsel %vm230, %v888, 0
    %v927 = vsel %vm243, %v910, 0
    %v930 = vsel %vm243, %v911, 0
    %v933 = vsel %vm243, %v912, 0
    %v936 = vsel %vm243, %v913, 0
    %938 = vmatprep.subr.mxu0 %v930
    %939 = vmatpush1.msra.mxu0 %v927
    %940 = vmatprep.subr.mxu0 0.0
    %941 = vmatpush1.msra.mxu0 0.0
    %942 = vmatprep.subr.mxu0 0.0
    %943 = vmatpush1.msra.mxu0 0.0
    %944 = vmatprep.subr.mxu0 0.0
    %945 = vmatpush1.msra.mxu0 0.0
    %946 = vmatprep.subr.mxu0 0.0
    %947 = vmatpush1.msra.mxu0 0.0
    %948 = vmatprep.subr.mxu0 0.0
    %949 = vmatpush1.msra.mxu0 0.0
    %950 = vmatprep.subr.mxu0 0.0
    %951 = vmatpush1.msra.mxu0 0.0
    %952 = vmatprep.subr.mxu0 0.0
    %953 = vmatpush1.msra.mxu0 0.0
    %954 = vmatprep.subr.mxu0 0.0
    %955 = vmatpush1.msra.mxu0 0.0
    %956 = vmatprep.subr.mxu0 0.0
    %957 = vmatpush1.msra.mxu0 0.0
    %958 = vmatprep.subr.mxu0 0.0
    %959 = vmatpush1.msra.mxu0 0.0
    %960 = vmatprep.subr.mxu0 0.0
    %961 = vmatpush1.msra.mxu0 0.0
    %962 = vmatprep.subr.mxu0 0.0
    %963 = vmatpush1.msra.mxu0 0.0
    %964 = vmatprep.subr.mxu0 0.0
    %965 = vmatpush1.msra.mxu0 0.0
    %966 = vmatprep.subr.mxu0 0.0
    %967 = vmatpush1.msra.mxu0 0.0
    %968 = vmatprep.subr.mxu0 0.0
    %969 = vmatpush1.msra.mxu0 0.0
    %970 = vmatprep.subr.mxu0 0.0
    %971 = vmatpush1.msra.mxu0 0.0
    %972 = vmatprep.subr.mxu0 0.0
    %973 = vmatpush1.msra.mxu0 0.0
    %974 = vmatprep.subr.mxu0 0.0
    %975 = vmatpush1.msra.mxu0 0.0
    %976 = vmatprep.subr.mxu0 0.0
    %977 = vmatpush1.msra.mxu0 0.0
    %978 = vmatprep.subr.mxu0 0.0
    %979 = vmatpush1.msra.mxu0 0.0
    %980 = vmatprep.subr.mxu0 0.0
    %981 = vmatpush1.msra.mxu0 0.0
    %982 = vmatprep.subr.mxu0 0.0
    %983 = vmatpush1.msra.mxu0 0.0
    %984 = vmatprep.subr.mxu0 0.0
    %985 = vmatpush1.msra.mxu0 0.0
    %986 = vmatprep.subr.mxu0 0.0
    %987 = vmatpush1.msra.mxu0 0.0
    %988 = vmatprep.subr.mxu0 0.0
    %989 = vmatpush1.msra.mxu0 0.0
    %990 = vmatprep.subr.mxu0 0.0
    %991 = vmatpush1.msra.mxu0 0.0
    %992 = vmatprep.subr.mxu0 0.0
    %993 = vmatpush1.msra.mxu0 0.0
    %994 = vmatprep.subr.mxu0 0.0
    %995 = vmatpush1.msra.mxu0 0.0
    %996 = vmatprep.subr.mxu0 0.0
    %997 = vmatpush1.msra.mxu0 0.0
    %998 = vmatprep.subr.mxu0 0.0
    %999 = vmatpush1.msra.mxu0 0.0
    %1000 = vmatprep.subr.mxu0 0.0
    %1001 = vmatpush1.msra.mxu0 0.0
    %1002 = vmatprep.mubr.f32.mxu0 0.0
    %1003 = vmatmul.mubr.f32.gmra.mrb[0].mxu0 %v915
    %v1004 = vpop.f32.mrb[0].mxu0
    %v1005 = vadd.f32 0.0, %v1004
    %v1006 = vpop.f32.mrb[0].mxu0
    %v1007 = vadd.f32 0.0, %v1006
    %1008 = vmatprep.mubr.f32.mxu0 0.0
    %1009 = vmatmul.mubr.f32.gmra.mrb[0].mxu0 %v918
    %v1010 = vpop.f32.mrb[0].mxu0
    %v1011 = vadd.f32 0.0, %v1010
    %v1012 = vpop.f32.mrb[0].mxu0
    %v1013 = vadd.f32 0.0, %v1012
    %1014 = vmatprep.mubr.f32.mxu0 0.0
    %1015 = vmatmul.mubr.f32.gmra.mrb[0].mxu0 %v921
    %v1016 = vpop.f32.mrb[0].mxu0
    %v1017 = vadd.f32 0.0, %v1016
    %v1018 = vpop.f32.mrb[0].mxu0
    %v1019 = vadd.f32 0.0, %v1018
    %1020 = vmatprep.mubr.f32.mxu0 0.0
    %1021 = vmatmul.mubr.f32.gmra.mrb[0].mxu0 %v924
    %v1022 = vpop.f32.mrb[0].mxu0
    %v1023 = vadd.f32 0.0, %v1022
    %v1024 = vpop.f32.mrb[0].mxu0
    %v1025 = vadd.f32 0.0, %v1024
    %1026 = vdwg.mxu0
    %1027 = vmatprep.subr.mxu0 %v936
    %1028 = vmatpush1.msra.mxu0 %v933
    %1029 = vmatprep.subr.mxu0 0.0
    %1030 = vmatpush1.msra.mxu0 0.0
    %1031 = vmatprep.subr.mxu0 0.0
    %1032 = vmatpush1.msra.mxu0 0.0
    %1033 = vmatprep.subr.mxu0 0.0
    %1034 = vmatpush1.msra.mxu0 0.0
    %1035 = vmatprep.subr.mxu0 0.0
    %1036 = vmatpush1.msra.mxu0 0.0
    %1037 = vmatprep.subr.mxu0 0.0
    %1038 = vmatpush1.msra.mxu0 0.0
    %1039 = vmatprep.subr.mxu0 0.0
    %1040 = vmatpush1.msra.mxu0 0.0
    %1041 = vmatprep.subr.mxu0 0.0
    %1042 = vmatpush1.msra.mxu0 0.0
    %1043 = vmatprep.subr.mxu0 0.0
    %1044 = vmatpush1.msra.mxu0 0.0
    %1045 = vmatprep.subr.mxu0 0.0
    %1046 = vmatpush1.msra.mxu0 0.0
    %1047 = vmatprep.subr.mxu0 0.0
    %1048 = vmatpush1.msra.mxu0 0.0
    %1049 = vmatprep.subr.mxu0 0.0
    %1050 = vmatpush1.msra.mxu0 0.0
    %1051 = vmatprep.subr.mxu0 0.0
    %1052 = vmatpush1.msra.mxu0 0.0
    %1053 = vmatprep.subr.mxu0 0.0
    %1054 = vmatpush1.msra.mxu0 0.0
    %1055 = vmatprep.subr.mxu0 0.0
    %1056 = vmatpush1.msra.mxu0 0.0
    %1057 = vmatprep.subr.mxu0 0.0
    %1058 = vmatpush1.msra.mxu0 0.0
    %1059 = vmatprep.subr.mxu0 0.0
    %1060 = vmatpush1.msra.mxu0 0.0
    %1061 = vmatprep.subr.mxu0 0.0
    %1062 = vmatpush1.msra.mxu0 0.0
    %1063 = vmatprep.subr.mxu0 0.0
    %1064 = vmatpush1.msra.mxu0 0.0
    %1065 = vmatprep.subr.mxu0 0.0
    %1066 = vmatpush1.msra.mxu0 0.0
    %1067 = vmatprep.subr.mxu0 0.0
    %1068 = vmatpush1.msra.mxu0 0.0
    %1069 = vmatprep.subr.mxu0 0.0
    %1070 = vmatpush1.msra.mxu0 0.0
    %1071 = vmatprep.subr.mxu0 0.0
    %1072 = vmatpush1.msra.mxu0 0.0
    %1073 = vmatprep.subr.mxu0 0.0
    %1074 = vmatpush1.msra.mxu0 0.0
    %1075 = vmatprep.subr.mxu0 0.0
    %1076 = vmatpush1.msra.mxu0 0.0
    %1077 = vmatprep.subr.mxu0 0.0
    %1078 = vmatpush1.msra.mxu0 0.0
    %1079 = vmatprep.subr.mxu0 0.0
    %1080 = vmatpush1.msra.mxu0 0.0
    %1081 = vmatprep.subr.mxu0 0.0
    %1082 = vmatpush1.msra.mxu0 0.0
    %1083 = vmatprep.subr.mxu0 0.0
    %1084 = vmatpush1.msra.mxu0 0.0
    %1085 = vmatprep.subr.mxu0 0.0
    %1086 = vmatpush1.msra.mxu0 0.0
    %1087 = vmatprep.subr.mxu0 0.0
    %1088 = vmatpush1.msra.mxu0 0.0
    %1089 = vmatprep.subr.mxu0 0.0
    %1090 = vmatpush1.msra.mxu0 0.0
    %1091 = vmatprep.mubr.f32.mxu0 0.0
    %1092 = vmatmul.mubr.f32.gmra.mrb[0].mxu0 %v915
    %v1093 = vpop.f32.mrb[0].mxu0
    %v1094 = vadd.f32 0.0, %v1093
    %v1095 = vpop.f32.mrb[0].mxu0
    %v1096 = vadd.f32 0.0, %v1095
    %1097 = vmatprep.mubr.f32.mxu0 0.0
    %1098 = vmatmul.mubr.f32.gmra.mrb[0].mxu0 %v918
    %v1099 = vpop.f32.mrb[0].mxu0
    %v1100 = vadd.f32 0.0, %v1099
    %v1101 = vpop.f32.mrb[0].mxu0
    %v1102 = vadd.f32 0.0, %v1101
    %1103 = vmatprep.mubr.f32.mxu0 0.0
    %1104 = vmatmul.mubr.f32.gmra.mrb[0].mxu0 %v921
    %v1105 = vpop.f32.mrb[0].mxu0
    %v1106 = vadd.f32 0.0, %v1105
    %v1107 = vpop.f32.mrb[0].mxu0
    %v1108 = vadd.f32 0.0, %v1107
    %1109 = vmatprep.mubr.f32.mxu0 0.0
    %1110 = vmatmul.mubr.f32.gmra.mrb[0].mxu0 %v924
    %v1111 = vpop.f32.mrb[0].mxu0
    %v1112 = vadd.f32 0.0, %v1111
    %v1113 = vpop.f32.mrb[0].mxu0
    %v1114 = vadd.f32 0.0, %v1113
    %1115 = vdwg.mxu0
    %v1116 = vadd.f32 %v868, %v1005
    %v1117 = vadd.f32 %v869, %v1007
    %v1118 = vadd.f32 %v870, %v1094
    %v1119 = vadd.f32 %v871, %v1096
    %v1120 = vadd.f32 %v872, %v1011
    %v1121 = vadd.f32 %v873, %v1013
    %v1122 = vadd.f32 %v874, %v1100
    %v1123 = vadd.f32 %v875, %v1102
    %v1124 = vadd.f32 %v876, %v1017
    %v1125 = vadd.f32 %v877, %v1019
    %v1126 = vadd.f32 %v878, %v1106
    %v1127 = vadd.f32 %v879, %v1108
    %v1128 = vadd.f32 %v880, %v1023
    %v1129 = vadd.f32 %v881, %v1025
    %v1130 = vadd.f32 %v882, %v1112
    %v1131 = vadd.f32 %v883, %v1114
    %s1132 = scalar_lea.vmem %s1, 128
    %v1133 = vld [vmem:[%s1132] sm:$0xff]
    %v1134 = vld [vmem:[%s1132 + $0x8] sm:$0xff]
    %v1135 = vld [vmem:[%s1132 + $0x10] sm:$0xff]
    %v1136 = vld [vmem:[%s1132 + $0x18] sm:$0xff]
    %v1138 = vsel %vm230, %v1133, 0
    %v1141 = vsel %vm230, %v1134, 0
    %v1144 = vsel %vm230, %v1135, 0
    %v1147 = vsel %vm230, %v1136, 0
    %v1149 = vsel %vm243, %v163, 0
    %v1151 = vsel %vm243, %v171, 0
    %v1153 = vsel %vm243, %v164, 0
    %v1155 = vsel %vm243, %v172, 0
    %1157 = vmatprep.subr.mxu0 %v1151
    %1158 = vmatpush1.msra.mxu0 %v1149
    %1159 = vmatprep.subr.mxu0 0.0
    %1160 = vmatpush1.msra.mxu0 0.0
    %1161 = vmatprep.subr.mxu0 0.0
    %1162 = vmatpush1.msra.mxu0 0.0
    %1163 = vmatprep.subr.mxu0 0.0
    %1164 = vmatpush1.msra.mxu0 0.0
    %1165 = vmatprep.subr.mxu0 0.0
    %1166 = vmatpush1.msra.mxu0 0.0
    %1167 = vmatprep.subr.mxu0 0.0
    %1168 = vmatpush1.msra.mxu0 0.0
    %1169 = vmatprep.subr.mxu0 0.0
    %1170 = vmatpush1.msra.mxu0 0.0
    %1171 = vmatprep.subr.mxu0 0.0
    %1172 = vmatpush1.msra.mxu0 0.0
    %1173 = vmatprep.subr.mxu0 0.0
    %1174 = vmatpush1.msra.mxu0 0.0
    %1175 = vmatprep.subr.mxu0 0.0
    %1176 = vmatpush1.msra.mxu0 0.0
    %1177 = vmatprep.subr.mxu0 0.0
    %1178 = vmatpush1.msra.mxu0 0.0
    %1179 = vmatprep.subr.mxu0 0.0
    %1180 = vmatpush1.msra.mxu0 0.0
    %1181 = vmatprep.subr.mxu0 0.0
    %1182 = vmatpush1.msra.mxu0 0.0
    %1183 = vmatprep.subr.mxu0 0.0
    %1184 = vmatpush1.msra.mxu0 0.0
    %1185 = vmatprep.subr.mxu0 0.0
    %1186 = vmatpush1.msra.mxu0 0.0
    %1187 = vmatprep.subr.mxu0 0.0
    %1188 = vmatpush1.msra.mxu0 0.0
    %1189 = vmatprep.subr.mxu0 0.0
    %1190 = vmatpush1.msra.mxu0 0.0
    %1191 = vmatprep.subr.mxu0 0.0
    %1192 = vmatpush1.msra.mxu0 0.0
    %1193 = vmatprep.subr.mxu0 0.0
    %1194 = vmatpush1.msra.mxu0 0.0
    %1195 = vmatprep.subr.mxu0 0.0
    %1196 = vmatpush1.msra.mxu0 0.0
    %1197 = vmatprep.subr.mxu0 0.0
    %1198 = vmatpush1.msra.mxu0 0.0
    %1199 = vmatprep.subr.mxu0 0.0
    %1200 = vmatpush1.msra.mxu0 0.0
    %1201 = vmatprep.subr.mxu0 0.0
    %1202 = vmatpush1.msra.mxu0 0.0
    %1203 = vmatprep.subr.mxu0 0.0
    %1204 = vmatpush1.msra.mxu0 0.0
    %1205 = vmatprep.subr.mxu0 0.0
    %1206 = vmatpush1.msra.mxu0 0.0
    %1207 = vmatprep.subr.mxu0 0.0
    %1208 = vmatpush1.msra.mxu0 0.0
    %1209 = vmatprep.subr.mxu0 0.0
    %1210 = vmatpush1.msra.mxu0 0.0
    %1211 = vmatprep.subr.mxu0 0.0
    %1212 = vmatpush1.msra.mxu0 0.0
    %1213 = vmatprep.subr.mxu0 0.0
    %1214 = vmatpush1.msra.mxu0 0.0
    %1215 = vmatprep.subr.mxu0 0.0
    %1216 = vmatpush1.msra.mxu0 0.0
    %1217 = vmatprep.subr.mxu0 0.0
    %1218 = vmatpush1.msra.mxu0 0.0
    %1219 = vmatprep.subr.mxu0 0.0
    %1220 = vmatpush1.msra.mxu0 0.0
    %1221 = vmatprep.mubr.f32.mxu0 0.0
    %1222 = vmatmul.mubr.f32.gmra.mrb[0].mxu0 %v1138
    %v1223 = vpop.f32.mrb[0].mxu0
    %v1224 = vadd.f32 0.0, %v1223
    %v1225 = vpop.f32.mrb[0].mxu0
    %v1226 = vadd.f32 0.0, %v1225
    %1227 = vmatprep.mubr.f32.mxu0 0.0
    %1228 = vmatmul.mubr.f32.gmra.mrb[0].mxu0 %v1141
    %v1229 = vpop.f32.mrb[0].mxu0
    %v1230 = vadd.f32 0.0, %v1229
    %v1231 = vpop.f32.mrb[0].mxu0
    %v1232 = vadd.f32 0.0, %v1231
    %1233 = vmatprep.mubr.f32.mxu0 0.0
    %1234 = vmatmul.mubr.f32.gmra.mrb[0].mxu0 %v1144
    %v1235 = vpop.f32.mrb[0].mxu0
    %v1236 = vadd.f32 0.0, %v1235
    %v1237 = vpop.f32.mrb[0].mxu0
    %v1238 = vadd.f32 0.0, %v1237
    %1239 = vmatprep.mubr.f32.mxu0 0.0
    %1240 = vmatmul.mubr.f32.gmra.mrb[0].mxu0 %v1147
    %v1241 = vpop.f32.mrb[0].mxu0
    %v1242 = vadd.f32 0.0, %v1241
    %v1243 = vpop.f32.mrb[0].mxu0
    %v1244 = vadd.f32 0.0, %v1243
    %1245 = vdwg.mxu0
    %1246 = vmatprep.subr.mxu0 %v1155
    %1247 = vmatpush1.msra.mxu0 %v1153
    %1248 = vmatprep.subr.mxu0 0.0
    %1249 = vmatpush1.msra.mxu0 0.0
    %1250 = vmatprep.subr.mxu0 0.0
    %1251 = vmatpush1.msra.mxu0 0.0
    %1252 = vmatprep.subr.mxu0 0.0
    %1253 = vmatpush1.msra.mxu0 0.0
    %1254 = vmatprep.subr.mxu0 0.0
    %1255 = vmatpush1.msra.mxu0 0.0
    %1256 = vmatprep.subr.mxu0 0.0
    %1257 = vmatpush1.msra.mxu0 0.0
    %1258 = vmatprep.subr.mxu0 0.0
    %1259 = vmatpush1.msra.mxu0 0.0
    %1260 = vmatprep.subr.mxu0 0.0
    %1261 = vmatpush1.msra.mxu0 0.0
    %1262 = vmatprep.subr.mxu0 0.0
    %1263 = vmatpush1.msra.mxu0 0.0
    %1264 = vmatprep.subr.mxu0 0.0
    %1265 = vmatpush1.msra.mxu0 0.0
    %1266 = vmatprep.subr.mxu0 0.0
    %1267 = vmatpush1.msra.mxu0 0.0
    %1268 = vmatprep.subr.mxu0 0.0
    %1269 = vmatpush1.msra.mxu0 0.0
    %1270 = vmatprep.subr.mxu0 0.0
    %1271 = vmatpush1.msra.mxu0 0.0
    %1272 = vmatprep.subr.mxu0 0.0
    %1273 = vmatpush1.msra.mxu0 0.0
    %1274 = vmatprep.subr.mxu0 0.0
    %1275 = vmatpush1.msra.mxu0 0.0
    %1276 = vmatprep.subr.mxu0 0.0
    %1277 = vmatpush1.msra.mxu0 0.0
    %1278 = vmatprep.subr.mxu0 0.0
    %1279 = vmatpush1.msra.mxu0 0.0
    %1280 = vmatprep.subr.mxu0 0.0
    %1281 = vmatpush1.msra.mxu0 0.0
    %1282 = vmatprep.subr.mxu0 0.0
    %1283 = vmatpush1.msra.mxu0 0.0
    %1284 = vmatprep.subr.mxu0 0.0
    %1285 = vmatpush1.msra.mxu0 0.0
    %1286 = vmatprep.subr.mxu0 0.0
    %1287 = vmatpush1.msra.mxu0 0.0
    %1288 = vmatprep.subr.mxu0 0.0
    %1289 = vmatpush1.msra.mxu0 0.0
    %1290 = vmatprep.subr.mxu0 0.0
    %1291 = vmatpush1.msra.mxu0 0.0
    %1292 = vmatprep.subr.mxu0 0.0
    %1293 = vmatpush1.msra.mxu0 0.0
    %1294 = vmatprep.subr.mxu0 0.0
    %1295 = vmatpush1.msra.mxu0 0.0
    %1296 = vmatprep.subr.mxu0 0.0
    %1297 = vmatpush1.msra.mxu0 0.0
    %1298 = vmatprep.subr.mxu0 0.0
    %1299 = vmatpush1.msra.mxu0 0.0
    %1300 = vmatprep.subr.mxu0 0.0
    %1301 = vmatpush1.msra.mxu0 0.0
    %1302 = vmatprep.subr.mxu0 0.0
    %1303 = vmatpush1.msra.mxu0 0.0
    %1304 = vmatprep.subr.mxu0 0.0
    %1305 = vmatpush1.msra.mxu0 0.0
    %1306 = vmatprep.subr.mxu0 0.0
    %1307 = vmatpush1.msra.mxu0 0.0
    %1308 = vmatprep.subr.mxu0 0.0
    %1309 = vmatpush1.msra.mxu0 0.0
    %1310 = vmatprep.mubr.f32.mxu0 0.0
    %1311 = vmatmul.mubr.f32.gmra.mrb[0].mxu0 %v1138
    %v1312 = vpop.f32.mrb[0].mxu0
    %v1313 = vadd.f32 0.0, %v1312
    %v1314 = vpop.f32.mrb[0].mxu0
    %v1315 = vadd.f32 0.0, %v1314
    %1316 = vmatprep.mubr.f32.mxu0 0.0
    %1317 = vmatmul.mubr.f32.gmra.mrb[0].mxu0 %v1141
    %v1318 = vpop.f32.mrb[0].mxu0
    %v1319 = vadd.f32 0.0, %v1318
    %v1320 = vpop.f32.mrb[0].mxu0
    %v1321 = vadd.f32 0.0, %v1320
    %1322 = vmatprep.mubr.f32.mxu0 0.0
    %1323 = vmatmul.mubr.f32.gmra.mrb[0].mxu0 %v1144
    %v1324 = vpop.f32.mrb[0].mxu0
    %v1325 = vadd.f32 0.0, %v1324
    %v1326 = vpop.f32.mrb[0].mxu0
    %v1327 = vadd.f32 0.0, %v1326
    %1328 = vmatprep.mubr.f32.mxu0 0.0
    %1329 = vmatmul.mubr.f32.gmra.mrb[0].mxu0 %v1147
    %v1330 = vpop.f32.mrb[0].mxu0
    %v1331 = vadd.f32 0.0, %v1330
    %v1332 = vpop.f32.mrb[0].mxu0
    %v1333 = vadd.f32 0.0, %v1332
    %1334 = vdwg.mxu0
    %v1335 = vadd.f32 %v1116, %v1224
    %v1336 = vadd.f32 %v1117, %v1226
    %v1337 = vadd.f32 %v1118, %v1313
    %v1338 = vadd.f32 %v1119, %v1315
    %v1339 = vadd.f32 %v1120, %v1230
    %v1340 = vadd.f32 %v1121, %v1232
    %v1341 = vadd.f32 %v1122, %v1319
    %v1342 = vadd.f32 %v1123, %v1321
    %v1343 = vadd.f32 %v1124, %v1236
    %v1344 = vadd.f32 %v1125, %v1238
    %v1345 = vadd.f32 %v1126, %v1325
    %v1346 = vadd.f32 %v1127, %v1327
    %v1347 = vadd.f32 %v1128, %v1242
    %v1348 = vadd.f32 %v1129, %v1244
    %v1349 = vadd.f32 %v1130, %v1331
    %v1350 = vadd.f32 %v1131, %v1333
    %s1351 = scalar_lea.vmem %s1, 160
    %v1352 = vld [vmem:[%s1351] sm:$0xff]
    %v1353 = vld [vmem:[%s1351 + $0x8] sm:$0xff]
    %v1354 = vld [vmem:[%s1351 + $0x10] sm:$0xff]
    %v1355 = vld [vmem:[%s1351 + $0x18] sm:$0xff]
    %1356 = vrot.lane.b32.xlu0 %v163, 127
    %v1357 = vpop.permute.xlu0 %1356
    %1358 = vrot.lane.b32.xlu0 %v171, 127
    %v1359 = vpop.permute.xlu0 %1358
    %1360 = vrot.lane.b32.xlu0 %v164, 127
    %v1361 = vpop.permute.xlu0 %1360
    %1362 = vrot.lane.b32.xlu0 %v172, 127
    %v1363 = vpop.permute.xlu0 %1362
    %vm1364 = vcmp.lt.s32.totalorder %v31, 127
    %v1365 = vsel %vm1364, %v1361, %v1363
    %v1366 = vsel %vm1364, %v1359, %v1361
    %v1367 = vsel %vm1364, %v1357, %v1359
    %v1368 = vsel %vm1364, %v1363, %v1357
    %v1369 = vsel %vm143, 1, 0
    %v1370 = vsel %vm144, 1, 0
    %v1371 = vsel %vm145, 1, 0
    %v1372 = vsel %vm146, 1, 0
    %vm1373 = vcmp.eq.s32.totalorder %v1369, 1
    %vm1374 = vcmp.eq.s32.totalorder %v1370, 1
    %vm1375 = vcmp.eq.s32.totalorder %v1371, 1
    %vm1376 = vcmp.eq.s32.totalorder %v1372, 1
    %v1377 = vsel %vm1373, %v1367, 0.0
    %v1378 = vsel %vm1374, %v1366, 0.0
    %v1379 = vsel %vm1375, %v1365, 0.0
    %v1380 = vsel %vm1376, %v1368, 0.0
    %v1382 = vsel %vm230, %v1352, 0
    %v1385 = vsel %vm230, %v1353, 0
    %v1388 = vsel %vm230, %v1354, 0
    %v1391 = vsel %vm230, %v1355, 0
    %v1394 = vsel %vm243, %v1377, 0
    %v1397 = vsel %vm243, %v1378, 0
    %v1400 = vsel %vm243, %v1379, 0
    %v1403 = vsel %vm243, %v1380, 0
    %1405 = vmatprep.subr.mxu0 %v1397
    %1406 = vmatpush1.msra.mxu0 %v1394
    %1407 = vmatprep.subr.mxu0 0.0
    %1408 = vmatpush1.msra.mxu0 0.0
    %1409 = vmatprep.subr.mxu0 0.0
    %1410 = vmatpush1.msra.mxu0 0.0
    %1411 = vmatprep.subr.mxu0 0.0
    %1412 = vmatpush1.msra.mxu0 0.0
    %1413 = vmatprep.subr.mxu0 0.0
    %1414 = vmatpush1.msra.mxu0 0.0
    %1415 = vmatprep.subr.mxu0 0.0
    %1416 = vmatpush1.msra.mxu0 0.0
    %1417 = vmatprep.subr.mxu0 0.0
    %1418 = vmatpush1.msra.mxu0 0.0
    %1419 = vmatprep.subr.mxu0 0.0
    %1420 = vmatpush1.msra.mxu0 0.0
    %1421 = vmatprep.subr.mxu0 0.0
    %1422 = vmatpush1.msra.mxu0 0.0
    %1423 = vmatprep.subr.mxu0 0.0
    %1424 = vmatpush1.msra.mxu0 0.0
    %1425 = vmatprep.subr.mxu0 0.0
    %1426 = vmatpush1.msra.mxu0 0.0
    %1427 = vmatprep.subr.mxu0 0.0
    %1428 = vmatpush1.msra.mxu0 0.0
    %1429 = vmatprep.subr.mxu0 0.0
    %1430 = vmatpush1.msra.mxu0 0.0
    %1431 = vmatprep.subr.mxu0 0.0
    %1432 = vmatpush1.msra.mxu0 0.0
    %1433 = vmatprep.subr.mxu0 0.0
    %1434 = vmatpush1.msra.mxu0 0.0
    %1435 = vmatprep.subr.mxu0 0.0
    %1436 = vmatpush1.msra.mxu0 0.0
    %1437 = vmatprep.subr.mxu0 0.0
    %1438 = vmatpush1.msra.mxu0 0.0
    %1439 = vmatprep.subr.mxu0 0.0
    %1440 = vmatpush1.msra.mxu0 0.0
    %1441 = vmatprep.subr.mxu0 0.0
    %1442 = vmatpush1.msra.mxu0 0.0
    %1443 = vmatprep.subr.mxu0 0.0
    %1444 = vmatpush1.msra.mxu0 0.0
    %1445 = vmatprep.subr.mxu0 0.0
    %1446 = vmatpush1.msra.mxu0 0.0
    %1447 = vmatprep.subr.mxu0 0.0
    %1448 = vmatpush1.msra.mxu0 0.0
    %1449 = vmatprep.subr.mxu0 0.0
    %1450 = vmatpush1.msra.mxu0 0.0
    %1451 = vmatprep.subr.mxu0 0.0
    %1452 = vmatpush1.msra.mxu0 0.0
    %1453 = vmatprep.subr.mxu0 0.0
    %1454 = vmatpush1.msra.mxu0 0.0
    %1455 = vmatprep.subr.mxu0 0.0
    %1456 = vmatpush1.msra.mxu0 0.0
    %1457 = vmatprep.subr.mxu0 0.0
    %1458 = vmatpush1.msra.mxu0 0.0
    %1459 = vmatprep.subr.mxu0 0.0
    %1460 = vmatpush1.msra.mxu0 0.0
    %1461 = vmatprep.subr.mxu0 0.0
    %1462 = vmatpush1.msra.mxu0 0.0
    %1463 = vmatprep.subr.mxu0 0.0
    %1464 = vmatpush1.msra.mxu0 0.0
    %1465 = vmatprep.subr.mxu0 0.0
    %1466 = vmatpush1.msra.mxu0 0.0
    %1467 = vmatprep.subr.mxu0 0.0
    %1468 = vmatpush1.msra.mxu0 0.0
    %1469 = vmatprep.mubr.f32.mxu0 0.0
    %1470 = vmatmul.mubr.f32.gmra.mrb[0].mxu0 %v1382
    %v1471 = vpop.f32.mrb[0].mxu0
    %v1472 = vadd.f32 0.0, %v1471
    %v1473 = vpop.f32.mrb[0].mxu0
    %v1474 = vadd.f32 0.0, %v1473
    %1475 = vmatprep.mubr.f32.mxu0 0.0
    %1476 = vmatmul.mubr.f32.gmra.mrb[0].mxu0 %v1385
    %v1477 = vpop.f32.mrb[0].mxu0
    %v1478 = vadd.f32 0.0, %v1477
    %v1479 = vpop.f32.mrb[0].mxu0
    %v1480 = vadd.f32 0.0, %v1479
    %1481 = vmatprep.mubr.f32.mxu0 0.0
    %1482 = vmatmul.mubr.f32.gmra.mrb[0].mxu0 %v1388
    %v1483 = vpop.f32.mrb[0].mxu0
    %v1484 = vadd.f32 0.0, %v1483
    %v1485 = vpop.f32.mrb[0].mxu0
    %v1486 = vadd.f32 0.0, %v1485
    %1487 = vmatprep.mubr.f32.mxu0 0.0
    %1488 = vmatmul.mubr.f32.gmra.mrb[0].mxu0 %v1391
    %v1489 = vpop.f32.mrb[0].mxu0
    %v1490 = vadd.f32 0.0, %v1489
    %v1491 = vpop.f32.mrb[0].mxu0
    %v1492 = vadd.f32 0.0, %v1491
    %1493 = vdwg.mxu0
    %1494 = vmatprep.subr.mxu0 %v1403
    %1495 = vmatpush1.msra.mxu0 %v1400
    %1496 = vmatprep.subr.mxu0 0.0
    %1497 = vmatpush1.msra.mxu0 0.0
    %1498 = vmatprep.subr.mxu0 0.0
    %1499 = vmatpush1.msra.mxu0 0.0
    %1500 = vmatprep.subr.mxu0 0.0
    %1501 = vmatpush1.msra.mxu0 0.0
    %1502 = vmatprep.subr.mxu0 0.0
    %1503 = vmatpush1.msra.mxu0 0.0
    %1504 = vmatprep.subr.mxu0 0.0
    %1505 = vmatpush1.msra.mxu0 0.0
    %1506 = vmatprep.subr.mxu0 0.0
    %1507 = vmatpush1.msra.mxu0 0.0
    %1508 = vmatprep.subr.mxu0 0.0
    %1509 = vmatpush1.msra.mxu0 0.0
    %1510 = vmatprep.subr.mxu0 0.0
    %1511 = vmatpush1.msra.mxu0 0.0
    %1512 = vmatprep.subr.mxu0 0.0
    %1513 = vmatpush1.msra.mxu0 0.0
    %1514 = vmatprep.subr.mxu0 0.0
    %1515 = vmatpush1.msra.mxu0 0.0
    %1516 = vmatprep.subr.mxu0 0.0
    %1517 = vmatpush1.msra.mxu0 0.0
    %1518 = vmatprep.subr.mxu0 0.0
    %1519 = vmatpush1.msra.mxu0 0.0
    %1520 = vmatprep.subr.mxu0 0.0
    %1521 = vmatpush1.msra.mxu0 0.0
    %1522 = vmatprep.subr.mxu0 0.0
    %1523 = vmatpush1.msra.mxu0 0.0
    %1524 = vmatprep.subr.mxu0 0.0
    %1525 = vmatpush1.msra.mxu0 0.0
    %1526 = vmatprep.subr.mxu0 0.0
    %1527 = vmatpush1.msra.mxu0 0.0
    %1528 = vmatprep.subr.mxu0 0.0
    %1529 = vmatpush1.msra.mxu0 0.0
    %1530 = vmatprep.subr.mxu0 0.0
    %1531 = vmatpush1.msra.mxu0 0.0
    %1532 = vmatprep.subr.mxu0 0.0
    %1533 = vmatpush1.msra.mxu0 0.0
    %1534 = vmatprep.subr.mxu0 0.0
    %1535 = vmatpush1.msra.mxu0 0.0
    %1536 = vmatprep.subr.mxu0 0.0
    %1537 = vmatpush1.msra.mxu0 0.0
    %1538 = vmatprep.subr.mxu0 0.0
    %1539 = vmatpush1.msra.mxu0 0.0
    %1540 = vmatprep.subr.mxu0 0.0
    %1541 = vmatpush1.msra.mxu0 0.0
    %1542 = vmatprep.subr.mxu0 0.0
    %1543 = vmatpush1.msra.mxu0 0.0
    %1544 = vmatprep.subr.mxu0 0.0
    %1545 = vmatpush1.msra.mxu0 0.0
    %1546 = vmatprep.subr.mxu0 0.0
    %1547 = vmatpush1.msra.mxu0 0.0
    %1548 = vmatprep.subr.mxu0 0.0
    %1549 = vmatpush1.msra.mxu0 0.0
    %1550 = vmatprep.subr.mxu0 0.0
    %1551 = vmatpush1.msra.mxu0 0.0
    %1552 = vmatprep.subr.mxu0 0.0
    %1553 = vmatpush1.msra.mxu0 0.0
    %1554 = vmatprep.subr.mxu0 0.0
    %1555 = vmatpush1.msra.mxu0 0.0
    %1556 = vmatprep.subr.mxu0 0.0
    %1557 = vmatpush1.msra.mxu0 0.0
    %1558 = vmatprep.mubr.f32.mxu0 0.0
    %1559 = vmatmul.mubr.f32.gmra.mrb[0].mxu0 %v1382
    %v1560 = vpop.f32.mrb[0].mxu0
    %v1561 = vadd.f32 0.0, %v1560
    %v1562 = vpop.f32.mrb[0].mxu0
    %v1563 = vadd.f32 0.0, %v1562
    %1564 = vmatprep.mubr.f32.mxu0 0.0
    %1565 = vmatmul.mubr.f32.gmra.mrb[0].mxu0 %v1385
    %v1566 = vpop.f32.mrb[0].mxu0
    %v1567 = vadd.f32 0.0, %v1566
    %v1568 = vpop.f32.mrb[0].mxu0
    %v1569 = vadd.f32 0.0, %v1568
    %1570 = vmatprep.mubr.f32.mxu0 0.0
    %1571 = vmatmul.mubr.f32.gmra.mrb[0].mxu0 %v1388
    %v1572 = vpop.f32.mrb[0].mxu0
    %v1573 = vadd.f32 0.0, %v1572
    %v1574 = vpop.f32.mrb[0].mxu0
    %v1575 = vadd.f32 0.0, %v1574
    %1576 = vmatprep.mubr.f32.mxu0 0.0
    %1577 = vmatmul.mubr.f32.gmra.mrb[0].mxu0 %v1391
    %v1578 = vpop.f32.mrb[0].mxu0
    %v1579 = vadd.f32 0.0, %v1578
    %v1580 = vpop.f32.mrb[0].mxu0
    %v1581 = vadd.f32 0.0, %v1580
    %1582 = vdwg.mxu0
    %v1583 = vadd.f32 %v1335, %v1472
    %v1584 = vadd.f32 %v1336, %v1474
    %v1585 = vadd.f32 %v1337, %v1561
    %v1586 = vadd.f32 %v1338, %v1563
    %v1587 = vadd.f32 %v1339, %v1478
    %v1588 = vadd.f32 %v1340, %v1480
    %v1589 = vadd.f32 %v1341, %v1567
    %v1590 = vadd.f32 %v1342, %v1569
    %v1591 = vadd.f32 %v1343, %v1484
    %v1592 = vadd.f32 %v1344, %v1486
    %v1593 = vadd.f32 %v1345, %v1573
    %v1594 = vadd.f32 %v1346, %v1575
    %v1595 = vadd.f32 %v1347, %v1490
    %v1596 = vadd.f32 %v1348, %v1492
    %v1597 = vadd.f32 %v1349, %v1579
    %v1598 = vadd.f32 %v1350, %v1581
    %s1599 = scalar_lea.vmem %s1, 192
    %v1600 = vld [vmem:[%s1599] sm:$0xff]
    %v1601 = vld [vmem:[%s1599 + $0x8] sm:$0xff]
    %v1602 = vld [vmem:[%s1599 + $0x10] sm:$0xff]
    %v1603 = vld [vmem:[%s1599 + $0x18] sm:$0xff]
    %1604 = vrot.lane.b32.xlu0 %v163, 113
    %v1605 = vpop.permute.xlu0 %1604
    %1606 = vrot.lane.b32.xlu0 %v171, 113
    %v1607 = vpop.permute.xlu0 %1606
    %1608 = vrot.lane.b32.xlu0 %v164, 113
    %v1609 = vpop.permute.xlu0 %1608
    %1610 = vrot.lane.b32.xlu0 %v172, 113
    %v1611 = vpop.permute.xlu0 %1610
    %vm1612 = vcmp.lt.s32.totalorder %v31, 113
    %v1613 = vsel %vm1612, %v1609, %v1611
    %v1614 = vsel %vm1612, %v1607, %v1609
    %v1615 = vsel %vm1612, %v1605, %v1607
    %v1616 = vsel %vm1612, %v1611, %v1605
    %v1617 = vsel %vm155, 1, 0
    %v1618 = vsel %vm156, 1, 0
    %v1619 = vsel %vm157, 1, 0
    %v1620 = vsel %vm158, 1, 0
    %vm1621 = vcmp.eq.s32.totalorder %v1617, 1
    %vm1622 = vcmp.eq.s32.totalorder %v1618, 1
    %vm1623 = vcmp.eq.s32.totalorder %v1619, 1
    %vm1624 = vcmp.eq.s32.totalorder %v1620, 1
    %v1625 = vsel %vm1621, %v1615, 0.0
    %v1626 = vsel %vm1622, %v1614, 0.0
    %v1627 = vsel %vm1623, %v1613, 0.0
    %v1628 = vsel %vm1624, %v1616, 0.0
    %v1630 = vsel %vm230, %v1600, 0
    %v1633 = vsel %vm230, %v1601, 0
    %v1636 = vsel %vm230, %v1602, 0
    %v1639 = vsel %vm230, %v1603, 0
    %v1642 = vsel %vm243, %v1625, 0
    %v1645 = vsel %vm243, %v1626, 0
    %v1648 = vsel %vm243, %v1627, 0
    %v1651 = vsel %vm243, %v1628, 0
    %1653 = vmatprep.subr.mxu0 %v1645
    %1654 = vmatpush1.msra.mxu0 %v1642
    %1655 = vmatprep.subr.mxu0 0.0
    %1656 = vmatpush1.msra.mxu0 0.0
    %1657 = vmatprep.subr.mxu0 0.0
    %1658 = vmatpush1.msra.mxu0 0.0
    %1659 = vmatprep.subr.mxu0 0.0
    %1660 = vmatpush1.msra.mxu0 0.0
    %1661 = vmatprep.subr.mxu0 0.0
    %1662 = vmatpush1.msra.mxu0 0.0
    %1663 = vmatprep.subr.mxu0 0.0
    %1664 = vmatpush1.msra.mxu0 0.0
    %1665 = vmatprep.subr.mxu0 0.0
    %1666 = vmatpush1.msra.mxu0 0.0
    %1667 = vmatprep.subr.mxu0 0.0
    %1668 = vmatpush1.msra.mxu0 0.0
    %1669 = vmatprep.subr.mxu0 0.0
    %1670 = vmatpush1.msra.mxu0 0.0
    %1671 = vmatprep.subr.mxu0 0.0
    %1672 = vmatpush1.msra.mxu0 0.0
    %1673 = vmatprep.subr.mxu0 0.0
    %1674 = vmatpush1.msra.mxu0 0.0
    %1675 = vmatprep.subr.mxu0 0.0
    %1676 = vmatpush1.msra.mxu0 0.0
    %1677 = vmatprep.subr.mxu0 0.0
    %1678 = vmatpush1.msra.mxu0 0.0
    %1679 = vmatprep.subr.mxu0 0.0
    %1680 = vmatpush1.msra.mxu0 0.0
    %1681 = vmatprep.subr.mxu0 0.0
    %1682 = vmatpush1.msra.mxu0 0.0
    %1683 = vmatprep.subr.mxu0 0.0
    %1684 = vmatpush1.msra.mxu0 0.0
    %1685 = vmatprep.subr.mxu0 0.0
    %1686 = vmatpush1.msra.mxu0 0.0
    %1687 = vmatprep.subr.mxu0 0.0
    %1688 = vmatpush1.msra.mxu0 0.0
    %1689 = vmatprep.subr.mxu0 0.0
    %1690 = vmatpush1.msra.mxu0 0.0
    %1691 = vmatprep.subr.mxu0 0.0
    %1692 = vmatpush1.msra.mxu0 0.0
    %1693 = vmatprep.subr.mxu0 0.0
    %1694 = vmatpush1.msra.mxu0 0.0
    %1695 = vmatprep.subr.mxu0 0.0
    %1696 = vmatpush1.msra.mxu0 0.0
    %1697 = vmatprep.subr.mxu0 0.0
    %1698 = vmatpush1.msra.mxu0 0.0
    %1699 = vmatprep.subr.mxu0 0.0
    %1700 = vmatpush1.msra.mxu0 0.0
    %1701 = vmatprep.subr.mxu0 0.0
    %1702 = vmatpush1.msra.mxu0 0.0
    %1703 = vmatprep.subr.mxu0 0.0
    %1704 = vmatpush1.msra.mxu0 0.0
    %1705 = vmatprep.subr.mxu0 0.0
    %1706 = vmatpush1.msra.mxu0 0.0
    %1707 = vmatprep.subr.mxu0 0.0
    %1708 = vmatpush1.msra.mxu0 0.0
    %1709 = vmatprep.subr.mxu0 0.0
    %1710 = vmatpush1.msra.mxu0 0.0
    %1711 = vmatprep.subr.mxu0 0.0
    %1712 = vmatpush1.msra.mxu0 0.0
    %1713 = vmatprep.subr.mxu0 0.0
    %1714 = vmatpush1.msra.mxu0 0.0
    %1715 = vmatprep.subr.mxu0 0.0
    %1716 = vmatpush1.msra.mxu0 0.0
    %1717 = vmatprep.mubr.f32.mxu0 0.0
    %1718 = vmatmul.mubr.f32.gmra.mrb[0].mxu0 %v1630
    %v1719 = vpop.f32.mrb[0].mxu0
    %v1720 = vadd.f32 0.0, %v1719
    %v1721 = vpop.f32.mrb[0].mxu0
    %v1722 = vadd.f32 0.0, %v1721
    %1723 = vmatprep.mubr.f32.mxu0 0.0
    %1724 = vmatmul.mubr.f32.gmra.mrb[0].mxu0 %v1633
    %v1725 = vpop.f32.mrb[0].mxu0
    %v1726 = vadd.f32 0.0, %v1725
    %v1727 = vpop.f32.mrb[0].mxu0
    %v1728 = vadd.f32 0.0, %v1727
    %1729 = vmatprep.mubr.f32.mxu0 0.0
    %1730 = vmatmul.mubr.f32.gmra.mrb[0].mxu0 %v1636
    %v1731 = vpop.f32.mrb[0].mxu0
    %v1732 = vadd.f32 0.0, %v1731
    %v1733 = vpop.f32.mrb[0].mxu0
    %v1734 = vadd.f32 0.0, %v1733
    %1735 = vmatprep.mubr.f32.mxu0 0.0
    %1736 = vmatmul.mubr.f32.gmra.mrb[0].mxu0 %v1639
    %v1737 = vpop.f32.mrb[0].mxu0
    %v1738 = vadd.f32 0.0, %v1737
    %v1739 = vpop.f32.mrb[0].mxu0
    %v1740 = vadd.f32 0.0, %v1739
    %1741 = vdwg.mxu0
    %1742 = vmatprep.subr.mxu0 %v1651
    %1743 = vmatpush1.msra.mxu0 %v1648
    %1744 = vmatprep.subr.mxu0 0.0
    %1745 = vmatpush1.msra.mxu0 0.0
    %1746 = vmatprep.subr.mxu0 0.0
    %1747 = vmatpush1.msra.mxu0 0.0
    %1748 = vmatprep.subr.mxu0 0.0
    %1749 = vmatpush1.msra.mxu0 0.0
    %1750 = vmatprep.subr.mxu0 0.0
    %1751 = vmatpush1.msra.mxu0 0.0
    %1752 = vmatprep.subr.mxu0 0.0
    %1753 = vmatpush1.msra.mxu0 0.0
    %1754 = vmatprep.subr.mxu0 0.0
    %1755 = vmatpush1.msra.mxu0 0.0
    %1756 = vmatprep.subr.mxu0 0.0
    %1757 = vmatpush1.msra.mxu0 0.0
    %1758 = vmatprep.subr.mxu0 0.0
    %1759 = vmatpush1.msra.mxu0 0.0
    %1760 = vmatprep.subr.mxu0 0.0
    %1761 = vmatpush1.msra.mxu0 0.0
    %1762 = vmatprep.subr.mxu0 0.0
    %1763 = vmatpush1.msra.mxu0 0.0
    %1764 = vmatprep.subr.mxu0 0.0
    %1765 = vmatpush1.msra.mxu0 0.0
    %1766 = vmatprep.subr.mxu0 0.0
    %1767 = vmatpush1.msra.mxu0 0.0
    %1768 = vmatprep.subr.mxu0 0.0
    %1769 = vmatpush1.msra.mxu0 0.0
    %1770 = vmatprep.subr.mxu0 0.0
    %1771 = vmatpush1.msra.mxu0 0.0
    %1772 = vmatprep.subr.mxu0 0.0
    %1773 = vmatpush1.msra.mxu0 0.0
    %1774 = vmatprep.subr.mxu0 0.0
    %1775 = vmatpush1.msra.mxu0 0.0
    %1776 = vmatprep.subr.mxu0 0.0
    %1777 = vmatpush1.msra.mxu0 0.0
    %1778 = vmatprep.subr.mxu0 0.0
    %1779 = vmatpush1.msra.mxu0 0.0
    %1780 = vmatprep.subr.mxu0 0.0
    %1781 = vmatpush1.msra.mxu0 0.0
    %1782 = vmatprep.subr.mxu0 0.0
    %1783 = vmatpush1.msra.mxu0 0.0
    %1784 = vmatprep.subr.mxu0 0.0
    %1785 = vmatpush1.msra.mxu0 0.0
    %1786 = vmatprep.subr.mxu0 0.0
    %1787 = vmatpush1.msra.mxu0 0.0
    %1788 = vmatprep.subr.mxu0 0.0
    %1789 = vmatpush1.msra.mxu0 0.0
    %1790 = vmatprep.subr.mxu0 0.0
    %1791 = vmatpush1.msra.mxu0 0.0
    %1792 = vmatprep.subr.mxu0 0.0
    %1793 = vmatpush1.msra.mxu0 0.0
    %1794 = vmatprep.subr.mxu0 0.0
    %1795 = vmatpush1.msra.mxu0 0.0
    %1796 = vmatprep.subr.mxu0 0.0
    %1797 = vmatpush1.msra.mxu0 0.0
    %1798 = vmatprep.subr.mxu0 0.0
    %1799 = vmatpush1.msra.mxu0 0.0
    %1800 = vmatprep.subr.mxu0 0.0
    %1801 = vmatpush1.msra.mxu0 0.0
    %1802 = vmatprep.subr.mxu0 0.0
    %1803 = vmatpush1.msra.mxu0 0.0
    %1804 = vmatprep.subr.mxu0 0.0
    %1805 = vmatpush1.msra.mxu0 0.0
    %1806 = vmatprep.mubr.f32.mxu0 0.0
    %1807 = vmatmul.mubr.f32.gmra.mrb[0].mxu0 %v1630
    %v1808 = vpop.f32.mrb[0].mxu0
    %v1809 = vadd.f32 0.0, %v1808
    %v1810 = vpop.f32.mrb[0].mxu0
    %v1811 = vadd.f32 0.0, %v1810
    %1812 = vmatprep.mubr.f32.mxu0 0.0
    %1813 = vmatmul.mubr.f32.gmra.mrb[0].mxu0 %v1633
    %v1814 = vpop.f32.mrb[0].mxu0
    %v1815 = vadd.f32 0.0, %v1814
    %v1816 = vpop.f32.mrb[0].mxu0
    %v1817 = vadd.f32 0.0, %v1816
    %1818 = vmatprep.mubr.f32.mxu0 0.0
    %1819 = vmatmul.mubr.f32.gmra.mrb[0].mxu0 %v1636
    %v1820 = vpop.f32.mrb[0].mxu0
    %v1821 = vadd.f32 0.0, %v1820
    %v1822 = vpop.f32.mrb[0].mxu0
    %v1823 = vadd.f32 0.0, %v1822
    %1824 = vmatprep.mubr.f32.mxu0 0.0
    %1825 = vmatmul.mubr.f32.gmra.mrb[0].mxu0 %v1639
    %v1826 = vpop.f32.mrb[0].mxu0
    %v1827 = vadd.f32 0.0, %v1826
    %v1828 = vpop.f32.mrb[0].mxu0
    %v1829 = vadd.f32 0.0, %v1828
    %1830 = vdwg.mxu0
    %v1831 = vadd.f32 %v1583, %v1720
    %v1832 = vadd.f32 %v1584, %v1722
    %v1833 = vadd.f32 %v1585, %v1809
    %v1834 = vadd.f32 %v1586, %v1811
    %v1835 = vadd.f32 %v1587, %v1726
    %v1836 = vadd.f32 %v1588, %v1728
    %v1837 = vadd.f32 %v1589, %v1815
    %v1838 = vadd.f32 %v1590, %v1817
    %v1839 = vadd.f32 %v1591, %v1732
    %v1840 = vadd.f32 %v1592, %v1734
    %v1841 = vadd.f32 %v1593, %v1821
    %v1842 = vadd.f32 %v1594, %v1823
    %v1843 = vadd.f32 %v1595, %v1738
    %v1844 = vadd.f32 %v1596, %v1740
    %v1845 = vadd.f32 %v1597, %v1827
    %v1846 = vadd.f32 %v1598, %v1829
    %s1847 = scalar_lea.vmem %s1, 224
    %v1848 = vld [vmem:[%s1847] sm:$0xff]
    %v1849 = vld [vmem:[%s1847 + $0x8] sm:$0xff]
    %v1850 = vld [vmem:[%s1847 + $0x10] sm:$0xff]
    %v1851 = vld [vmem:[%s1847 + $0x18] sm:$0xff]
    %1852 = vrot.lane.b32.xlu0 %v163, 112
    %v1853 = vpop.permute.xlu0 %1852
    %1854 = vrot.lane.b32.xlu0 %v171, 112
    %v1855 = vpop.permute.xlu0 %1854
    %1856 = vrot.lane.b32.xlu0 %v164, 112
    %v1857 = vpop.permute.xlu0 %1856
    %1858 = vrot.lane.b32.xlu0 %v172, 112
    %v1859 = vpop.permute.xlu0 %1858
    %vm1860 = vcmp.lt.s32.totalorder %v31, 112
    %v1861 = vsel %vm1860, %v1857, %v1859
    %v1862 = vsel %vm1860, %v1855, %v1857
    %v1863 = vsel %vm1860, %v1853, %v1855
    %v1864 = vsel %vm1860, %v1859, %v1853
    %v1865 = vsel %vm135, 1, 0
    %v1866 = vsel %vm136, 1, 0
    %v1867 = vsel %vm137, 1, 0
    %v1868 = vsel %vm138, 1, 0
    %vm1869 = vcmp.eq.s32.totalorder %v1865, 1
    %vm1870 = vcmp.eq.s32.totalorder %v1866, 1
    %vm1871 = vcmp.eq.s32.totalorder %v1867, 1
    %vm1872 = vcmp.eq.s32.totalorder %v1868, 1
    %v1873 = vsel %vm1869, %v1863, 0.0
    %v1874 = vsel %vm1870, %v1862, 0.0
    %v1875 = vsel %vm1871, %v1861, 0.0
    %v1876 = vsel %vm1872, %v1864, 0.0
    %v1878 = vsel %vm230, %v1848, 0
    %v1881 = vsel %vm230, %v1849, 0
    %v1884 = vsel %vm230, %v1850, 0
    %v1887 = vsel %vm230, %v1851, 0
    %v1890 = vsel %vm243, %v1873, 0
    %v1893 = vsel %vm243, %v1874, 0
    %v1896 = vsel %vm243, %v1875, 0
    %v1899 = vsel %vm243, %v1876, 0
    %1901 = vmatprep.subr.mxu0 %v1893
    %1902 = vmatpush1.msra.mxu0 %v1890
    %1903 = vmatprep.subr.mxu0 0.0
    %1904 = vmatpush1.msra.mxu0 0.0
    %1905 = vmatprep.subr.mxu0 0.0
    %1906 = vmatpush1.msra.mxu0 0.0
    %1907 = vmatprep.subr.mxu0 0.0
    %1908 = vmatpush1.msra.mxu0 0.0
    %1909 = vmatprep.subr.mxu0 0.0
    %1910 = vmatpush1.msra.mxu0 0.0
    %1911 = vmatprep.subr.mxu0 0.0
    %1912 = vmatpush1.msra.mxu0 0.0
    %1913 = vmatprep.subr.mxu0 0.0
    %1914 = vmatpush1.msra.mxu0 0.0
    %1915 = vmatprep.subr.mxu0 0.0
    %1916 = vmatpush1.msra.mxu0 0.0
    %1917 = vmatprep.subr.mxu0 0.0
    %1918 = vmatpush1.msra.mxu0 0.0
    %1919 = vmatprep.subr.mxu0 0.0
    %1920 = vmatpush1.msra.mxu0 0.0
    %1921 = vmatprep.subr.mxu0 0.0
    %1922 = vmatpush1.msra.mxu0 0.0
    %1923 = vmatprep.subr.mxu0 0.0
    %1924 = vmatpush1.msra.mxu0 0.0
    %1925 = vmatprep.subr.mxu0 0.0
    %1926 = vmatpush1.msra.mxu0 0.0
    %1927 = vmatprep.subr.mxu0 0.0
    %1928 = vmatpush1.msra.mxu0 0.0
    %1929 = vmatprep.subr.mxu0 0.0
    %1930 = vmatpush1.msra.mxu0 0.0
    %1931 = vmatprep.subr.mxu0 0.0
    %1932 = vmatpush1.msra.mxu0 0.0
    %1933 = vmatprep.subr.mxu0 0.0
    %1934 = vmatpush1.msra.mxu0 0.0
    %1935 = vmatprep.subr.mxu0 0.0
    %1936 = vmatpush1.msra.mxu0 0.0
    %1937 = vmatprep.subr.mxu0 0.0
    %1938 = vmatpush1.msra.mxu0 0.0
    %1939 = vmatprep.subr.mxu0 0.0
    %1940 = vmatpush1.msra.mxu0 0.0
    %1941 = vmatprep.subr.mxu0 0.0
    %1942 = vmatpush1.msra.mxu0 0.0
    %1943 = vmatprep.subr.mxu0 0.0
    %1944 = vmatpush1.msra.mxu0 0.0
    %1945 = vmatprep.subr.mxu0 0.0
    %1946 = vmatpush1.msra.mxu0 0.0
    %1947 = vmatprep.subr.mxu0 0.0
    %1948 = vmatpush1.msra.mxu0 0.0
    %1949 = vmatprep.subr.mxu0 0.0
    %1950 = vmatpush1.msra.mxu0 0.0
    %1951 = vmatprep.subr.mxu0 0.0
    %1952 = vmatpush1.msra.mxu0 0.0
    %1953 = vmatprep.subr.mxu0 0.0
    %1954 = vmatpush1.msra.mxu0 0.0
    %1955 = vmatprep.subr.mxu0 0.0
    %1956 = vmatpush1.msra.mxu0 0.0
    %1957 = vmatprep.subr.mxu0 0.0
    %1958 = vmatpush1.msra.mxu0 0.0
    %1959 = vmatprep.subr.mxu0 0.0
    %1960 = vmatpush1.msra.mxu0 0.0
    %1961 = vmatprep.subr.mxu0 0.0
    %1962 = vmatpush1.msra.mxu0 0.0
    %1963 = vmatprep.subr.mxu0 0.0
    %1964 = vmatpush1.msra.mxu0 0.0
    %1965 = vmatprep.mubr.f32.mxu0 0.0
    %1966 = vmatmul.mubr.f32.gmra.mrb[0].mxu0 %v1878
    %v1967 = vpop.f32.mrb[0].mxu0
    %v1968 = vadd.f32 0.0, %v1967
    %v1969 = vpop.f32.mrb[0].mxu0
    %v1970 = vadd.f32 0.0, %v1969
    %1971 = vmatprep.mubr.f32.mxu0 0.0
    %1972 = vmatmul.mubr.f32.gmra.mrb[0].mxu0 %v1881
    %v1973 = vpop.f32.mrb[0].mxu0
    %v1974 = vadd.f32 0.0, %v1973
    %v1975 = vpop.f32.mrb[0].mxu0
    %v1976 = vadd.f32 0.0, %v1975
    %1977 = vmatprep.mubr.f32.mxu0 0.0
    %1978 = vmatmul.mubr.f32.gmra.mrb[0].mxu0 %v1884
    %v1979 = vpop.f32.mrb[0].mxu0
    %v1980 = vadd.f32 0.0, %v1979
    %v1981 = vpop.f32.mrb[0].mxu0
    %v1982 = vadd.f32 0.0, %v1981
    %1983 = vmatprep.mubr.f32.mxu0 0.0
    %1984 = vmatmul.mubr.f32.gmra.mrb[0].mxu0 %v1887
    %v1985 = vpop.f32.mrb[0].mxu0
    %v1986 = vadd.f32 0.0, %v1985
    %v1987 = vpop.f32.mrb[0].mxu0
    %v1988 = vadd.f32 0.0, %v1987
    %1989 = vdwg.mxu0
    %1990 = vmatprep.subr.mxu0 %v1899
    %1991 = vmatpush1.msra.mxu0 %v1896
    %1992 = vmatprep.subr.mxu0 0.0
    %1993 = vmatpush1.msra.mxu0 0.0
    %1994 = vmatprep.subr.mxu0 0.0
    %1995 = vmatpush1.msra.mxu0 0.0
    %1996 = vmatprep.subr.mxu0 0.0
    %1997 = vmatpush1.msra.mxu0 0.0
    %1998 = vmatprep.subr.mxu0 0.0
    %1999 = vmatpush1.msra.mxu0 0.0
    %2000 = vmatprep.subr.mxu0 0.0
    %2001 = vmatpush1.msra.mxu0 0.0
    %2002 = vmatprep.subr.mxu0 0.0
    %2003 = vmatpush1.msra.mxu0 0.0
    %2004 = vmatprep.subr.mxu0 0.0
    %2005 = vmatpush1.msra.mxu0 0.0
    %2006 = vmatprep.subr.mxu0 0.0
    %2007 = vmatpush1.msra.mxu0 0.0
    %2008 = vmatprep.subr.mxu0 0.0
    %2009 = vmatpush1.msra.mxu0 0.0
    %2010 = vmatprep.subr.mxu0 0.0
    %2011 = vmatpush1.msra.mxu0 0.0
    %2012 = vmatprep.subr.mxu0 0.0
    %2013 = vmatpush1.msra.mxu0 0.0
    %2014 = vmatprep.subr.mxu0 0.0
    %2015 = vmatpush1.msra.mxu0 0.0
    %2016 = vmatprep.subr.mxu0 0.0
    %2017 = vmatpush1.msra.mxu0 0.0
    %2018 = vmatprep.subr.mxu0 0.0
    %2019 = vmatpush1.msra.mxu0 0.0
    %2020 = vmatprep.subr.mxu0 0.0
    %2021 = vmatpush1.msra.mxu0 0.0
    %2022 = vmatprep.subr.mxu0 0.0
    %2023 = vmatpush1.msra.mxu0 0.0
    %2024 = vmatprep.subr.mxu0 0.0
    %2025 = vmatpush1.msra.mxu0 0.0
    %2026 = vmatprep.subr.mxu0 0.0
    %2027 = vmatpush1.msra.mxu0 0.0
    %2028 = vmatprep.subr.mxu0 0.0
    %2029 = vmatpush1.msra.mxu0 0.0
    %2030 = vmatprep.subr.mxu0 0.0
    %2031 = vmatpush1.msra.mxu0 0.0
    %2032 = vmatprep.subr.mxu0 0.0
    %2033 = vmatpush1.msra.mxu0 0.0
    %2034 = vmatprep.subr.mxu0 0.0
    %2035 = vmatpush1.msra.mxu0 0.0
    %2036 = vmatprep.subr.mxu0 0.0
    %2037 = vmatpush1.msra.mxu0 0.0
    %2038 = vmatprep.subr.mxu0 0.0
    %2039 = vmatpush1.msra.mxu0 0.0
    %2040 = vmatprep.subr.mxu0 0.0
    %2041 = vmatpush1.msra.mxu0 0.0
    %2042 = vmatprep.subr.mxu0 0.0
    %2043 = vmatpush1.msra.mxu0 0.0
    %2044 = vmatprep.subr.mxu0 0.0
    %2045 = vmatpush1.msra.mxu0 0.0
    %2046 = vmatprep.subr.mxu0 0.0
    %2047 = vmatpush1.msra.mxu0 0.0
    %2048 = vmatprep.subr.mxu0 0.0
    %2049 = vmatpush1.msra.mxu0 0.0
    %2050 = vmatprep.subr.mxu0 0.0
    %2051 = vmatpush1.msra.mxu0 0.0
    %2052 = vmatprep.subr.mxu0 0.0
    %2053 = vmatpush1.msra.mxu0 0.0
    %2054 = vmatprep.mubr.f32.mxu0 0.0
    %2055 = vmatmul.mubr.f32.gmra.mrb[0].mxu0 %v1878
    %v2056 = vpop.f32.mrb[0].mxu0
    %v2057 = vadd.f32 0.0, %v2056
    %v2058 = vpop.f32.mrb[0].mxu0
    %v2059 = vadd.f32 0.0, %v2058
    %2060 = vmatprep.mubr.f32.mxu0 0.0
    %2061 = vmatmul.mubr.f32.gmra.mrb[0].mxu0 %v1881
    %v2062 = vpop.f32.mrb[0].mxu0
    %v2063 = vadd.f32 0.0, %v2062
    %v2064 = vpop.f32.mrb[0].mxu0
    %v2065 = vadd.f32 0.0, %v2064
    %2066 = vmatprep.mubr.f32.mxu0 0.0
    %2067 = vmatmul.mubr.f32.gmra.mrb[0].mxu0 %v1884
    %v2068 = vpop.f32.mrb[0].mxu0
    %v2069 = vadd.f32 0.0, %v2068
    %v2070 = vpop.f32.mrb[0].mxu0
    %v2071 = vadd.f32 0.0, %v2070
    %2072 = vmatprep.mubr.f32.mxu0 0.0
    %2073 = vmatmul.mubr.f32.gmra.mrb[0].mxu0 %v1887
    %v2074 = vpop.f32.mrb[0].mxu0
    %v2075 = vadd.f32 0.0, %v2074
    %v2076 = vpop.f32.mrb[0].mxu0
    %v2077 = vadd.f32 0.0, %v2076
    %2078 = vdwg.mxu0
    %v2079 = vadd.f32 %v1831, %v1968
    %v2080 = vadd.f32 %v1832, %v1970
    %v2081 = vadd.f32 %v1833, %v2057
    %v2082 = vadd.f32 %v1834, %v2059
    %v2083 = vadd.f32 %v1835, %v1974
    %v2084 = vadd.f32 %v1836, %v1976
    %v2085 = vadd.f32 %v1837, %v2063
    %v2086 = vadd.f32 %v1838, %v2065
    %v2087 = vadd.f32 %v1839, %v1980
    %v2088 = vadd.f32 %v1840, %v1982
    %v2089 = vadd.f32 %v1841, %v2069
    %v2090 = vadd.f32 %v1842, %v2071
    %v2091 = vadd.f32 %v1843, %v1986
    %v2092 = vadd.f32 %v1844, %v1988
    %v2093 = vadd.f32 %v1845, %v2075
    %v2094 = vadd.f32 %v1846, %v2077
    %s2095 = scalar_lea.vmem %s1, 256
    %v2096 = vld [vmem:[%s2095] sm:$0xff]
    %v2097 = vld [vmem:[%s2095 + $0x8] sm:$0xff]
    %v2098 = vld [vmem:[%s2095 + $0x10] sm:$0xff]
    %v2099 = vld [vmem:[%s2095 + $0x18] sm:$0xff]
    %2100 = vrot.lane.b32.xlu0 %v163, 111
    %v2101 = vpop.permute.xlu0 %2100
    %2102 = vrot.lane.b32.xlu0 %v171, 111
    %v2103 = vpop.permute.xlu0 %2102
    %2104 = vrot.lane.b32.xlu0 %v164, 111
    %v2105 = vpop.permute.xlu0 %2104
    %2106 = vrot.lane.b32.xlu0 %v172, 111
    %v2107 = vpop.permute.xlu0 %2106
    %vm2108 = vcmp.lt.s32.totalorder %v31, 111
    %v2109 = vsel %vm2108, %v2105, %v2107
    %v2110 = vsel %vm2108, %v2103, %v2105
    %v2111 = vsel %vm2108, %v2101, %v2103
    %v2112 = vsel %vm2108, %v2107, %v2101
    %v2113 = vsel %vm159, 1, 0
    %v2114 = vsel %vm160, 1, 0
    %v2115 = vsel %vm161, 1, 0
    %v2116 = vsel %vm162, 1, 0
    %vm2117 = vcmp.eq.s32.totalorder %v2113, 1
    %vm2118 = vcmp.eq.s32.totalorder %v2114, 1
    %vm2119 = vcmp.eq.s32.totalorder %v2115, 1
    %vm2120 = vcmp.eq.s32.totalorder %v2116, 1
    %v2121 = vsel %vm2117, %v2111, 0.0
    %v2122 = vsel %vm2118, %v2110, 0.0
    %v2123 = vsel %vm2119, %v2109, 0.0
    %v2124 = vsel %vm2120, %v2112, 0.0
    %v2126 = vsel %vm230, %v2096, 0
    %v2129 = vsel %vm230, %v2097, 0
    %v2132 = vsel %vm230, %v2098, 0
    %v2135 = vsel %vm230, %v2099, 0
    %v2138 = vsel %vm243, %v2121, 0
    %v2141 = vsel %vm243, %v2122, 0
    %v2144 = vsel %vm243, %v2123, 0
    %v2147 = vsel %vm243, %v2124, 0
    %2149 = vmatprep.subr.mxu0 %v2141
    %2150 = vmatpush1.msra.mxu0 %v2138
    %2151 = vmatprep.subr.mxu0 0.0
    %2152 = vmatpush1.msra.mxu0 0.0
    %2153 = vmatprep.subr.mxu0 0.0
    %2154 = vmatpush1.msra.mxu0 0.0
    %2155 = vmatprep.subr.mxu0 0.0
    %2156 = vmatpush1.msra.mxu0 0.0
    %2157 = vmatprep.subr.mxu0 0.0
    %2158 = vmatpush1.msra.mxu0 0.0
    %2159 = vmatprep.subr.mxu0 0.0
    %2160 = vmatpush1.msra.mxu0 0.0
    %2161 = vmatprep.subr.mxu0 0.0
    %2162 = vmatpush1.msra.mxu0 0.0
    %2163 = vmatprep.subr.mxu0 0.0
    %2164 = vmatpush1.msra.mxu0 0.0
    %2165 = vmatprep.subr.mxu0 0.0
    %2166 = vmatpush1.msra.mxu0 0.0
    %2167 = vmatprep.subr.mxu0 0.0
    %2168 = vmatpush1.msra.mxu0 0.0
    %2169 = vmatprep.subr.mxu0 0.0
    %2170 = vmatpush1.msra.mxu0 0.0
    %2171 = vmatprep.subr.mxu0 0.0
    %2172 = vmatpush1.msra.mxu0 0.0
    %2173 = vmatprep.subr.mxu0 0.0
    %2174 = vmatpush1.msra.mxu0 0.0
    %2175 = vmatprep.subr.mxu0 0.0
    %2176 = vmatpush1.msra.mxu0 0.0
    %2177 = vmatprep.subr.mxu0 0.0
    %2178 = vmatpush1.msra.mxu0 0.0
    %2179 = vmatprep.subr.mxu0 0.0
    %2180 = vmatpush1.msra.mxu0 0.0
    %2181 = vmatprep.subr.mxu0 0.0
    %2182 = vmatpush1.msra.mxu0 0.0
    %2183 = vmatprep.subr.mxu0 0.0
    %2184 = vmatpush1.msra.mxu0 0.0
    %2185 = vmatprep.subr.mxu0 0.0
    %2186 = vmatpush1.msra.mxu0 0.0
    %2187 = vmatprep.subr.mxu0 0.0
    %2188 = vmatpush1.msra.mxu0 0.0
    %2189 = vmatprep.subr.mxu0 0.0
    %2190 = vmatpush1.msra.mxu0 0.0
    %2191 = vmatprep.subr.mxu0 0.0
    %2192 = vmatpush1.msra.mxu0 0.0
    %2193 = vmatprep.subr.mxu0 0.0
    %2194 = vmatpush1.msra.mxu0 0.0
    %2195 = vmatprep.subr.mxu0 0.0
    %2196 = vmatpush1.msra.mxu0 0.0
    %2197 = vmatprep.subr.mxu0 0.0
    %2198 = vmatpush1.msra.mxu0 0.0
    %2199 = vmatprep.subr.mxu0 0.0
    %2200 = vmatpush1.msra.mxu0 0.0
    %2201 = vmatprep.subr.mxu0 0.0
    %2202 = vmatpush1.msra.mxu0 0.0
    %2203 = vmatprep.subr.mxu0 0.0
    %2204 = vmatpush1.msra.mxu0 0.0
    %2205 = vmatprep.subr.mxu0 0.0
    %2206 = vmatpush1.msra.mxu0 0.0
    %2207 = vmatprep.subr.mxu0 0.0
    %2208 = vmatpush1.msra.mxu0 0.0
    %2209 = vmatprep.subr.mxu0 0.0
    %2210 = vmatpush1.msra.mxu0 0.0
    %2211 = vmatprep.subr.mxu0 0.0
    %2212 = vmatpush1.msra.mxu0 0.0
    %2213 = vmatprep.mubr.f32.mxu0 0.0
    %2214 = vmatmul.mubr.f32.gmra.mrb[0].mxu0 %v2126
    %v2215 = vpop.f32.mrb[0].mxu0
    %v2216 = vadd.f32 0.0, %v2215
    %v2217 = vpop.f32.mrb[0].mxu0
    %v2218 = vadd.f32 0.0, %v2217
    %2219 = vmatprep.mubr.f32.mxu0 0.0
    %2220 = vmatmul.mubr.f32.gmra.mrb[0].mxu0 %v2129
    %v2221 = vpop.f32.mrb[0].mxu0
    %v2222 = vadd.f32 0.0, %v2221
    %v2223 = vpop.f32.mrb[0].mxu0
    %v2224 = vadd.f32 0.0, %v2223
    %2225 = vmatprep.mubr.f32.mxu0 0.0
    %2226 = vmatmul.mubr.f32.gmra.mrb[0].mxu0 %v2132
    %v2227 = vpop.f32.mrb[0].mxu0
    %v2228 = vadd.f32 0.0, %v2227
    %v2229 = vpop.f32.mrb[0].mxu0
    %v2230 = vadd.f32 0.0, %v2229
    %2231 = vmatprep.mubr.f32.mxu0 0.0
    %2232 = vmatmul.mubr.f32.gmra.mrb[0].mxu0 %v2135
    %v2233 = vpop.f32.mrb[0].mxu0
    %v2234 = vadd.f32 0.0, %v2233
    %v2235 = vpop.f32.mrb[0].mxu0
    %v2236 = vadd.f32 0.0, %v2235
    %2237 = vdwg.mxu0
    %2238 = vmatprep.subr.mxu0 %v2147
    %2239 = vmatpush1.msra.mxu0 %v2144
    %2240 = vmatprep.subr.mxu0 0.0
    %2241 = vmatpush1.msra.mxu0 0.0
    %2242 = vmatprep.subr.mxu0 0.0
    %2243 = vmatpush1.msra.mxu0 0.0
    %2244 = vmatprep.subr.mxu0 0.0
    %2245 = vmatpush1.msra.mxu0 0.0
    %2246 = vmatprep.subr.mxu0 0.0
    %2247 = vmatpush1.msra.mxu0 0.0
    %2248 = vmatprep.subr.mxu0 0.0
    %2249 = vmatpush1.msra.mxu0 0.0
    %2250 = vmatprep.subr.mxu0 0.0
    %2251 = vmatpush1.msra.mxu0 0.0
    %2252 = vmatprep.subr.mxu0 0.0
    %2253 = vmatpush1.msra.mxu0 0.0
    %2254 = vmatprep.subr.mxu0 0.0
    %2255 = vmatpush1.msra.mxu0 0.0
    %2256 = vmatprep.subr.mxu0 0.0
    %2257 = vmatpush1.msra.mxu0 0.0
    %2258 = vmatprep.subr.mxu0 0.0
    %2259 = vmatpush1.msra.mxu0 0.0
    %2260 = vmatprep.subr.mxu0 0.0
    %2261 = vmatpush1.msra.mxu0 0.0
    %2262 = vmatprep.subr.mxu0 0.0
    %2263 = vmatpush1.msra.mxu0 0.0
    %2264 = vmatprep.subr.mxu0 0.0
    %2265 = vmatpush1.msra.mxu0 0.0
    %2266 = vmatprep.subr.mxu0 0.0
    %2267 = vmatpush1.msra.mxu0 0.0
    %2268 = vmatprep.subr.mxu0 0.0
    %2269 = vmatpush1.msra.mxu0 0.0
    %2270 = vmatprep.subr.mxu0 0.0
    %2271 = vmatpush1.msra.mxu0 0.0
    %2272 = vmatprep.subr.mxu0 0.0
    %2273 = vmatpush1.msra.mxu0 0.0
    %2274 = vmatprep.subr.mxu0 0.0
    %2275 = vmatpush1.msra.mxu0 0.0
    %2276 = vmatprep.subr.mxu0 0.0
    %2277 = vmatpush1.msra.mxu0 0.0
    %2278 = vmatprep.subr.mxu0 0.0
    %2279 = vmatpush1.msra.mxu0 0.0
    %2280 = vmatprep.subr.mxu0 0.0
    %2281 = vmatpush1.msra.mxu0 0.0
    %2282 = vmatprep.subr.mxu0 0.0
    %2283 = vmatpush1.msra.mxu0 0.0
    %2284 = vmatprep.subr.mxu0 0.0
    %2285 = vmatpush1.msra.mxu0 0.0
    %2286 = vmatprep.subr.mxu0 0.0
    %2287 = vmatpush1.msra.mxu0 0.0
    %2288 = vmatprep.subr.mxu0 0.0
    %2289 = vmatpush1.msra.mxu0 0.0
    %2290 = vmatprep.subr.mxu0 0.0
    %2291 = vmatpush1.msra.mxu0 0.0
    %2292 = vmatprep.subr.mxu0 0.0
    %2293 = vmatpush1.msra.mxu0 0.0
    %2294 = vmatprep.subr.mxu0 0.0
    %2295 = vmatpush1.msra.mxu0 0.0
    %2296 = vmatprep.subr.mxu0 0.0
    %2297 = vmatpush1.msra.mxu0 0.0
    %2298 = vmatprep.subr.mxu0 0.0
    %2299 = vmatpush1.msra.mxu0 0.0
    %2300 = vmatprep.subr.mxu0 0.0
    %2301 = vmatpush1.msra.mxu0 0.0
    %2302 = vmatprep.mubr.f32.mxu0 0.0
    %2303 = vmatmul.mubr.f32.gmra.mrb[0].mxu0 %v2126
    %v2304 = vpop.f32.mrb[0].mxu0
    %v2305 = vadd.f32 0.0, %v2304
    %v2306 = vpop.f32.mrb[0].mxu0
    %v2307 = vadd.f32 0.0, %v2306
    %2308 = vmatprep.mubr.f32.mxu0 0.0
    %2309 = vmatmul.mubr.f32.gmra.mrb[0].mxu0 %v2129
    %v2310 = vpop.f32.mrb[0].mxu0
    %v2311 = vadd.f32 0.0, %v2310
    %v2312 = vpop.f32.mrb[0].mxu0
    %v2313 = vadd.f32 0.0, %v2312
    %2314 = vmatprep.mubr.f32.mxu0 0.0
    %2315 = vmatmul.mubr.f32.gmra.mrb[0].mxu0 %v2132
    %v2316 = vpop.f32.mrb[0].mxu0
    %v2317 = vadd.f32 0.0, %v2316
    %v2318 = vpop.f32.mrb[0].mxu0
    %v2319 = vadd.f32 0.0, %v2318
    %2320 = vmatprep.mubr.f32.mxu0 0.0
    %2321 = vmatmul.mubr.f32.gmra.mrb[0].mxu0 %v2135
    %v2322 = vpop.f32.mrb[0].mxu0
    %v2323 = vadd.f32 0.0, %v2322
    %v2324 = vpop.f32.mrb[0].mxu0
    %v2325 = vadd.f32 0.0, %v2324
    %2326 = vdwg.mxu0
    %v2327 = vadd.f32 %v2079, %v2216
    %v2328 = vadd.f32 %v2080, %v2218
    %v2329 = vadd.f32 %v2081, %v2305
    %v2330 = vadd.f32 %v2082, %v2307
    %v2331 = vadd.f32 %v2083, %v2222
    %v2332 = vadd.f32 %v2084, %v2224
    %v2333 = vadd.f32 %v2085, %v2311
    %v2334 = vadd.f32 %v2086, %v2313
    %v2335 = vadd.f32 %v2087, %v2228
    %v2336 = vadd.f32 %v2088, %v2230
    %v2337 = vadd.f32 %v2089, %v2317
    %v2338 = vadd.f32 %v2090, %v2319
    %v2339 = vadd.f32 %v2091, %v2234
    %v2340 = vadd.f32 %v2092, %v2236
    %v2341 = vadd.f32 %v2093, %v2323
    %v2342 = vadd.f32 %v2094, %v2325
    %v2343 = vld [vmem:[%s2] sm:$0xff]
    %v2344 = vld [vmem:[%s2 + $0x8] sm:$0xff]
    %v2345 = vld [vmem:[%s2 + $0x10] sm:$0xff]
    %v2346 = vld [vmem:[%s2 + $0x18] sm:$0xff]
    %2348 = vset.pattern.permute.xlu0 0
    %2349 = vperm.xlu0 %2348, %v2343
    %v2350 = vpop.permute.xlu0 %2349
    %2353 = vset.pattern.permute.xlu0 0
    %2354 = vperm.xlu0 %2353, %v2344
    %v2355 = vpop.permute.xlu0 %2354
    %2358 = vset.pattern.permute.xlu0 0
    %2359 = vperm.xlu0 %2358, %v2345
    %v2360 = vpop.permute.xlu0 %2359
    %2363 = vset.pattern.permute.xlu0 0
    %2364 = vperm.xlu0 %2363, %v2346
    %v2365 = vpop.permute.xlu0 %2364
    %v2367 = vadd.f32 %v2327, %v2350
    %v2368 = vadd.f32 %v2328, %v2350
    %v2369 = vadd.f32 %v2329, %v2350
    %v2370 = vadd.f32 %v2330, %v2350
    %v2371 = vadd.f32 %v2331, %v2355
    %v2372 = vadd.f32 %v2332, %v2355
    %v2373 = vadd.f32 %v2333, %v2355
    %v2374 = vadd.f32 %v2334, %v2355
    %v2375 = vadd.f32 %v2335, %v2360
    %v2376 = vadd.f32 %v2336, %v2360
    %v2377 = vadd.f32 %v2337, %v2360
    %v2378 = vadd.f32 %v2338, %v2360
    %v2379 = vadd.f32 %v2339, %v2365
    %v2380 = vadd.f32 %v2340, %v2365
    %v2381 = vadd.f32 %v2341, %v2365
    %v2382 = vadd.f32 %v2342, %v2365
    %v2383 = vmax.f32 %v2367, 0.0
    %v2384 = vmax.f32 %v2368, 0.0
    %v2385 = vmax.f32 %v2369, 0.0
    %v2386 = vmax.f32 %v2370, 0.0
    %v2387 = vmax.f32 %v2371, 0.0
    %v2388 = vmax.f32 %v2372, 0.0
    %v2389 = vmax.f32 %v2373, 0.0
    %v2390 = vmax.f32 %v2374, 0.0
    %v2391 = vmax.f32 %v2375, 0.0
    %v2392 = vmax.f32 %v2376, 0.0
    %v2393 = vmax.f32 %v2377, 0.0
    %v2394 = vmax.f32 %v2378, 0.0
    %v2395 = vmax.f32 %v2379, 0.0
    %v2396 = vmax.f32 %v2380, 0.0
    %v2397 = vmax.f32 %v2381, 0.0
    %v2398 = vmax.f32 %v2382, 0.0
    %2399 = vst [vmem:[#allocation2] sm:$0xff] %v2383
    %2400 = vst [vmem:[#allocation2 + $0x8] sm:$0xff] %v2384
    %2401 = vst [vmem:[#allocation2 + $0x10] sm:$0xff] %v2385
    %2402 = vst [vmem:[#allocation2 + $0x18] sm:$0xff] %v2386
    %2403 = vst [vmem:[#allocation2 + $0x20] sm:$0xff] %v2387
    %2404 = vst [vmem:[#allocation2 + $0x28] sm:$0xff] %v2388
    %2405 = vst [vmem:[#allocation2 + $0x30] sm:$0xff] %v2389
    %2406 = vst [vmem:[#allocation2 + $0x38] sm:$0xff] %v2390
    %2407 = vst [vmem:[#allocation2 + $0x40] sm:$0xff] %v2391
    %2408 = vst [vmem:[#allocation2 + $0x48] sm:$0xff] %v2392
    %2409 = vst [vmem:[#allocation2 + $0x50] sm:$0xff] %v2393
    %2410 = vst [vmem:[#allocation2 + $0x58] sm:$0xff] %v2394
    %2411 = vst [vmem:[#allocation2 + $0x60] sm:$0xff] %v2395
    %2412 = vst [vmem:[#allocation2 + $0x68] sm:$0xff] %v2396
    %2413 = vst [vmem:[#allocation2 + $0x70] sm:$0xff] %v2397
    %2414 = vst [vmem:[#allocation2 + $0x78] sm:$0xff] %v2398
    %v2415 = vld [vmem:[%s3] sm:$0xff]
    %v2416 = vld [vmem:[%s3 + $0x8] sm:$0xff]
    %v2417 = vld [vmem:[%s3 + $0x10] sm:$0xff]
    %v2418 = vld [vmem:[%s3 + $0x18] sm:$0xff]
    %2419 = vrot.lane.b32.xlu0 %v2383, 17
    %v2420 = vpop.permute.xlu0 %2419
    %2421 = vrot.lane.b32.xlu0 %v2387, 17
    %v2422 = vpop.permute.xlu0 %2421
    %2423 = vrot.lane.b32.xlu0 %v2391, 17
    %v2424 = vpop.permute.xlu0 %2423
    %2425 = vrot.lane.b32.xlu0 %v2395, 17
    %v2426 = vpop.permute.xlu0 %2425
    %2427 = vrot.lane.b32.xlu0 %v2384, 17
    %v2428 = vpop.permute.xlu0 %2427
    %2429 = vrot.lane.b32.xlu0 %v2388, 17
    %v2430 = vpop.permute.xlu0 %2429
    %2431 = vrot.lane.b32.xlu0 %v2392, 17
    %v2432 = vpop.permute.xlu0 %2431
    %2433 = vrot.lane.b32.xlu0 %v2396, 17
    %v2434 = vpop.permute.xlu0 %2433
    %2435 = vrot.lane.b32.xlu0 %v2385, 17
    %v2436 = vpop.permute.xlu0 %2435
    %2437 = vrot.lane.b32.xlu0 %v2389, 17
    %v2438 = vpop.permute.xlu0 %2437
    %2439 = vrot.lane.b32.xlu0 %v2393, 17
    %v2440 = vpop.permute.xlu0 %2439
    %2441 = vrot.lane.b32.xlu0 %v2397, 17
    %v2442 = vpop.permute.xlu0 %2441
    %2443 = vrot.lane.b32.xlu0 %v2386, 17
    %v2444 = vpop.permute.xlu0 %2443
    %2445 = vrot.lane.b32.xlu0 %v2390, 17
    %v2446 = vpop.permute.xlu0 %2445
    %2447 = vrot.lane.b32.xlu0 %v2394, 17
    %v2448 = vpop.permute.xlu0 %2447
    %2449 = vrot.lane.b32.xlu0 %v2398, 17
    %v2450 = vpop.permute.xlu0 %2449
    %v2451 = vsel %vm183, %v2436, %v2444
    %v2452 = vsel %vm183, %v2438, %v2446
    %v2453 = vsel %vm183, %v2440, %v2448
    %v2454 = vsel %vm183, %v2442, %v2450
    %v2455 = vsel %vm183, %v2428, %v2436
    %v2456 = vsel %vm183, %v2430, %v2438
    %v2457 = vsel %vm183, %v2432, %v2440
    %v2458 = vsel %vm183, %v2434, %v2442
    %v2459 = vsel %vm183, %v2420, %v2428
    %v2460 = vsel %vm183, %v2422, %v2430
    %v2461 = vsel %vm183, %v2424, %v2432
    %v2462 = vsel %vm183, %v2426, %v2434
    %v2463 = vsel %vm183, %v2444, %v2420
    %v2464 = vsel %vm183, %v2446, %v2422
    %v2465 = vsel %vm183, %v2448, %v2424
    %v2466 = vsel %vm183, %v2450, %v2426
    %v2467 = vsel %vm192, %v2463, 0.0
    %v2468 = vsel %vm193, %v2459, 0.0
    %v2469 = vsel %vm194, %v2455, 0.0
    %v2470 = vsel %vm195, %v2451, 0.0
    %v2471 = vsel %vm192, %v2464, 0.0
    %v2472 = vsel %vm193, %v2460, 0.0
    %v2473 = vsel %vm194, %v2456, 0.0
    %v2474 = vsel %vm195, %v2452, 0.0
    %v2475 = vsel %vm192, %v2465, 0.0
    %v2476 = vsel %vm193, %v2461, 0.0
    %v2477 = vsel %vm194, %v2457, 0.0
    %v2478 = vsel %vm195, %v2453, 0.0
    %v2479 = vsel %vm192, %v2466, 0.0
    %v2480 = vsel %vm193, %v2462, 0.0
    %v2481 = vsel %vm194, %v2458, 0.0
    %v2482 = vsel %vm195, %v2454, 0.0
    %s2483 = scalar_lea.vmem %s3, 32
    %v2484 = vld [vmem:[%s2483] sm:$0xff]
    %v2485 = vld [vmem:[%s2483 + $0x8] sm:$0xff]
    %v2486 = vld [vmem:[%s2483 + $0x10] sm:$0xff]
    %v2487 = vld [vmem:[%s2483 + $0x18] sm:$0xff]
    %2488 = vrot.lane.b32.xlu0 %v2383, 16
    %v2489 = vpop.permute.xlu0 %2488
    %2490 = vrot.lane.b32.xlu0 %v2387, 16
    %v2491 = vpop.permute.xlu0 %2490
    %2492 = vrot.lane.b32.xlu0 %v2391, 16
    %v2493 = vpop.permute.xlu0 %2492
    %2494 = vrot.lane.b32.xlu0 %v2395, 16
    %v2495 = vpop.permute.xlu0 %2494
    %2496 = vrot.lane.b32.xlu0 %v2384, 16
    %v2497 = vpop.permute.xlu0 %2496
    %2498 = vrot.lane.b32.xlu0 %v2388, 16
    %v2499 = vpop.permute.xlu0 %2498
    %2500 = vrot.lane.b32.xlu0 %v2392, 16
    %v2501 = vpop.permute.xlu0 %2500
    %2502 = vrot.lane.b32.xlu0 %v2396, 16
    %v2503 = vpop.permute.xlu0 %2502
    %2504 = vrot.lane.b32.xlu0 %v2385, 16
    %v2505 = vpop.permute.xlu0 %2504
    %2506 = vrot.lane.b32.xlu0 %v2389, 16
    %v2507 = vpop.permute.xlu0 %2506
    %2508 = vrot.lane.b32.xlu0 %v2393, 16
    %v2509 = vpop.permute.xlu0 %2508
    %2510 = vrot.lane.b32.xlu0 %v2397, 16
    %v2511 = vpop.permute.xlu0 %2510
    %2512 = vrot.lane.b32.xlu0 %v2386, 16
    %v2513 = vpop.permute.xlu0 %2512
    %2514 = vrot.lane.b32.xlu0 %v2390, 16
    %v2515 = vpop.permute.xlu0 %2514
    %2516 = vrot.lane.b32.xlu0 %v2394, 16
    %v2517 = vpop.permute.xlu0 %2516
    %2518 = vrot.lane.b32.xlu0 %v2398, 16
    %v2519 = vpop.permute.xlu0 %2518
    %v2520 = vsel %vm213, %v2505, %v2513
    %v2521 = vsel %vm213, %v2507, %v2515
    %v2522 = vsel %vm213, %v2509, %v2517
    %v2523 = vsel %vm213, %v2511, %v2519
    %v2524 = vsel %vm213, %v2497, %v2505
    %v2525 = vsel %vm213, %v2499, %v2507
    %v2526 = vsel %vm213, %v2501, %v2509
    %v2527 = vsel %vm213, %v2503, %v2511
    %v2528 = vsel %vm213, %v2489, %v2497
    %v2529 = vsel %vm213, %v2491, %v2499
    %v2530 = vsel %vm213, %v2493, %v2501
    %v2531 = vsel %vm213, %v2495, %v2503
    %v2532 = vsel %vm213, %v2513, %v2489
    %v2533 = vsel %vm213, %v2515, %v2491
    %v2534 = vsel %vm213, %v2517, %v2493
    %v2535 = vsel %vm213, %v2519, %v2495
    %v2536 = vsel %vm222, %v2532, 0.0
    %v2537 = vsel %vm223, %v2528, 0.0
    %v2538 = vsel %vm224, %v2524, 0.0
    %v2539 = vsel %vm225, %v2520, 0.0
    %v2540 = vsel %vm222, %v2533, 0.0
    %v2541 = vsel %vm223, %v2529, 0.0
    %v2542 = vsel %vm224, %v2525, 0.0
    %v2543 = vsel %vm225, %v2521, 0.0
    %v2544 = vsel %vm222, %v2534, 0.0
    %v2545 = vsel %vm223, %v2530, 0.0
    %v2546 = vsel %vm224, %v2526, 0.0
    %v2547 = vsel %vm225, %v2522, 0.0
    %v2548 = vsel %vm222, %v2535, 0.0
    %v2549 = vsel %vm223, %v2531, 0.0
    %v2550 = vsel %vm224, %v2527, 0.0
    %v2551 = vsel %vm225, %v2523, 0.0
    %vm2552 = vcmask 261120
    %v2554 = vsel %vm2552, %v2484, 0
    %v2557 = vsel %vm2552, %v2485, 0
    %v2560 = vsel %vm2552, %v2486, 0
    %v2563 = vsel %vm2552, %v2487, 0
    %2565 = vmatprep.subr.mxu0 %v2537
    %2566 = vmatpush1.msra.mxu0 %v2536
    %2567 = vmatprep.subr.mxu0 %v2541
    %2568 = vmatpush1.msra.mxu0 %v2540
    %2569 = vmatprep.subr.mxu0 %v2545
    %2570 = vmatpush1.msra.mxu0 %v2544
    %2571 = vmatprep.subr.mxu0 %v2549
    %2572 = vmatpush1.msra.mxu0 %v2548
    %2573 = vmatprep.subr.mxu0 0.0
    %2574 = vmatpush1.msra.mxu0 0.0
    %2575 = vmatprep.subr.mxu0 0.0
    %2576 = vmatpush1.msra.mxu0 0.0
    %2577 = vmatprep.subr.mxu0 0.0
    %2578 = vmatpush1.msra.mxu0 0.0
    %2579 = vmatprep.subr.mxu0 0.0
    %2580 = vmatpush1.msra.mxu0 0.0
    %2581 = vmatprep.subr.mxu0 0.0
    %2582 = vmatpush1.msra.mxu0 0.0
    %2583 = vmatprep.subr.mxu0 0.0
    %2584 = vmatpush1.msra.mxu0 0.0
    %2585 = vmatprep.subr.mxu0 0.0
    %2586 = vmatpush1.msra.mxu0 0.0
    %2587 = vmatprep.subr.mxu0 0.0
    %2588 = vmatpush1.msra.mxu0 0.0
    %2589 = vmatprep.subr.mxu0 0.0
    %2590 = vmatpush1.msra.mxu0 0.0
    %2591 = vmatprep.subr.mxu0 0.0
    %2592 = vmatpush1.msra.mxu0 0.0
    %2593 = vmatprep.subr.mxu0 0.0
    %2594 = vmatpush1.msra.mxu0 0.0
    %2595 = vmatprep.subr.mxu0 0.0
    %2596 = vmatpush1.msra.mxu0 0.0
    %2597 = vmatprep.subr.mxu0 0.0
    %2598 = vmatpush1.msra.mxu0 0.0
    %2599 = vmatprep.subr.mxu0 0.0
    %2600 = vmatpush1.msra.mxu0 0.0
    %2601 = vmatprep.subr.mxu0 0.0
    %2602 = vmatpush1.msra.mxu0 0.0
    %2603 = vmatprep.subr.mxu0 0.0
    %2604 = vmatpush1.msra.mxu0 0.0
    %2605 = vmatprep.subr.mxu0 0.0
    %2606 = vmatpush1.msra.mxu0 0.0
    %2607 = vmatprep.subr.mxu0 0.0
    %2608 = vmatpush1.msra.mxu0 0.0
    %2609 = vmatprep.subr.mxu0 0.0
    %2610 = vmatpush1.msra.mxu0 0.0
    %2611 = vmatprep.subr.mxu0 0.0
    %2612 = vmatpush1.msra.mxu0 0.0
    %2613 = vmatprep.subr.mxu0 0.0
    %2614 = vmatpush1.msra.mxu0 0.0
    %2615 = vmatprep.subr.mxu0 0.0
    %2616 = vmatpush1.msra.mxu0 0.0
    %2617 = vmatprep.subr.mxu0 0.0
    %2618 = vmatpush1.msra.mxu0 0.0
    %2619 = vmatprep.subr.mxu0 0.0
    %2620 = vmatpush1.msra.mxu0 0.0
    %2621 = vmatprep.subr.mxu0 0.0
    %2622 = vmatpush1.msra.mxu0 0.0
    %2623 = vmatprep.subr.mxu0 0.0
    %2624 = vmatpush1.msra.mxu0 0.0
    %2625 = vmatprep.subr.mxu0 0.0
    %2626 = vmatpush1.msra.mxu0 0.0
    %2627 = vmatprep.subr.mxu0 0.0
    %2628 = vmatpush1.msra.mxu0 0.0
    %2629 = vmatprep.mubr.f32.mxu0 0.0
    %2630 = vmatmul.mubr.f32.gmra.mrb[0].mxu0 %v2554
    %v2631 = vpop.f32.mrb[0].mxu0
    %v2632 = vadd.f32 0.0, %v2631
    %v2633 = vpop.f32.mrb[0].mxu0
    %v2634 = vadd.f32 0.0, %v2633
    %2635 = vmatprep.mubr.f32.mxu0 0.0
    %2636 = vmatmul.mubr.f32.gmra.mrb[0].mxu0 %v2557
    %v2637 = vpop.f32.mrb[0].mxu0
    %v2638 = vadd.f32 0.0, %v2637
    %v2639 = vpop.f32.mrb[0].mxu0
    %v2640 = vadd.f32 0.0, %v2639
    %2641 = vmatprep.mubr.f32.mxu0 0.0
    %2642 = vmatmul.mubr.f32.gmra.mrb[0].mxu0 %v2560
    %v2643 = vpop.f32.mrb[0].mxu0
    %v2644 = vadd.f32 0.0, %v2643
    %v2645 = vpop.f32.mrb[0].mxu0
    %v2646 = vadd.f32 0.0, %v2645
    %2647 = vmatprep.mubr.f32.mxu0 0.0
    %2648 = vmatmul.mubr.f32.gmra.mrb[0].mxu0 %v2563
    %v2649 = vpop.f32.mrb[0].mxu0
    %v2650 = vadd.f32 0.0, %v2649
    %v2651 = vpop.f32.mrb[0].mxu0
    %v2652 = vadd.f32 0.0, %v2651
    %2653 = vdwg.mxu0
    %2654 = vmatprep.subr.mxu0 %v2539
    %2655 = vmatpush1.msra.mxu0 %v2538
    %2656 = vmatprep.subr.mxu0 %v2543
    %2657 = vmatpush1.msra.mxu0 %v2542
    %2658 = vmatprep.subr.mxu0 %v2547
    %2659 = vmatpush1.msra.mxu0 %v2546
    %2660 = vmatprep.subr.mxu0 %v2551
    %2661 = vmatpush1.msra.mxu0 %v2550
    %2662 = vmatprep.subr.mxu0 0.0
    %2663 = vmatpush1.msra.mxu0 0.0
    %2664 = vmatprep.subr.mxu0 0.0
    %2665 = vmatpush1.msra.mxu0 0.0
    %2666 = vmatprep.subr.mxu0 0.0
    %2667 = vmatpush1.msra.mxu0 0.0
    %2668 = vmatprep.subr.mxu0 0.0
    %2669 = vmatpush1.msra.mxu0 0.0
    %2670 = vmatprep.subr.mxu0 0.0
    %2671 = vmatpush1.msra.mxu0 0.0
    %2672 = vmatprep.subr.mxu0 0.0
    %2673 = vmatpush1.msra.mxu0 0.0
    %2674 = vmatprep.subr.mxu0 0.0
    %2675 = vmatpush1.msra.mxu0 0.0
    %2676 = vmatprep.subr.mxu0 0.0
    %2677 = vmatpush1.msra.mxu0 0.0
    %2678 = vmatprep.subr.mxu0 0.0
    %2679 = vmatpush1.msra.mxu0 0.0
    %2680 = vmatprep.subr.mxu0 0.0
    %2681 = vmatpush1.msra.mxu0 0.0
    %2682 = vmatprep.subr.mxu0 0.0
    %2683 = vmatpush1.msra.mxu0 0.0
    %2684 = vmatprep.subr.mxu0 0.0
    %2685 = vmatpush1.msra.mxu0 0.0
    %2686 = vmatprep.subr.mxu0 0.0
    %2687 = vmatpush1.msra.mxu0 0.0
    %2688 = vmatprep.subr.mxu0 0.0
    %2689 = vmatpush1.msra.mxu0 0.0
    %2690 = vmatprep.subr.mxu0 0.0
    %2691 = vmatpush1.msra.mxu0 0.0
    %2692 = vmatprep.subr.mxu0 0.0
    %2693 = vmatpush1.msra.mxu0 0.0
    %2694 = vmatprep.subr.mxu0 0.0
    %2695 = vmatpush1.msra.mxu0 0.0
    %2696 = vmatprep.subr.mxu0 0.0
    %2697 = vmatpush1.msra.mxu0 0.0
    %2698 = vmatprep.subr.mxu0 0.0
    %2699 = vmatpush1.msra.mxu0 0.0
    %2700 = vmatprep.subr.mxu0 0.0
    %2701 = vmatpush1.msra.mxu0 0.0
    %2702 = vmatprep.subr.mxu0 0.0
    %2703 = vmatpush1.msra.mxu0 0.0
    %2704 = vmatprep.subr.mxu0 0.0
    %2705 = vmatpush1.msra.mxu0 0.0
    %2706 = vmatprep.subr.mxu0 0.0
    %2707 = vmatpush1.msra.mxu0 0.0
    %2708 = vmatprep.subr.mxu0 0.0
    %2709 = vmatpush1.msra.mxu0 0.0
    %2710 = vmatprep.subr.mxu0 0.0
    %2711 = vmatpush1.msra.mxu0 0.0
    %2712 = vmatprep.subr.mxu0 0.0
    %2713 = vmatpush1.msra.mxu0 0.0
    %2714 = vmatprep.subr.mxu0 0.0
    %2715 = vmatpush1.msra.mxu0 0.0
    %2716 = vmatprep.subr.mxu0 0.0
    %2717 = vmatpush1.msra.mxu0 0.0
    %2718 = vmatprep.mubr.f32.mxu0 0.0
    %2719 = vmatmul.mubr.f32.gmra.mrb[0].mxu0 %v2554
    %v2720 = vpop.f32.mrb[0].mxu0
    %v2721 = vadd.f32 0.0, %v2720
    %v2722 = vpop.f32.mrb[0].mxu0
    %v2723 = vadd.f32 0.0, %v2722
    %2724 = vmatprep.mubr.f32.mxu0 0.0
    %2725 = vmatmul.mubr.f32.gmra.mrb[0].mxu0 %v2557
    %v2726 = vpop.f32.mrb[0].mxu0
    %v2727 = vadd.f32 0.0, %v2726
    %v2728 = vpop.f32.mrb[0].mxu0
    %v2729 = vadd.f32 0.0, %v2728
    %2730 = vmatprep.mubr.f32.mxu0 0.0
    %2731 = vmatmul.mubr.f32.gmra.mrb[0].mxu0 %v2560
    %v2732 = vpop.f32.mrb[0].mxu0
    %v2733 = vadd.f32 0.0, %v2732
    %v2734 = vpop.f32.mrb[0].mxu0
    %v2735 = vadd.f32 0.0, %v2734
    %2736 = vmatprep.mubr.f32.mxu0 0.0
    %2737 = vmatmul.mubr.f32.gmra.mrb[0].mxu0 %v2563
    %v2738 = vpop.f32.mrb[0].mxu0
    %v2739 = vadd.f32 0.0, %v2738
    %v2740 = vpop.f32.mrb[0].mxu0
    %v2741 = vadd.f32 0.0, %v2740
    %2742 = vdwg.mxu0
    %v2744 = vsel %vm2552, %v2415, 0
    %v2747 = vsel %vm2552, %v2416, 0
    %v2750 = vsel %vm2552, %v2417, 0
    %v2753 = vsel %vm2552, %v2418, 0
    %2755 = vmatprep.subr.mxu0 %v2468
    %2756 = vmatpush1.msra.mxu0 %v2467
    %2757 = vmatprep.subr.mxu0 %v2472
    %2758 = vmatpush1.msra.mxu0 %v2471
    %2759 = vmatprep.subr.mxu0 %v2476
    %2760 = vmatpush1.msra.mxu0 %v2475
    %2761 = vmatprep.subr.mxu0 %v2480
    %2762 = vmatpush1.msra.mxu0 %v2479
    %2763 = vmatprep.subr.mxu0 0.0
    %2764 = vmatpush1.msra.mxu0 0.0
    %2765 = vmatprep.subr.mxu0 0.0
    %2766 = vmatpush1.msra.mxu0 0.0
    %2767 = vmatprep.subr.mxu0 0.0
    %2768 = vmatpush1.msra.mxu0 0.0
    %2769 = vmatprep.subr.mxu0 0.0
    %2770 = vmatpush1.msra.mxu0 0.0
    %2771 = vmatprep.subr.mxu0 0.0
    %2772 = vmatpush1.msra.mxu0 0.0
    %2773 = vmatprep.subr.mxu0 0.0
    %2774 = vmatpush1.msra.mxu0 0.0
    %2775 = vmatprep.subr.mxu0 0.0
    %2776 = vmatpush1.msra.mxu0 0.0
    %2777 = vmatprep.subr.mxu0 0.0
    %2778 = vmatpush1.msra.mxu0 0.0
    %2779 = vmatprep.subr.mxu0 0.0
    %2780 = vmatpush1.msra.mxu0 0.0
    %2781 = vmatprep.subr.mxu0 0.0
    %2782 = vmatpush1.msra.mxu0 0.0
    %2783 = vmatprep.subr.mxu0 0.0
    %2784 = vmatpush1.msra.mxu0 0.0
    %2785 = vmatprep.subr.mxu0 0.0
    %2786 = vmatpush1.msra.mxu0 0.0
    %2787 = vmatprep.subr.mxu0 0.0
    %2788 = vmatpush1.msra.mxu0 0.0
    %2789 = vmatprep.subr.mxu0 0.0
    %2790 = vmatpush1.msra.mxu0 0.0
    %2791 = vmatprep.subr.mxu0 0.0
    %2792 = vmatpush1.msra.mxu0 0.0
    %2793 = vmatprep.subr.mxu0 0.0
    %2794 = vmatpush1.msra.mxu0 0.0
    %2795 = vmatprep.subr.mxu0 0.0
    %2796 = vmatpush1.msra.mxu0 0.0
    %2797 = vmatprep.subr.mxu0 0.0
    %2798 = vmatpush1.msra.mxu0 0.0
    %2799 = vmatprep.subr.mxu0 0.0
    %2800 = vmatpush1.msra.mxu0 0.0
    %2801 = vmatprep.subr.mxu0 0.0
    %2802 = vmatpush1.msra.mxu0 0.0
    %2803 = vmatprep.subr.mxu0 0.0
    %2804 = vmatpush1.msra.mxu0 0.0
    %2805 = vmatprep.subr.mxu0 0.0
    %2806 = vmatpush1.msra.mxu0 0.0
    %2807 = vmatprep.subr.mxu0 0.0
    %2808 = vmatpush1.msra.mxu0 0.0
    %2809 = vmatprep.subr.mxu0 0.0
    %2810 = vmatpush1.msra.mxu0 0.0
    %2811 = vmatprep.subr.mxu0 0.0
    %2812 = vmatpush1.msra.mxu0 0.0
    %2813 = vmatprep.subr.mxu0 0.0
    %2814 = vmatpush1.msra.mxu0 0.0
    %2815 = vmatprep.subr.mxu0 0.0
    %2816 = vmatpush1.msra.mxu0 0.0
    %2817 = vmatprep.subr.mxu0 0.0
    %2818 = vmatpush1.msra.mxu0 0.0
    %2819 = vmatprep.mubr.f32.mxu0 0.0
    %2820 = vmatmul.mubr.f32.gmra.mrb[0].mxu0 %v2744
    %v2821 = vpop.f32.mrb[0].mxu0
    %v2822 = vadd.f32 %v2632, %v2821
    %v2823 = vpop.f32.mrb[0].mxu0
    %v2824 = vadd.f32 %v2634, %v2823
    %2825 = vmatprep.mubr.f32.mxu0 0.0
    %2826 = vmatmul.mubr.f32.gmra.mrb[0].mxu0 %v2747
    %v2827 = vpop.f32.mrb[0].mxu0
    %v2828 = vadd.f32 %v2638, %v2827
    %v2829 = vpop.f32.mrb[0].mxu0
    %v2830 = vadd.f32 %v2640, %v2829
    %2831 = vmatprep.mubr.f32.mxu0 0.0
    %2832 = vmatmul.mubr.f32.gmra.mrb[0].mxu0 %v2750
    %v2833 = vpop.f32.mrb[0].mxu0
    %v2834 = vadd.f32 %v2644, %v2833
    %v2835 = vpop.f32.mrb[0].mxu0
    %v2836 = vadd.f32 %v2646, %v2835
    %2837 = vmatprep.mubr.f32.mxu0 0.0
    %2838 = vmatmul.mubr.f32.gmra.mrb[0].mxu0 %v2753
    %v2839 = vpop.f32.mrb[0].mxu0
    %v2840 = vadd.f32 %v2650, %v2839
    %v2841 = vpop.f32.mrb[0].mxu0
    %v2842 = vadd.f32 %v2652, %v2841
    %2843 = vdwg.mxu0
    %2844 = vmatprep.subr.mxu0 %v2470
    %2845 = vmatpush1.msra.mxu0 %v2469
    %2846 = vmatprep.subr.mxu0 %v2474
    %2847 = vmatpush1.msra.mxu0 %v2473
    %2848 = vmatprep.subr.mxu0 %v2478
    %2849 = vmatpush1.msra.mxu0 %v2477
    %2850 = vmatprep.subr.mxu0 %v2482
    %2851 = vmatpush1.msra.mxu0 %v2481
    %2852 = vmatprep.subr.mxu0 0.0
    %2853 = vmatpush1.msra.mxu0 0.0
    %2854 = vmatprep.subr.mxu0 0.0
    %2855 = vmatpush1.msra.mxu0 0.0
    %2856 = vmatprep.subr.mxu0 0.0
    %2857 = vmatpush1.msra.mxu0 0.0
    %2858 = vmatprep.subr.mxu0 0.0
    %2859 = vmatpush1.msra.mxu0 0.0
    %2860 = vmatprep.subr.mxu0 0.0
    %2861 = vmatpush1.msra.mxu0 0.0
    %2862 = vmatprep.subr.mxu0 0.0
    %2863 = vmatpush1.msra.mxu0 0.0
    %2864 = vmatprep.subr.mxu0 0.0
    %2865 = vmatpush1.msra.mxu0 0.0
    %2866 = vmatprep.subr.mxu0 0.0
    %2867 = vmatpush1.msra.mxu0 0.0
    %2868 = vmatprep.subr.mxu0 0.0
    %2869 = vmatpush1.msra.mxu0 0.0
    %2870 = vmatprep.subr.mxu0 0.0
    %2871 = vmatpush1.msra.mxu0 0.0
    %2872 = vmatprep.subr.mxu0 0.0
    %2873 = vmatpush1.msra.mxu0 0.0
    %2874 = vmatprep.subr.mxu0 0.0
    %2875 = vmatpush1.msra.mxu0 0.0
    %2876 = vmatprep.subr.mxu0 0.0
    %2877 = vmatpush1.msra.mxu0 0.0
    %2878 = vmatprep.subr.mxu0 0.0
    %2879 = vmatpush1.msra.mxu0 0.0
    %2880 = vmatprep.subr.mxu0 0.0
    %2881 = vmatpush1.msra.mxu0 0.0
    %2882 = vmatprep.subr.mxu0 0.0
    %2883 = vmatpush1.msra.mxu0 0.0
    %2884 = vmatprep.subr.mxu0 0.0
    %2885 = vmatpush1.msra.mxu0 0.0
    %2886 = vmatprep.subr.mxu0 0.0
    %2887 = vmatpush1.msra.mxu0 0.0
    %2888 = vmatprep.subr.mxu0 0.0
    %2889 = vmatpush1.msra.mxu0 0.0
    %2890 = vmatprep.subr.mxu0 0.0
    %2891 = vmatpush1.msra.mxu0 0.0
    %2892 = vmatprep.subr.mxu0 0.0
    %2893 = vmatpush1.msra.mxu0 0.0
    %2894 = vmatprep.subr.mxu0 0.0
    %2895 = vmatpush1.msra.mxu0 0.0
    %2896 = vmatprep.subr.mxu0 0.0
    %2897 = vmatpush1.msra.mxu0 0.0
    %2898 = vmatprep.subr.mxu0 0.0
    %2899 = vmatpush1.msra.mxu0 0.0
    %2900 = vmatprep.subr.mxu0 0.0
    %2901 = vmatpush1.msra.mxu0 0.0
    %2902 = vmatprep.subr.mxu0 0.0
    %2903 = vmatpush1.msra.mxu0 0.0
    %2904 = vmatprep.subr.mxu0 0.0
    %2905 = vmatpush1.msra.mxu0 0.0
    %2906 = vmatprep.subr.mxu0 0.0
    %2907 = vmatpush1.msra.mxu0 0.0
    %2908 = vmatprep.mubr.f32.mxu0 0.0
    %2909 = vmatmul.mubr.f32.gmra.mrb[0].mxu0 %v2744
    %v2910 = vpop.f32.mrb[0].mxu0
    %v2911 = vadd.f32 %v2721, %v2910
    %v2912 = vpop.f32.mrb[0].mxu0
    %v2913 = vadd.f32 %v2723, %v2912
    %2914 = vmatprep.mubr.f32.mxu0 0.0
    %2915 = vmatmul.mubr.f32.gmra.mrb[0].mxu0 %v2747
    %v2916 = vpop.f32.mrb[0].mxu0
    %v2917 = vadd.f32 %v2727, %v2916
    %v2918 = vpop.f32.mrb[0].mxu0
    %v2919 = vadd.f32 %v2729, %v2918
    %2920 = vmatprep.mubr.f32.mxu0 0.0
    %2921 = vmatmul.mubr.f32.gmra.mrb[0].mxu0 %v2750
    %v2922 = vpop.f32.mrb[0].mxu0
    %v2923 = vadd.f32 %v2733, %v2922
    %v2924 = vpop.f32.mrb[0].mxu0
    %v2925 = vadd.f32 %v2735, %v2924
    %2926 = vmatprep.mubr.f32.mxu0 0.0
    %2927 = vmatmul.mubr.f32.gmra.mrb[0].mxu0 %v2753
    %v2928 = vpop.f32.mrb[0].mxu0
    %v2929 = vadd.f32 %v2739, %v2928
    %v2930 = vpop.f32.mrb[0].mxu0
    %v2931 = vadd.f32 %v2741, %v2930
    %2932 = vdwg.mxu0
    %s2933 = scalar_lea.vmem %s3, 64
    %v2934 = vld [vmem:[%s2933] sm:$0xff]
    %v2935 = vld [vmem:[%s2933 + $0x8] sm:$0xff]
    %v2936 = vld [vmem:[%s2933 + $0x10] sm:$0xff]
    %v2937 = vld [vmem:[%s2933 + $0x18] sm:$0xff]
    %2938 = vrot.lane.b32.xlu0 %v2383, 15
    %v2939 = vpop.permute.xlu0 %2938
    %2940 = vrot.lane.b32.xlu0 %v2387, 15
    %v2941 = vpop.permute.xlu0 %2940
    %2942 = vrot.lane.b32.xlu0 %v2391, 15
    %v2943 = vpop.permute.xlu0 %2942
    %2944 = vrot.lane.b32.xlu0 %v2395, 15
    %v2945 = vpop.permute.xlu0 %2944
    %2946 = vrot.lane.b32.xlu0 %v2384, 15
    %v2947 = vpop.permute.xlu0 %2946
    %2948 = vrot.lane.b32.xlu0 %v2388, 15
    %v2949 = vpop.permute.xlu0 %2948
    %2950 = vrot.lane.b32.xlu0 %v2392, 15
    %v2951 = vpop.permute.xlu0 %2950
    %2952 = vrot.lane.b32.xlu0 %v2396, 15
    %v2953 = vpop.permute.xlu0 %2952
    %2954 = vrot.lane.b32.xlu0 %v2385, 15
    %v2955 = vpop.permute.xlu0 %2954
    %2956 = vrot.lane.b32.xlu0 %v2389, 15
    %v2957 = vpop.permute.xlu0 %2956
    %2958 = vrot.lane.b32.xlu0 %v2393, 15
    %v2959 = vpop.permute.xlu0 %2958
    %2960 = vrot.lane.b32.xlu0 %v2397, 15
    %v2961 = vpop.permute.xlu0 %2960
    %2962 = vrot.lane.b32.xlu0 %v2386, 15
    %v2963 = vpop.permute.xlu0 %2962
    %2964 = vrot.lane.b32.xlu0 %v2390, 15
    %v2965 = vpop.permute.xlu0 %2964
    %2966 = vrot.lane.b32.xlu0 %v2394, 15
    %v2967 = vpop.permute.xlu0 %2966
    %2968 = vrot.lane.b32.xlu0 %v2398, 15
    %v2969 = vpop.permute.xlu0 %2968
    %v2970 = vsel %vm649, %v2955, %v2963
    %v2971 = vsel %vm649, %v2957, %v2965
    %v2972 = vsel %vm649, %v2959, %v2967
    %v2973 = vsel %vm649, %v2961, %v2969
    %v2974 = vsel %vm649, %v2947, %v2955
    %v2975 = vsel %vm649, %v2949, %v2957
    %v2976 = vsel %vm649, %v2951, %v2959
    %v2977 = vsel %vm649, %v2953, %v2961
    %v2978 = vsel %vm649, %v2939, %v2947
    %v2979 = vsel %vm649, %v2941, %v2949
    %v2980 = vsel %vm649, %v2943, %v2951
    %v2981 = vsel %vm649, %v2945, %v2953
    %v2982 = vsel %vm649, %v2963, %v2939
    %v2983 = vsel %vm649, %v2965, %v2941
    %v2984 = vsel %vm649, %v2967, %v2943
    %v2985 = vsel %vm649, %v2969, %v2945
    %v2986 = vsel %vm658, %v2982, 0.0
    %v2987 = vsel %vm659, %v2978, 0.0
    %v2988 = vsel %vm660, %v2974, 0.0
    %v2989 = vsel %vm661, %v2970, 0.0
    %v2990 = vsel %vm658, %v2983, 0.0
    %v2991 = vsel %vm659, %v2979, 0.0
    %v2992 = vsel %vm660, %v2975, 0.0
    %v2993 = vsel %vm661, %v2971, 0.0
    %v2994 = vsel %vm658, %v2984, 0.0
    %v2995 = vsel %vm659, %v2980, 0.0
    %v2996 = vsel %vm660, %v2976, 0.0
    %v2997 = vsel %vm661, %v2972, 0.0
    %v2998 = vsel %vm658, %v2985, 0.0
    %v2999 = vsel %vm659, %v2981, 0.0
    %v3000 = vsel %vm660, %v2977, 0.0
    %v3001 = vsel %vm661, %v2973, 0.0
    %v3003 = vsel %vm2552, %v2934, 0
    %v3006 = vsel %vm2552, %v2935, 0
    %v3009 = vsel %vm2552, %v2936, 0
    %v3012 = vsel %vm2552, %v2937, 0
    %3014 = vmatprep.subr.mxu0 %v2987
    %3015 = vmatpush1.msra.mxu0 %v2986
    %3016 = vmatprep.subr.mxu0 %v2991
    %3017 = vmatpush1.msra.mxu0 %v2990
    %3018 = vmatprep.subr.mxu0 %v2995
    %3019 = vmatpush1.msra.mxu0 %v2994
    %3020 = vmatprep.subr.mxu0 %v2999
    %3021 = vmatpush1.msra.mxu0 %v2998
    %3022 = vmatprep.subr.mxu0 0.0
    %3023 = vmatpush1.msra.mxu0 0.0
    %3024 = vmatprep.subr.mxu0 0.0
    %3025 = vmatpush1.msra.mxu0 0.0
    %3026 = vmatprep.subr.mxu0 0.0
    %3027 = vmatpush1.msra.mxu0 0.0
    %3028 = vmatprep.subr.mxu0 0.0
    %3029 = vmatpush1.msra.mxu0 0.0
    %3030 = vmatprep.subr.mxu0 0.0
    %3031 = vmatpush1.msra.mxu0 0.0
    %3032 = vmatprep.subr.mxu0 0.0
    %3033 = vmatpush1.msra.mxu0 0.0
    %3034 = vmatprep.subr.mxu0 0.0
    %3035 = vmatpush1.msra.mxu0 0.0
    %3036 = vmatprep.subr.mxu0 0.0
    %3037 = vmatpush1.msra.mxu0 0.0
    %3038 = vmatprep.subr.mxu0 0.0
    %3039 = vmatpush1.msra.mxu0 0.0
    %3040 = vmatprep.subr.mxu0 0.0
    %3041 = vmatpush1.msra.mxu0 0.0
    %3042 = vmatprep.subr.mxu0 0.0
    %3043 = vmatpush1.msra.mxu0 0.0
    %3044 = vmatprep.subr.mxu0 0.0
    %3045 = vmatpush1.msra.mxu0 0.0
    %3046 = vmatprep.subr.mxu0 0.0
    %3047 = vmatpush1.msra.mxu0 0.0
    %3048 = vmatprep.subr.mxu0 0.0
    %3049 = vmatpush1.msra.mxu0 0.0
    %3050 = vmatprep.subr.mxu0 0.0
    %3051 = vmatpush1.msra.mxu0 0.0
    %3052 = vmatprep.subr.mxu0 0.0
    %3053 = vmatpush1.msra.mxu0 0.0
    %3054 = vmatprep.subr.mxu0 0.0
    %3055 = vmatpush1.msra.mxu0 0.0
    %3056 = vmatprep.subr.mxu0 0.0
    %3057 = vmatpush1.msra.mxu0 0.0
    %3058 = vmatprep.subr.mxu0 0.0
    %3059 = vmatpush1.msra.mxu0 0.0
    %3060 = vmatprep.subr.mxu0 0.0
    %3061 = vmatpush1.msra.mxu0 0.0
    %3062 = vmatprep.subr.mxu0 0.0
    %3063 = vmatpush1.msra.mxu0 0.0
    %3064 = vmatprep.subr.mxu0 0.0
    %3065 = vmatpush1.msra.mxu0 0.0
    %3066 = vmatprep.subr.mxu0 0.0
    %3067 = vmatpush1.msra.mxu0 0.0
    %3068 = vmatprep.subr.mxu0 0.0
    %3069 = vmatpush1.msra.mxu0 0.0
    %3070 = vmatprep.subr.mxu0 0.0
    %3071 = vmatpush1.msra.mxu0 0.0
    %3072 = vmatprep.subr.mxu0 0.0
    %3073 = vmatpush1.msra.mxu0 0.0
    %3074 = vmatprep.subr.mxu0 0.0
    %3075 = vmatpush1.msra.mxu0 0.0
    %3076 = vmatprep.subr.mxu0 0.0
    %3077 = vmatpush1.msra.mxu0 0.0
    %3078 = vmatprep.mubr.f32.mxu0 0.0
    %3079 = vmatmul.mubr.f32.gmra.mrb[0].mxu0 %v3003
    %v3080 = vpop.f32.mrb[0].mxu0
    %v3081 = vadd.f32 0.0, %v3080
    %v3082 = vpop.f32.mrb[0].mxu0
    %v3083 = vadd.f32 0.0, %v3082
    %3084 = vmatprep.mubr.f32.mxu0 0.0
    %3085 = vmatmul.mubr.f32.gmra.mrb[0].mxu0 %v3006
    %v3086 = vpop.f32.mrb[0].mxu0
    %v3087 = vadd.f32 0.0, %v3086
    %v3088 = vpop.f32.mrb[0].mxu0
    %v3089 = vadd.f32 0.0, %v3088
    %3090 = vmatprep.mubr.f32.mxu0 0.0
    %3091 = vmatmul.mubr.f32.gmra.mrb[0].mxu0 %v3009
    %v3092 = vpop.f32.mrb[0].mxu0
    %v3093 = vadd.f32 0.0, %v3092
    %v3094 = vpop.f32.mrb[0].mxu0
    %v3095 = vadd.f32 0.0, %v3094
    %3096 = vmatprep.mubr.f32.mxu0 0.0
    %3097 = vmatmul.mubr.f32.gmra.mrb[0].mxu0 %v3012
    %v3098 = vpop.f32.mrb[0].mxu0
    %v3099 = vadd.f32 0.0, %v3098
    %v3100 = vpop.f32.mrb[0].mxu0
    %v3101 = vadd.f32 0.0, %v3100
    %3102 = vdwg.mxu0
    %3103 = vmatprep.subr.mxu0 %v2989
    %3104 = vmatpush1.msra.mxu0 %v2988
    %3105 = vmatprep.subr.mxu0 %v2993
    %3106 = vmatpush1.msra.mxu0 %v2992
    %3107 = vmatprep.subr.mxu0 %v2997
    %3108 = vmatpush1.msra.mxu0 %v2996
    %3109 = vmatprep.subr.mxu0 %v3001
    %3110 = vmatpush1.msra.mxu0 %v3000
    %3111 = vmatprep.subr.mxu0 0.0
    %3112 = vmatpush1.msra.mxu0 0.0
    %3113 = vmatprep.subr.mxu0 0.0
    %3114 = vmatpush1.msra.mxu0 0.0
    %3115 = vmatprep.subr.mxu0 0.0
    %3116 = vmatpush1.msra.mxu0 0.0
    %3117 = vmatprep.subr.mxu0 0.0
    %3118 = vmatpush1.msra.mxu0 0.0
    %3119 = vmatprep.subr.mxu0 0.0
    %3120 = vmatpush1.msra.mxu0 0.0
    %3121 = vmatprep.subr.mxu0 0.0
    %3122 = vmatpush1.msra.mxu0 0.0
    %3123 = vmatprep.subr.mxu0 0.0
    %3124 = vmatpush1.msra.mxu0 0.0
    %3125 = vmatprep.subr.mxu0 0.0
    %3126 = vmatpush1.msra.mxu0 0.0
    %3127 = vmatprep.subr.mxu0 0.0
    %3128 = vmatpush1.msra.mxu0 0.0
    %3129 = vmatprep.subr.mxu0 0.0
    %3130 = vmatpush1.msra.mxu0 0.0
    %3131 = vmatprep.subr.mxu0 0.0
    %3132 = vmatpush1.msra.mxu0 0.0
    %3133 = vmatprep.subr.mxu0 0.0
    %3134 = vmatpush1.msra.mxu0 0.0
    %3135 = vmatprep.subr.mxu0 0.0
    %3136 = vmatpush1.msra.mxu0 0.0
    %3137 = vmatprep.subr.mxu0 0.0
    %3138 = vmatpush1.msra.mxu0 0.0
    %3139 = vmatprep.subr.mxu0 0.0
    %3140 = vmatpush1.msra.mxu0 0.0
    %3141 = vmatprep.subr.mxu0 0.0
    %3142 = vmatpush1.msra.mxu0 0.0
    %3143 = vmatprep.subr.mxu0 0.0
    %3144 = vmatpush1.msra.mxu0 0.0
    %3145 = vmatprep.subr.mxu0 0.0
    %3146 = vmatpush1.msra.mxu0 0.0
    %3147 = vmatprep.subr.mxu0 0.0
    %3148 = vmatpush1.msra.mxu0 0.0
    %3149 = vmatprep.subr.mxu0 0.0
    %3150 = vmatpush1.msra.mxu0 0.0
    %3151 = vmatprep.subr.mxu0 0.0
    %3152 = vmatpush1.msra.mxu0 0.0
    %3153 = vmatprep.subr.mxu0 0.0
    %3154 = vmatpush1.msra.mxu0 0.0
    %3155 = vmatprep.subr.mxu0 0.0
    %3156 = vmatpush1.msra.mxu0 0.0
    %3157 = vmatprep.subr.mxu0 0.0
    %3158 = vmatpush1.msra.mxu0 0.0
    %3159 = vmatprep.subr.mxu0 0.0
    %3160 = vmatpush1.msra.mxu0 0.0
    %3161 = vmatprep.subr.mxu0 0.0
    %3162 = vmatpush1.msra.mxu0 0.0
    %3163 = vmatprep.subr.mxu0 0.0
    %3164 = vmatpush1.msra.mxu0 0.0
    %3165 = vmatprep.subr.mxu0 0.0
    %3166 = vmatpush1.msra.mxu0 0.0
    %3167 = vmatprep.mubr.f32.mxu0 0.0
    %3168 = vmatmul.mubr.f32.gmra.mrb[0].mxu0 %v3003
    %v3169 = vpop.f32.mrb[0].mxu0
    %v3170 = vadd.f32 0.0, %v3169
    %v3171 = vpop.f32.mrb[0].mxu0
    %v3172 = vadd.f32 0.0, %v3171
    %3173 = vmatprep.mubr.f32.mxu0 0.0
    %3174 = vmatmul.mubr.f32.gmra.mrb[0].mxu0 %v3006
    %v3175 = vpop.f32.mrb[0].mxu0
    %v3176 = vadd.f32 0.0, %v3175
    %v3177 = vpop.f32.mrb[0].mxu0
    %v3178 = vadd.f32 0.0, %v3177
    %3179 = vmatprep.mubr.f32.mxu0 0.0
    %3180 = vmatmul.mubr.f32.gmra.mrb[0].mxu0 %v3009
    %v3181 = vpop.f32.mrb[0].mxu0
    %v3182 = vadd.f32 0.0, %v3181
    %v3183 = vpop.f32.mrb[0].mxu0
    %v3184 = vadd.f32 0.0, %v3183
    %3185 = vmatprep.mubr.f32.mxu0 0.0
    %3186 = vmatmul.mubr.f32.gmra.mrb[0].mxu0 %v3012
    %v3187 = vpop.f32.mrb[0].mxu0
    %v3188 = vadd.f32 0.0, %v3187
    %v3189 = vpop.f32.mrb[0].mxu0
    %v3190 = vadd.f32 0.0, %v3189
    %3191 = vdwg.mxu0
    %v3192 = vadd.f32 %v2822, %v3081
    %v3193 = vadd.f32 %v2824, %v3083
    %v3194 = vadd.f32 %v2911, %v3170
    %v3195 = vadd.f32 %v2913, %v3172
    %v3196 = vadd.f32 %v2828, %v3087
    %v3197 = vadd.f32 %v2830, %v3089
    %v3198 = vadd.f32 %v2917, %v3176
    %v3199 = vadd.f32 %v2919, %v3178
    %v3200 = vadd.f32 %v2834, %v3093
    %v3201 = vadd.f32 %v2836, %v3095
    %v3202 = vadd.f32 %v2923, %v3182
    %v3203 = vadd.f32 %v2925, %v3184
    %v3204 = vadd.f32 %v2840, %v3099
    %v3205 = vadd.f32 %v2842, %v3101
    %v3206 = vadd.f32 %v2929, %v3188
    %v3207 = vadd.f32 %v2931, %v3190
    %s3208 = scalar_lea.vmem %s3, 96
    %v3209 = vld [vmem:[%s3208] sm:$0xff]
    %v3210 = vld [vmem:[%s3208 + $0x8] sm:$0xff]
    %v3211 = vld [vmem:[%s3208 + $0x10] sm:$0xff]
    %v3212 = vld [vmem:[%s3208 + $0x18] sm:$0xff]
    %3213 = vrot.lane.b32.xlu0 %v2383, 1
    %v3214 = vpop.permute.xlu0 %3213
    %3215 = vrot.lane.b32.xlu0 %v2387, 1
    %v3216 = vpop.permute.xlu0 %3215
    %3217 = vrot.lane.b32.xlu0 %v2391, 1
    %v3218 = vpop.permute.xlu0 %3217
    %3219 = vrot.lane.b32.xlu0 %v2395, 1
    %v3220 = vpop.permute.xlu0 %3219
    %3221 = vrot.lane.b32.xlu0 %v2384, 1
    %v3222 = vpop.permute.xlu0 %3221
    %3223 = vrot.lane.b32.xlu0 %v2388, 1
    %v3224 = vpop.permute.xlu0 %3223
    %3225 = vrot.lane.b32.xlu0 %v2392, 1
    %v3226 = vpop.permute.xlu0 %3225
    %3227 = vrot.lane.b32.xlu0 %v2396, 1
    %v3228 = vpop.permute.xlu0 %3227
    %3229 = vrot.lane.b32.xlu0 %v2385, 1
    %v3230 = vpop.permute.xlu0 %3229
    %3231 = vrot.lane.b32.xlu0 %v2389, 1
    %v3232 = vpop.permute.xlu0 %3231
    %3233 = vrot.lane.b32.xlu0 %v2393, 1
    %v3234 = vpop.permute.xlu0 %3233
    %3235 = vrot.lane.b32.xlu0 %v2397, 1
    %v3236 = vpop.permute.xlu0 %3235
    %3237 = vrot.lane.b32.xlu0 %v2386, 1
    %v3238 = vpop.permute.xlu0 %3237
    %3239 = vrot.lane.b32.xlu0 %v2390, 1
    %v3240 = vpop.permute.xlu0 %3239
    %3241 = vrot.lane.b32.xlu0 %v2394, 1
    %v3242 = vpop.permute.xlu0 %3241
    %3243 = vrot.lane.b32.xlu0 %v2398, 1
    %v3244 = vpop.permute.xlu0 %3243
    %v3245 = vsel %vm897, %v3230, %v3238
    %v3246 = vsel %vm897, %v3232, %v3240
    %v3247 = vsel %vm897, %v3234, %v3242
    %v3248 = vsel %vm897, %v3236, %v3244
    %v3249 = vsel %vm897, %v3222, %v3230
    %v3250 = vsel %vm897, %v3224, %v3232
    %v3251 = vsel %vm897, %v3226, %v3234
    %v3252 = vsel %vm897, %v3228, %v3236
    %v3253 = vsel %vm897, %v3214, %v3222
    %v3254 = vsel %vm897, %v3216, %v3224
    %v3255 = vsel %vm897, %v3218, %v3226
    %v3256 = vsel %vm897, %v3220, %v3228
    %v3257 = vsel %vm897, %v3238, %v3214
    %v3258 = vsel %vm897, %v3240, %v3216
    %v3259 = vsel %vm897, %v3242, %v3218
    %v3260 = vsel %vm897, %v3244, %v3220
    %v3261 = vsel %vm906, %v3257, 0.0
    %v3262 = vsel %vm907, %v3253, 0.0
    %v3263 = vsel %vm908, %v3249, 0.0
    %v3264 = vsel %vm909, %v3245, 0.0
    %v3265 = vsel %vm906, %v3258, 0.0
    %v3266 = vsel %vm907, %v3254, 0.0
    %v3267 = vsel %vm908, %v3250, 0.0
    %v3268 = vsel %vm909, %v3246, 0.0
    %v3269 = vsel %vm906, %v3259, 0.0
    %v3270 = vsel %vm907, %v3255, 0.0
    %v3271 = vsel %vm908, %v3251, 0.0
    %v3272 = vsel %vm909, %v3247, 0.0
    %v3273 = vsel %vm906, %v3260, 0.0
    %v3274 = vsel %vm907, %v3256, 0.0
    %v3275 = vsel %vm908, %v3252, 0.0
    %v3276 = vsel %vm909, %v3248, 0.0
    %v3278 = vsel %vm2552, %v3209, 0
    %v3281 = vsel %vm2552, %v3210, 0
    %v3284 = vsel %vm2552, %v3211, 0
    %v3287 = vsel %vm2552, %v3212, 0
    %3289 = vmatprep.subr.mxu0 %v3262
    %3290 = vmatpush1.msra.mxu0 %v3261
    %3291 = vmatprep.subr.mxu0 %v3266
    %3292 = vmatpush1.msra.mxu0 %v3265
    %3293 = vmatprep.subr.mxu0 %v3270
    %3294 = vmatpush1.msra.mxu0 %v3269
    %3295 = vmatprep.subr.mxu0 %v3274
    %3296 = vmatpush1.msra.mxu0 %v3273
    %3297 = vmatprep.subr.mxu0 0.0
    %3298 = vmatpush1.msra.mxu0 0.0
    %3299 = vmatprep.subr.mxu0 0.0
    %3300 = vmatpush1.msra.mxu0 0.0
    %3301 = vmatprep.subr.mxu0 0.0
    %3302 = vmatpush1.msra.mxu0 0.0
    %3303 = vmatprep.subr.mxu0 0.0
    %3304 = vmatpush1.msra.mxu0 0.0
    %3305 = vmatprep.subr.mxu0 0.0
    %3306 = vmatpush1.msra.mxu0 0.0
    %3307 = vmatprep.subr.mxu0 0.0
    %3308 = vmatpush1.msra.mxu0 0.0
    %3309 = vmatprep.subr.mxu0 0.0
    %3310 = vmatpush1.msra.mxu0 0.0
    %3311 = vmatprep.subr.mxu0 0.0
    %3312 = vmatpush1.msra.mxu0 0.0
    %3313 = vmatprep.subr.mxu0 0.0
    %3314 = vmatpush1.msra.mxu0 0.0
    %3315 = vmatprep.subr.mxu0 0.0
    %3316 = vmatpush1.msra.mxu0 0.0
    %3317 = vmatprep.subr.mxu0 0.0
    %3318 = vmatpush1.msra.mxu0 0.0
    %3319 = vmatprep.subr.mxu0 0.0
    %3320 = vmatpush1.msra.mxu0 0.0
    %3321 = vmatprep.subr.mxu0 0.0
    %3322 = vmatpush1.msra.mxu0 0.0
    %3323 = vmatprep.subr.mxu0 0.0
    %3324 = vmatpush1.msra.mxu0 0.0
    %3325 = vmatprep.subr.mxu0 0.0
    %3326 = vmatpush1.msra.mxu0 0.0
    %3327 = vmatprep.subr.mxu0 0.0
    %3328 = vmatpush1.msra.mxu0 0.0
    %3329 = vmatprep.subr.mxu0 0.0
    %3330 = vmatpush1.msra.mxu0 0.0
    %3331 = vmatprep.subr.mxu0 0.0
    %3332 = vmatpush1.msra.mxu0 0.0
    %3333 = vmatprep.subr.mxu0 0.0
    %3334 = vmatpush1.msra.mxu0 0.0
    %3335 = vmatprep.subr.mxu0 0.0
    %3336 = vmatpush1.msra.mxu0 0.0
    %3337 = vmatprep.subr.mxu0 0.0
    %3338 = vmatpush1.msra.mxu0 0.0
    %3339 = vmatprep.subr.mxu0 0.0
    %3340 = vmatpush1.msra.mxu0 0.0
    %3341 = vmatprep.subr.mxu0 0.0
    %3342 = vmatpush1.msra.mxu0 0.0
    %3343 = vmatprep.subr.mxu0 0.0
    %3344 = vmatpush1.msra.mxu0 0.0
    %3345 = vmatprep.subr.mxu0 0.0
    %3346 = vmatpush1.msra.mxu0 0.0
    %3347 = vmatprep.subr.mxu0 0.0
    %3348 = vmatpush1.msra.mxu0 0.0
    %3349 = vmatprep.subr.mxu0 0.0
    %3350 = vmatpush1.msra.mxu0 0.0
    %3351 = vmatprep.subr.mxu0 0.0
    %3352 = vmatpush1.msra.mxu0 0.0
    %3353 = vmatprep.mubr.f32.mxu0 0.0
    %3354 = vmatmul.mubr.f32.gmra.mrb[0].mxu0 %v3278
    %v3355 = vpop.f32.mrb[0].mxu0
    %v3356 = vadd.f32 0.0, %v3355
    %v3357 = vpop.f32.mrb[0].mxu0
    %v3358 = vadd.f32 0.0, %v3357
    %3359 = vmatprep.mubr.f32.mxu0 0.0
    %3360 = vmatmul.mubr.f32.gmra.mrb[0].mxu0 %v3281
    %v3361 = vpop.f32.mrb[0].mxu0
    %v3362 = vadd.f32 0.0, %v3361
    %v3363 = vpop.f32.mrb[0].mxu0
    %v3364 = vadd.f32 0.0, %v3363
    %3365 = vmatprep.mubr.f32.mxu0 0.0
    %3366 = vmatmul.mubr.f32.gmra.mrb[0].mxu0 %v3284
    %v3367 = vpop.f32.mrb[0].mxu0
    %v3368 = vadd.f32 0.0, %v3367
    %v3369 = vpop.f32.mrb[0].mxu0
    %v3370 = vadd.f32 0.0, %v3369
    %3371 = vmatprep.mubr.f32.mxu0 0.0
    %3372 = vmatmul.mubr.f32.gmra.mrb[0].mxu0 %v3287
    %v3373 = vpop.f32.mrb[0].mxu0
    %v3374 = vadd.f32 0.0, %v3373
    %v3375 = vpop.f32.mrb[0].mxu0
    %v3376 = vadd.f32 0.0, %v3375
    %3377 = vdwg.mxu0
    %3378 = vmatprep.subr.mxu0 %v3264
    %3379 = vmatpush1.msra.mxu0 %v3263
    %3380 = vmatprep.subr.mxu0 %v3268
    %3381 = vmatpush1.msra.mxu0 %v3267
    %3382 = vmatprep.subr.mxu0 %v3272
    %3383 = vmatpush1.msra.mxu0 %v3271
    %3384 = vmatprep.subr.mxu0 %v3276
    %3385 = vmatpush1.msra.mxu0 %v3275
    %3386 = vmatprep.subr.mxu0 0.0
    %3387 = vmatpush1.msra.mxu0 0.0
    %3388 = vmatprep.subr.mxu0 0.0
    %3389 = vmatpush1.msra.mxu0 0.0
    %3390 = vmatprep.subr.mxu0 0.0
    %3391 = vmatpush1.msra.mxu0 0.0
    %3392 = vmatprep.subr.mxu0 0.0
    %3393 = vmatpush1.msra.mxu0 0.0
    %3394 = vmatprep.subr.mxu0 0.0
    %3395 = vmatpush1.msra.mxu0 0.0
    %3396 = vmatprep.subr.mxu0 0.0
    %3397 = vmatpush1.msra.mxu0 0.0
    %3398 = vmatprep.subr.mxu0 0.0
    %3399 = vmatpush1.msra.mxu0 0.0
    %3400 = vmatprep.subr.mxu0 0.0
    %3401 = vmatpush1.msra.mxu0 0.0
    %3402 = vmatprep.subr.mxu0 0.0
    %3403 = vmatpush1.msra.mxu0 0.0
    %3404 = vmatprep.subr.mxu0 0.0
    %3405 = vmatpush1.msra.mxu0 0.0
    %3406 = vmatprep.subr.mxu0 0.0
    %3407 = vmatpush1.msra.mxu0 0.0
    %3408 = vmatprep.subr.mxu0 0.0
    %3409 = vmatpush1.msra.mxu0 0.0
    %3410 = vmatprep.subr.mxu0 0.0
    %3411 = vmatpush1.msra.mxu0 0.0
    %3412 = vmatprep.subr.mxu0 0.0
    %3413 = vmatpush1.msra.mxu0 0.0
    %3414 = vmatprep.subr.mxu0 0.0
    %3415 = vmatpush1.msra.mxu0 0.0
    %3416 = vmatprep.subr.mxu0 0.0
    %3417 = vmatpush1.msra.mxu0 0.0
    %3418 = vmatprep.subr.mxu0 0.0
    %3419 = vmatpush1.msra.mxu0 0.0
    %3420 = vmatprep.subr.mxu0 0.0
    %3421 = vmatpush1.msra.mxu0 0.0
    %3422 = vmatprep.subr.mxu0 0.0
    %3423 = vmatpush1.msra.mxu0 0.0
    %3424 = vmatprep.subr.mxu0 0.0
    %3425 = vmatpush1.msra.mxu0 0.0
    %3426 = vmatprep.subr.mxu0 0.0
    %3427 = vmatpush1.msra.mxu0 0.0
    %3428 = vmatprep.subr.mxu0 0.0
    %3429 = vmatpush1.msra.mxu0 0.0
    %3430 = vmatprep.subr.mxu0 0.0
    %3431 = vmatpush1.msra.mxu0 0.0
    %3432 = vmatprep.subr.mxu0 0.0
    %3433 = vmatpush1.msra.mxu0 0.0
    %3434 = vmatprep.subr.mxu0 0.0
    %3435 = vmatpush1.msra.mxu0 0.0
    %3436 = vmatprep.subr.mxu0 0.0
    %3437 = vmatpush1.msra.mxu0 0.0
    %3438 = vmatprep.subr.mxu0 0.0
    %3439 = vmatpush1.msra.mxu0 0.0
    %3440 = vmatprep.subr.mxu0 0.0
    %3441 = vmatpush1.msra.mxu0 0.0
    %3442 = vmatprep.mubr.f32.mxu0 0.0
    %3443 = vmatmul.mubr.f32.gmra.mrb[0].mxu0 %v3278
    %v3444 = vpop.f32.mrb[0].mxu0
    %v3445 = vadd.f32 0.0, %v3444
    %v3446 = vpop.f32.mrb[0].mxu0
    %v3447 = vadd.f32 0.0, %v3446
    %3448 = vmatprep.mubr.f32.mxu0 0.0
    %3449 = vmatmul.mubr.f32.gmra.mrb[0].mxu0 %v3281
    %v3450 = vpop.f32.mrb[0].mxu0
    %v3451 = vadd.f32 0.0, %v3450
    %v3452 = vpop.f32.mrb[0].mxu0
    %v3453 = vadd.f32 0.0, %v3452
    %3454 = vmatprep.mubr.f32.mxu0 0.0
    %3455 = vmatmul.mubr.f32.gmra.mrb[0].mxu0 %v3284
    %v3456 = vpop.f32.mrb[0].mxu0
    %v3457 = vadd.f32 0.0, %v3456
    %v3458 = vpop.f32.mrb[0].mxu0
    %v3459 = vadd.f32 0.0, %v3458
    %3460 = vmatprep.mubr.f32.mxu0 0.0
    %3461 = vmatmul.mubr.f32.gmra.mrb[0].mxu0 %v3287
    %v3462 = vpop.f32.mrb[0].mxu0
    %v3463 = vadd.f32 0.0, %v3462
    %v3464 = vpop.f32.mrb[0].mxu0
    %v3465 = vadd.f32 0.0, %v3464
    %3466 = vdwg.mxu0
    %v3467 = vadd.f32 %v3192, %v3356
    %v3468 = vadd.f32 %v3193, %v3358
    %v3469 = vadd.f32 %v3194, %v3445
    %v3470 = vadd.f32 %v3195, %v3447
    %v3471 = vadd.f32 %v3196, %v3362
    %v3472 = vadd.f32 %v3197, %v3364
    %v3473 = vadd.f32 %v3198, %v3451
    %v3474 = vadd.f32 %v3199, %v3453
    %v3475 = vadd.f32 %v3200, %v3368
    %v3476 = vadd.f32 %v3201, %v3370
    %v3477 = vadd.f32 %v3202, %v3457
    %v3478 = vadd.f32 %v3203, %v3459
    %v3479 = vadd.f32 %v3204, %v3374
    %v3480 = vadd.f32 %v3205, %v3376
    %v3481 = vadd.f32 %v3206, %v3463
    %v3482 = vadd.f32 %v3207, %v3465
    %s3483 = scalar_lea.vmem %s3, 128
    %v3484 = vld [vmem:[%s3483] sm:$0xff]
    %v3485 = vld [vmem:[%s3483 + $0x8] sm:$0xff]
    %v3486 = vld [vmem:[%s3483 + $0x10] sm:$0xff]
    %v3487 = vld [vmem:[%s3483 + $0x18] sm:$0xff]
    %v3489 = vsel %vm2552, %v3484, 0
    %v3492 = vsel %vm2552, %v3485, 0
    %v3495 = vsel %vm2552, %v3486, 0
    %v3498 = vsel %vm2552, %v3487, 0
    %3500 = vmatprep.subr.mxu0 %v2384
    %3501 = vmatpush1.msra.mxu0 %v2383
    %3502 = vmatprep.subr.mxu0 %v2388
    %3503 = vmatpush1.msra.mxu0 %v2387
    %3504 = vmatprep.subr.mxu0 %v2392
    %3505 = vmatpush1.msra.mxu0 %v2391
    %3506 = vmatprep.subr.mxu0 %v2396
    %3507 = vmatpush1.msra.mxu0 %v2395
    %3508 = vmatprep.subr.mxu0 0.0
    %3509 = vmatpush1.msra.mxu0 0.0
    %3510 = vmatprep.subr.mxu0 0.0
    %3511 = vmatpush1.msra.mxu0 0.0
    %3512 = vmatprep.subr.mxu0 0.0
    %3513 = vmatpush1.msra.mxu0 0.0
    %3514 = vmatprep.subr.mxu0 0.0
    %3515 = vmatpush1.msra.mxu0 0.0
    %3516 = vmatprep.subr.mxu0 0.0
    %3517 = vmatpush1.msra.mxu0 0.0
    %3518 = vmatprep.subr.mxu0 0.0
    %3519 = vmatpush1.msra.mxu0 0.0
    %3520 = vmatprep.subr.mxu0 0.0
    %3521 = vmatpush1.msra.mxu0 0.0
    %3522 = vmatprep.subr.mxu0 0.0
    %3523 = vmatpush1.msra.mxu0 0.0
    %3524 = vmatprep.subr.mxu0 0.0
    %3525 = vmatpush1.msra.mxu0 0.0
    %3526 = vmatprep.subr.mxu0 0.0
    %3527 = vmatpush1.msra.mxu0 0.0
    %3528 = vmatprep.subr.mxu0 0.0
    %3529 = vmatpush1.msra.mxu0 0.0
    %3530 = vmatprep.subr.mxu0 0.0
    %3531 = vmatpush1.msra.mxu0 0.0
    %3532 = vmatprep.subr.mxu0 0.0
    %3533 = vmatpush1.msra.mxu0 0.0
    %3534 = vmatprep.subr.mxu0 0.0
    %3535 = vmatpush1.msra.mxu0 0.0
    %3536 = vmatprep.subr.mxu0 0.0
    %3537 = vmatpush1.msra.mxu0 0.0
    %3538 = vmatprep.subr.mxu0 0.0
    %3539 = vmatpush1.msra.mxu0 0.0
    %3540 = vmatprep.subr.mxu0 0.0
    %3541 = vmatpush1.msra.mxu0 0.0
    %3542 = vmatprep.subr.mxu0 0.0
    %3543 = vmatpush1.msra.mxu0 0.0
    %3544 = vmatprep.subr.mxu0 0.0
    %3545 = vmatpush1.msra.mxu0 0.0
    %3546 = vmatprep.subr.mxu0 0.0
    %3547 = vmatpush1.msra.mxu0 0.0
    %3548 = vmatprep.subr.mxu0 0.0
    %3549 = vmatpush1.msra.mxu0 0.0
    %3550 = vmatprep.subr.mxu0 0.0
    %3551 = vmatpush1.msra.mxu0 0.0
    %3552 = vmatprep.subr.mxu0 0.0
    %3553 = vmatpush1.msra.mxu0 0.0
    %3554 = vmatprep.subr.mxu0 0.0
    %3555 = vmatpush1.msra.mxu0 0.0
    %3556 = vmatprep.subr.mxu0 0.0
    %3557 = vmatpush1.msra.mxu0 0.0
    %3558 = vmatprep.subr.mxu0 0.0
    %3559 = vmatpush1.msra.mxu0 0.0
    %3560 = vmatprep.subr.mxu0 0.0
    %3561 = vmatpush1.msra.mxu0 0.0
    %3562 = vmatprep.subr.mxu0 0.0
    %3563 = vmatpush1.msra.mxu0 0.0
    %3564 = vmatprep.mubr.f32.mxu0 0.0
    %3565 = vmatmul.mubr.f32.gmra.mrb[0].mxu0 %v3489
    %v3566 = vpop.f32.mrb[0].mxu0
    %v3567 = vadd.f32 0.0, %v3566
    %v3568 = vpop.f32.mrb[0].mxu0
    %v3569 = vadd.f32 0.0, %v3568
    %3570 = vmatprep.mubr.f32.mxu0 0.0
    %3571 = vmatmul.mubr.f32.gmra.mrb[0].mxu0 %v3492
    %v3572 = vpop.f32.mrb[0].mxu0
    %v3573 = vadd.f32 0.0, %v3572
    %v3574 = vpop.f32.mrb[0].mxu0
    %v3575 = vadd.f32 0.0, %v3574
    %3576 = vmatprep.mubr.f32.mxu0 0.0
    %3577 = vmatmul.mubr.f32.gmra.mrb[0].mxu0 %v3495
    %v3578 = vpop.f32.mrb[0].mxu0
    %v3579 = vadd.f32 0.0, %v3578
    %v3580 = vpop.f32.mrb[0].mxu0
    %v3581 = vadd.f32 0.0, %v3580
    %3582 = vmatprep.mubr.f32.mxu0 0.0
    %3583 = vmatmul.mubr.f32.gmra.mrb[0].mxu0 %v3498
    %v3584 = vpop.f32.mrb[0].mxu0
    %v3585 = vadd.f32 0.0, %v3584
    %v3586 = vpop.f32.mrb[0].mxu0
    %v3587 = vadd.f32 0.0, %v3586
    %3588 = vdwg.mxu0
    %3589 = vmatprep.subr.mxu0 %v2386
    %3590 = vmatpush1.msra.mxu0 %v2385
    %3591 = vmatprep.subr.mxu0 %v2390
    %3592 = vmatpush1.msra.mxu0 %v2389
    %3593 = vmatprep.subr.mxu0 %v2394
    %3594 = vmatpush1.msra.mxu0 %v2393
    %3595 = vmatprep.subr.mxu0 %v2398
    %3596 = vmatpush1.msra.mxu0 %v2397
    %3597 = vmatprep.subr.mxu0 0.0
    %3598 = vmatpush1.msra.mxu0 0.0
    %3599 = vmatprep.subr.mxu0 0.0
    %3600 = vmatpush1.msra.mxu0 0.0
    %3601 = vmatprep.subr.mxu0 0.0
    %3602 = vmatpush1.msra.mxu0 0.0
    %3603 = vmatprep.subr.mxu0 0.0
    %3604 = vmatpush1.msra.mxu0 0.0
    %3605 = vmatprep.subr.mxu0 0.0
    %3606 = vmatpush1.msra.mxu0 0.0
    %3607 = vmatprep.subr.mxu0 0.0
    %3608 = vmatpush1.msra.mxu0 0.0
    %3609 = vmatprep.subr.mxu0 0.0
    %3610 = vmatpush1.msra.mxu0 0.0
    %3611 = vmatprep.subr.mxu0 0.0
    %3612 = vmatpush1.msra.mxu0 0.0
    %3613 = vmatprep.subr.mxu0 0.0
    %3614 = vmatpush1.msra.mxu0 0.0
    %3615 = vmatprep.subr.mxu0 0.0
    %3616 = vmatpush1.msra.mxu0 0.0
    %3617 = vmatprep.subr.mxu0 0.0
    %3618 = vmatpush1.msra.mxu0 0.0
    %3619 = vmatprep.subr.mxu0 0.0
    %3620 = vmatpush1.msra.mxu0 0.0
    %3621 = vmatprep.subr.mxu0 0.0
    %3622 = vmatpush1.msra.mxu0 0.0
    %3623 = vmatprep.subr.mxu0 0.0
    %3624 = vmatpush1.msra.mxu0 0.0
    %3625 = vmatprep.subr.mxu0 0.0
    %3626 = vmatpush1.msra.mxu0 0.0
    %3627 = vmatprep.subr.mxu0 0.0
    %3628 = vmatpush1.msra.mxu0 0.0
    %3629 = vmatprep.subr.mxu0 0.0
    %3630 = vmatpush1.msra.mxu0 0.0
    %3631 = vmatprep.subr.mxu0 0.0
    %3632 = vmatpush1.msra.mxu0 0.0
    %3633 = vmatprep.subr.mxu0 0.0
    %3634 = vmatpush1.msra.mxu0 0.0
    %3635 = vmatprep.subr.mxu0 0.0
    %3636 = vmatpush1.msra.mxu0 0.0
    %3637 = vmatprep.subr.mxu0 0.0
    %3638 = vmatpush1.msra.mxu0 0.0
    %3639 = vmatprep.subr.mxu0 0.0
    %3640 = vmatpush1.msra.mxu0 0.0
    %3641 = vmatprep.subr.mxu0 0.0
    %3642 = vmatpush1.msra.mxu0 0.0
    %3643 = vmatprep.subr.mxu0 0.0
    %3644 = vmatpush1.msra.mxu0 0.0
    %3645 = vmatprep.subr.mxu0 0.0
    %3646 = vmatpush1.msra.mxu0 0.0
    %3647 = vmatprep.subr.mxu0 0.0
    %3648 = vmatpush1.msra.mxu0 0.0
    %3649 = vmatprep.subr.mxu0 0.0
    %3650 = vmatpush1.msra.mxu0 0.0
    %3651 = vmatprep.subr.mxu0 0.0
    %3652 = vmatpush1.msra.mxu0 0.0
    %3653 = vmatprep.mubr.f32.mxu0 0.0
    %3654 = vmatmul.mubr.f32.gmra.mrb[0].mxu0 %v3489
    %v3655 = vpop.f32.mrb[0].mxu0
    %v3656 = vadd.f32 0.0, %v3655
    %v3657 = vpop.f32.mrb[0].mxu0
    %v3658 = vadd.f32 0.0, %v3657
    %3659 = vmatprep.mubr.f32.mxu0 0.0
    %3660 = vmatmul.mubr.f32.gmra.mrb[0].mxu0 %v3492
    %v3661 = vpop.f32.mrb[0].mxu0
    %v3662 = vadd.f32 0.0, %v3661
    %v3663 = vpop.f32.mrb[0].mxu0
    %v3664 = vadd.f32 0.0, %v3663
    %3665 = vmatprep.mubr.f32.mxu0 0.0
    %3666 = vmatmul.mubr.f32.gmra.mrb[0].mxu0 %v3495
    %v3667 = vpop.f32.mrb[0].mxu0
    %v3668 = vadd.f32 0.0, %v3667
    %v3669 = vpop.f32.mrb[0].mxu0
    %v3670 = vadd.f32 0.0, %v3669
    %3671 = vmatprep.mubr.f32.mxu0 0.0
    %3672 = vmatmul.mubr.f32.gmra.mrb[0].mxu0 %v3498
    %v3673 = vpop.f32.mrb[0].mxu0
    %v3674 = vadd.f32 0.0, %v3673
    %v3675 = vpop.f32.mrb[0].mxu0
    %v3676 = vadd.f32 0.0, %v3675
    %3677 = vdwg.mxu0
    %v3678 = vadd.f32 %v3467, %v3567
    %v3679 = vadd.f32 %v3468, %v3569
    %v3680 = vadd.f32 %v3469, %v3656
    %v3681 = vadd.f32 %v3470, %v3658
    %v3682 = vadd.f32 %v3471, %v3573
    %v3683 = vadd.f32 %v3472, %v3575
    %v3684 = vadd.f32 %v3473, %v3662
    %v3685 = vadd.f32 %v3474, %v3664
    %v3686 = vadd.f32 %v3475, %v3579
    %v3687 = vadd.f32 %v3476, %v3581
    %v3688 = vadd.f32 %v3477, %v3668
    %v3689 = vadd.f32 %v3478, %v3670
    %v3690 = vadd.f32 %v3479, %v3585
    %v3691 = vadd.f32 %v3480, %v3587
    %v3692 = vadd.f32 %v3481, %v3674
    %v3693 = vadd.f32 %v3482, %v3676
    %s3694 = scalar_lea.vmem %s3, 160
    %v3695 = vld [vmem:[%s3694] sm:$0xff]
    %v3696 = vld [vmem:[%s3694 + $0x8] sm:$0xff]
    %v3697 = vld [vmem:[%s3694 + $0x10] sm:$0xff]
    %v3698 = vld [vmem:[%s3694 + $0x18] sm:$0xff]
    %3699 = vrot.lane.b32.xlu0 %v2383, 127
    %v3700 = vpop.permute.xlu0 %3699
    %3701 = vrot.lane.b32.xlu0 %v2387, 127
    %v3702 = vpop.permute.xlu0 %3701
    %3703 = vrot.lane.b32.xlu0 %v2391, 127
    %v3704 = vpop.permute.xlu0 %3703
    %3705 = vrot.lane.b32.xlu0 %v2395, 127
    %v3706 = vpop.permute.xlu0 %3705
    %3707 = vrot.lane.b32.xlu0 %v2384, 127
    %v3708 = vpop.permute.xlu0 %3707
    %3709 = vrot.lane.b32.xlu0 %v2388, 127
    %v3710 = vpop.permute.xlu0 %3709
    %3711 = vrot.lane.b32.xlu0 %v2392, 127
    %v3712 = vpop.permute.xlu0 %3711
    %3713 = vrot.lane.b32.xlu0 %v2396, 127
    %v3714 = vpop.permute.xlu0 %3713
    %3715 = vrot.lane.b32.xlu0 %v2385, 127
    %v3716 = vpop.permute.xlu0 %3715
    %3717 = vrot.lane.b32.xlu0 %v2389, 127
    %v3718 = vpop.permute.xlu0 %3717
    %3719 = vrot.lane.b32.xlu0 %v2393, 127
    %v3720 = vpop.permute.xlu0 %3719
    %3721 = vrot.lane.b32.xlu0 %v2397, 127
    %v3722 = vpop.permute.xlu0 %3721
    %3723 = vrot.lane.b32.xlu0 %v2386, 127
    %v3724 = vpop.permute.xlu0 %3723
    %3725 = vrot.lane.b32.xlu0 %v2390, 127
    %v3726 = vpop.permute.xlu0 %3725
    %3727 = vrot.lane.b32.xlu0 %v2394, 127
    %v3728 = vpop.permute.xlu0 %3727
    %3729 = vrot.lane.b32.xlu0 %v2398, 127
    %v3730 = vpop.permute.xlu0 %3729
    %v3731 = vsel %vm1364, %v3716, %v3724
    %v3732 = vsel %vm1364, %v3718, %v3726
    %v3733 = vsel %vm1364, %v3720, %v3728
    %v3734 = vsel %vm1364, %v3722, %v3730
    %v3735 = vsel %vm1364, %v3708, %v3716
    %v3736 = vsel %vm1364, %v3710, %v3718
    %v3737 = vsel %vm1364, %v3712, %v3720
    %v3738 = vsel %vm1364, %v3714, %v3722
    %v3739 = vsel %vm1364, %v3700, %v3708
    %v3740 = vsel %vm1364, %v3702, %v3710
    %v3741 = vsel %vm1364, %v3704, %v3712
    %v3742 = vsel %vm1364, %v3706, %v3714
    %v3743 = vsel %vm1364, %v3724, %v3700
    %v3744 = vsel %vm1364, %v3726, %v3702
    %v3745 = vsel %vm1364, %v3728, %v3704
    %v3746 = vsel %vm1364, %v3730, %v3706
    %v3747 = vsel %vm1373, %v3739, 0.0
    %v3748 = vsel %vm1374, %v3735, 0.0
    %v3749 = vsel %vm1375, %v3731, 0.0
    %v3750 = vsel %vm1376, %v3743, 0.0
    %v3751 = vsel %vm1373, %v3740, 0.0
    %v3752 = vsel %vm1374, %v3736, 0.0
    %v3753 = vsel %vm1375, %v3732, 0.0
    %v3754 = vsel %vm1376, %v3744, 0.0
    %v3755 = vsel %vm1373, %v3741, 0.0
    %v3756 = vsel %vm1374, %v3737, 0.0
    %v3757 = vsel %vm1375, %v3733, 0.0
    %v3758 = vsel %vm1376, %v3745, 0.0
    %v3759 = vsel %vm1373, %v3742, 0.0
    %v3760 = vsel %vm1374, %v3738, 0.0
    %v3761 = vsel %vm1375, %v3734, 0.0
    %v3762 = vsel %vm1376, %v3746, 0.0
    %v3764 = vsel %vm2552, %v3695, 0
    %v3767 = vsel %vm2552, %v3696, 0
    %v3770 = vsel %vm2552, %v3697, 0
    %v3773 = vsel %vm2552, %v3698, 0
    %3775 = vmatprep.subr.mxu0 %v3748
    %3776 = vmatpush1.msra.mxu0 %v3747
    %3777 = vmatprep.subr.mxu0 %v3752
    %3778 = vmatpush1.msra.mxu0 %v3751
    %3779 = vmatprep.subr.mxu0 %v3756
    %3780 = vmatpush1.msra.mxu0 %v3755
    %3781 = vmatprep.subr.mxu0 %v3760
    %3782 = vmatpush1.msra.mxu0 %v3759
    %3783 = vmatprep.subr.mxu0 0.0
    %3784 = vmatpush1.msra.mxu0 0.0
    %3785 = vmatprep.subr.mxu0 0.0
    %3786 = vmatpush1.msra.mxu0 0.0
    %3787 = vmatprep.subr.mxu0 0.0
    %3788 = vmatpush1.msra.mxu0 0.0
    %3789 = vmatprep.subr.mxu0 0.0
    %3790 = vmatpush1.msra.mxu0 0.0
    %3791 = vmatprep.subr.mxu0 0.0
    %3792 = vmatpush1.msra.mxu0 0.0
    %3793 = vmatprep.subr.mxu0 0.0
    %3794 = vmatpush1.msra.mxu0 0.0
    %3795 = vmatprep.subr.mxu0 0.0
    %3796 = vmatpush1.msra.mxu0 0.0
    %3797 = vmatprep.subr.mxu0 0.0
    %3798 = vmatpush1.msra.mxu0 0.0
    %3799 = vmatprep.subr.mxu0 0.0
    %3800 = vmatpush1.msra.mxu0 0.0
    %3801 = vmatprep.subr.mxu0 0.0
    %3802 = vmatpush1.msra.mxu0 0.0
    %3803 = vmatprep.subr.mxu0 0.0
    %3804 = vmatpush1.msra.mxu0 0.0
    %3805 = vmatprep.subr.mxu0 0.0
    %3806 = vmatpush1.msra.mxu0 0.0
    %3807 = vmatprep.subr.mxu0 0.0
    %3808 = vmatpush1.msra.mxu0 0.0
    %3809 = vmatprep.subr.mxu0 0.0
    %3810 = vmatpush1.msra.mxu0 0.0
    %3811 = vmatprep.subr.mxu0 0.0
    %3812 = vmatpush1.msra.mxu0 0.0
    %3813 = vmatprep.subr.mxu0 0.0
    %3814 = vmatpush1.msra.mxu0 0.0
    %3815 = vmatprep.subr.mxu0 0.0
    %3816 = vmatpush1.msra.mxu0 0.0
    %3817 = vmatprep.subr.mxu0 0.0
    %3818 = vmatpush1.msra.mxu0 0.0
    %3819 = vmatprep.subr.mxu0 0.0
    %3820 = vmatpush1.msra.mxu0 0.0
    %3821 = vmatprep.subr.mxu0 0.0
    %3822 = vmatpush1.msra.mxu0 0.0
    %3823 = vmatprep.subr.mxu0 0.0
    %3824 = vmatpush1.msra.mxu0 0.0
    %3825 = vmatprep.subr.mxu0 0.0
    %3826 = vmatpush1.msra.mxu0 0.0
    %3827 = vmatprep.subr.mxu0 0.0
    %3828 = vmatpush1.msra.mxu0 0.0
    %3829 = vmatprep.subr.mxu0 0.0
    %3830 = vmatpush1.msra.mxu0 0.0
    %3831 = vmatprep.subr.mxu0 0.0
    %3832 = vmatpush1.msra.mxu0 0.0
    %3833 = vmatprep.subr.mxu0 0.0
    %3834 = vmatpush1.msra.mxu0 0.0
    %3835 = vmatprep.subr.mxu0 0.0
    %3836 = vmatpush1.msra.mxu0 0.0
    %3837 = vmatprep.subr.mxu0 0.0
    %3838 = vmatpush1.msra.mxu0 0.0
    %3839 = vmatprep.mubr.f32.mxu0 0.0
    %3840 = vmatmul.mubr.f32.gmra.mrb[0].mxu0 %v3764
    %v3841 = vpop.f32.mrb[0].mxu0
    %v3842 = vadd.f32 0.0, %v3841
    %v3843 = vpop.f32.mrb[0].mxu0
    %v3844 = vadd.f32 0.0, %v3843
    %3845 = vmatprep.mubr.f32.mxu0 0.0
    %3846 = vmatmul.mubr.f32.gmra.mrb[0].mxu0 %v3767
    %v3847 = vpop.f32.mrb[0].mxu0
    %v3848 = vadd.f32 0.0, %v3847
    %v3849 = vpop.f32.mrb[0].mxu0
    %v3850 = vadd.f32 0.0, %v3849
    %3851 = vmatprep.mubr.f32.mxu0 0.0
    %3852 = vmatmul.mubr.f32.gmra.mrb[0].mxu0 %v3770
    %v3853 = vpop.f32.mrb[0].mxu0
    %v3854 = vadd.f32 0.0, %v3853
    %v3855 = vpop.f32.mrb[0].mxu0
    %v3856 = vadd.f32 0.0, %v3855
    %3857 = vmatprep.mubr.f32.mxu0 0.0
    %3858 = vmatmul.mubr.f32.gmra.mrb[0].mxu0 %v3773
    %v3859 = vpop.f32.mrb[0].mxu0
    %v3860 = vadd.f32 0.0, %v3859
    %v3861 = vpop.f32.mrb[0].mxu0
    %v3862 = vadd.f32 0.0, %v3861
    %3863 = vdwg.mxu0
    %3864 = vmatprep.subr.mxu0 %v3750
    %3865 = vmatpush1.msra.mxu0 %v3749
    %3866 = vmatprep.subr.mxu0 %v3754
    %3867 = vmatpush1.msra.mxu0 %v3753
    %3868 = vmatprep.subr.mxu0 %v3758
    %3869 = vmatpush1.msra.mxu0 %v3757
    %3870 = vmatprep.subr.mxu0 %v3762
    %3871 = vmatpush1.msra.mxu0 %v3761
    %3872 = vmatprep.subr.mxu0 0.0
    %3873 = vmatpush1.msra.mxu0 0.0
    %3874 = vmatprep.subr.mxu0 0.0
    %3875 = vmatpush1.msra.mxu0 0.0
    %3876 = vmatprep.subr.mxu0 0.0
    %3877 = vmatpush1.msra.mxu0 0.0
    %3878 = vmatprep.subr.mxu0 0.0
    %3879 = vmatpush1.msra.mxu0 0.0
    %3880 = vmatprep.subr.mxu0 0.0
    %3881 = vmatpush1.msra.mxu0 0.0
    %3882 = vmatprep.subr.mxu0 0.0
    %3883 = vmatpush1.msra.mxu0 0.0
    %3884 = vmatprep.subr.mxu0 0.0
    %3885 = vmatpush1.msra.mxu0 0.0
    %3886 = vmatprep.subr.mxu0 0.0
    %3887 = vmatpush1.msra.mxu0 0.0
    %3888 = vmatprep.subr.mxu0 0.0
    %3889 = vmatpush1.msra.mxu0 0.0
    %3890 = vmatprep.subr.mxu0 0.0
    %3891 = vmatpush1.msra.mxu0 0.0
    %3892 = vmatprep.subr.mxu0 0.0
    %3893 = vmatpush1.msra.mxu0 0.0
    %3894 = vmatprep.subr.mxu0 0.0
    %3895 = vmatpush1.msra.mxu0 0.0
    %3896 = vmatprep.subr.mxu0 0.0
    %3897 = vmatpush1.msra.mxu0 0.0
    %3898 = vmatprep.subr.mxu0 0.0
    %3899 = vmatpush1.msra.mxu0 0.0
    %3900 = vmatprep.subr.mxu0 0.0
    %3901 = vmatpush1.msra.mxu0 0.0
    %3902 = vmatprep.subr.mxu0 0.0
    %3903 = vmatpush1.msra.mxu0 0.0
    %3904 = vmatprep.subr.mxu0 0.0
    %3905 = vmatpush1.msra.mxu0 0.0
    %3906 = vmatprep.subr.mxu0 0.0
    %3907 = vmatpush1.msra.mxu0 0.0
    %3908 = vmatprep.subr.mxu0 0.0
    %3909 = vmatpush1.msra.mxu0 0.0
    %3910 = vmatprep.subr.mxu0 0.0
    %3911 = vmatpush1.msra.mxu0 0.0
    %3912 = vmatprep.subr.mxu0 0.0
    %3913 = vmatpush1.msra.mxu0 0.0
    %3914 = vmatprep.subr.mxu0 0.0
    %3915 = vmatpush1.msra.mxu0 0.0
    %3916 = vmatprep.subr.mxu0 0.0
    %3917 = vmatpush1.msra.mxu0 0.0
    %3918 = vmatprep.subr.mxu0 0.0
    %3919 = vmatpush1.msra.mxu0 0.0
    %3920 = vmatprep.subr.mxu0 0.0
    %3921 = vmatpush1.msra.mxu0 0.0
    %3922 = vmatprep.subr.mxu0 0.0
    %3923 = vmatpush1.msra.mxu0 0.0
    %3924 = vmatprep.subr.mxu0 0.0
    %3925 = vmatpush1.msra.mxu0 0.0
    %3926 = vmatprep.subr.mxu0 0.0
    %3927 = vmatpush1.msra.mxu0 0.0
    %3928 = vmatprep.mubr.f32.mxu0 0.0
    %3929 = vmatmul.mubr.f32.gmra.mrb[0].mxu0 %v3764
    %v3930 = vpop.f32.mrb[0].mxu0
    %v3931 = vadd.f32 0.0, %v3930
    %v3932 = vpop.f32.mrb[0].mxu0
    %v3933 = vadd.f32 0.0, %v3932
    %3934 = vmatprep.mubr.f32.mxu0 0.0
    %3935 = vmatmul.mubr.f32.gmra.mrb[0].mxu0 %v3767
    %v3936 = vpop.f32.mrb[0].mxu0
    %v3937 = vadd.f32 0.0, %v3936
    %v3938 = vpop.f32.mrb[0].mxu0
    %v3939 = vadd.f32 0.0, %v3938
    %3940 = vmatprep.mubr.f32.mxu0 0.0
    %3941 = vmatmul.mubr.f32.gmra.mrb[0].mxu0 %v3770
    %v3942 = vpop.f32.mrb[0].mxu0
    %v3943 = vadd.f32 0.0, %v3942
    %v3944 = vpop.f32.mrb[0].mxu0
    %v3945 = vadd.f32 0.0, %v3944
    %3946 = vmatprep.mubr.f32.mxu0 0.0
    %3947 = vmatmul.mubr.f32.gmra.mrb[0].mxu0 %v3773
    %v3948 = vpop.f32.mrb[0].mxu0
    %v3949 = vadd.f32 0.0, %v3948
    %v3950 = vpop.f32.mrb[0].mxu0
    %v3951 = vadd.f32 0.0, %v3950
    %3952 = vdwg.mxu0
    %v3953 = vadd.f32 %v3678, %v3842
    %v3954 = vadd.f32 %v3679, %v3844
    %v3955 = vadd.f32 %v3680, %v3931
    %v3956 = vadd.f32 %v3681, %v3933
    %v3957 = vadd.f32 %v3682, %v3848
    %v3958 = vadd.f32 %v3683, %v3850
    %v3959 = vadd.f32 %v3684, %v3937
    %v3960 = vadd.f32 %v3685, %v3939
    %v3961 = vadd.f32 %v3686, %v3854
    %v3962 = vadd.f32 %v3687, %v3856
    %v3963 = vadd.f32 %v3688, %v3943
    %v3964 = vadd.f32 %v3689, %v3945
    %v3965 = vadd.f32 %v3690, %v3860
    %v3966 = vadd.f32 %v3691, %v3862
    %v3967 = vadd.f32 %v3692, %v3949
    %v3968 = vadd.f32 %v3693, %v3951
    %s3969 = scalar_lea.vmem %s3, 192
    %v3970 = vld [vmem:[%s3969] sm:$0xff]
    %v3971 = vld [vmem:[%s3969 + $0x8] sm:$0xff]
    %v3972 = vld [vmem:[%s3969 + $0x10] sm:$0xff]
    %v3973 = vld [vmem:[%s3969 + $0x18] sm:$0xff]
    %3974 = vrot.lane.b32.xlu0 %v2383, 113
    %v3975 = vpop.permute.xlu0 %3974
    %3976 = vrot.lane.b32.xlu0 %v2387, 113
    %v3977 = vpop.permute.xlu0 %3976
    %3978 = vrot.lane.b32.xlu0 %v2391, 113
    %v3979 = vpop.permute.xlu0 %3978
    %3980 = vrot.lane.b32.xlu0 %v2395, 113
    %v3981 = vpop.permute.xlu0 %3980
    %3982 = vrot.lane.b32.xlu0 %v2384, 113
    %v3983 = vpop.permute.xlu0 %3982
    %3984 = vrot.lane.b32.xlu0 %v2388, 113
    %v3985 = vpop.permute.xlu0 %3984
    %3986 = vrot.lane.b32.xlu0 %v2392, 113
    %v3987 = vpop.permute.xlu0 %3986
    %3988 = vrot.lane.b32.xlu0 %v2396, 113
    %v3989 = vpop.permute.xlu0 %3988
    %3990 = vrot.lane.b32.xlu0 %v2385, 113
    %v3991 = vpop.permute.xlu0 %3990
    %3992 = vrot.lane.b32.xlu0 %v2389, 113
    %v3993 = vpop.permute.xlu0 %3992
    %3994 = vrot.lane.b32.xlu0 %v2393, 113
    %v3995 = vpop.permute.xlu0 %3994
    %3996 = vrot.lane.b32.xlu0 %v2397, 113
    %v3997 = vpop.permute.xlu0 %3996
    %3998 = vrot.lane.b32.xlu0 %v2386, 113
    %v3999 = vpop.permute.xlu0 %3998
    %4000 = vrot.lane.b32.xlu0 %v2390, 113
    %v4001 = vpop.permute.xlu0 %4000
    %4002 = vrot.lane.b32.xlu0 %v2394, 113
    %v4003 = vpop.permute.xlu0 %4002
    %4004 = vrot.lane.b32.xlu0 %v2398, 113
    %v4005 = vpop.permute.xlu0 %4004
    %v4006 = vsel %vm1612, %v3991, %v3999
    %v4007 = vsel %vm1612, %v3993, %v4001
    %v4008 = vsel %vm1612, %v3995, %v4003
    %v4009 = vsel %vm1612, %v3997, %v4005
    %v4010 = vsel %vm1612, %v3983, %v3991
    %v4011 = vsel %vm1612, %v3985, %v3993
    %v4012 = vsel %vm1612, %v3987, %v3995
    %v4013 = vsel %vm1612, %v3989, %v3997
    %v4014 = vsel %vm1612, %v3975, %v3983
    %v4015 = vsel %vm1612, %v3977, %v3985
    %v4016 = vsel %vm1612, %v3979, %v3987
    %v4017 = vsel %vm1612, %v3981, %v3989
    %v4018 = vsel %vm1612, %v3999, %v3975
    %v4019 = vsel %vm1612, %v4001, %v3977
    %v4020 = vsel %vm1612, %v4003, %v3979
    %v4021 = vsel %vm1612, %v4005, %v3981
    %v4022 = vsel %vm1621, %v4014, 0.0
    %v4023 = vsel %vm1622, %v4010, 0.0
    %v4024 = vsel %vm1623, %v4006, 0.0
    %v4025 = vsel %vm1624, %v4018, 0.0
    %v4026 = vsel %vm1621, %v4015, 0.0
    %v4027 = vsel %vm1622, %v4011, 0.0
    %v4028 = vsel %vm1623, %v4007, 0.0
    %v4029 = vsel %vm1624, %v4019, 0.0
    %v4030 = vsel %vm1621, %v4016, 0.0
    %v4031 = vsel %vm1622, %v4012, 0.0
    %v4032 = vsel %vm1623, %v4008, 0.0
    %v4033 = vsel %vm1624, %v4020, 0.0
    %v4034 = vsel %vm1621, %v4017, 0.0
    %v4035 = vsel %vm1622, %v4013, 0.0
    %v4036 = vsel %vm1623, %v4009, 0.0
    %v4037 = vsel %vm1624, %v4021, 0.0
    %v4039 = vsel %vm2552, %v3970, 0
    %v4042 = vsel %vm2552, %v3971, 0
    %v4045 = vsel %vm2552, %v3972, 0
    %v4048 = vsel %vm2552, %v3973, 0
    %4050 = vmatprep.subr.mxu0 %v4023
    %4051 = vmatpush1.msra.mxu0 %v4022
    %4052 = vmatprep.subr.mxu0 %v4027
    %4053 = vmatpush1.msra.mxu0 %v4026
    %4054 = vmatprep.subr.mxu0 %v4031
    %4055 = vmatpush1.msra.mxu0 %v4030
    %4056 = vmatprep.subr.mxu0 %v4035
    %4057 = vmatpush1.msra.mxu0 %v4034
    %4058 = vmatprep.subr.mxu0 0.0
    %4059 = vmatpush1.msra.mxu0 0.0
    %4060 = vmatprep.subr.mxu0 0.0
    %4061 = vmatpush1.msra.mxu0 0.0
    %4062 = vmatprep.subr.mxu0 0.0
    %4063 = vmatpush1.msra.mxu0 0.0
    %4064 = vmatprep.subr.mxu0 0.0
    %4065 = vmatpush1.msra.mxu0 0.0
    %4066 = vmatprep.subr.mxu0 0.0
    %4067 = vmatpush1.msra.mxu0 0.0
    %4068 = vmatprep.subr.mxu0 0.0
    %4069 = vmatpush1.msra.mxu0 0.0
    %4070 = vmatprep.subr.mxu0 0.0
    %4071 = vmatpush1.msra.mxu0 0.0
    %4072 = vmatprep.subr.mxu0 0.0
    %4073 = vmatpush1.msra.mxu0 0.0
    %4074 = vmatprep.subr.mxu0 0.0
    %4075 = vmatpush1.msra.mxu0 0.0
    %4076 = vmatprep.subr.mxu0 0.0
    %4077 = vmatpush1.msra.mxu0 0.0
    %4078 = vmatprep.subr.mxu0 0.0
    %4079 = vmatpush1.msra.mxu0 0.0
    %4080 = vmatprep.subr.mxu0 0.0
    %4081 = vmatpush1.msra.mxu0 0.0
    %4082 = vmatprep.subr.mxu0 0.0
    %4083 = vmatpush1.msra.mxu0 0.0
    %4084 = vmatprep.subr.mxu0 0.0
    %4085 = vmatpush1.msra.mxu0 0.0
    %4086 = vmatprep.subr.mxu0 0.0
    %4087 = vmatpush1.msra.mxu0 0.0
    %4088 = vmatprep.subr.mxu0 0.0
    %4089 = vmatpush1.msra.mxu0 0.0
    %4090 = vmatprep.subr.mxu0 0.0
    %4091 = vmatpush1.msra.mxu0 0.0
    %4092 = vmatprep.subr.mxu0 0.0
    %4093 = vmatpush1.msra.mxu0 0.0
    %4094 = vmatprep.subr.mxu0 0.0
    %4095 = vmatpush1.msra.mxu0 0.0
    %4096 = vmatprep.subr.mxu0 0.0
    %4097 = vmatpush1.msra.mxu0 0.0
    %4098 = vmatprep.subr.mxu0 0.0
    %4099 = vmatpush1.msra.mxu0 0.0
    %4100 = vmatprep.subr.mxu0 0.0
    %4101 = vmatpush1.msra.mxu0 0.0
    %4102 = vmatprep.subr.mxu0 0.0
    %4103 = vmatpush1.msra.mxu0 0.0
    %4104 = vmatprep.subr.mxu0 0.0
    %4105 = vmatpush1.msra.mxu0 0.0
    %4106 = vmatprep.subr.mxu0 0.0
    %4107 = vmatpush1.msra.mxu0 0.0
    %4108 = vmatprep.subr.mxu0 0.0
    %4109 = vmatpush1.msra.mxu0 0.0
    %4110 = vmatprep.subr.mxu0 0.0
    %4111 = vmatpush1.msra.mxu0 0.0
    %4112 = vmatprep.subr.mxu0 0.0
    %4113 = vmatpush1.msra.mxu0 0.0
    %4114 = vmatprep.mubr.f32.mxu0 0.0
    %4115 = vmatmul.mubr.f32.gmra.mrb[0].mxu0 %v4039
    %v4116 = vpop.f32.mrb[0].mxu0
    %v4117 = vadd.f32 0.0, %v4116
    %v4118 = vpop.f32.mrb[0].mxu0
    %v4119 = vadd.f32 0.0, %v4118
    %4120 = vmatprep.mubr.f32.mxu0 0.0
    %4121 = vmatmul.mubr.f32.gmra.mrb[0].mxu0 %v4042
    %v4122 = vpop.f32.mrb[0].mxu0
    %v4123 = vadd.f32 0.0, %v4122
    %v4124 = vpop.f32.mrb[0].mxu0
    %v4125 = vadd.f32 0.0, %v4124
    %4126 = vmatprep.mubr.f32.mxu0 0.0
    %4127 = vmatmul.mubr.f32.gmra.mrb[0].mxu0 %v4045
    %v4128 = vpop.f32.mrb[0].mxu0
    %v4129 = vadd.f32 0.0, %v4128
    %v4130 = vpop.f32.mrb[0].mxu0
    %v4131 = vadd.f32 0.0, %v4130
    %4132 = vmatprep.mubr.f32.mxu0 0.0
    %4133 = vmatmul.mubr.f32.gmra.mrb[0].mxu0 %v4048
    %v4134 = vpop.f32.mrb[0].mxu0
    %v4135 = vadd.f32 0.0, %v4134
    %v4136 = vpop.f32.mrb[0].mxu0
    %v4137 = vadd.f32 0.0, %v4136
    %4138 = vdwg.mxu0
    %4139 = vmatprep.subr.mxu0 %v4025
    %4140 = vmatpush1.msra.mxu0 %v4024
    %4141 = vmatprep.subr.mxu0 %v4029
    %4142 = vmatpush1.msra.mxu0 %v4028
    %4143 = vmatprep.subr.mxu0 %v4033
    %4144 = vmatpush1.msra.mxu0 %v4032
    %4145 = vmatprep.subr.mxu0 %v4037
    %4146 = vmatpush1.msra.mxu0 %v4036
    %4147 = vmatprep.subr.mxu0 0.0
    %4148 = vmatpush1.msra.mxu0 0.0
    %4149 = vmatprep.subr.mxu0 0.0
    %4150 = vmatpush1.msra.mxu0 0.0
    %4151 = vmatprep.subr.mxu0 0.0
    %4152 = vmatpush1.msra.mxu0 0.0
    %4153 = vmatprep.subr.mxu0 0.0
    %4154 = vmatpush1.msra.mxu0 0.0
    %4155 = vmatprep.subr.mxu0 0.0
    %4156 = vmatpush1.msra.mxu0 0.0
    %4157 = vmatprep.subr.mxu0 0.0
    %4158 = vmatpush1.msra.mxu0 0.0
    %4159 = vmatprep.subr.mxu0 0.0
    %4160 = vmatpush1.msra.mxu0 0.0
    %4161 = vmatprep.subr.mxu0 0.0
    %4162 = vmatpush1.msra.mxu0 0.0
    %4163 = vmatprep.subr.mxu0 0.0
    %4164 = vmatpush1.msra.mxu0 0.0
    %4165 = vmatprep.subr.mxu0 0.0
    %4166 = vmatpush1.msra.mxu0 0.0
    %4167 = vmatprep.subr.mxu0 0.0
    %4168 = vmatpush1.msra.mxu0 0.0
    %4169 = vmatprep.subr.mxu0 0.0
    %4170 = vmatpush1.msra.mxu0 0.0
    %4171 = vmatprep.subr.mxu0 0.0
    %4172 = vmatpush1.msra.mxu0 0.0
    %4173 = vmatprep.subr.mxu0 0.0
    %4174 = vmatpush1.msra.mxu0 0.0
    %4175 = vmatprep.subr.mxu0 0.0
    %4176 = vmatpush1.msra.mxu0 0.0
    %4177 = vmatprep.subr.mxu0 0.0
    %4178 = vmatpush1.msra.mxu0 0.0
    %4179 = vmatprep.subr.mxu0 0.0
    %4180 = vmatpush1.msra.mxu0 0.0
    %4181 = vmatprep.subr.mxu0 0.0
    %4182 = vmatpush1.msra.mxu0 0.0
    %4183 = vmatprep.subr.mxu0 0.0
    %4184 = vmatpush1.msra.mxu0 0.0
    %4185 = vmatprep.subr.mxu0 0.0
    %4186 = vmatpush1.msra.mxu0 0.0
    %4187 = vmatprep.subr.mxu0 0.0
    %4188 = vmatpush1.msra.mxu0 0.0
    %4189 = vmatprep.subr.mxu0 0.0
    %4190 = vmatpush1.msra.mxu0 0.0
    %4191 = vmatprep.subr.mxu0 0.0
    %4192 = vmatpush1.msra.mxu0 0.0
    %4193 = vmatprep.subr.mxu0 0.0
    %4194 = vmatpush1.msra.mxu0 0.0
    %4195 = vmatprep.subr.mxu0 0.0
    %4196 = vmatpush1.msra.mxu0 0.0
    %4197 = vmatprep.subr.mxu0 0.0
    %4198 = vmatpush1.msra.mxu0 0.0
    %4199 = vmatprep.subr.mxu0 0.0
    %4200 = vmatpush1.msra.mxu0 0.0
    %4201 = vmatprep.subr.mxu0 0.0
    %4202 = vmatpush1.msra.mxu0 0.0
    %4203 = vmatprep.mubr.f32.mxu0 0.0
    %4204 = vmatmul.mubr.f32.gmra.mrb[0].mxu0 %v4039
    %v4205 = vpop.f32.mrb[0].mxu0
    %v4206 = vadd.f32 0.0, %v4205
    %v4207 = vpop.f32.mrb[0].mxu0
    %v4208 = vadd.f32 0.0, %v4207
    %4209 = vmatprep.mubr.f32.mxu0 0.0
    %4210 = vmatmul.mubr.f32.gmra.mrb[0].mxu0 %v4042
    %v4211 = vpop.f32.mrb[0].mxu0
    %v4212 = vadd.f32 0.0, %v4211
    %v4213 = vpop.f32.mrb[0].mxu0
    %v4214 = vadd.f32 0.0, %v4213
    %4215 = vmatprep.mubr.f32.mxu0 0.0
    %4216 = vmatmul.mubr.f32.gmra.mrb[0].mxu0 %v4045
    %v4217 = vpop.f32.mrb[0].mxu0
    %v4218 = vadd.f32 0.0, %v4217
    %v4219 = vpop.f32.mrb[0].mxu0
    %v4220 = vadd.f32 0.0, %v4219
    %4221 = vmatprep.mubr.f32.mxu0 0.0
    %4222 = vmatmul.mubr.f32.gmra.mrb[0].mxu0 %v4048
    %v4223 = vpop.f32.mrb[0].mxu0
    %v4224 = vadd.f32 0.0, %v4223
    %v4225 = vpop.f32.mrb[0].mxu0
    %v4226 = vadd.f32 0.0, %v4225
    %4227 = vdwg.mxu0
    %v4228 = vadd.f32 %v3953, %v4117
    %v4229 = vadd.f32 %v3954, %v4119
    %v4230 = vadd.f32 %v3955, %v4206
    %v4231 = vadd.f32 %v3956, %v4208
    %v4232 = vadd.f32 %v3957, %v4123
    %v4233 = vadd.f32 %v3958, %v4125
    %v4234 = vadd.f32 %v3959, %v4212
    %v4235 = vadd.f32 %v3960, %v4214
    %v4236 = vadd.f32 %v3961, %v4129
    %v4237 = vadd.f32 %v3962, %v4131
    %v4238 = vadd.f32 %v3963, %v4218
    %v4239 = vadd.f32 %v3964, %v4220
    %v4240 = vadd.f32 %v3965, %v4135
    %v4241 = vadd.f32 %v3966, %v4137
    %v4242 = vadd.f32 %v3967, %v4224
    %v4243 = vadd.f32 %v3968, %v4226
    %s4244 = scalar_lea.vmem %s3, 224
    %v4245 = vld [vmem:[%s4244] sm:$0xff]
    %v4246 = vld [vmem:[%s4244 + $0x8] sm:$0xff]
    %v4247 = vld [vmem:[%s4244 + $0x10] sm:$0xff]
    %v4248 = vld [vmem:[%s4244 + $0x18] sm:$0xff]
    %4249 = vrot.lane.b32.xlu0 %v2383, 112
    %v4250 = vpop.permute.xlu0 %4249
    %4251 = vrot.lane.b32.xlu0 %v2387, 112
    %v4252 = vpop.permute.xlu0 %4251
    %4253 = vrot.lane.b32.xlu0 %v2391, 112
    %v4254 = vpop.permute.xlu0 %4253
    %4255 = vrot.lane.b32.xlu0 %v2395, 112
    %v4256 = vpop.permute.xlu0 %4255
    %4257 = vrot.lane.b32.xlu0 %v2384, 112
    %v4258 = vpop.permute.xlu0 %4257
    %4259 = vrot.lane.b32.xlu0 %v2388, 112
    %v4260 = vpop.permute.xlu0 %4259
    %4261 = vrot.lane.b32.xlu0 %v2392, 112
    %v4262 = vpop.permute.xlu0 %4261
    %4263 = vrot.lane.b32.xlu0 %v2396, 112
    %v4264 = vpop.permute.xlu0 %4263
    %4265 = vrot.lane.b32.xlu0 %v2385, 112
    %v4266 = vpop.permute.xlu0 %4265
    %4267 = vrot.lane.b32.xlu0 %v2389, 112
    %v4268 = vpop.permute.xlu0 %4267
    %4269 = vrot.lane.b32.xlu0 %v2393, 112
    %v4270 = vpop.permute.xlu0 %4269
    %4271 = vrot.lane.b32.xlu0 %v2397, 112
    %v4272 = vpop.permute.xlu0 %4271
    %4273 = vrot.lane.b32.xlu0 %v2386, 112
    %v4274 = vpop.permute.xlu0 %4273
    %4275 = vrot.lane.b32.xlu0 %v2390, 112
    %v4276 = vpop.permute.xlu0 %4275
    %4277 = vrot.lane.b32.xlu0 %v2394, 112
    %v4278 = vpop.permute.xlu0 %4277
    %4279 = vrot.lane.b32.xlu0 %v2398, 112
    %v4280 = vpop.permute.xlu0 %4279
    %v4281 = vsel %vm1860, %v4266, %v4274
    %v4282 = vsel %vm1860, %v4268, %v4276
    %v4283 = vsel %vm1860, %v4270, %v4278
    %v4284 = vsel %vm1860, %v4272, %v4280
    %v4285 = vsel %vm1860, %v4258, %v4266
    %v4286 = vsel %vm1860, %v4260, %v4268
    %v4287 = vsel %vm1860, %v4262, %v4270
    %v4288 = vsel %vm1860, %v4264, %v4272
    %v4289 = vsel %vm1860, %v4250, %v4258
    %v4290 = vsel %vm1860, %v4252, %v4260
    %v4291 = vsel %vm1860, %v4254, %v4262
    %v4292 = vsel %vm1860, %v4256, %v4264
    %v4293 = vsel %vm1860, %v4274, %v4250
    %v4294 = vsel %vm1860, %v4276, %v4252
    %v4295 = vsel %vm1860, %v4278, %v4254
    %v4296 = vsel %vm1860, %v4280, %v4256
    %v4297 = vsel %vm1869, %v4289, 0.0
    %v4298 = vsel %vm1870, %v4285, 0.0
    %v4299 = vsel %vm1871, %v4281, 0.0
    %v4300 = vsel %vm1872, %v4293, 0.0
    %v4301 = vsel %vm1869, %v4290, 0.0
    %v4302 = vsel %vm1870, %v4286, 0.0
    %v4303 = vsel %vm1871, %v4282, 0.0
    %v4304 = vsel %vm1872, %v4294, 0.0
    %v4305 = vsel %vm1869, %v4291, 0.0
    %v4306 = vsel %vm1870, %v4287, 0.0
    %v4307 = vsel %vm1871, %v4283, 0.0
    %v4308 = vsel %vm1872, %v4295, 0.0
    %v4309 = vsel %vm1869, %v4292, 0.0
    %v4310 = vsel %vm1870, %v4288, 0.0
    %v4311 = vsel %vm1871, %v4284, 0.0
    %v4312 = vsel %vm1872, %v4296, 0.0
    %v4314 = vsel %vm2552, %v4245, 0
    %v4317 = vsel %vm2552, %v4246, 0
    %v4320 = vsel %vm2552, %v4247, 0
    %v4323 = vsel %vm2552, %v4248, 0
    %4325 = vmatprep.subr.mxu0 %v4298
    %4326 = vmatpush1.msra.mxu0 %v4297
    %4327 = vmatprep.subr.mxu0 %v4302
    %4328 = vmatpush1.msra.mxu0 %v4301
    %4329 = vmatprep.subr.mxu0 %v4306
    %4330 = vmatpush1.msra.mxu0 %v4305
    %4331 = vmatprep.subr.mxu0 %v4310
    %4332 = vmatpush1.msra.mxu0 %v4309
    %4333 = vmatprep.subr.mxu0 0.0
    %4334 = vmatpush1.msra.mxu0 0.0
    %4335 = vmatprep.subr.mxu0 0.0
    %4336 = vmatpush1.msra.mxu0 0.0
    %4337 = vmatprep.subr.mxu0 0.0
    %4338 = vmatpush1.msra.mxu0 0.0
    %4339 = vmatprep.subr.mxu0 0.0
    %4340 = vmatpush1.msra.mxu0 0.0
    %4341 = vmatprep.subr.mxu0 0.0
    %4342 = vmatpush1.msra.mxu0 0.0
    %4343 = vmatprep.subr.mxu0 0.0
    %4344 = vmatpush1.msra.mxu0 0.0
    %4345 = vmatprep.subr.mxu0 0.0
    %4346 = vmatpush1.msra.mxu0 0.0
    %4347 = vmatprep.subr.mxu0 0.0
    %4348 = vmatpush1.msra.mxu0 0.0
    %4349 = vmatprep.subr.mxu0 0.0
    %4350 = vmatpush1.msra.mxu0 0.0
    %4351 = vmatprep.subr.mxu0 0.0
    %4352 = vmatpush1.msra.mxu0 0.0
    %4353 = vmatprep.subr.mxu0 0.0
    %4354 = vmatpush1.msra.mxu0 0.0
    %4355 = vmatprep.subr.mxu0 0.0
    %4356 = vmatpush1.msra.mxu0 0.0
    %4357 = vmatprep.subr.mxu0 0.0
    %4358 = vmatpush1.msra.mxu0 0.0
    %4359 = vmatprep.subr.mxu0 0.0
    %4360 = vmatpush1.msra.mxu0 0.0
    %4361 = vmatprep.subr.mxu0 0.0
    %4362 = vmatpush1.msra.mxu0 0.0
    %4363 = vmatprep.subr.mxu0 0.0
    %4364 = vmatpush1.msra.mxu0 0.0
    %4365 = vmatprep.subr.mxu0 0.0
    %4366 = vmatpush1.msra.mxu0 0.0
    %4367 = vmatprep.subr.mxu0 0.0
    %4368 = vmatpush1.msra.mxu0 0.0
    %4369 = vmatprep.subr.mxu0 0.0
    %4370 = vmatpush1.msra.mxu0 0.0
    %4371 = vmatprep.subr.mxu0 0.0
    %4372 = vmatpush1.msra.mxu0 0.0
    %4373 = vmatprep.subr.mxu0 0.0
    %4374 = vmatpush1.msra.mxu0 0.0
    %4375 = vmatprep.subr.mxu0 0.0
    %4376 = vmatpush1.msra.mxu0 0.0
    %4377 = vmatprep.subr.mxu0 0.0
    %4378 = vmatpush1.msra.mxu0 0.0
    %4379 = vmatprep.subr.mxu0 0.0
    %4380 = vmatpush1.msra.mxu0 0.0
    %4381 = vmatprep.subr.mxu0 0.0
    %4382 = vmatpush1.msra.mxu0 0.0
    %4383 = vmatprep.subr.mxu0 0.0
    %4384 = vmatpush1.msra.mxu0 0.0
    %4385 = vmatprep.subr.mxu0 0.0
    %4386 = vmatpush1.msra.mxu0 0.0
    %4387 = vmatprep.subr.mxu0 0.0
    %4388 = vmatpush1.msra.mxu0 0.0
    %4389 = vmatprep.mubr.f32.mxu0 0.0
    %4390 = vmatmul.mubr.f32.gmra.mrb[0].mxu0 %v4314
    %v4391 = vpop.f32.mrb[0].mxu0
    %v4392 = vadd.f32 0.0, %v4391
    %v4393 = vpop.f32.mrb[0].mxu0
    %v4394 = vadd.f32 0.0, %v4393
    %4395 = vmatprep.mubr.f32.mxu0 0.0
    %4396 = vmatmul.mubr.f32.gmra.mrb[0].mxu0 %v4317
    %v4397 = vpop.f32.mrb[0].mxu0
    %v4398 = vadd.f32 0.0, %v4397
    %v4399 = vpop.f32.mrb[0].mxu0
    %v4400 = vadd.f32 0.0, %v4399
    %4401 = vmatprep.mubr.f32.mxu0 0.0
    %4402 = vmatmul.mubr.f32.gmra.mrb[0].mxu0 %v4320
    %v4403 = vpop.f32.mrb[0].mxu0
    %v4404 = vadd.f32 0.0, %v4403
    %v4405 = vpop.f32.mrb[0].mxu0
    %v4406 = vadd.f32 0.0, %v4405
    %4407 = vmatprep.mubr.f32.mxu0 0.0
    %4408 = vmatmul.mubr.f32.gmra.mrb[0].mxu0 %v4323
    %v4409 = vpop.f32.mrb[0].mxu0
    %v4410 = vadd.f32 0.0, %v4409
    %v4411 = vpop.f32.mrb[0].mxu0
    %v4412 = vadd.f32 0.0, %v4411
    %4413 = vdwg.mxu0
    %4414 = vmatprep.subr.mxu0 %v4300
    %4415 = vmatpush1.msra.mxu0 %v4299
    %4416 = vmatprep.subr.mxu0 %v4304
    %4417 = vmatpush1.msra.mxu0 %v4303
    %4418 = vmatprep.subr.mxu0 %v4308
    %4419 = vmatpush1.msra.mxu0 %v4307
    %4420 = vmatprep.subr.mxu0 %v4312
    %4421 = vmatpush1.msra.mxu0 %v4311
    %4422 = vmatprep.subr.mxu0 0.0
    %4423 = vmatpush1.msra.mxu0 0.0
    %4424 = vmatprep.subr.mxu0 0.0
    %4425 = vmatpush1.msra.mxu0 0.0
    %4426 = vmatprep.subr.mxu0 0.0
    %4427 = vmatpush1.msra.mxu0 0.0
    %4428 = vmatprep.subr.mxu0 0.0
    %4429 = vmatpush1.msra.mxu0 0.0
    %4430 = vmatprep.subr.mxu0 0.0
    %4431 = vmatpush1.msra.mxu0 0.0
    %4432 = vmatprep.subr.mxu0 0.0
    %4433 = vmatpush1.msra.mxu0 0.0
    %4434 = vmatprep.subr.mxu0 0.0
    %4435 = vmatpush1.msra.mxu0 0.0
    %4436 = vmatprep.subr.mxu0 0.0
    %4437 = vmatpush1.msra.mxu0 0.0
    %4438 = vmatprep.subr.mxu0 0.0
    %4439 = vmatpush1.msra.mxu0 0.0
    %4440 = vmatprep.subr.mxu0 0.0
    %4441 = vmatpush1.msra.mxu0 0.0
    %4442 = vmatprep.subr.mxu0 0.0
    %4443 = vmatpush1.msra.mxu0 0.0
    %4444 = vmatprep.subr.mxu0 0.0
    %4445 = vmatpush1.msra.mxu0 0.0
    %4446 = vmatprep.subr.mxu0 0.0
    %4447 = vmatpush1.msra.mxu0 0.0
    %4448 = vmatprep.subr.mxu0 0.0
    %4449 = vmatpush1.msra.mxu0 0.0
    %4450 = vmatprep.subr.mxu0 0.0
    %4451 = vmatpush1.msra.mxu0 0.0
    %4452 = vmatprep.subr.mxu0 0.0
    %4453 = vmatpush1.msra.mxu0 0.0
    %4454 = vmatprep.subr.mxu0 0.0
    %4455 = vmatpush1.msra.mxu0 0.0
    %4456 = vmatprep.subr.mxu0 0.0
    %4457 = vmatpush1.msra.mxu0 0.0
    %4458 = vmatprep.subr.mxu0 0.0
    %4459 = vmatpush1.msra.mxu0 0.0
    %4460 = vmatprep.subr.mxu0 0.0
    %4461 = vmatpush1.msra.mxu0 0.0
    %4462 = vmatprep.subr.mxu0 0.0
    %4463 = vmatpush1.msra.mxu0 0.0
    %4464 = vmatprep.subr.mxu0 0.0
    %4465 = vmatpush1.msra.mxu0 0.0
    %4466 = vmatprep.subr.mxu0 0.0
    %4467 = vmatpush1.msra.mxu0 0.0
    %4468 = vmatprep.subr.mxu0 0.0
    %4469 = vmatpush1.msra.mxu0 0.0
    %4470 = vmatprep.subr.mxu0 0.0
    %4471 = vmatpush1.msra.mxu0 0.0
    %4472 = vmatprep.subr.mxu0 0.0
    %4473 = vmatpush1.msra.mxu0 0.0
    %4474 = vmatprep.subr.mxu0 0.0
    %4475 = vmatpush1.msra.mxu0 0.0
    %4476 = vmatprep.subr.mxu0 0.0
    %4477 = vmatpush1.msra.mxu0 0.0
    %4478 = vmatprep.mubr.f32.mxu0 0.0
    %4479 = vmatmul.mubr.f32.gmra.mrb[0].mxu0 %v4314
    %v4480 = vpop.f32.mrb[0].mxu0
    %v4481 = vadd.f32 0.0, %v4480
    %v4482 = vpop.f32.mrb[0].mxu0
    %v4483 = vadd.f32 0.0, %v4482
    %4484 = vmatprep.mubr.f32.mxu0 0.0
    %4485 = vmatmul.mubr.f32.gmra.mrb[0].mxu0 %v4317
    %v4486 = vpop.f32.mrb[0].mxu0
    %v4487 = vadd.f32 0.0, %v4486
    %v4488 = vpop.f32.mrb[0].mxu0
    %v4489 = vadd.f32 0.0, %v4488
    %4490 = vmatprep.mubr.f32.mxu0 0.0
    %4491 = vmatmul.mubr.f32.gmra.mrb[0].mxu0 %v4320
    %v4492 = vpop.f32.mrb[0].mxu0
    %v4493 = vadd.f32 0.0, %v4492
    %v4494 = vpop.f32.mrb[0].mxu0
    %v4495 = vadd.f32 0.0, %v4494
    %4496 = vmatprep.mubr.f32.mxu0 0.0
    %4497 = vmatmul.mubr.f32.gmra.mrb[0].mxu0 %v4323
    %v4498 = vpop.f32.mrb[0].mxu0
    %v4499 = vadd.f32 0.0, %v4498
    %v4500 = vpop.f32.mrb[0].mxu0
    %v4501 = vadd.f32 0.0, %v4500
    %4502 = vdwg.mxu0
    %v4503 = vadd.f32 %v4228, %v4392
    %v4504 = vadd.f32 %v4229, %v4394
    %v4505 = vadd.f32 %v4230, %v4481
    %v4506 = vadd.f32 %v4231, %v4483
    %v4507 = vadd.f32 %v4232, %v4398
    %v4508 = vadd.f32 %v4233, %v4400
    %v4509 = vadd.f32 %v4234, %v4487
    %v4510 = vadd.f32 %v4235, %v4489
    %v4511 = vadd.f32 %v4236, %v4404
    %v4512 = vadd.f32 %v4237, %v4406
    %v4513 = vadd.f32 %v4238, %v4493
    %v4514 = vadd.f32 %v4239, %v4495
    %v4515 = vadd.f32 %v4240, %v4410
    %v4516 = vadd.f32 %v4241, %v4412
    %v4517 = vadd.f32 %v4242, %v4499
    %v4518 = vadd.f32 %v4243, %v4501
    %s4519 = scalar_lea.vmem %s3, 256
    %v4520 = vld [vmem:[%s4519] sm:$0xff]
    %v4521 = vld [vmem:[%s4519 + $0x8] sm:$0xff]
    %v4522 = vld [vmem:[%s4519 + $0x10] sm:$0xff]
    %v4523 = vld [vmem:[%s4519 + $0x18] sm:$0xff]
    %4524 = vrot.lane.b32.xlu0 %v2383, 111
    %v4525 = vpop.permute.xlu0 %4524
    %4526 = vrot.lane.b32.xlu0 %v2387, 111
    %v4527 = vpop.permute.xlu0 %4526
    %4528 = vrot.lane.b32.xlu0 %v2391, 111
    %v4529 = vpop.permute.xlu0 %4528
    %4530 = vrot.lane.b32.xlu0 %v2395, 111
    %v4531 = vpop.permute.xlu0 %4530
    %4532 = vrot.lane.b32.xlu0 %v2384, 111
    %v4533 = vpop.permute.xlu0 %4532
    %4534 = vrot.lane.b32.xlu0 %v2388, 111
    %v4535 = vpop.permute.xlu0 %4534
    %4536 = vrot.lane.b32.xlu0 %v2392, 111
    %v4537 = vpop.permute.xlu0 %4536
    %4538 = vrot.lane.b32.xlu0 %v2396, 111
    %v4539 = vpop.permute.xlu0 %4538
    %4540 = vrot.lane.b32.xlu0 %v2385, 111
    %v4541 = vpop.permute.xlu0 %4540
    %4542 = vrot.lane.b32.xlu0 %v2389, 111
    %v4543 = vpop.permute.xlu0 %4542
    %4544 = vrot.lane.b32.xlu0 %v2393, 111
    %v4545 = vpop.permute.xlu0 %4544
    %4546 = vrot.lane.b32.xlu0 %v2397, 111
    %v4547 = vpop.permute.xlu0 %4546
    %4548 = vrot.lane.b32.xlu0 %v2386, 111
    %v4549 = vpop.permute.xlu0 %4548
    %4550 = vrot.lane.b32.xlu0 %v2390, 111
    %v4551 = vpop.permute.xlu0 %4550
    %4552 = vrot.lane.b32.xlu0 %v2394, 111
    %v4553 = vpop.permute.xlu0 %4552
    %4554 = vrot.lane.b32.xlu0 %v2398, 111
    %v4555 = vpop.permute.xlu0 %4554
    %v4556 = vsel %vm2108, %v4541, %v4549
    %v4557 = vsel %vm2108, %v4543, %v4551
    %v4558 = vsel %vm2108, %v4545, %v4553
    %v4559 = vsel %vm2108, %v4547, %v4555
    %v4560 = vsel %vm2108, %v4533, %v4541
    %v4561 = vsel %vm2108, %v4535, %v4543
    %v4562 = vsel %vm2108, %v4537, %v4545
    %v4563 = vsel %vm2108, %v4539, %v4547
    %v4564 = vsel %vm2108, %v4525, %v4533
    %v4565 = vsel %vm2108, %v4527, %v4535
    %v4566 = vsel %vm2108, %v4529, %v4537
    %v4567 = vsel %vm2108, %v4531, %v4539
    %v4568 = vsel %vm2108, %v4549, %v4525
    %v4569 = vsel %vm2108, %v4551, %v4527
    %v4570 = vsel %vm2108, %v4553, %v4529
    %v4571 = vsel %vm2108, %v4555, %v4531
    %v4572 = vsel %vm2117, %v4564, 0.0
    %v4573 = vsel %vm2118, %v4560, 0.0
    %v4574 = vsel %vm2119, %v4556, 0.0
    %v4575 = vsel %vm2120, %v4568, 0.0
    %v4576 = vsel %vm2117, %v4565, 0.0
    %v4577 = vsel %vm2118, %v4561, 0.0
    %v4578 = vsel %vm2119, %v4557, 0.0
    %v4579 = vsel %vm2120, %v4569, 0.0
    %v4580 = vsel %vm2117, %v4566, 0.0
    %v4581 = vsel %vm2118, %v4562, 0.0
    %v4582 = vsel %vm2119, %v4558, 0.0
    %v4583 = vsel %vm2120, %v4570, 0.0
    %v4584 = vsel %vm2117, %v4567, 0.0
    %v4585 = vsel %vm2118, %v4563, 0.0
    %v4586 = vsel %vm2119, %v4559, 0.0
    %v4587 = vsel %vm2120, %v4571, 0.0
    %v4589 = vsel %vm2552, %v4520, 0
    %v4592 = vsel %vm2552, %v4521, 0
    %v4595 = vsel %vm2552, %v4522, 0
    %v4598 = vsel %vm2552, %v4523, 0
    %4600 = vmatprep.subr.mxu0 %v4573
    %4601 = vmatpush1.msra.mxu0 %v4572
    %4602 = vmatprep.subr.mxu0 %v4577
    %4603 = vmatpush1.msra.mxu0 %v4576
    %4604 = vmatprep.subr.mxu0 %v4581
    %4605 = vmatpush1.msra.mxu0 %v4580
    %4606 = vmatprep.subr.mxu0 %v4585
    %4607 = vmatpush1.msra.mxu0 %v4584
    %4608 = vmatprep.subr.mxu0 0.0
    %4609 = vmatpush1.msra.mxu0 0.0
    %4610 = vmatprep.subr.mxu0 0.0
    %4611 = vmatpush1.msra.mxu0 0.0
    %4612 = vmatprep.subr.mxu0 0.0
    %4613 = vmatpush1.msra.mxu0 0.0
    %4614 = vmatprep.subr.mxu0 0.0
    %4615 = vmatpush1.msra.mxu0 0.0
    %4616 = vmatprep.subr.mxu0 0.0
    %4617 = vmatpush1.msra.mxu0 0.0
    %4618 = vmatprep.subr.mxu0 0.0
    %4619 = vmatpush1.msra.mxu0 0.0
    %4620 = vmatprep.subr.mxu0 0.0
    %4621 = vmatpush1.msra.mxu0 0.0
    %4622 = vmatprep.subr.mxu0 0.0
    %4623 = vmatpush1.msra.mxu0 0.0
    %4624 = vmatprep.subr.mxu0 0.0
    %4625 = vmatpush1.msra.mxu0 0.0
    %4626 = vmatprep.subr.mxu0 0.0
    %4627 = vmatpush1.msra.mxu0 0.0
    %4628 = vmatprep.subr.mxu0 0.0
    %4629 = vmatpush1.msra.mxu0 0.0
    %4630 = vmatprep.subr.mxu0 0.0
    %4631 = vmatpush1.msra.mxu0 0.0
    %4632 = vmatprep.subr.mxu0 0.0
    %4633 = vmatpush1.msra.mxu0 0.0
    %4634 = vmatprep.subr.mxu0 0.0
    %4635 = vmatpush1.msra.mxu0 0.0
    %4636 = vmatprep.subr.mxu0 0.0
    %4637 = vmatpush1.msra.mxu0 0.0
    %4638 = vmatprep.subr.mxu0 0.0
    %4639 = vmatpush1.msra.mxu0 0.0
    %4640 = vmatprep.subr.mxu0 0.0
    %4641 = vmatpush1.msra.mxu0 0.0
    %4642 = vmatprep.subr.mxu0 0.0
    %4643 = vmatpush1.msra.mxu0 0.0
    %4644 = vmatprep.subr.mxu0 0.0
    %4645 = vmatpush1.msra.mxu0 0.0
    %4646 = vmatprep.subr.mxu0 0.0
    %4647 = vmatpush1.msra.mxu0 0.0
    %4648 = vmatprep.subr.mxu0 0.0
    %4649 = vmatpush1.msra.mxu0 0.0
    %4650 = vmatprep.subr.mxu0 0.0
    %4651 = vmatpush1.msra.mxu0 0.0
    %4652 = vmatprep.subr.mxu0 0.0
    %4653 = vmatpush1.msra.mxu0 0.0
    %4654 = vmatprep.subr.mxu0 0.0
    %4655 = vmatpush1.msra.mxu0 0.0
    %4656 = vmatprep.subr.mxu0 0.0
    %4657 = vmatpush1.msra.mxu0 0.0
    %4658 = vmatprep.subr.mxu0 0.0
    %4659 = vmatpush1.msra.mxu0 0.0
    %4660 = vmatprep.subr.mxu0 0.0
    %4661 = vmatpush1.msra.mxu0 0.0
    %4662 = vmatprep.subr.mxu0 0.0
    %4663 = vmatpush1.msra.mxu0 0.0
    %4664 = vmatprep.mubr.f32.mxu0 0.0
    %4665 = vmatmul.mubr.f32.gmra.mrb[0].mxu0 %v4589
    %v4666 = vpop.f32.mrb[0].mxu0
    %v4667 = vadd.f32 0.0, %v4666
    %v4668 = vpop.f32.mrb[0].mxu0
    %v4669 = vadd.f32 0.0, %v4668
    %4670 = vmatprep.mubr.f32.mxu0 0.0
    %4671 = vmatmul.mubr.f32.gmra.mrb[0].mxu0 %v4592
    %v4672 = vpop.f32.mrb[0].mxu0
    %v4673 = vadd.f32 0.0, %v4672
    %v4674 = vpop.f32.mrb[0].mxu0
    %v4675 = vadd.f32 0.0, %v4674
    %4676 = vmatprep.mubr.f32.mxu0 0.0
    %4677 = vmatmul.mubr.f32.gmra.mrb[0].mxu0 %v4595
    %v4678 = vpop.f32.mrb[0].mxu0
    %v4679 = vadd.f32 0.0, %v4678
    %v4680 = vpop.f32.mrb[0].mxu0
    %v4681 = vadd.f32 0.0, %v4680
    %4682 = vmatprep.mubr.f32.mxu0 0.0
    %4683 = vmatmul.mubr.f32.gmra.mrb[0].mxu0 %v4598
    %v4684 = vpop.f32.mrb[0].mxu0
    %v4685 = vadd.f32 0.0, %v4684
    %v4686 = vpop.f32.mrb[0].mxu0
    %v4687 = vadd.f32 0.0, %v4686
    %4688 = vdwg.mxu0
    %4689 = vmatprep.subr.mxu0 %v4575
    %4690 = vmatpush1.msra.mxu0 %v4574
    %4691 = vmatprep.subr.mxu0 %v4579
    %4692 = vmatpush1.msra.mxu0 %v4578
    %4693 = vmatprep.subr.mxu0 %v4583
    %4694 = vmatpush1.msra.mxu0 %v4582
    %4695 = vmatprep.subr.mxu0 %v4587
    %4696 = vmatpush1.msra.mxu0 %v4586
    %4697 = vmatprep.subr.mxu0 0.0
    %4698 = vmatpush1.msra.mxu0 0.0
    %4699 = vmatprep.subr.mxu0 0.0
    %4700 = vmatpush1.msra.mxu0 0.0
    %4701 = vmatprep.subr.mxu0 0.0
    %4702 = vmatpush1.msra.mxu0 0.0
    %4703 = vmatprep.subr.mxu0 0.0
    %4704 = vmatpush1.msra.mxu0 0.0
    %4705 = vmatprep.subr.mxu0 0.0
    %4706 = vmatpush1.msra.mxu0 0.0
    %4707 = vmatprep.subr.mxu0 0.0
    %4708 = vmatpush1.msra.mxu0 0.0
    %4709 = vmatprep.subr.mxu0 0.0
    %4710 = vmatpush1.msra.mxu0 0.0
    %4711 = vmatprep.subr.mxu0 0.0
    %4712 = vmatpush1.msra.mxu0 0.0
    %4713 = vmatprep.subr.mxu0 0.0
    %4714 = vmatpush1.msra.mxu0 0.0
    %4715 = vmatprep.subr.mxu0 0.0
    %4716 = vmatpush1.msra.mxu0 0.0
    %4717 = vmatprep.subr.mxu0 0.0
    %4718 = vmatpush1.msra.mxu0 0.0
    %4719 = vmatprep.subr.mxu0 0.0
    %4720 = vmatpush1.msra.mxu0 0.0
    %4721 = vmatprep.subr.mxu0 0.0
    %4722 = vmatpush1.msra.mxu0 0.0
    %4723 = vmatprep.subr.mxu0 0.0
    %4724 = vmatpush1.msra.mxu0 0.0
    %4725 = vmatprep.subr.mxu0 0.0
    %4726 = vmatpush1.msra.mxu0 0.0
    %4727 = vmatprep.subr.mxu0 0.0
    %4728 = vmatpush1.msra.mxu0 0.0
    %4729 = vmatprep.subr.mxu0 0.0
    %4730 = vmatpush1.msra.mxu0 0.0
    %4731 = vmatprep.subr.mxu0 0.0
    %4732 = vmatpush1.msra.mxu0 0.0
    %4733 = vmatprep.subr.mxu0 0.0
    %4734 = vmatpush1.msra.mxu0 0.0
    %4735 = vmatprep.subr.mxu0 0.0
    %4736 = vmatpush1.msra.mxu0 0.0
    %4737 = vmatprep.subr.mxu0 0.0
    %4738 = vmatpush1.msra.mxu0 0.0
    %4739 = vmatprep.subr.mxu0 0.0
    %4740 = vmatpush1.msra.mxu0 0.0
    %4741 = vmatprep.subr.mxu0 0.0
    %4742 = vmatpush1.msra.mxu0 0.0
    %4743 = vmatprep.subr.mxu0 0.0
    %4744 = vmatpush1.msra.mxu0 0.0
    %4745 = vmatprep.subr.mxu0 0.0
    %4746 = vmatpush1.msra.mxu0 0.0
    %4747 = vmatprep.subr.mxu0 0.0
    %4748 = vmatpush1.msra.mxu0 0.0
    %4749 = vmatprep.subr.mxu0 0.0
    %4750 = vmatpush1.msra.mxu0 0.0
    %4751 = vmatprep.subr.mxu0 0.0
    %4752 = vmatpush1.msra.mxu0 0.0
    %4753 = vmatprep.mubr.f32.mxu0 0.0
    %4754 = vmatmul.mubr.f32.gmra.mrb[0].mxu0 %v4589
    %v4755 = vpop.f32.mrb[0].mxu0
    %v4756 = vadd.f32 0.0, %v4755
    %v4757 = vpop.f32.mrb[0].mxu0
    %v4758 = vadd.f32 0.0, %v4757
    %4759 = vmatprep.mubr.f32.mxu0 0.0
    %4760 = vmatmul.mubr.f32.gmra.mrb[0].mxu0 %v4592
    %v4761 = vpop.f32.mrb[0].mxu0
    %v4762 = vadd.f32 0.0, %v4761
    %v4763 = vpop.f32.mrb[0].mxu0
    %v4764 = vadd.f32 0.0, %v4763
    %4765 = vmatprep.mubr.f32.mxu0 0.0
    %4766 = vmatmul.mubr.f32.gmra.mrb[0].mxu0 %v4595
    %v4767 = vpop.f32.mrb[0].mxu0
    %v4768 = vadd.f32 0.0, %v4767
    %v4769 = vpop.f32.mrb[0].mxu0
    %v4770 = vadd.f32 0.0, %v4769
    %4771 = vmatprep.mubr.f32.mxu0 0.0
    %4772 = vmatmul.mubr.f32.gmra.mrb[0].mxu0 %v4598
    %v4773 = vpop.f32.mrb[0].mxu0
    %v4774 = vadd.f32 0.0, %v4773
    %v4775 = vpop.f32.mrb[0].mxu0
    %v4776 = vadd.f32 0.0, %v4775
    %4777 = vdwg.mxu0
    %v4778 = vadd.f32 %v4503, %v4667
    %v4779 = vadd.f32 %v4504, %v4669
    %v4780 = vadd.f32 %v4505, %v4756
    %v4781 = vadd.f32 %v4506, %v4758
    %v4782 = vadd.f32 %v4507, %v4673
    %v4783 = vadd.f32 %v4508, %v4675
    %v4784 = vadd.f32 %v4509, %v4762
    %v4785 = vadd.f32 %v4510, %v4764
    %v4786 = vadd.f32 %v4511, %v4679
    %v4787 = vadd.f32 %v4512, %v4681
    %v4788 = vadd.f32 %v4513, %v4768
    %v4789 = vadd.f32 %v4514, %v4770
    %v4790 = vadd.f32 %v4515, %v4685
    %v4791 = vadd.f32 %v4516, %v4687
    %v4792 = vadd.f32 %v4517, %v4774
    %v4793 = vadd.f32 %v4518, %v4776
    %v4794 = vld [vmem:[%s4] sm:$0xff]
    %v4795 = vld [vmem:[%s4 + $0x8] sm:$0xff]
    %v4796 = vld [vmem:[%s4 + $0x10] sm:$0xff]
    %v4797 = vld [vmem:[%s4 + $0x18] sm:$0xff]
    %4799 = vset.pattern.permute.xlu0 0
    %4800 = vperm.xlu0 %4799, %v4794
    %v4801 = vpop.permute.xlu0 %4800
    %4804 = vset.pattern.permute.xlu0 0
    %4805 = vperm.xlu0 %4804, %v4795
    %v4806 = vpop.permute.xlu0 %4805
    %4809 = vset.pattern.permute.xlu0 0
    %4810 = vperm.xlu0 %4809, %v4796
    %v4811 = vpop.permute.xlu0 %4810
    %4814 = vset.pattern.permute.xlu0 0
    %4815 = vperm.xlu0 %4814, %v4797
    %v4816 = vpop.permute.xlu0 %4815
    %v4818 = vadd.f32 %v4778, %v4801
    %v4819 = vadd.f32 %v4779, %v4801
    %v4820 = vadd.f32 %v4780, %v4801
    %v4821 = vadd.f32 %v4781, %v4801
    %v4822 = vadd.f32 %v4782, %v4806
    %v4823 = vadd.f32 %v4783, %v4806
    %v4824 = vadd.f32 %v4784, %v4806
    %v4825 = vadd.f32 %v4785, %v4806
    %v4826 = vadd.f32 %v4786, %v4811
    %v4827 = vadd.f32 %v4787, %v4811
    %v4828 = vadd.f32 %v4788, %v4811
    %v4829 = vadd.f32 %v4789, %v4811
    %v4830 = vadd.f32 %v4790, %v4816
    %v4831 = vadd.f32 %v4791, %v4816
    %v4832 = vadd.f32 %v4792, %v4816
    %v4833 = vadd.f32 %v4793, %v4816
    %v4834 = vmax.f32 %v4818, 0.0
    %v4835 = vmax.f32 %v4819, 0.0
    %v4836 = vmax.f32 %v4820, 0.0
    %v4837 = vmax.f32 %v4821, 0.0
    %v4838 = vmax.f32 %v4822, 0.0
    %v4839 = vmax.f32 %v4823, 0.0
    %v4840 = vmax.f32 %v4824, 0.0
    %v4841 = vmax.f32 %v4825, 0.0
    %v4842 = vmax.f32 %v4826, 0.0
    %v4843 = vmax.f32 %v4827, 0.0
    %v4844 = vmax.f32 %v4828, 0.0
    %v4845 = vmax.f32 %v4829, 0.0
    %v4846 = vmax.f32 %v4830, 0.0
    %v4847 = vmax.f32 %v4831, 0.0
    %v4848 = vmax.f32 %v4832, 0.0
    %v4849 = vmax.f32 %v4833, 0.0
    %v4850 = vadd.f32 %v4834, %v4835
    %4851 = vadd.xlane.f32.xlu0 %v4850
    %v4852 = vpop.xlane.xlu0 %4851
    %v4853 = vadd.f32 %v4838, %v4839
    %4854 = vadd.xlane.f32.xlu0 %v4853
    %v4855 = vpop.xlane.xlu0 %4854
    %v4856 = vadd.f32 %v4842, %v4843
    %4857 = vadd.xlane.f32.xlu0 %v4856
    %v4858 = vpop.xlane.xlu0 %4857
    %v4859 = vadd.f32 %v4846, %v4847
    %4860 = vadd.xlane.f32.xlu0 %v4859
    %v4861 = vpop.xlane.xlu0 %4860
    %v4862 = vrcp.pop 256.0
    %v4863 = vmul.f32 %v4852, %v4862
    %v4864 = vmul.f32 %v4855, %v4862
    %v4865 = vmul.f32 %v4858, %v4862
    %v4866 = vmul.f32 %v4861, %v4862
    %v4867 = vmax.f32 %v4834, %v4835
    %4868 = vmax.xlane.f32.xlu0 %v4867
    %v4869 = vpop.xlane.xlu0 %4868
    %v4870 = vmax.f32 %v4838, %v4839
    %4871 = vmax.xlane.f32.xlu0 %v4870
    %v4872 = vpop.xlane.xlu0 %4871
    %v4873 = vmax.f32 %v4842, %v4843
    %4874 = vmax.xlane.f32.xlu0 %v4873
    %v4875 = vpop.xlane.xlu0 %4874
    %v4876 = vmax.f32 %v4846, %v4847
    %4877 = vmax.xlane.f32.xlu0 %v4876
    %v4878 = vpop.xlane.xlu0 %4877
    %v4879 = vadd.f32 %v4836, %v4837
    %4880 = vadd.xlane.f32.xlu0 %v4879
    %v4881 = vpop.xlane.xlu0 %4880
    %v4882 = vadd.f32 %v4840, %v4841
    %4883 = vadd.xlane.f32.xlu0 %v4882
    %v4884 = vpop.xlane.xlu0 %4883
    %v4885 = vadd.f32 %v4844, %v4845
    %4886 = vadd.xlane.f32.xlu0 %v4885
    %v4887 = vpop.xlane.xlu0 %4886
    %v4888 = vadd.f32 %v4848, %v4849
    %4889 = vadd.xlane.f32.xlu0 %v4888
    %v4890 = vpop.xlane.xlu0 %4889
    %v4891 = vmul.f32 %v4881, %v4862
    %v4892 = vmul.f32 %v4884, %v4862
    %v4893 = vmul.f32 %v4887, %v4862
    %v4894 = vmul.f32 %v4890, %v4862
    %v4895 = vmax.f32 %v4836, %v4837
    %4896 = vmax.xlane.f32.xlu0 %v4895
    %v4897 = vpop.xlane.xlu0 %4896
    %v4898 = vmax.f32 %v4840, %v4841
    %4899 = vmax.xlane.f32.xlu0 %v4898
    %v4900 = vpop.xlane.xlu0 %4899
    %v4901 = vmax.f32 %v4844, %v4845
    %4902 = vmax.xlane.f32.xlu0 %v4901
    %v4903 = vpop.xlane.xlu0 %4902
    %v4904 = vmax.f32 %v4848, %v4849
    %4905 = vmax.xlane.f32.xlu0 %v4904
    %v4906 = vpop.xlane.xlu0 %4905
    %vm4907 = vcmask 7168
    %v4908 = vsel %vm4907, %v4863, %v4891
    %v4909 = vsel %vm4907, %v4864, %v4892
    %v4910 = vsel %vm4907, %v4865, %v4893
    %v4911 = vsel %vm4907, %v4866, %v4894
    %vm4912 = vcmask 15360
    %v4913 = vsel %vm4912, %v4908, %v4869
    %v4914 = vsel %vm4912, %v4909, %v4872
    %v4915 = vsel %vm4912, %v4910, %v4875
    %v4916 = vsel %vm4912, %v4911, %v4878
    %vm4917 = vcmask 23552
    %v4918 = vsel %vm4917, %v4913, %v4897
    %v4919 = vsel %vm4917, %v4914, %v4900
    %v4920 = vsel %vm4917, %v4915, %v4903
    %v4921 = vsel %vm4917, %v4916, %v4906
    %v4922 = vld [vmem:[%s5] sm:$0x3]
    %v4924 = vsel %vm2552, %v4922, 0
    %4926 = vmatprep.subr.mxu0 0.0
    %4927 = vmatpush1.msra.mxu0 %v4918
    %4928 = vmatprep.subr.mxu0 0.0
    %4929 = vmatpush1.msra.mxu0 %v4919
    %4930 = vmatprep.subr.mxu0 0.0
    %4931 = vmatpush1.msra.mxu0 %v4920
    %4932 = vmatprep.subr.mxu0 0.0
    %4933 = vmatpush1.msra.mxu0 %v4921
    %4934 = vmatprep.subr.mxu0 0.0
    %4935 = vmatpush1.msra.mxu0 0.0
    %4936 = vmatprep.subr.mxu0 0.0
    %4937 = vmatpush1.msra.mxu0 0.0
    %4938 = vmatprep.subr.mxu0 0.0
    %4939 = vmatpush1.msra.mxu0 0.0
    %4940 = vmatprep.subr.mxu0 0.0
    %4941 = vmatpush1.msra.mxu0 0.0
    %4942 = vmatprep.subr.mxu0 0.0
    %4943 = vmatpush1.msra.mxu0 0.0
    %4944 = vmatprep.subr.mxu0 0.0
    %4945 = vmatpush1.msra.mxu0 0.0
    %4946 = vmatprep.subr.mxu0 0.0
    %4947 = vmatpush1.msra.mxu0 0.0
    %4948 = vmatprep.subr.mxu0 0.0
    %4949 = vmatpush1.msra.mxu0 0.0
    %4950 = vmatprep.subr.mxu0 0.0
    %4951 = vmatpush1.msra.mxu0 0.0
    %4952 = vmatprep.subr.mxu0 0.0
    %4953 = vmatpush1.msra.mxu0 0.0
    %4954 = vmatprep.subr.mxu0 0.0
    %4955 = vmatpush1.msra.mxu0 0.0
    %4956 = vmatprep.subr.mxu0 0.0
    %4957 = vmatpush1.msra.mxu0 0.0
    %4958 = vmatprep.subr.mxu0 0.0
    %4959 = vmatpush1.msra.mxu0 0.0
    %4960 = vmatprep.subr.mxu0 0.0
    %4961 = vmatpush1.msra.mxu0 0.0
    %4962 = vmatprep.subr.mxu0 0.0
    %4963 = vmatpush1.msra.mxu0 0.0
    %4964 = vmatprep.subr.mxu0 0.0
    %4965 = vmatpush1.msra.mxu0 0.0
    %4966 = vmatprep.subr.mxu0 0.0
    %4967 = vmatpush1.msra.mxu0 0.0
    %4968 = vmatprep.subr.mxu0 0.0
    %4969 = vmatpush1.msra.mxu0 0.0
    %4970 = vmatprep.subr.mxu0 0.0
    %4971 = vmatpush1.msra.mxu0 0.0
    %4972 = vmatprep.subr.mxu0 0.0
    %4973 = vmatpush1.msra.mxu0 0.0
    %4974 = vmatprep.subr.mxu0 0.0
    %4975 = vmatpush1.msra.mxu0 0.0
    %4976 = vmatprep.subr.mxu0 0.0
    %4977 = vmatpush1.msra.mxu0 0.0
    %4978 = vmatprep.subr.mxu0 0.0
    %4979 = vmatpush1.msra.mxu0 0.0
    %4980 = vmatprep.subr.mxu0 0.0
    %4981 = vmatpush1.msra.mxu0 0.0
    %4982 = vmatprep.subr.mxu0 0.0
    %4983 = vmatpush1.msra.mxu0 0.0
    %4984 = vmatprep.subr.mxu0 0.0
    %4985 = vmatpush1.msra.mxu0 0.0
    %4986 = vmatprep.subr.mxu0 0.0
    %4987 = vmatpush1.msra.mxu0 0.0
    %4988 = vmatprep.subr.mxu0 0.0
    %4989 = vmatpush1.msra.mxu0 0.0
    %4990 = vmatprep.mubr.f32.mxu0 0.0
    %4991 = vmatmul.mubr.f32.gmra.mrb[0].mxu0 %v4924
    %v4992 = vpop.f32.mrb[0].mxu0
    %v4993 = vadd.f32 0.0, %v4992
    %v4994 = vpop.f32.mrb[0].mxu0
    %4995 = vdwg.mxu0
    %v4996 = vmax.f32 %v4993, 0.0
    %v4997 = vld [vmem:[%s6] sm:$0xff]
    %v4998 = vld [vmem:[%s6 + $0x8] sm:$0xff]
    %v4999 = vld [vmem:[%s6 + $0x10] sm:$0xff]
    %v5000 = vld [vmem:[%s6 + $0x18] sm:$0xff]
    %v5002 = vsel %vm4912, %v4997, 0
    %v5005 = vsel %vm4912, %v4998, 0
    %v5008 = vsel %vm4912, %v4999, 0
    %v5011 = vsel %vm4912, %v5000, 0
    %vm5013 = vcmask 1041408
    %v5015 = vsel %vm5013, %v4996, 0
    %5017 = vmatprep.subr.mxu0 0.0
    %5018 = vmatpush1.msra.mxu0 %v5015
    %5019 = vmatprep.subr.mxu0 0.0
    %5020 = vmatpush1.msra.mxu0 0.0
    %5021 = vmatprep.subr.mxu0 0.0
    %5022 = vmatpush1.msra.mxu0 0.0
    %5023 = vmatprep.subr.mxu0 0.0
    %5024 = vmatpush1.msra.mxu0 0.0
    %5025 = vmatprep.subr.mxu0 0.0
    %5026 = vmatpush1.msra.mxu0 0.0
    %5027 = vmatprep.subr.mxu0 0.0
    %5028 = vmatpush1.msra.mxu0 0.0
    %5029 = vmatprep.subr.mxu0 0.0
    %5030 = vmatpush1.msra.mxu0 0.0
    %5031 = vmatprep.subr.mxu0 0.0
    %5032 = vmatpush1.msra.mxu0 0.0
    %5033 = vmatprep.subr.mxu0 0.0
    %5034 = vmatpush1.msra.mxu0 0.0
    %5035 = vmatprep.subr.mxu0 0.0
    %5036 = vmatpush1.msra.mxu0 0.0
    %5037 = vmatprep.subr.mxu0 0.0
    %5038 = vmatpush1.msra.mxu0 0.0
    %5039 = vmatprep.subr.mxu0 0.0
    %5040 = vmatpush1.msra.mxu0 0.0
    %5041 = vmatprep.subr.mxu0 0.0
    %5042 = vmatpush1.msra.mxu0 0.0
    %5043 = vmatprep.subr.mxu0 0.0
    %5044 = vmatpush1.msra.mxu0 0.0
    %5045 = vmatprep.subr.mxu0 0.0
    %5046 = vmatpush1.msra.mxu0 0.0
    %5047 = vmatprep.subr.mxu0 0.0
    %5048 = vmatpush1.msra.mxu0 0.0
    %5049 = vmatprep.subr.mxu0 0.0
    %5050 = vmatpush1.msra.mxu0 0.0
    %5051 = vmatprep.subr.mxu0 0.0
    %5052 = vmatpush1.msra.mxu0 0.0
    %5053 = vmatprep.subr.mxu0 0.0
    %5054 = vmatpush1.msra.mxu0 0.0
    %5055 = vmatprep.subr.mxu0 0.0
    %5056 = vmatpush1.msra.mxu0 0.0
    %5057 = vmatprep.subr.mxu0 0.0
    %5058 = vmatpush1.msra.mxu0 0.0
    %5059 = vmatprep.subr.mxu0 0.0
    %5060 = vmatpush1.msra.mxu0 0.0
    %5061 = vmatprep.subr.mxu0 0.0
    %5062 = vmatpush1.msra.mxu0 0.0
    %5063 = vmatprep.subr.mxu0 0.0
    %5064 = vmatpush1.msra.mxu0 0.0
    %5065 = vmatprep.subr.mxu0 0.0
    %5066 = vmatpush1.msra.mxu0 0.0
    %5067 = vmatprep.subr.mxu0 0.0
    %5068 = vmatpush1.msra.mxu0 0.0
    %5069 = vmatprep.subr.mxu0 0.0
    %5070 = vmatpush1.msra.mxu0 0.0
    %5071 = vmatprep.subr.mxu0 0.0
    %5072 = vmatpush1.msra.mxu0 0.0
    %5073 = vmatprep.subr.mxu0 0.0
    %5074 = vmatpush1.msra.mxu0 0.0
    %5075 = vmatprep.subr.mxu0 0.0
    %5076 = vmatpush1.msra.mxu0 0.0
    %5077 = vmatprep.subr.mxu0 0.0
    %5078 = vmatpush1.msra.mxu0 0.0
    %5079 = vmatprep.subr.mxu0 0.0
    %5080 = vmatpush1.msra.mxu0 0.0
    %5081 = vmatprep.mubr.f32.mxu0 0.0
    %5082 = vmatmul.mubr.f32.gmra.mrb[0].mxu0 %v5002
    %v5083 = vpop.f32.mrb[0].mxu0
    %v5084 = vadd.f32 0.0, %v5083
    %v5085 = vpop.f32.mrb[0].mxu0
    %5086 = vmatprep.mubr.f32.mxu0 0.0
    %5087 = vmatmul.mubr.f32.gmra.mrb[0].mxu0 %v5005
    %v5088 = vpop.f32.mrb[0].mxu0
    %v5089 = vadd.f32 0.0, %v5088
    %v5090 = vpop.f32.mrb[0].mxu0
    %5091 = vmatprep.mubr.f32.mxu0 0.0
    %5092 = vmatmul.mubr.f32.gmra.mrb[0].mxu0 %v5008
    %v5093 = vpop.f32.mrb[0].mxu0
    %v5094 = vadd.f32 0.0, %v5093
    %v5095 = vpop.f32.mrb[0].mxu0
    %5096 = vmatprep.mubr.f32.mxu0 0.0
    %5097 = vmatmul.mubr.f32.gmra.mrb[0].mxu0 %v5011
    %v5098 = vpop.f32.mrb[0].mxu0
    %v5099 = vadd.f32 0.0, %v5098
    %v5100 = vpop.f32.mrb[0].mxu0
    %5101 = vdwg.mxu0
    %5106 = vrot.lane.b32.xlu0 %v5084, 126
    %v5107 = vpop.permute.xlu0 %5106
    %5108 = vrot.lane.b32.xlu0 %v5089, 126
    %v5109 = vpop.permute.xlu0 %5108
    %5110 = vrot.lane.b32.xlu0 %v5094, 126
    %v5111 = vpop.permute.xlu0 %5110
    %5112 = vrot.lane.b32.xlu0 %v5099, 126
    %v5113 = vpop.permute.xlu0 %5112
    %v5118 = vadd.f32 %v5084, %v5107
    %v5119 = vadd.f32 %v5089, %v5109
    %v5120 = vadd.f32 %v5094, %v5111
    %v5121 = vadd.f32 %v5099, %v5113
    %v5122 = vxor.u32 %v5118, 2147483648
    %v5123 = vxor.u32 %v5119, 2147483648
    %v5124 = vxor.u32 %v5120, 2147483648
    %v5125 = vxor.u32 %v5121, 2147483648
    %v5126 = vmul.f32 %v5122, 1.442695
    %v5127 = vpow.pop %v5126
    %v5128 = vmul.f32 %v5123, 1.442695
    %v5129 = vpow.pop %v5128
    %v5130 = vmul.f32 %v5124, 1.442695
    %v5131 = vpow.pop %v5130
    %v5132 = vmul.f32 %v5125, 1.442695
    %v5133 = vpow.pop %v5132
    %v5134 = vadd.f32 %v5127, 1.0
    %v5135 = vadd.f32 %v5129, 1.0
    %v5136 = vadd.f32 %v5131, 1.0
    %v5137 = vadd.f32 %v5133, 1.0
    %v5138 = vrcp.pop %v5134
    %v5139 = vmul.f32 1.0, %v5138
    %v5140 = vrcp.pop %v5135
    %v5141 = vmul.f32 1.0, %v5140
    %v5142 = vrcp.pop %v5136
    %v5143 = vmul.f32 1.0, %v5142
    %v5144 = vrcp.pop %v5137
    %v5145 = vmul.f32 1.0, %v5144
    %5147 = vset.pattern.permute.xlu0 0
    %5148 = vperm.xlu0 %5147, %v5139
    %v5149 = vpop.permute.xlu0 %5148
    %5152 = vset.pattern.permute.xlu0 0
    %5153 = vperm.xlu0 %5152, %v5141
    %v5154 = vpop.permute.xlu0 %5153
    %5157 = vset.pattern.permute.xlu0 0
    %5158 = vperm.xlu0 %5157, %v5143
    %v5159 = vpop.permute.xlu0 %5158
    %5162 = vset.pattern.permute.xlu0 0
    %5163 = vperm.xlu0 %5162, %v5145
    %v5164 = vpop.permute.xlu0 %5163
    %v5166 = vmul.f32 %v4834, %v5149
    %v5167 = vmul.f32 %v4835, %v5149
    %v5168 = vmul.f32 %v4838, %v5154
    %v5169 = vmul.f32 %v4839, %v5154
    %v5170 = vmul.f32 %v4842, %v5159
    %v5171 = vmul.f32 %v4843, %v5159
    %v5172 = vmul.f32 %v4846, %v5164
    %v5173 = vmul.f32 %v4847, %v5164
    %5174 = vset.pattern.permute.xlu0 1
    %5175 = vperm.xlu0 %5174, %v5139
    %v5176 = vpop.permute.xlu0 %5175
    %5178 = vset.pattern.permute.xlu0 1
    %5179 = vperm.xlu0 %5178, %v5141
    %v5180 = vpop.permute.xlu0 %5179
    %5182 = vset.pattern.permute.xlu0 1
    %5183 = vperm.xlu0 %5182, %v5143
    %v5184 = vpop.permute.xlu0 %5183
    %5186 = vset.pattern.permute.xlu0 1
    %5187 = vperm.xlu0 %5186, %v5145
    %v5188 = vpop.permute.xlu0 %5187
    %v5190 = vmul.f32 %v4836, %v5176
    %v5191 = vmul.f32 %v4837, %v5176
    %v5192 = vmul.f32 %v4840, %v5180
    %v5193 = vmul.f32 %v4841, %v5180
    %v5194 = vmul.f32 %v4844, %v5184
    %v5195 = vmul.f32 %v4845, %v5184
    %v5196 = vmul.f32 %v4848, %v5188
    %v5197 = vmul.f32 %v4849, %v5188
    %v5198 = vadd.f32 %v5166, %v5168
    %v5199 = vadd.f32 %v5198, %v5170
    %v5200 = vadd.f32 %v5199, %v5172
    %v5201 = vrot.slane %v5200, 4
    %v5202 = vadd.f32 %v5200, %v5201
    %v5203 = vrot.slane %v5202, 2
    %v5204 = vadd.f32 %v5202, %v5203
    %v5205 = vrot.slane %v5204, 1
    %v5206 = vadd.f32 %v5204, %v5205
    %v5207 = vadd.f32 %v5167, %v5169
    %v5208 = vadd.f32 %v5207, %v5171
    %v5209 = vadd.f32 %v5208, %v5173
    %v5210 = vrot.slane %v5209, 4
    %v5211 = vadd.f32 %v5209, %v5210
    %v5212 = vrot.slane %v5211, 2
    %v5213 = vadd.f32 %v5211, %v5212
    %v5214 = vrot.slane %v5213, 1
    %v5215 = vadd.f32 %v5213, %v5214
    %v5216 = vadd.f32 %v5190, %v5192
    %v5217 = vadd.f32 %v5216, %v5194
    %v5218 = vadd.f32 %v5217, %v5196
    %v5219 = vrot.slane %v5218, 4
    %v5220 = vadd.f32 %v5218, %v5219
    %v5221 = vrot.slane %v5220, 2
    %v5222 = vadd.f32 %v5220, %v5221
    %v5223 = vrot.slane %v5222, 1
    %v5224 = vadd.f32 %v5222, %v5223
    %v5225 = vadd.f32 %v5191, %v5193
    %v5226 = vadd.f32 %v5225, %v5195
    %v5227 = vadd.f32 %v5226, %v5197
    %v5228 = vrot.slane %v5227, 4
    %v5229 = vadd.f32 %v5227, %v5228
    %v5230 = vrot.slane %v5229, 2
    %v5231 = vadd.f32 %v5229, %v5230
    %v5232 = vrot.slane %v5231, 1
    %v5233 = vadd.f32 %v5231, %v5232
    %v5234 = vrcp.pop 32.0
    %v5235 = vmul.f32 %v5206, %v5234
    %v5236 = vmul.f32 %v5215, %v5234
    %v5237 = vmul.f32 %v5224, %v5234
    %v5238 = vmul.f32 %v5233, %v5234
    %v5239 = vmax.f32 %v5166, %v5168
    %v5240 = vmax.f32 %v5239, %v5170
    %v5241 = vmax.f32 %v5240, %v5172
    %v5242 = vrot.slane %v5241, 4
    %v5243 = vmax.f32 %v5241, %v5242
    %v5244 = vrot.slane %v5243, 2
    %v5245 = vmax.f32 %v5243, %v5244
    %v5246 = vrot.slane %v5245, 1
    %v5247 = vmax.f32 %v5245, %v5246
    %v5248 = vmax.f32 %v5167, %v5169
    %v5249 = vmax.f32 %v5248, %v5171
    %v5250 = vmax.f32 %v5249, %v5173
    %v5251 = vrot.slane %v5250, 4
    %v5252 = vmax.f32 %v5250, %v5251
    %v5253 = vrot.slane %v5252, 2
    %v5254 = vmax.f32 %v5252, %v5253
    %v5255 = vrot.slane %v5254, 1
    %v5256 = vmax.f32 %v5254, %v5255
    %v5257 = vmax.f32 %v5190, %v5192
    %v5258 = vmax.f32 %v5257, %v5194
    %v5259 = vmax.f32 %v5258, %v5196
    %v5260 = vrot.slane %v5259, 4
    %v5261 = vmax.f32 %v5259, %v5260
    %v5262 = vrot.slane %v5261, 2
    %v5263 = vmax.f32 %v5261, %v5262
    %v5264 = vrot.slane %v5263, 1
    %v5265 = vmax.f32 %v5263, %v5264
    %v5266 = vmax.f32 %v5191, %v5193
    %v5267 = vmax.f32 %v5266, %v5195
    %v5268 = vmax.f32 %v5267, %v5197
    %v5269 = vrot.slane %v5268, 4
    %v5270 = vmax.f32 %v5268, %v5269
    %v5271 = vrot.slane %v5270, 2
    %v5272 = vmax.f32 %v5270, %v5271
    %v5273 = vrot.slane %v5272, 1
    %v5274 = vmax.f32 %v5272, %v5273
    %vm5275 = vcmask 1040384
    %v5276 = vsel %vm5275, %v5235, %v5247
    %v5277 = vsel %vm5275, %v5236, %v5256
    %v5278 = vsel %vm5275, %v5237, %v5265
    %v5279 = vsel %vm5275, %v5238, %v5274
    %v5280 = vld [vmem:[%s7] sm:$0x1]
    %5281 = vrot.lane.b32.xlu0 %v5276, 17
    %v5282 = vpop.permute.xlu0 %5281
    %5283 = vrot.lane.b32.xlu0 %v5277, 17
    %v5284 = vpop.permute.xlu0 %5283
    %5285 = vrot.lane.b32.xlu0 %v5278, 17
    %v5286 = vpop.permute.xlu0 %5285
    %5287 = vrot.lane.b32.xlu0 %v5279, 17
    %v5288 = vpop.permute.xlu0 %5287
    %v5289 = vsel %vm183, %v5286, %v5288
    %v5290 = vsel %vm183, %v5284, %v5286
    %v5291 = vsel %vm183, %v5282, %v5284
    %v5292 = vsel %vm183, %v5288, %v5282
    %v5293 = vsel %vm192, %v5292, 0.0
    %v5294 = vsel %vm193, %v5291, 0.0
    %v5295 = vsel %vm194, %v5290, 0.0
    %v5296 = vsel %vm195, %v5289, 0.0
    %s5297 = scalar_lea.vmem %s7, 1
    %v5298 = vld [vmem:[%s5297] sm:$0x1]
    %5299 = vrot.lane.b32.xlu0 %v5276, 16
    %v5300 = vpop.permute.xlu0 %5299
    %5301 = vrot.lane.b32.xlu0 %v5277, 16
    %v5302 = vpop.permute.xlu0 %5301
    %5303 = vrot.lane.b32.xlu0 %v5278, 16
    %v5304 = vpop.permute.xlu0 %5303
    %5305 = vrot.lane.b32.xlu0 %v5279, 16
    %v5306 = vpop.permute.xlu0 %5305
    %v5307 = vsel %vm213, %v5304, %v5306
    %v5308 = vsel %vm213, %v5302, %v5304
    %v5309 = vsel %vm213, %v5300, %v5302
    %v5310 = vsel %vm213, %v5306, %v5300
    %v5311 = vsel %vm222, %v5310, 0.0
    %v5312 = vsel %vm223, %v5309, 0.0
    %v5313 = vsel %vm224, %v5308, 0.0
    %v5314 = vsel %vm225, %v5307, 0.0
    %v5316 = vsel %vm4912, %v5298, 0
    %v5319 = vsel %vm5013, %v5311, 0
    %v5322 = vsel %vm5013, %v5312, 0
    %v5325 = vsel %vm5013, %v5313, 0
    %v5328 = vsel %vm5013, %v5314, 0
    %5330 = vmatprep.subr.mxu0 %v5322
    %5331 = vmatpush1.msra.mxu0 %v5319
    %5332 = vmatprep.subr.mxu0 0.0
    %5333 = vmatpush1.msra.mxu0 0.0
    %5334 = vmatprep.subr.mxu0 0.0
    %5335 = vmatpush1.msra.mxu0 0.0
    %5336 = vmatprep.subr.mxu0 0.0
    %5337 = vmatpush1.msra.mxu0 0.0
    %5338 = vmatprep.subr.mxu0 0.0
    %5339 = vmatpush1.msra.mxu0 0.0
    %5340 = vmatprep.subr.mxu0 0.0
    %5341 = vmatpush1.msra.mxu0 0.0
    %5342 = vmatprep.subr.mxu0 0.0
    %5343 = vmatpush1.msra.mxu0 0.0
    %5344 = vmatprep.subr.mxu0 0.0
    %5345 = vmatpush1.msra.mxu0 0.0
    %5346 = vmatprep.subr.mxu0 0.0
    %5347 = vmatpush1.msra.mxu0 0.0
    %5348 = vmatprep.subr.mxu0 0.0
    %5349 = vmatpush1.msra.mxu0 0.0
    %5350 = vmatprep.subr.mxu0 0.0
    %5351 = vmatpush1.msra.mxu0 0.0
    %5352 = vmatprep.subr.mxu0 0.0
    %5353 = vmatpush1.msra.mxu0 0.0
    %5354 = vmatprep.subr.mxu0 0.0
    %5355 = vmatpush1.msra.mxu0 0.0
    %5356 = vmatprep.subr.mxu0 0.0
    %5357 = vmatpush1.msra.mxu0 0.0
    %5358 = vmatprep.subr.mxu0 0.0
    %5359 = vmatpush1.msra.mxu0 0.0
    %5360 = vmatprep.subr.mxu0 0.0
    %5361 = vmatpush1.msra.mxu0 0.0
    %5362 = vmatprep.subr.mxu0 0.0
    %5363 = vmatpush1.msra.mxu0 0.0
    %5364 = vmatprep.subr.mxu0 0.0
    %5365 = vmatpush1.msra.mxu0 0.0
    %5366 = vmatprep.subr.mxu0 0.0
    %5367 = vmatpush1.msra.mxu0 0.0
    %5368 = vmatprep.subr.mxu0 0.0
    %5369 = vmatpush1.msra.mxu0 0.0
    %5370 = vmatprep.subr.mxu0 0.0
    %5371 = vmatpush1.msra.mxu0 0.0
    %5372 = vmatprep.subr.mxu0 0.0
    %5373 = vmatpush1.msra.mxu0 0.0
    %5374 = vmatprep.subr.mxu0 0.0
    %5375 = vmatpush1.msra.mxu0 0.0
    %5376 = vmatprep.subr.mxu0 0.0
    %5377 = vmatpush1.msra.mxu0 0.0
    %5378 = vmatprep.subr.mxu0 0.0
    %5379 = vmatpush1.msra.mxu0 0.0
    %5380 = vmatprep.subr.mxu0 0.0
    %5381 = vmatpush1.msra.mxu0 0.0
    %5382 = vmatprep.subr.mxu0 0.0
    %5383 = vmatpush1.msra.mxu0 0.0
    %5384 = vmatprep.subr.mxu0 0.0
    %5385 = vmatpush1.msra.mxu0 0.0
    %5386 = vmatprep.subr.mxu0 0.0
    %5387 = vmatpush1.msra.mxu0 0.0
    %5388 = vmatprep.subr.mxu0 0.0
    %5389 = vmatpush1.msra.mxu0 0.0
    %5390 = vmatprep.subr.mxu0 0.0
    %5391 = vmatpush1.msra.mxu0 0.0
    %5392 = vmatprep.subr.mxu0 0.0
    %5393 = vmatpush1.msra.mxu0 0.0
    %5394 = vmatprep.mubr.f32.mxu0 0.0
    %5395 = vmatmul.mubr.f32.gmra.mrb[0].mxu0 %v5316
    %v5396 = vpop.f32.mrb[0].mxu0
    %v5397 = vadd.f32 0.0, %v5396
    %v5398 = vpop.f32.mrb[0].mxu0
    %v5399 = vadd.f32 0.0, %v5398
    %5400 = vdwg.mxu0
    %5401 = vmatprep.subr.mxu0 %v5328
    %5402 = vmatpush1.msra.mxu0 %v5325
    %5403 = vmatprep.subr.mxu0 0.0
    %5404 = vmatpush1.msra.mxu0 0.0
    %5405 = vmatprep.subr.mxu0 0.0
    %5406 = vmatpush1.msra.mxu0 0.0
    %5407 = vmatprep.subr.mxu0 0.0
    %5408 = vmatpush1.msra.mxu0 0.0
    %5409 = vmatprep.subr.mxu0 0.0
    %5410 = vmatpush1.msra.mxu0 0.0
    %5411 = vmatprep.subr.mxu0 0.0
    %5412 = vmatpush1.msra.mxu0 0.0
    %5413 = vmatprep.subr.mxu0 0.0
    %5414 = vmatpush1.msra.mxu0 0.0
    %5415 = vmatprep.subr.mxu0 0.0
    %5416 = vmatpush1.msra.mxu0 0.0
    %5417 = vmatprep.subr.mxu0 0.0
    %5418 = vmatpush1.msra.mxu0 0.0
    %5419 = vmatprep.subr.mxu0 0.0
    %5420 = vmatpush1.msra.mxu0 0.0
    %5421 = vmatprep.subr.mxu0 0.0
    %5422 = vmatpush1.msra.mxu0 0.0
    %5423 = vmatprep.subr.mxu0 0.0
    %5424 = vmatpush1.msra.mxu0 0.0
    %5425 = vmatprep.subr.mxu0 0.0
    %5426 = vmatpush1.msra.mxu0 0.0
    %5427 = vmatprep.subr.mxu0 0.0
    %5428 = vmatpush1.msra.mxu0 0.0
    %5429 = vmatprep.subr.mxu0 0.0
    %5430 = vmatpush1.msra.mxu0 0.0
    %5431 = vmatprep.subr.mxu0 0.0
    %5432 = vmatpush1.msra.mxu0 0.0
    %5433 = vmatprep.subr.mxu0 0.0
    %5434 = vmatpush1.msra.mxu0 0.0
    %5435 = vmatprep.subr.mxu0 0.0
    %5436 = vmatpush1.msra.mxu0 0.0
    %5437 = vmatprep.subr.mxu0 0.0
    %5438 = vmatpush1.msra.mxu0 0.0
    %5439 = vmatprep.subr.mxu0 0.0
    %5440 = vmatpush1.msra.mxu0 0.0
    %5441 = vmatprep.subr.mxu0 0.0
    %5442 = vmatpush1.msra.mxu0 0.0
    %5443 = vmatprep.subr.mxu0 0.0
    %5444 = vmatpush1.msra.mxu0 0.0
    %5445 = vmatprep.subr.mxu0 0.0
    %5446 = vmatpush1.msra.mxu0 0.0
    %5447 = vmatprep.subr.mxu0 0.0
    %5448 = vmatpush1.msra.mxu0 0.0
    %5449 = vmatprep.subr.mxu0 0.0
    %5450 = vmatpush1.msra.mxu0 0.0
    %5451 = vmatprep.subr.mxu0 0.0
    %5452 = vmatpush1.msra.mxu0 0.0
    %5453 = vmatprep.subr.mxu0 0.0
    %5454 = vmatpush1.msra.mxu0 0.0
    %5455 = vmatprep.subr.mxu0 0.0
    %5456 = vmatpush1.msra.mxu0 0.0
    %5457 = vmatprep.subr.mxu0 0.0
    %5458 = vmatpush1.msra.mxu0 0.0
    %5459 = vmatprep.subr.mxu0 0.0
    %5460 = vmatpush1.msra.mxu0 0.0
    %5461 = vmatprep.subr.mxu0 0.0
    %5462 = vmatpush1.msra.mxu0 0.0
    %5463 = vmatprep.subr.mxu0 0.0
    %5464 = vmatpush1.msra.mxu0 0.0
    %5465 = vmatprep.mubr.f32.mxu0 0.0
    %5466 = vmatmul.mubr.f32.gmra.mrb[0].mxu0 %v5316
    %v5467 = vpop.f32.mrb[0].mxu0
    %v5468 = vadd.f32 0.0, %v5467
    %v5469 = vpop.f32.mrb[0].mxu0
    %v5470 = vadd.f32 0.0, %v5469
    %5471 = vdwg.mxu0
    %v5473 = vsel %vm4912, %v5280, 0
    %v5476 = vsel %vm5013, %v5293, 0
    %v5479 = vsel %vm5013, %v5294, 0
    %v5482 = vsel %vm5013, %v5295, 0
    %v5485 = vsel %vm5013, %v5296, 0
    %5487 = vmatprep.subr.mxu0 %v5479
    %5488 = vmatpush1.msra.mxu0 %v5476
    %5489 = vmatprep.subr.mxu0 0.0
    %5490 = vmatpush1.msra.mxu0 0.0
    %5491 = vmatprep.subr.mxu0 0.0
    %5492 = vmatpush1.msra.mxu0 0.0
    %5493 = vmatprep.subr.mxu0 0.0
    %5494 = vmatpush1.msra.mxu0 0.0
    %5495 = vmatprep.subr.mxu0 0.0
    %5496 = vmatpush1.msra.mxu0 0.0
    %5497 = vmatprep.subr.mxu0 0.0
    %5498 = vmatpush1.msra.mxu0 0.0
    %5499 = vmatprep.subr.mxu0 0.0
    %5500 = vmatpush1.msra.mxu0 0.0
    %5501 = vmatprep.subr.mxu0 0.0
    %5502 = vmatpush1.msra.mxu0 0.0
    %5503 = vmatprep.subr.mxu0 0.0
    %5504 = vmatpush1.msra.mxu0 0.0
    %5505 = vmatprep.subr.mxu0 0.0
    %5506 = vmatpush1.msra.mxu0 0.0
    %5507 = vmatprep.subr.mxu0 0.0
    %5508 = vmatpush1.msra.mxu0 0.0
    %5509 = vmatprep.subr.mxu0 0.0
    %5510 = vmatpush1.msra.mxu0 0.0
    %5511 = vmatprep.subr.mxu0 0.0
    %5512 = vmatpush1.msra.mxu0 0.0
    %5513 = vmatprep.subr.mxu0 0.0
    %5514 = vmatpush1.msra.mxu0 0.0
    %5515 = vmatprep.subr.mxu0 0.0
    %5516 = vmatpush1.msra.mxu0 0.0
    %5517 = vmatprep.subr.mxu0 0.0
    %5518 = vmatpush1.msra.mxu0 0.0
    %5519 = vmatprep.subr.mxu0 0.0
    %5520 = vmatpush1.msra.mxu0 0.0
    %5521 = vmatprep.subr.mxu0 0.0
    %5522 = vmatpush1.msra.mxu0 0.0
    %5523 = vmatprep.subr.mxu0 0.0
    %5524 = vmatpush1.msra.mxu0 0.0
    %5525 = vmatprep.subr.mxu0 0.0
    %5526 = vmatpush1.msra.mxu0 0.0
    %5527 = vmatprep.subr.mxu0 0.0
    %5528 = vmatpush1.msra.mxu0 0.0
    %5529 = vmatprep.subr.mxu0 0.0
    %5530 = vmatpush1.msra.mxu0 0.0
    %5531 = vmatprep.subr.mxu0 0.0
    %5532 = vmatpush1.msra.mxu0 0.0
    %5533 = vmatprep.subr.mxu0 0.0
    %5534 = vmatpush1.msra.mxu0 0.0
    %5535 = vmatprep.subr.mxu0 0.0
    %5536 = vmatpush1.msra.mxu0 0.0
    %5537 = vmatprep.subr.mxu0 0.0
    %5538 = vmatpush1.msra.mxu0 0.0
    %5539 = vmatprep.subr.mxu0 0.0
    %5540 = vmatpush1.msra.mxu0 0.0
    %5541 = vmatprep.subr.mxu0 0.0
    %5542 = vmatpush1.msra.mxu0 0.0
    %5543 = vmatprep.subr.mxu0 0.0
    %5544 = vmatpush1.msra.mxu0 0.0
    %5545 = vmatprep.subr.mxu0 0.0
    %5546 = vmatpush1.msra.mxu0 0.0
    %5547 = vmatprep.subr.mxu0 0.0
    %5548 = vmatpush1.msra.mxu0 0.0
    %5549 = vmatprep.subr.mxu0 0.0
    %5550 = vmatpush1.msra.mxu0 0.0
    %5551 = vmatprep.mubr.f32.mxu0 0.0
    %5552 = vmatmul.mubr.f32.gmra.mrb[0].mxu0 %v5473
    %v5553 = vpop.f32.mrb[0].mxu0
    %v5554 = vadd.f32 %v5397, %v5553
    %v5555 = vpop.f32.mrb[0].mxu0
    %v5556 = vadd.f32 %v5399, %v5555
    %5557 = vdwg.mxu0
    %5558 = vmatprep.subr.mxu0 %v5485
    %5559 = vmatpush1.msra.mxu0 %v5482
    %5560 = vmatprep.subr.mxu0 0.0
    %5561 = vmatpush1.msra.mxu0 0.0
    %5562 = vmatprep.subr.mxu0 0.0
    %5563 = vmatpush1.msra.mxu0 0.0
    %5564 = vmatprep.subr.mxu0 0.0
    %5565 = vmatpush1.msra.mxu0 0.0
    %5566 = vmatprep.subr.mxu0 0.0
    %5567 = vmatpush1.msra.mxu0 0.0
    %5568 = vmatprep.subr.mxu0 0.0
    %5569 = vmatpush1.msra.mxu0 0.0
    %5570 = vmatprep.subr.mxu0 0.0
    %5571 = vmatpush1.msra.mxu0 0.0
    %5572 = vmatprep.subr.mxu0 0.0
    %5573 = vmatpush1.msra.mxu0 0.0
    %5574 = vmatprep.subr.mxu0 0.0
    %5575 = vmatpush1.msra.mxu0 0.0
    %5576 = vmatprep.subr.mxu0 0.0
    %5577 = vmatpush1.msra.mxu0 0.0
    %5578 = vmatprep.subr.mxu0 0.0
    %5579 = vmatpush1.msra.mxu0 0.0
    %5580 = vmatprep.subr.mxu0 0.0
    %5581 = vmatpush1.msra.mxu0 0.0
    %5582 = vmatprep.subr.mxu0 0.0
    %5583 = vmatpush1.msra.mxu0 0.0
    %5584 = vmatprep.subr.mxu0 0.0
    %5585 = vmatpush1.msra.mxu0 0.0
    %5586 = vmatprep.subr.mxu0 0.0
    %5587 = vmatpush1.msra.mxu0 0.0
    %5588 = vmatprep.subr.mxu0 0.0
    %5589 = vmatpush1.msra.mxu0 0.0
    %5590 = vmatprep.subr.mxu0 0.0
    %5591 = vmatpush1.msra.mxu0 0.0
    %5592 = vmatprep.subr.mxu0 0.0
    %5593 = vmatpush1.msra.mxu0 0.0
    %5594 = vmatprep.subr.mxu0 0.0
    %5595 = vmatpush1.msra.mxu0 0.0
    %5596 = vmatprep.subr.mxu0 0.0
    %5597 = vmatpush1.msra.mxu0 0.0
    %5598 = vmatprep.subr.mxu0 0.0
    %5599 = vmatpush1.msra.mxu0 0.0
    %5600 = vmatprep.subr.mxu0 0.0
    %5601 = vmatpush1.msra.mxu0 0.0
    %5602 = vmatprep.subr.mxu0 0.0
    %5603 = vmatpush1.msra.mxu0 0.0
    %5604 = vmatprep.subr.mxu0 0.0
    %5605 = vmatpush1.msra.mxu0 0.0
    %5606 = vmatprep.subr.mxu0 0.0
    %5607 = vmatpush1.msra.mxu0 0.0
    %5608 = vmatprep.subr.mxu0 0.0
    %5609 = vmatpush1.msra.mxu0 0.0
    %5610 = vmatprep.subr.mxu0 0.0
    %5611 = vmatpush1.msra.mxu0 0.0
    %5612 = vmatprep.subr.mxu0 0.0
    %5613 = vmatpush1.msra.mxu0 0.0
    %5614 = vmatprep.subr.mxu0 0.0
    %5615 = vmatpush1.msra.mxu0 0.0
    %5616 = vmatprep.subr.mxu0 0.0
    %5617 = vmatpush1.msra.mxu0 0.0
    %5618 = vmatprep.subr.mxu0 0.0
    %5619 = vmatpush1.msra.mxu0 0.0
    %5620 = vmatprep.subr.mxu0 0.0
    %5621 = vmatpush1.msra.mxu0 0.0
    %5622 = vmatprep.mubr.f32.mxu0 0.0
    %5623 = vmatmul.mubr.f32.gmra.mrb[0].mxu0 %v5473
    %v5624 = vpop.f32.mrb[0].mxu0
    %v5625 = vadd.f32 %v5468, %v5624
    %v5626 = vpop.f32.mrb[0].mxu0
    %v5627 = vadd.f32 %v5470, %v5626
    %5628 = vdwg.mxu0
    %s5629 = scalar_lea.vmem %s7, 2
    %v5630 = vld [vmem:[%s5629] sm:$0x1]
    %5631 = vrot.lane.b32.xlu0 %v5276, 15
    %v5632 = vpop.permute.xlu0 %5631
    %5633 = vrot.lane.b32.xlu0 %v5277, 15
    %v5634 = vpop.permute.xlu0 %5633
    %5635 = vrot.lane.b32.xlu0 %v5278, 15
    %v5636 = vpop.permute.xlu0 %5635
    %5637 = vrot.lane.b32.xlu0 %v5279, 15
    %v5638 = vpop.permute.xlu0 %5637
    %v5639 = vsel %vm649, %v5636, %v5638
    %v5640 = vsel %vm649, %v5634, %v5636
    %v5641 = vsel %vm649, %v5632, %v5634
    %v5642 = vsel %vm649, %v5638, %v5632
    %v5643 = vsel %vm658, %v5642, 0.0
    %v5644 = vsel %vm659, %v5641, 0.0
    %v5645 = vsel %vm660, %v5640, 0.0
    %v5646 = vsel %vm661, %v5639, 0.0
    %v5648 = vsel %vm4912, %v5630, 0
    %v5651 = vsel %vm5013, %v5643, 0
    %v5654 = vsel %vm5013, %v5644, 0
    %v5657 = vsel %vm5013, %v5645, 0
    %v5660 = vsel %vm5013, %v5646, 0
    %5662 = vmatprep.subr.mxu0 %v5654
    %5663 = vmatpush1.msra.mxu0 %v5651
    %5664 = vmatprep.subr.mxu0 0.0
    %5665 = vmatpush1.msra.mxu0 0.0
    %5666 = vmatprep.subr.mxu0 0.0
    %5667 = vmatpush1.msra.mxu0 0.0
    %5668 = vmatprep.subr.mxu0 0.0
    %5669 = vmatpush1.msra.mxu0 0.0
    %5670 = vmatprep.subr.mxu0 0.0
    %5671 = vmatpush1.msra.mxu0 0.0
    %5672 = vmatprep.subr.mxu0 0.0
    %5673 = vmatpush1.msra.mxu0 0.0
    %5674 = vmatprep.subr.mxu0 0.0
    %5675 = vmatpush1.msra.mxu0 0.0
    %5676 = vmatprep.subr.mxu0 0.0
    %5677 = vmatpush1.msra.mxu0 0.0
    %5678 = vmatprep.subr.mxu0 0.0
    %5679 = vmatpush1.msra.mxu0 0.0
    %5680 = vmatprep.subr.mxu0 0.0
    %5681 = vmatpush1.msra.mxu0 0.0
    %5682 = vmatprep.subr.mxu0 0.0
    %5683 = vmatpush1.msra.mxu0 0.0
    %5684 = vmatprep.subr.mxu0 0.0
    %5685 = vmatpush1.msra.mxu0 0.0
    %5686 = vmatprep.subr.mxu0 0.0
    %5687 = vmatpush1.msra.mxu0 0.0
    %5688 = vmatprep.subr.mxu0 0.0
    %5689 = vmatpush1.msra.mxu0 0.0
    %5690 = vmatprep.subr.mxu0 0.0
    %5691 = vmatpush1.msra.mxu0 0.0
    %5692 = vmatprep.subr.mxu0 0.0
    %5693 = vmatpush1.msra.mxu0 0.0
    %5694 = vmatprep.subr.mxu0 0.0
    %5695 = vmatpush1.msra.mxu0 0.0
    %5696 = vmatprep.subr.mxu0 0.0
    %5697 = vmatpush1.msra.mxu0 0.0
    %5698 = vmatprep.subr.mxu0 0.0
    %5699 = vmatpush1.msra.mxu0 0.0
    %5700 = vmatprep.subr.mxu0 0.0
    %5701 = vmatpush1.msra.mxu0 0.0
    %5702 = vmatprep.subr.mxu0 0.0
    %5703 = vmatpush1.msra.mxu0 0.0
    %5704 = vmatprep.subr.mxu0 0.0
    %5705 = vmatpush1.msra.mxu0 0.0
    %5706 = vmatprep.subr.mxu0 0.0
    %5707 = vmatpush1.msra.mxu0 0.0
    %5708 = vmatprep.subr.mxu0 0.0
    %5709 = vmatpush1.msra.mxu0 0.0
    %5710 = vmatprep.subr.mxu0 0.0
    %5711 = vmatpush1.msra.mxu0 0.0
    %5712 = vmatprep.subr.mxu0 0.0
    %5713 = vmatpush1.msra.mxu0 0.0
    %5714 = vmatprep.subr.mxu0 0.0
    %5715 = vmatpush1.msra.mxu0 0.0
    %5716 = vmatprep.subr.mxu0 0.0
    %5717 = vmatpush1.msra.mxu0 0.0
    %5718 = vmatprep.subr.mxu0 0.0
    %5719 = vmatpush1.msra.mxu0 0.0
    %5720 = vmatprep.subr.mxu0 0.0
    %5721 = vmatpush1.msra.mxu0 0.0
    %5722 = vmatprep.subr.mxu0 0.0
    %5723 = vmatpush1.msra.mxu0 0.0
    %5724 = vmatprep.subr.mxu0 0.0
    %5725 = vmatpush1.msra.mxu0 0.0
    %5726 = vmatprep.mubr.f32.mxu0 0.0
    %5727 = vmatmul.mubr.f32.gmra.mrb[0].mxu0 %v5648
    %v5728 = vpop.f32.mrb[0].mxu0
    %v5729 = vadd.f32 0.0, %v5728
    %v5730 = vpop.f32.mrb[0].mxu0
    %v5731 = vadd.f32 0.0, %v5730
    %5732 = vdwg.mxu0
    %5733 = vmatprep.subr.mxu0 %v5660
    %5734 = vmatpush1.msra.mxu0 %v5657
    %5735 = vmatprep.subr.mxu0 0.0
    %5736 = vmatpush1.msra.mxu0 0.0
    %5737 = vmatprep.subr.mxu0 0.0
    %5738 = vmatpush1.msra.mxu0 0.0
    %5739 = vmatprep.subr.mxu0 0.0
    %5740 = vmatpush1.msra.mxu0 0.0
    %5741 = vmatprep.subr.mxu0 0.0
    %5742 = vmatpush1.msra.mxu0 0.0
    %5743 = vmatprep.subr.mxu0 0.0
    %5744 = vmatpush1.msra.mxu0 0.0
    %5745 = vmatprep.subr.mxu0 0.0
    %5746 = vmatpush1.msra.mxu0 0.0
    %5747 = vmatprep.subr.mxu0 0.0
    %5748 = vmatpush1.msra.mxu0 0.0
    %5749 = vmatprep.subr.mxu0 0.0
    %5750 = vmatpush1.msra.mxu0 0.0
    %5751 = vmatprep.subr.mxu0 0.0
    %5752 = vmatpush1.msra.mxu0 0.0
    %5753 = vmatprep.subr.mxu0 0.0
    %5754 = vmatpush1.msra.mxu0 0.0
    %5755 = vmatprep.subr.mxu0 0.0
    %5756 = vmatpush1.msra.mxu0 0.0
    %5757 = vmatprep.subr.mxu0 0.0
    %5758 = vmatpush1.msra.mxu0 0.0
    %5759 = vmatprep.subr.mxu0 0.0
    %5760 = vmatpush1.msra.mxu0 0.0
    %5761 = vmatprep.subr.mxu0 0.0
    %5762 = vmatpush1.msra.mxu0 0.0
    %5763 = vmatprep.subr.mxu0 0.0
    %5764 = vmatpush1.msra.mxu0 0.0
    %5765 = vmatprep.subr.mxu0 0.0
    %5766 = vmatpush1.msra.mxu0 0.0
    %5767 = vmatprep.subr.mxu0 0.0
    %5768 = vmatpush1.msra.mxu0 0.0
    %5769 = vmatprep.subr.mxu0 0.0
    %5770 = vmatpush1.msra.mxu0 0.0
    %5771 = vmatprep.subr.mxu0 0.0
    %5772 = vmatpush1.msra.mxu0 0.0
    %5773 = vmatprep.subr.mxu0 0.0
    %5774 = vmatpush1.msra.mxu0 0.0
    %5775 = vmatprep.subr.mxu0 0.0
    %5776 = vmatpush1.msra.mxu0 0.0
    %5777 = vmatprep.subr.mxu0 0.0
    %5778 = vmatpush1.msra.mxu0 0.0
    %5779 = vmatprep.subr.mxu0 0.0
    %5780 = vmatpush1.msra.mxu0 0.0
    %5781 = vmatprep.subr.mxu0 0.0
    %5782 = vmatpush1.msra.mxu0 0.0
    %5783 = vmatprep.subr.mxu0 0.0
    %5784 = vmatpush1.msra.mxu0 0.0
    %5785 = vmatprep.subr.mxu0 0.0
    %5786 = vmatpush1.msra.mxu0 0.0
    %5787 = vmatprep.subr.mxu0 0.0
    %5788 = vmatpush1.msra.mxu0 0.0
    %5789 = vmatprep.subr.mxu0 0.0
    %5790 = vmatpush1.msra.mxu0 0.0
    %5791 = vmatprep.subr.mxu0 0.0
    %5792 = vmatpush1.msra.mxu0 0.0
    %5793 = vmatprep.subr.mxu0 0.0
    %5794 = vmatpush1.msra.mxu0 0.0
    %5795 = vmatprep.subr.mxu0 0.0
    %5796 = vmatpush1.msra.mxu0 0.0
    %5797 = vmatprep.mubr.f32.mxu0 0.0
    %5798 = vmatmul.mubr.f32.gmra.mrb[0].mxu0 %v5648
    %v5799 = vpop.f32.mrb[0].mxu0
    %v5800 = vadd.f32 0.0, %v5799
    %v5801 = vpop.f32.mrb[0].mxu0
    %v5802 = vadd.f32 0.0, %v5801
    %5803 = vdwg.mxu0
    %v5804 = vadd.f32 %v5554, %v5729
    %v5805 = vadd.f32 %v5556, %v5731
    %v5806 = vadd.f32 %v5625, %v5800
    %v5807 = vadd.f32 %v5627, %v5802
    %s5808 = scalar_lea.vmem %s7, 3
    %v5809 = vld [vmem:[%s5808] sm:$0x1]
    %5810 = vrot.lane.b32.xlu0 %v5276, 1
    %v5811 = vpop.permute.xlu0 %5810
    %5812 = vrot.lane.b32.xlu0 %v5277, 1
    %v5813 = vpop.permute.xlu0 %5812
    %5814 = vrot.lane.b32.xlu0 %v5278, 1
    %v5815 = vpop.permute.xlu0 %5814
    %5816 = vrot.lane.b32.xlu0 %v5279, 1
    %v5817 = vpop.permute.xlu0 %5816
    %v5818 = vsel %vm897, %v5815, %v5817
    %v5819 = vsel %vm897, %v5813, %v5815
    %v5820 = vsel %vm897, %v5811, %v5813
    %v5821 = vsel %vm897, %v5817, %v5811
    %v5822 = vsel %vm906, %v5821, 0.0
    %v5823 = vsel %vm907, %v5820, 0.0
    %v5824 = vsel %vm908, %v5819, 0.0
    %v5825 = vsel %vm909, %v5818, 0.0
    %v5827 = vsel %vm4912, %v5809, 0
    %v5830 = vsel %vm5013, %v5822, 0
    %v5833 = vsel %vm5013, %v5823, 0
    %v5836 = vsel %vm5013, %v5824, 0
    %v5839 = vsel %vm5013, %v5825, 0
    %5841 = vmatprep.subr.mxu0 %v5833
    %5842 = vmatpush1.msra.mxu0 %v5830
    %5843 = vmatprep.subr.mxu0 0.0
    %5844 = vmatpush1.msra.mxu0 0.0
    %5845 = vmatprep.subr.mxu0 0.0
    %5846 = vmatpush1.msra.mxu0 0.0
    %5847 = vmatprep.subr.mxu0 0.0
    %5848 = vmatpush1.msra.mxu0 0.0
    %5849 = vmatprep.subr.mxu0 0.0
    %5850 = vmatpush1.msra.mxu0 0.0
    %5851 = vmatprep.subr.mxu0 0.0
    %5852 = vmatpush1.msra.mxu0 0.0
    %5853 = vmatprep.subr.mxu0 0.0
    %5854 = vmatpush1.msra.mxu0 0.0
    %5855 = vmatprep.subr.mxu0 0.0
    %5856 = vmatpush1.msra.mxu0 0.0
    %5857 = vmatprep.subr.mxu0 0.0
    %5858 = vmatpush1.msra.mxu0 0.0
    %5859 = vmatprep.subr.mxu0 0.0
    %5860 = vmatpush1.msra.mxu0 0.0
    %5861 = vmatprep.subr.mxu0 0.0
    %5862 = vmatpush1.msra.mxu0 0.0
    %5863 = vmatprep.subr.mxu0 0.0
    %5864 = vmatpush1.msra.mxu0 0.0
    %5865 = vmatprep.subr.mxu0 0.0
    %5866 = vmatpush1.msra.mxu0 0.0
    %5867 = vmatprep.subr.mxu0 0.0
    %5868 = vmatpush1.msra.mxu0 0.0
    %5869 = vmatprep.subr.mxu0 0.0
    %5870 = vmatpush1.msra.mxu0 0.0
    %5871 = vmatprep.subr.mxu0 0.0
    %5872 = vmatpush1.msra.mxu0 0.0
    %5873 = vmatprep.subr.mxu0 0.0
    %5874 = vmatpush1.msra.mxu0 0.0
    %5875 = vmatprep.subr.mxu0 0.0
    %5876 = vmatpush1.msra.mxu0 0.0
    %5877 = vmatprep.subr.mxu0 0.0
    %5878 = vmatpush1.msra.mxu0 0.0
    %5879 = vmatprep.subr.mxu0 0.0
    %5880 = vmatpush1.msra.mxu0 0.0
    %5881 = vmatprep.subr.mxu0 0.0
    %5882 = vmatpush1.msra.mxu0 0.0
    %5883 = vmatprep.subr.mxu0 0.0
    %5884 = vmatpush1.msra.mxu0 0.0
    %5885 = vmatprep.subr.mxu0 0.0
    %5886 = vmatpush1.msra.mxu0 0.0
    %5887 = vmatprep.subr.mxu0 0.0
    %5888 = vmatpush1.msra.mxu0 0.0
    %5889 = vmatprep.subr.mxu0 0.0
    %5890 = vmatpush1.msra.mxu0 0.0
    %5891 = vmatprep.subr.mxu0 0.0
    %5892 = vmatpush1.msra.mxu0 0.0
    %5893 = vmatprep.subr.mxu0 0.0
    %5894 = vmatpush1.msra.mxu0 0.0
    %5895 = vmatprep.subr.mxu0 0.0
    %5896 = vmatpush1.msra.mxu0 0.0
    %5897 = vmatprep.subr.mxu0 0.0
    %5898 = vmatpush1.msra.mxu0 0.0
    %5899 = vmatprep.subr.mxu0 0.0
    %5900 = vmatpush1.msra.mxu0 0.0
    %5901 = vmatprep.subr.mxu0 0.0
    %5902 = vmatpush1.msra.mxu0 0.0
    %5903 = vmatprep.subr.mxu0 0.0
    %5904 = vmatpush1.msra.mxu0 0.0
    %5905 = vmatprep.mubr.f32.mxu0 0.0
    %5906 = vmatmul.mubr.f32.gmra.mrb[0].mxu0 %v5827
    %v5907 = vpop.f32.mrb[0].mxu0
    %v5908 = vadd.f32 0.0, %v5907
    %v5909 = vpop.f32.mrb[0].mxu0
    %v5910 = vadd.f32 0.0, %v5909
    %5911 = vdwg.mxu0
    %5912 = vmatprep.subr.mxu0 %v5839
    %5913 = vmatpush1.msra.mxu0 %v5836
    %5914 = vmatprep.subr.mxu0 0.0
    %5915 = vmatpush1.msra.mxu0 0.0
    %5916 = vmatprep.subr.mxu0 0.0
    %5917 = vmatpush1.msra.mxu0 0.0
    %5918 = vmatprep.subr.mxu0 0.0
    %5919 = vmatpush1.msra.mxu0 0.0
    %5920 = vmatprep.subr.mxu0 0.0
    %5921 = vmatpush1.msra.mxu0 0.0
    %5922 = vmatprep.subr.mxu0 0.0
    %5923 = vmatpush1.msra.mxu0 0.0
    %5924 = vmatprep.subr.mxu0 0.0
    %5925 = vmatpush1.msra.mxu0 0.0
    %5926 = vmatprep.subr.mxu0 0.0
    %5927 = vmatpush1.msra.mxu0 0.0
    %5928 = vmatprep.subr.mxu0 0.0
    %5929 = vmatpush1.msra.mxu0 0.0
    %5930 = vmatprep.subr.mxu0 0.0
    %5931 = vmatpush1.msra.mxu0 0.0
    %5932 = vmatprep.subr.mxu0 0.0
    %5933 = vmatpush1.msra.mxu0 0.0
    %5934 = vmatprep.subr.mxu0 0.0
    %5935 = vmatpush1.msra.mxu0 0.0
    %5936 = vmatprep.subr.mxu0 0.0
    %5937 = vmatpush1.msra.mxu0 0.0
    %5938 = vmatprep.subr.mxu0 0.0
    %5939 = vmatpush1.msra.mxu0 0.0
    %5940 = vmatprep.subr.mxu0 0.0
    %5941 = vmatpush1.msra.mxu0 0.0
    %5942 = vmatprep.subr.mxu0 0.0
    %5943 = vmatpush1.msra.mxu0 0.0
    %5944 = vmatprep.subr.mxu0 0.0
    %5945 = vmatpush1.msra.mxu0 0.0
    %5946 = vmatprep.subr.mxu0 0.0
    %5947 = vmatpush1.msra.mxu0 0.0
    %5948 = vmatprep.subr.mxu0 0.0
    %5949 = vmatpush1.msra.mxu0 0.0
    %5950 = vmatprep.subr.mxu0 0.0
    %5951 = vmatpush1.msra.mxu0 0.0
    %5952 = vmatprep.subr.mxu0 0.0
    %5953 = vmatpush1.msra.mxu0 0.0
    %5954 = vmatprep.subr.mxu0 0.0
    %5955 = vmatpush1.msra.mxu0 0.0
    %5956 = vmatprep.subr.mxu0 0.0
    %5957 = vmatpush1.msra.mxu0 0.0
    %5958 = vmatprep.subr.mxu0 0.0
    %5959 = vmatpush1.msra.mxu0 0.0
    %5960 = vmatprep.subr.mxu0 0.0
    %5961 = vmatpush1.msra.mxu0 0.0
    %5962 = vmatprep.subr.mxu0 0.0
    %5963 = vmatpush1.msra.mxu0 0.0
    %5964 = vmatprep.subr.mxu0 0.0
    %5965 = vmatpush1.msra.mxu0 0.0
    %5966 = vmatprep.subr.mxu0 0.0
    %5967 = vmatpush1.msra.mxu0 0.0
    %5968 = vmatprep.subr.mxu0 0.0
    %5969 = vmatpush1.msra.mxu0 0.0
    %5970 = vmatprep.subr.mxu0 0.0
    %5971 = vmatpush1.msra.mxu0 0.0
    %5972 = vmatprep.subr.mxu0 0.0
    %5973 = vmatpush1.msra.mxu0 0.0
    %5974 = vmatprep.subr.mxu0 0.0
    %5975 = vmatpush1.msra.mxu0 0.0
    %5976 = vmatprep.mubr.f32.mxu0 0.0
    %5977 = vmatmul.mubr.f32.gmra.mrb[0].mxu0 %v5827
    %v5978 = vpop.f32.mrb[0].mxu0
    %v5979 = vadd.f32 0.0, %v5978
    %v5980 = vpop.f32.mrb[0].mxu0
    %v5981 = vadd.f32 0.0, %v5980
    %5982 = vdwg.mxu0
    %v5983 = vadd.f32 %v5804, %v5908
    %v5984 = vadd.f32 %v5805, %v5910
    %v5985 = vadd.f32 %v5806, %v5979
    %v5986 = vadd.f32 %v5807, %v5981
    %s5987 = scalar_lea.vmem %s7, 4
    %v5988 = vld [vmem:[%s5987] sm:$0x1]
    %v5990 = vsel %vm4912, %v5988, 0
    %v5993 = vsel %vm5013, %v5276, 0
    %v5996 = vsel %vm5013, %v5277, 0
    %v5999 = vsel %vm5013, %v5278, 0
    %v6002 = vsel %vm5013, %v5279, 0
    %6004 = vmatprep.subr.mxu0 %v5996
    %6005 = vmatpush1.msra.mxu0 %v5993
    %6006 = vmatprep.subr.mxu0 0.0
    %6007 = vmatpush1.msra.mxu0 0.0
    %6008 = vmatprep.subr.mxu0 0.0
    %6009 = vmatpush1.msra.mxu0 0.0
    %6010 = vmatprep.subr.mxu0 0.0
    %6011 = vmatpush1.msra.mxu0 0.0
    %6012 = vmatprep.subr.mxu0 0.0
    %6013 = vmatpush1.msra.mxu0 0.0
    %6014 = vmatprep.subr.mxu0 0.0
    %6015 = vmatpush1.msra.mxu0 0.0
    %6016 = vmatprep.subr.mxu0 0.0
    %6017 = vmatpush1.msra.mxu0 0.0
    %6018 = vmatprep.subr.mxu0 0.0
    %6019 = vmatpush1.msra.mxu0 0.0
    %6020 = vmatprep.subr.mxu0 0.0
    %6021 = vmatpush1.msra.mxu0 0.0
    %6022 = vmatprep.subr.mxu0 0.0
    %6023 = vmatpush1.msra.mxu0 0.0
    %6024 = vmatprep.subr.mxu0 0.0
    %6025 = vmatpush1.msra.mxu0 0.0
    %6026 = vmatprep.subr.mxu0 0.0
    %6027 = vmatpush1.msra.mxu0 0.0
    %6028 = vmatprep.subr.mxu0 0.0
    %6029 = vmatpush1.msra.mxu0 0.0
    %6030 = vmatprep.subr.mxu0 0.0
    %6031 = vmatpush1.msra.mxu0 0.0
    %6032 = vmatprep.subr.mxu0 0.0
    %6033 = vmatpush1.msra.mxu0 0.0
    %6034 = vmatprep.subr.mxu0 0.0
    %6035 = vmatpush1.msra.mxu0 0.0
    %6036 = vmatprep.subr.mxu0 0.0
    %6037 = vmatpush1.msra.mxu0 0.0
    %6038 = vmatprep.subr.mxu0 0.0
    %6039 = vmatpush1.msra.mxu0 0.0
    %6040 = vmatprep.subr.mxu0 0.0
    %6041 = vmatpush1.msra.mxu0 0.0
    %6042 = vmatprep.subr.mxu0 0.0
    %6043 = vmatpush1.msra.mxu0 0.0
    %6044 = vmatprep.subr.mxu0 0.0
    %6045 = vmatpush1.msra.mxu0 0.0
    %6046 = vmatprep.subr.mxu0 0.0
    %6047 = vmatpush1.msra.mxu0 0.0
    %6048 = vmatprep.subr.mxu0 0.0
    %6049 = vmatpush1.msra.mxu0 0.0
    %6050 = vmatprep.subr.mxu0 0.0
    %6051 = vmatpush1.msra.mxu0 0.0
    %6052 = vmatprep.subr.mxu0 0.0
    %6053 = vmatpush1.msra.mxu0 0.0
    %6054 = vmatprep.subr.mxu0 0.0
    %6055 = vmatpush1.msra.mxu0 0.0
    %6056 = vmatprep.subr.mxu0 0.0
    %6057 = vmatpush1.msra.mxu0 0.0
    %6058 = vmatprep.subr.mxu0 0.0
    %6059 = vmatpush1.msra.mxu0 0.0
    %6060 = vmatprep.subr.mxu0 0.0
    %6061 = vmatpush1.msra.mxu0 0.0
    %6062 = vmatprep.subr.mxu0 0.0
    %6063 = vmatpush1.msra.mxu0 0.0
    %6064 = vmatprep.subr.mxu0 0.0
    %6065 = vmatpush1.msra.mxu0 0.0
    %6066 = vmatprep.subr.mxu0 0.0
    %6067 = vmatpush1.msra.mxu0 0.0
    %6068 = vmatprep.mubr.f32.mxu0 0.0
    %6069 = vmatmul.mubr.f32.gmra.mrb[0].mxu0 %v5990
    %v6070 = vpop.f32.mrb[0].mxu0
    %v6071 = vadd.f32 0.0, %v6070
    %v6072 = vpop.f32.mrb[0].mxu0
    %v6073 = vadd.f32 0.0, %v6072
    %6074 = vdwg.mxu0
    %6075 = vmatprep.subr.mxu0 %v6002
    %6076 = vmatpush1.msra.mxu0 %v5999
    %6077 = vmatprep.subr.mxu0 0.0
    %6078 = vmatpush1.msra.mxu0 0.0
    %6079 = vmatprep.subr.mxu0 0.0
    %6080 = vmatpush1.msra.mxu0 0.0
    %6081 = vmatprep.subr.mxu0 0.0
    %6082 = vmatpush1.msra.mxu0 0.0
    %6083 = vmatprep.subr.mxu0 0.0
    %6084 = vmatpush1.msra.mxu0 0.0
    %6085 = vmatprep.subr.mxu0 0.0
    %6086 = vmatpush1.msra.mxu0 0.0
    %6087 = vmatprep.subr.mxu0 0.0
    %6088 = vmatpush1.msra.mxu0 0.0
    %6089 = vmatprep.subr.mxu0 0.0
    %6090 = vmatpush1.msra.mxu0 0.0
    %6091 = vmatprep.subr.mxu0 0.0
    %6092 = vmatpush1.msra.mxu0 0.0
    %6093 = vmatprep.subr.mxu0 0.0
    %6094 = vmatpush1.msra.mxu0 0.0
    %6095 = vmatprep.subr.mxu0 0.0
    %6096 = vmatpush1.msra.mxu0 0.0
    %6097 = vmatprep.subr.mxu0 0.0
    %6098 = vmatpush1.msra.mxu0 0.0
    %6099 = vmatprep.subr.mxu0 0.0
    %6100 = vmatpush1.msra.mxu0 0.0
    %6101 = vmatprep.subr.mxu0 0.0
    %6102 = vmatpush1.msra.mxu0 0.0
    %6103 = vmatprep.subr.mxu0 0.0
    %6104 = vmatpush1.msra.mxu0 0.0
    %6105 = vmatprep.subr.mxu0 0.0
    %6106 = vmatpush1.msra.mxu0 0.0
    %6107 = vmatprep.subr.mxu0 0.0
    %6108 = vmatpush1.msra.mxu0 0.0
    %6109 = vmatprep.subr.mxu0 0.0
    %6110 = vmatpush1.msra.mxu0 0.0
    %6111 = vmatprep.subr.mxu0 0.0
    %6112 = vmatpush1.msra.mxu0 0.0
    %6113 = vmatprep.subr.mxu0 0.0
    %6114 = vmatpush1.msra.mxu0 0.0
    %6115 = vmatprep.subr.mxu0 0.0
    %6116 = vmatpush1.msra.mxu0 0.0
    %6117 = vmatprep.subr.mxu0 0.0
    %6118 = vmatpush1.msra.mxu0 0.0
    %6119 = vmatprep.subr.mxu0 0.0
    %6120 = vmatpush1.msra.mxu0 0.0
    %6121 = vmatprep.subr.mxu0 0.0
    %6122 = vmatpush1.msra.mxu0 0.0
    %6123 = vmatprep.subr.mxu0 0.0
    %6124 = vmatpush1.msra.mxu0 0.0
    %6125 = vmatprep.subr.mxu0 0.0
    %6126 = vmatpush1.msra.mxu0 0.0
    %6127 = vmatprep.subr.mxu0 0.0
    %6128 = vmatpush1.msra.mxu0 0.0
    %6129 = vmatprep.subr.mxu0 0.0
    %6130 = vmatpush1.msra.mxu0 0.0
    %6131 = vmatprep.subr.mxu0 0.0
    %6132 = vmatpush1.msra.mxu0 0.0
    %6133 = vmatprep.subr.mxu0 0.0
    %6134 = vmatpush1.msra.mxu0 0.0
    %6135 = vmatprep.subr.mxu0 0.0
    %6136 = vmatpush1.msra.mxu0 0.0
    %6137 = vmatprep.subr.mxu0 0.0
    %6138 = vmatpush1.msra.mxu0 0.0
    %6139 = vmatprep.mubr.f32.mxu0 0.0
    %6140 = vmatmul.mubr.f32.gmra.mrb[0].mxu0 %v5990
    %v6141 = vpop.f32.mrb[0].mxu0
    %v6142 = vadd.f32 0.0, %v6141
    %v6143 = vpop.f32.mrb[0].mxu0
    %v6144 = vadd.f32 0.0, %v6143
    %6145 = vdwg.mxu0
    %v6146 = vadd.f32 %v5983, %v6071
    %v6147 = vadd.f32 %v5984, %v6073
    %v6148 = vadd.f32 %v5985, %v6142
    %v6149 = vadd.f32 %v5986, %v6144
    %s6150 = scalar_lea.vmem %s7, 5
    %v6151 = vld [vmem:[%s6150] sm:$0x1]
    %6152 = vrot.lane.b32.xlu0 %v5276, 127
    %v6153 = vpop.permute.xlu0 %6152
    %6154 = vrot.lane.b32.xlu0 %v5277, 127
    %v6155 = vpop.permute.xlu0 %6154
    %6156 = vrot.lane.b32.xlu0 %v5278, 127
    %v6157 = vpop.permute.xlu0 %6156
    %6158 = vrot.lane.b32.xlu0 %v5279, 127
    %v6159 = vpop.permute.xlu0 %6158
    %v6160 = vsel %vm1364, %v6157, %v6159
    %v6161 = vsel %vm1364, %v6155, %v6157
    %v6162 = vsel %vm1364, %v6153, %v6155
    %v6163 = vsel %vm1364, %v6159, %v6153
    %v6164 = vsel %vm1373, %v6162, 0.0
    %v6165 = vsel %vm1374, %v6161, 0.0
    %v6166 = vsel %vm1375, %v6160, 0.0
    %v6167 = vsel %vm1376, %v6163, 0.0
    %v6169 = vsel %vm4912, %v6151, 0
    %v6172 = vsel %vm5013, %v6164, 0
    %v6175 = vsel %vm5013, %v6165, 0
    %v6178 = vsel %vm5013, %v6166, 0
    %v6181 = vsel %vm5013, %v6167, 0
    %6183 = vmatprep.subr.mxu0 %v6175
    %6184 = vmatpush1.msra.mxu0 %v6172
    %6185 = vmatprep.subr.mxu0 0.0
    %6186 = vmatpush1.msra.mxu0 0.0
    %6187 = vmatprep.subr.mxu0 0.0
    %6188 = vmatpush1.msra.mxu0 0.0
    %6189 = vmatprep.subr.mxu0 0.0
    %6190 = vmatpush1.msra.mxu0 0.0
    %6191 = vmatprep.subr.mxu0 0.0
    %6192 = vmatpush1.msra.mxu0 0.0
    %6193 = vmatprep.subr.mxu0 0.0
    %6194 = vmatpush1.msra.mxu0 0.0
    %6195 = vmatprep.subr.mxu0 0.0
    %6196 = vmatpush1.msra.mxu0 0.0
    %6197 = vmatprep.subr.mxu0 0.0
    %6198 = vmatpush1.msra.mxu0 0.0
    %6199 = vmatprep.subr.mxu0 0.0
    %6200 = vmatpush1.msra.mxu0 0.0
    %6201 = vmatprep.subr.mxu0 0.0
    %6202 = vmatpush1.msra.mxu0 0.0
    %6203 = vmatprep.subr.mxu0 0.0
    %6204 = vmatpush1.msra.mxu0 0.0
    %6205 = vmatprep.subr.mxu0 0.0
    %6206 = vmatpush1.msra.mxu0 0.0
    %6207 = vmatprep.subr.mxu0 0.0
    %6208 = vmatpush1.msra.mxu0 0.0
    %6209 = vmatprep.subr.mxu0 0.0
    %6210 = vmatpush1.msra.mxu0 0.0
    %6211 = vmatprep.subr.mxu0 0.0
    %6212 = vmatpush1.msra.mxu0 0.0
    %6213 = vmatprep.subr.mxu0 0.0
    %6214 = vmatpush1.msra.mxu0 0.0
    %6215 = vmatprep.subr.mxu0 0.0
    %6216 = vmatpush1.msra.mxu0 0.0
    %6217 = vmatprep.subr.mxu0 0.0
    %6218 = vmatpush1.msra.mxu0 0.0
    %6219 = vmatprep.subr.mxu0 0.0
    %6220 = vmatpush1.msra.mxu0 0.0
    %6221 = vmatprep.subr.mxu0 0.0
    %6222 = vmatpush1.msra.mxu0 0.0
    %6223 = vmatprep.subr.mxu0 0.0
    %6224 = vmatpush1.msra.mxu0 0.0
    %6225 = vmatprep.subr.mxu0 0.0
    %6226 = vmatpush1.msra.mxu0 0.0
    %6227 = vmatprep.subr.mxu0 0.0
    %6228 = vmatpush1.msra.mxu0 0.0
    %6229 = vmatprep.subr.mxu0 0.0
    %6230 = vmatpush1.msra.mxu0 0.0
    %6231 = vmatprep.subr.mxu0 0.0
    %6232 = vmatpush1.msra.mxu0 0.0
    %6233 = vmatprep.subr.mxu0 0.0
    %6234 = vmatpush1.msra.mxu0 0.0
    %6235 = vmatprep.subr.mxu0 0.0
    %6236 = vmatpush1.msra.mxu0 0.0
    %6237 = vmatprep.subr.mxu0 0.0
    %6238 = vmatpush1.msra.mxu0 0.0
    %6239 = vmatprep.subr.mxu0 0.0
    %6240 = vmatpush1.msra.mxu0 0.0
    %6241 = vmatprep.subr.mxu0 0.0
    %6242 = vmatpush1.msra.mxu0 0.0
    %6243 = vmatprep.subr.mxu0 0.0
    %6244 = vmatpush1.msra.mxu0 0.0
    %6245 = vmatprep.subr.mxu0 0.0
    %6246 = vmatpush1.msra.mxu0 0.0
    %6247 = vmatprep.mubr.f32.mxu0 0.0
    %6248 = vmatmul.mubr.f32.gmra.mrb[0].mxu0 %v6169
    %v6249 = vpop.f32.mrb[0].mxu0
    %v6250 = vadd.f32 0.0, %v6249
    %v6251 = vpop.f32.mrb[0].mxu0
    %v6252 = vadd.f32 0.0, %v6251
    %6253 = vdwg.mxu0
    %6254 = vmatprep.subr.mxu0 %v6181
    %6255 = vmatpush1.msra.mxu0 %v6178
    %6256 = vmatprep.subr.mxu0 0.0
    %6257 = vmatpush1.msra.mxu0 0.0
    %6258 = vmatprep.subr.mxu0 0.0
    %6259 = vmatpush1.msra.mxu0 0.0
    %6260 = vmatprep.subr.mxu0 0.0
    %6261 = vmatpush1.msra.mxu0 0.0
    %6262 = vmatprep.subr.mxu0 0.0
    %6263 = vmatpush1.msra.mxu0 0.0
    %6264 = vmatprep.subr.mxu0 0.0
    %6265 = vmatpush1.msra.mxu0 0.0
    %6266 = vmatprep.subr.mxu0 0.0
    %6267 = vmatpush1.msra.mxu0 0.0
    %6268 = vmatprep.subr.mxu0 0.0
    %6269 = vmatpush1.msra.mxu0 0.0
    %6270 = vmatprep.subr.mxu0 0.0
    %6271 = vmatpush1.msra.mxu0 0.0
    %6272 = vmatprep.subr.mxu0 0.0
    %6273 = vmatpush1.msra.mxu0 0.0
    %6274 = vmatprep.subr.mxu0 0.0
    %6275 = vmatpush1.msra.mxu0 0.0
    %6276 = vmatprep.subr.mxu0 0.0
    %6277 = vmatpush1.msra.mxu0 0.0
    %6278 = vmatprep.subr.mxu0 0.0
    %6279 = vmatpush1.msra.mxu0 0.0
    %6280 = vmatprep.subr.mxu0 0.0
    %6281 = vmatpush1.msra.mxu0 0.0
    %6282 = vmatprep.subr.mxu0 0.0
    %6283 = vmatpush1.msra.mxu0 0.0
    %6284 = vmatprep.subr.mxu0 0.0
    %6285 = vmatpush1.msra.mxu0 0.0
    %6286 = vmatprep.subr.mxu0 0.0
    %6287 = vmatpush1.msra.mxu0 0.0
    %6288 = vmatprep.subr.mxu0 0.0
    %6289 = vmatpush1.msra.mxu0 0.0
    %6290 = vmatprep.subr.mxu0 0.0
    %6291 = vmatpush1.msra.mxu0 0.0
    %6292 = vmatprep.subr.mxu0 0.0
    %6293 = vmatpush1.msra.mxu0 0.0
    %6294 = vmatprep.subr.mxu0 0.0
    %6295 = vmatpush1.msra.mxu0 0.0
    %6296 = vmatprep.subr.mxu0 0.0
    %6297 = vmatpush1.msra.mxu0 0.0
    %6298 = vmatprep.subr.mxu0 0.0
    %6299 = vmatpush1.msra.mxu0 0.0
    %6300 = vmatprep.subr.mxu0 0.0
    %6301 = vmatpush1.msra.mxu0 0.0
    %6302 = vmatprep.subr.mxu0 0.0
    %6303 = vmatpush1.msra.mxu0 0.0
    %6304 = vmatprep.subr.mxu0 0.0
    %6305 = vmatpush1.msra.mxu0 0.0
    %6306 = vmatprep.subr.mxu0 0.0
    %6307 = vmatpush1.msra.mxu0 0.0
    %6308 = vmatprep.subr.mxu0 0.0
    %6309 = vmatpush1.msra.mxu0 0.0
    %6310 = vmatprep.subr.mxu0 0.0
    %6311 = vmatpush1.msra.mxu0 0.0
    %6312 = vmatprep.subr.mxu0 0.0
    %6313 = vmatpush1.msra.mxu0 0.0
    %6314 = vmatprep.subr.mxu0 0.0
    %6315 = vmatpush1.msra.mxu0 0.0
    %6316 = vmatprep.subr.mxu0 0.0
    %6317 = vmatpush1.msra.mxu0 0.0
    %6318 = vmatprep.mubr.f32.mxu0 0.0
    %6319 = vmatmul.mubr.f32.gmra.mrb[0].mxu0 %v6169
    %v6320 = vpop.f32.mrb[0].mxu0
    %v6321 = vadd.f32 0.0, %v6320
    %v6322 = vpop.f32.mrb[0].mxu0
    %v6323 = vadd.f32 0.0, %v6322
    %6324 = vdwg.mxu0
    %v6325 = vadd.f32 %v6146, %v6250
    %v6326 = vadd.f32 %v6147, %v6252
    %v6327 = vadd.f32 %v6148, %v6321
    %v6328 = vadd.f32 %v6149, %v6323
    %s6329 = scalar_lea.vmem %s7, 6
    %v6330 = vld [vmem:[%s6329] sm:$0x1]
    %6331 = vrot.lane.b32.xlu0 %v5276, 113
    %v6332 = vpop.permute.xlu0 %6331
    %6333 = vrot.lane.b32.xlu0 %v5277, 113
    %v6334 = vpop.permute.xlu0 %6333
    %6335 = vrot.lane.b32.xlu0 %v5278, 113
    %v6336 = vpop.permute.xlu0 %6335
    %6337 = vrot.lane.b32.xlu0 %v5279, 113
    %v6338 = vpop.permute.xlu0 %6337
    %v6339 = vsel %vm1612, %v6336, %v6338
    %v6340 = vsel %vm1612, %v6334, %v6336
    %v6341 = vsel %vm1612, %v6332, %v6334
    %v6342 = vsel %vm1612, %v6338, %v6332
    %v6343 = vsel %vm1621, %v6341, 0.0
    %v6344 = vsel %vm1622, %v6340, 0.0
    %v6345 = vsel %vm1623, %v6339, 0.0
    %v6346 = vsel %vm1624, %v6342, 0.0
    %v6348 = vsel %vm4912, %v6330, 0
    %v6351 = vsel %vm5013, %v6343, 0
    %v6354 = vsel %vm5013, %v6344, 0
    %v6357 = vsel %vm5013, %v6345, 0
    %v6360 = vsel %vm5013, %v6346, 0
    %6362 = vmatprep.subr.mxu0 %v6354
    %6363 = vmatpush1.msra.mxu0 %v6351
    %6364 = vmatprep.subr.mxu0 0.0
    %6365 = vmatpush1.msra.mxu0 0.0
    %6366 = vmatprep.subr.mxu0 0.0
    %6367 = vmatpush1.msra.mxu0 0.0
    %6368 = vmatprep.subr.mxu0 0.0
    %6369 = vmatpush1.msra.mxu0 0.0
    %6370 = vmatprep.subr.mxu0 0.0
    %6371 = vmatpush1.msra.mxu0 0.0
    %6372 = vmatprep.subr.mxu0 0.0
    %6373 = vmatpush1.msra.mxu0 0.0
    %6374 = vmatprep.subr.mxu0 0.0
    %6375 = vmatpush1.msra.mxu0 0.0
    %6376 = vmatprep.subr.mxu0 0.0
    %6377 = vmatpush1.msra.mxu0 0.0
    %6378 = vmatprep.subr.mxu0 0.0
    %6379 = vmatpush1.msra.mxu0 0.0
    %6380 = vmatprep.subr.mxu0 0.0
    %6381 = vmatpush1.msra.mxu0 0.0
    %6382 = vmatprep.subr.mxu0 0.0
    %6383 = vmatpush1.msra.mxu0 0.0
    %6384 = vmatprep.subr.mxu0 0.0
    %6385 = vmatpush1.msra.mxu0 0.0
    %6386 = vmatprep.subr.mxu0 0.0
    %6387 = vmatpush1.msra.mxu0 0.0
    %6388 = vmatprep.subr.mxu0 0.0
    %6389 = vmatpush1.msra.mxu0 0.0
    %6390 = vmatprep.subr.mxu0 0.0
    %6391 = vmatpush1.msra.mxu0 0.0
    %6392 = vmatprep.subr.mxu0 0.0
    %6393 = vmatpush1.msra.mxu0 0.0
    %6394 = vmatprep.subr.mxu0 0.0
    %6395 = vmatpush1.msra.mxu0 0.0
    %6396 = vmatprep.subr.mxu0 0.0
    %6397 = vmatpush1.msra.mxu0 0.0
    %6398 = vmatprep.subr.mxu0 0.0
    %6399 = vmatpush1.msra.mxu0 0.0
    %6400 = vmatprep.subr.mxu0 0.0
    %6401 = vmatpush1.msra.mxu0 0.0
    %6402 = vmatprep.subr.mxu0 0.0
    %6403 = vmatpush1.msra.mxu0 0.0
    %6404 = vmatprep.subr.mxu0 0.0
    %6405 = vmatpush1.msra.mxu0 0.0
    %6406 = vmatprep.subr.mxu0 0.0
    %6407 = vmatpush1.msra.mxu0 0.0
    %6408 = vmatprep.subr.mxu0 0.0
    %6409 = vmatpush1.msra.mxu0 0.0
    %6410 = vmatprep.subr.mxu0 0.0
    %6411 = vmatpush1.msra.mxu0 0.0
    %6412 = vmatprep.subr.mxu0 0.0
    %6413 = vmatpush1.msra.mxu0 0.0
    %6414 = vmatprep.subr.mxu0 0.0
    %6415 = vmatpush1.msra.mxu0 0.0
    %6416 = vmatprep.subr.mxu0 0.0
    %6417 = vmatpush1.msra.mxu0 0.0
    %6418 = vmatprep.subr.mxu0 0.0
    %6419 = vmatpush1.msra.mxu0 0.0
    %6420 = vmatprep.subr.mxu0 0.0
    %6421 = vmatpush1.msra.mxu0 0.0
    %6422 = vmatprep.subr.mxu0 0.0
    %6423 = vmatpush1.msra.mxu0 0.0
    %6424 = vmatprep.subr.mxu0 0.0
    %6425 = vmatpush1.msra.mxu0 0.0
    %6426 = vmatprep.mubr.f32.mxu0 0.0
    %6427 = vmatmul.mubr.f32.gmra.mrb[0].mxu0 %v6348
    %v6428 = vpop.f32.mrb[0].mxu0
    %v6429 = vadd.f32 0.0, %v6428
    %v6430 = vpop.f32.mrb[0].mxu0
    %v6431 = vadd.f32 0.0, %v6430
    %6432 = vdwg.mxu0
    %6433 = vmatprep.subr.mxu0 %v6360
    %6434 = vmatpush1.msra.mxu0 %v6357
    %6435 = vmatprep.subr.mxu0 0.0
    %6436 = vmatpush1.msra.mxu0 0.0
    %6437 = vmatprep.subr.mxu0 0.0
    %6438 = vmatpush1.msra.mxu0 0.0
    %6439 = vmatprep.subr.mxu0 0.0
    %6440 = vmatpush1.msra.mxu0 0.0
    %6441 = vmatprep.subr.mxu0 0.0
    %6442 = vmatpush1.msra.mxu0 0.0
    %6443 = vmatprep.subr.mxu0 0.0
    %6444 = vmatpush1.msra.mxu0 0.0
    %6445 = vmatprep.subr.mxu0 0.0
    %6446 = vmatpush1.msra.mxu0 0.0
    %6447 = vmatprep.subr.mxu0 0.0
    %6448 = vmatpush1.msra.mxu0 0.0
    %6449 = vmatprep.subr.mxu0 0.0
    %6450 = vmatpush1.msra.mxu0 0.0
    %6451 = vmatprep.subr.mxu0 0.0
    %6452 = vmatpush1.msra.mxu0 0.0
    %6453 = vmatprep.subr.mxu0 0.0
    %6454 = vmatpush1.msra.mxu0 0.0
    %6455 = vmatprep.subr.mxu0 0.0
    %6456 = vmatpush1.msra.mxu0 0.0
    %6457 = vmatprep.subr.mxu0 0.0
    %6458 = vmatpush1.msra.mxu0 0.0
    %6459 = vmatprep.subr.mxu0 0.0
    %6460 = vmatpush1.msra.mxu0 0.0
    %6461 = vmatprep.subr.mxu0 0.0
    %6462 = vmatpush1.msra.mxu0 0.0
    %6463 = vmatprep.subr.mxu0 0.0
    %6464 = vmatpush1.msra.mxu0 0.0
    %6465 = vmatprep.subr.mxu0 0.0
    %6466 = vmatpush1.msra.mxu0 0.0
    %6467 = vmatprep.subr.mxu0 0.0
    %6468 = vmatpush1.msra.mxu0 0.0
    %6469 = vmatprep.subr.mxu0 0.0
    %6470 = vmatpush1.msra.mxu0 0.0
    %6471 = vmatprep.subr.mxu0 0.0
    %6472 = vmatpush1.msra.mxu0 0.0
    %6473 = vmatprep.subr.mxu0 0.0
    %6474 = vmatpush1.msra.mxu0 0.0
    %6475 = vmatprep.subr.mxu0 0.0
    %6476 = vmatpush1.msra.mxu0 0.0
    %6477 = vmatprep.subr.mxu0 0.0
    %6478 = vmatpush1.msra.mxu0 0.0
    %6479 = vmatprep.subr.mxu0 0.0
    %6480 = vmatpush1.msra.mxu0 0.0
    %6481 = vmatprep.subr.mxu0 0.0
    %6482 = vmatpush1.msra.mxu0 0.0
    %6483 = vmatprep.subr.mxu0 0.0
    %6484 = vmatpush1.msra.mxu0 0.0
    %6485 = vmatprep.subr.mxu0 0.0
    %6486 = vmatpush1.msra.mxu0 0.0
    %6487 = vmatprep.subr.mxu0 0.0
    %6488 = vmatpush1.msra.mxu0 0.0
    %6489 = vmatprep.subr.mxu0 0.0
    %6490 = vmatpush1.msra.mxu0 0.0
    %6491 = vmatprep.subr.mxu0 0.0
    %6492 = vmatpush1.msra.mxu0 0.0
    %6493 = vmatprep.subr.mxu0 0.0
    %6494 = vmatpush1.msra.mxu0 0.0
    %6495 = vmatprep.subr.mxu0 0.0
    %6496 = vmatpush1.msra.mxu0 0.0
    %6497 = vmatprep.mubr.f32.mxu0 0.0
    %6498 = vmatmul.mubr.f32.gmra.mrb[0].mxu0 %v6348
    %v6499 = vpop.f32.mrb[0].mxu0
    %v6500 = vadd.f32 0.0, %v6499
    %v6501 = vpop.f32.mrb[0].mxu0
    %v6502 = vadd.f32 0.0, %v6501
    %6503 = vdwg.mxu0
    %v6504 = vadd.f32 %v6325, %v6429
    %v6505 = vadd.f32 %v6326, %v6431
    %v6506 = vadd.f32 %v6327, %v6500
    %v6507 = vadd.f32 %v6328, %v6502
    %s6508 = scalar_lea.vmem %s7, 7
    %v6509 = vld [vmem:[%s6508] sm:$0x1]
    %6510 = vrot.lane.b32.xlu0 %v5276, 112
    %v6511 = vpop.permute.xlu0 %6510
    %6512 = vrot.lane.b32.xlu0 %v5277, 112
    %v6513 = vpop.permute.xlu0 %6512
    %6514 = vrot.lane.b32.xlu0 %v5278, 112
    %v6515 = vpop.permute.xlu0 %6514
    %6516 = vrot.lane.b32.xlu0 %v5279, 112
    %v6517 = vpop.permute.xlu0 %6516
    %v6518 = vsel %vm1860, %v6515, %v6517
    %v6519 = vsel %vm1860, %v6513, %v6515
    %v6520 = vsel %vm1860, %v6511, %v6513
    %v6521 = vsel %vm1860, %v6517, %v6511
    %v6522 = vsel %vm1869, %v6520, 0.0
    %v6523 = vsel %vm1870, %v6519, 0.0
    %v6524 = vsel %vm1871, %v6518, 0.0
    %v6525 = vsel %vm1872, %v6521, 0.0
    %v6527 = vsel %vm4912, %v6509, 0
    %v6530 = vsel %vm5013, %v6522, 0
    %v6533 = vsel %vm5013, %v6523, 0
    %v6536 = vsel %vm5013, %v6524, 0
    %v6539 = vsel %vm5013, %v6525, 0
    %6541 = vmatprep.subr.mxu0 %v6533
    %6542 = vmatpush1.msra.mxu0 %v6530
    %6543 = vmatprep.subr.mxu0 0.0
    %6544 = vmatpush1.msra.mxu0 0.0
    %6545 = vmatprep.subr.mxu0 0.0
    %6546 = vmatpush1.msra.mxu0 0.0
    %6547 = vmatprep.subr.mxu0 0.0
    %6548 = vmatpush1.msra.mxu0 0.0
    %6549 = vmatprep.subr.mxu0 0.0
    %6550 = vmatpush1.msra.mxu0 0.0
    %6551 = vmatprep.subr.mxu0 0.0
    %6552 = vmatpush1.msra.mxu0 0.0
    %6553 = vmatprep.subr.mxu0 0.0
    %6554 = vmatpush1.msra.mxu0 0.0
    %6555 = vmatprep.subr.mxu0 0.0
    %6556 = vmatpush1.msra.mxu0 0.0
    %6557 = vmatprep.subr.mxu0 0.0
    %6558 = vmatpush1.msra.mxu0 0.0
    %6559 = vmatprep.subr.mxu0 0.0
    %6560 = vmatpush1.msra.mxu0 0.0
    %6561 = vmatprep.subr.mxu0 0.0
    %6562 = vmatpush1.msra.mxu0 0.0
    %6563 = vmatprep.subr.mxu0 0.0
    %6564 = vmatpush1.msra.mxu0 0.0
    %6565 = vmatprep.subr.mxu0 0.0
    %6566 = vmatpush1.msra.mxu0 0.0
    %6567 = vmatprep.subr.mxu0 0.0
    %6568 = vmatpush1.msra.mxu0 0.0
    %6569 = vmatprep.subr.mxu0 0.0
    %6570 = vmatpush1.msra.mxu0 0.0
    %6571 = vmatprep.subr.mxu0 0.0
    %6572 = vmatpush1.msra.mxu0 0.0
    %6573 = vmatprep.subr.mxu0 0.0
    %6574 = vmatpush1.msra.mxu0 0.0
    %6575 = vmatprep.subr.mxu0 0.0
    %6576 = vmatpush1.msra.mxu0 0.0
    %6577 = vmatprep.subr.mxu0 0.0
    %6578 = vmatpush1.msra.mxu0 0.0
    %6579 = vmatprep.subr.mxu0 0.0
    %6580 = vmatpush1.msra.mxu0 0.0
    %6581 = vmatprep.subr.mxu0 0.0
    %6582 = vmatpush1.msra.mxu0 0.0
    %6583 = vmatprep.subr.mxu0 0.0
    %6584 = vmatpush1.msra.mxu0 0.0
    %6585 = vmatprep.subr.mxu0 0.0
    %6586 = vmatpush1.msra.mxu0 0.0
    %6587 = vmatprep.subr.mxu0 0.0
    %6588 = vmatpush1.msra.mxu0 0.0
    %6589 = vmatprep.subr.mxu0 0.0
    %6590 = vmatpush1.msra.mxu0 0.0
    %6591 = vmatprep.subr.mxu0 0.0
    %6592 = vmatpush1.msra.mxu0 0.0
    %6593 = vmatprep.subr.mxu0 0.0
    %6594 = vmatpush1.msra.mxu0 0.0
    %6595 = vmatprep.subr.mxu0 0.0
    %6596 = vmatpush1.msra.mxu0 0.0
    %6597 = vmatprep.subr.mxu0 0.0
    %6598 = vmatpush1.msra.mxu0 0.0
    %6599 = vmatprep.subr.mxu0 0.0
    %6600 = vmatpush1.msra.mxu0 0.0
    %6601 = vmatprep.subr.mxu0 0.0
    %6602 = vmatpush1.msra.mxu0 0.0
    %6603 = vmatprep.subr.mxu0 0.0
    %6604 = vmatpush1.msra.mxu0 0.0
    %6605 = vmatprep.mubr.f32.mxu0 0.0
    %6606 = vmatmul.mubr.f32.gmra.mrb[0].mxu0 %v6527
    %v6607 = vpop.f32.mrb[0].mxu0
    %v6608 = vadd.f32 0.0, %v6607
    %v6609 = vpop.f32.mrb[0].mxu0
    %v6610 = vadd.f32 0.0, %v6609
    %6611 = vdwg.mxu0
    %6612 = vmatprep.subr.mxu0 %v6539
    %6613 = vmatpush1.msra.mxu0 %v6536
    %6614 = vmatprep.subr.mxu0 0.0
    %6615 = vmatpush1.msra.mxu0 0.0
    %6616 = vmatprep.subr.mxu0 0.0
    %6617 = vmatpush1.msra.mxu0 0.0
    %6618 = vmatprep.subr.mxu0 0.0
    %6619 = vmatpush1.msra.mxu0 0.0
    %6620 = vmatprep.subr.mxu0 0.0
    %6621 = vmatpush1.msra.mxu0 0.0
    %6622 = vmatprep.subr.mxu0 0.0
    %6623 = vmatpush1.msra.mxu0 0.0
    %6624 = vmatprep.subr.mxu0 0.0
    %6625 = vmatpush1.msra.mxu0 0.0
    %6626 = vmatprep.subr.mxu0 0.0
    %6627 = vmatpush1.msra.mxu0 0.0
    %6628 = vmatprep.subr.mxu0 0.0
    %6629 = vmatpush1.msra.mxu0 0.0
    %6630 = vmatprep.subr.mxu0 0.0
    %6631 = vmatpush1.msra.mxu0 0.0
    %6632 = vmatprep.subr.mxu0 0.0
    %6633 = vmatpush1.msra.mxu0 0.0
    %6634 = vmatprep.subr.mxu0 0.0
    %6635 = vmatpush1.msra.mxu0 0.0
    %6636 = vmatprep.subr.mxu0 0.0
    %6637 = vmatpush1.msra.mxu0 0.0
    %6638 = vmatprep.subr.mxu0 0.0
    %6639 = vmatpush1.msra.mxu0 0.0
    %6640 = vmatprep.subr.mxu0 0.0
    %6641 = vmatpush1.msra.mxu0 0.0
    %6642 = vmatprep.subr.mxu0 0.0
    %6643 = vmatpush1.msra.mxu0 0.0
    %6644 = vmatprep.subr.mxu0 0.0
    %6645 = vmatpush1.msra.mxu0 0.0
    %6646 = vmatprep.subr.mxu0 0.0
    %6647 = vmatpush1.msra.mxu0 0.0
    %6648 = vmatprep.subr.mxu0 0.0
    %6649 = vmatpush1.msra.mxu0 0.0
    %6650 = vmatprep.subr.mxu0 0.0
    %6651 = vmatpush1.msra.mxu0 0.0
    %6652 = vmatprep.subr.mxu0 0.0
    %6653 = vmatpush1.msra.mxu0 0.0
    %6654 = vmatprep.subr.mxu0 0.0
    %6655 = vmatpush1.msra.mxu0 0.0
    %6656 = vmatprep.subr.mxu0 0.0
    %6657 = vmatpush1.msra.mxu0 0.0
    %6658 = vmatprep.subr.mxu0 0.0
    %6659 = vmatpush1.msra.mxu0 0.0
    %6660 = vmatprep.subr.mxu0 0.0
    %6661 = vmatpush1.msra.mxu0 0.0
    %6662 = vmatprep.subr.mxu0 0.0
    %6663 = vmatpush1.msra.mxu0 0.0
    %6664 = vmatprep.subr.mxu0 0.0
    %6665 = vmatpush1.msra.mxu0 0.0
    %6666 = vmatprep.subr.mxu0 0.0
    %6667 = vmatpush1.msra.mxu0 0.0
    %6668 = vmatprep.subr.mxu0 0.0
    %6669 = vmatpush1.msra.mxu0 0.0
    %6670 = vmatprep.subr.mxu0 0.0
    %6671 = vmatpush1.msra.mxu0 0.0
    %6672 = vmatprep.subr.mxu0 0.0
    %6673 = vmatpush1.msra.mxu0 0.0
    %6674 = vmatprep.subr.mxu0 0.0
    %6675 = vmatpush1.msra.mxu0 0.0
    %6676 = vmatprep.mubr.f32.mxu0 0.0
    %6677 = vmatmul.mubr.f32.gmra.mrb[0].mxu0 %v6527
    %v6678 = vpop.f32.mrb[0].mxu0
    %v6679 = vadd.f32 0.0, %v6678
    %v6680 = vpop.f32.mrb[0].mxu0
    %v6681 = vadd.f32 0.0, %v6680
    %6682 = vdwg.mxu0
    %v6683 = vadd.f32 %v6504, %v6608
    %v6684 = vadd.f32 %v6505, %v6610
    %v6685 = vadd.f32 %v6506, %v6679
    %v6686 = vadd.f32 %v6507, %v6681
    %s6687 = scalar_lea.vmem %s7, 8
    %v6688 = vld [vmem:[%s6687] sm:$0x1]
    %6689 = vrot.lane.b32.xlu0 %v5276, 111
    %v6690 = vpop.permute.xlu0 %6689
    %6691 = vrot.lane.b32.xlu0 %v5277, 111
    %v6692 = vpop.permute.xlu0 %6691
    %6693 = vrot.lane.b32.xlu0 %v5278, 111
    %v6694 = vpop.permute.xlu0 %6693
    %6695 = vrot.lane.b32.xlu0 %v5279, 111
    %v6696 = vpop.permute.xlu0 %6695
    %v6697 = vsel %vm2108, %v6694, %v6696
    %v6698 = vsel %vm2108, %v6692, %v6694
    %v6699 = vsel %vm2108, %v6690, %v6692
    %v6700 = vsel %vm2108, %v6696, %v6690
    %v6701 = vsel %vm2117, %v6699, 0.0
    %v6702 = vsel %vm2118, %v6698, 0.0
    %v6703 = vsel %vm2119, %v6697, 0.0
    %v6704 = vsel %vm2120, %v6700, 0.0
    %v6706 = vsel %vm4912, %v6688, 0
    %v6709 = vsel %vm5013, %v6701, 0
    %v6712 = vsel %vm5013, %v6702, 0
    %v6715 = vsel %vm5013, %v6703, 0
    %v6718 = vsel %vm5013, %v6704, 0
    %6720 = vmatprep.subr.mxu0 %v6712
    %6721 = vmatpush1.msra.mxu0 %v6709
    %6722 = vmatprep.subr.mxu0 0.0
    %6723 = vmatpush1.msra.mxu0 0.0
    %6724 = vmatprep.subr.mxu0 0.0
    %6725 = vmatpush1.msra.mxu0 0.0
    %6726 = vmatprep.subr.mxu0 0.0
    %6727 = vmatpush1.msra.mxu0 0.0
    %6728 = vmatprep.subr.mxu0 0.0
    %6729 = vmatpush1.msra.mxu0 0.0
    %6730 = vmatprep.subr.mxu0 0.0
    %6731 = vmatpush1.msra.mxu0 0.0
    %6732 = vmatprep.subr.mxu0 0.0
    %6733 = vmatpush1.msra.mxu0 0.0
    %6734 = vmatprep.subr.mxu0 0.0
    %6735 = vmatpush1.msra.mxu0 0.0
    %6736 = vmatprep.subr.mxu0 0.0
    %6737 = vmatpush1.msra.mxu0 0.0
    %6738 = vmatprep.subr.mxu0 0.0
    %6739 = vmatpush1.msra.mxu0 0.0
    %6740 = vmatprep.subr.mxu0 0.0
    %6741 = vmatpush1.msra.mxu0 0.0
    %6742 = vmatprep.subr.mxu0 0.0
    %6743 = vmatpush1.msra.mxu0 0.0
    %6744 = vmatprep.subr.mxu0 0.0
    %6745 = vmatpush1.msra.mxu0 0.0
    %6746 = vmatprep.subr.mxu0 0.0
    %6747 = vmatpush1.msra.mxu0 0.0
    %6748 = vmatprep.subr.mxu0 0.0
    %6749 = vmatpush1.msra.mxu0 0.0
    %6750 = vmatprep.subr.mxu0 0.0
    %6751 = vmatpush1.msra.mxu0 0.0
    %6752 = vmatprep.subr.mxu0 0.0
    %6753 = vmatpush1.msra.mxu0 0.0
    %6754 = vmatprep.subr.mxu0 0.0
    %6755 = vmatpush1.msra.mxu0 0.0
    %6756 = vmatprep.subr.mxu0 0.0
    %6757 = vmatpush1.msra.mxu0 0.0
    %6758 = vmatprep.subr.mxu0 0.0
    %6759 = vmatpush1.msra.mxu0 0.0
    %6760 = vmatprep.subr.mxu0 0.0
    %6761 = vmatpush1.msra.mxu0 0.0
    %6762 = vmatprep.subr.mxu0 0.0
    %6763 = vmatpush1.msra.mxu0 0.0
    %6764 = vmatprep.subr.mxu0 0.0
    %6765 = vmatpush1.msra.mxu0 0.0
    %6766 = vmatprep.subr.mxu0 0.0
    %6767 = vmatpush1.msra.mxu0 0.0
    %6768 = vmatprep.subr.mxu0 0.0
    %6769 = vmatpush1.msra.mxu0 0.0
    %6770 = vmatprep.subr.mxu0 0.0
    %6771 = vmatpush1.msra.mxu0 0.0
    %6772 = vmatprep.subr.mxu0 0.0
    %6773 = vmatpush1.msra.mxu0 0.0
    %6774 = vmatprep.subr.mxu0 0.0
    %6775 = vmatpush1.msra.mxu0 0.0
    %6776 = vmatprep.subr.mxu0 0.0
    %6777 = vmatpush1.msra.mxu0 0.0
    %6778 = vmatprep.subr.mxu0 0.0
    %6779 = vmatpush1.msra.mxu0 0.0
    %6780 = vmatprep.subr.mxu0 0.0
    %6781 = vmatpush1.msra.mxu0 0.0
    %6782 = vmatprep.subr.mxu0 0.0
    %6783 = vmatpush1.msra.mxu0 0.0
    %6784 = vmatprep.mubr.f32.mxu0 0.0
    %6785 = vmatmul.mubr.f32.gmra.mrb[0].mxu0 %v6706
    %v6786 = vpop.f32.mrb[0].mxu0
    %v6787 = vadd.f32 0.0, %v6786
    %v6788 = vpop.f32.mrb[0].mxu0
    %v6789 = vadd.f32 0.0, %v6788
    %6790 = vdwg.mxu0
    %6791 = vmatprep.subr.mxu0 %v6718
    %6792 = vmatpush1.msra.mxu0 %v6715
    %6793 = vmatprep.subr.mxu0 0.0
    %6794 = vmatpush1.msra.mxu0 0.0
    %6795 = vmatprep.subr.mxu0 0.0
    %6796 = vmatpush1.msra.mxu0 0.0
    %6797 = vmatprep.subr.mxu0 0.0
    %6798 = vmatpush1.msra.mxu0 0.0
    %6799 = vmatprep.subr.mxu0 0.0
    %6800 = vmatpush1.msra.mxu0 0.0
    %6801 = vmatprep.subr.mxu0 0.0
    %6802 = vmatpush1.msra.mxu0 0.0
    %6803 = vmatprep.subr.mxu0 0.0
    %6804 = vmatpush1.msra.mxu0 0.0
    %6805 = vmatprep.subr.mxu0 0.0
    %6806 = vmatpush1.msra.mxu0 0.0
    %6807 = vmatprep.subr.mxu0 0.0
    %6808 = vmatpush1.msra.mxu0 0.0
    %6809 = vmatprep.subr.mxu0 0.0
    %6810 = vmatpush1.msra.mxu0 0.0
    %6811 = vmatprep.subr.mxu0 0.0
    %6812 = vmatpush1.msra.mxu0 0.0
    %6813 = vmatprep.subr.mxu0 0.0
    %6814 = vmatpush1.msra.mxu0 0.0
    %6815 = vmatprep.subr.mxu0 0.0
    %6816 = vmatpush1.msra.mxu0 0.0
    %6817 = vmatprep.subr.mxu0 0.0
    %6818 = vmatpush1.msra.mxu0 0.0
    %6819 = vmatprep.subr.mxu0 0.0
    %6820 = vmatpush1.msra.mxu0 0.0
    %6821 = vmatprep.subr.mxu0 0.0
    %6822 = vmatpush1.msra.mxu0 0.0
    %6823 = vmatprep.subr.mxu0 0.0
    %6824 = vmatpush1.msra.mxu0 0.0
    %6825 = vmatprep.subr.mxu0 0.0
    %6826 = vmatpush1.msra.mxu0 0.0
    %6827 = vmatprep.subr.mxu0 0.0
    %6828 = vmatpush1.msra.mxu0 0.0
    %6829 = vmatprep.subr.mxu0 0.0
    %6830 = vmatpush1.msra.mxu0 0.0
    %6831 = vmatprep.subr.mxu0 0.0
    %6832 = vmatpush1.msra.mxu0 0.0
    %6833 = vmatprep.subr.mxu0 0.0
    %6834 = vmatpush1.msra.mxu0 0.0
    %6835 = vmatprep.subr.mxu0 0.0
    %6836 = vmatpush1.msra.mxu0 0.0
    %6837 = vmatprep.subr.mxu0 0.0
    %6838 = vmatpush1.msra.mxu0 0.0
    %6839 = vmatprep.subr.mxu0 0.0
    %6840 = vmatpush1.msra.mxu0 0.0
    %6841 = vmatprep.subr.mxu0 0.0
    %6842 = vmatpush1.msra.mxu0 0.0
    %6843 = vmatprep.subr.mxu0 0.0
    %6844 = vmatpush1.msra.mxu0 0.0
    %6845 = vmatprep.subr.mxu0 0.0
    %6846 = vmatpush1.msra.mxu0 0.0
    %6847 = vmatprep.subr.mxu0 0.0
    %6848 = vmatpush1.msra.mxu0 0.0
    %6849 = vmatprep.subr.mxu0 0.0
    %6850 = vmatpush1.msra.mxu0 0.0
    %6851 = vmatprep.subr.mxu0 0.0
    %6852 = vmatpush1.msra.mxu0 0.0
    %6853 = vmatprep.subr.mxu0 0.0
    %6854 = vmatpush1.msra.mxu0 0.0
    %6855 = vmatprep.mubr.f32.mxu0 0.0
    %6856 = vmatmul.mubr.f32.gmra.mrb[0].mxu0 %v6706
    %v6857 = vpop.f32.mrb[0].mxu0
    %v6858 = vadd.f32 0.0, %v6857
    %v6859 = vpop.f32.mrb[0].mxu0
    %v6860 = vadd.f32 0.0, %v6859
    %6861 = vdwg.mxu0
    %v6862 = vadd.f32 %v6683, %v6787
    %v6863 = vadd.f32 %v6684, %v6789
    %v6864 = vadd.f32 %v6685, %v6858
    %v6865 = vadd.f32 %v6686, %v6860
    %v6866 = vxor.u32 %v6862, 2147483648
    %v6867 = vxor.u32 %v6863, 2147483648
    %v6868 = vxor.u32 %v6864, 2147483648
    %v6869 = vxor.u32 %v6865, 2147483648
    %v6870 = vmul.f32 %v6866, 1.442695
    %v6871 = vpow.pop %v6870
    %v6872 = vmul.f32 %v6867, 1.442695
    %v6873 = vpow.pop %v6872
    %v6874 = vmul.f32 %v6868, 1.442695
    %v6875 = vpow.pop %v6874
    %v6876 = vmul.f32 %v6869, 1.442695
    %v6877 = vpow.pop %v6876
    %v6878 = vadd.f32 %v6871, 1.0
    %v6879 = vadd.f32 %v6873, 1.0
    %v6880 = vadd.f32 %v6875, 1.0
    %v6881 = vadd.f32 %v6877, 1.0
    %v6882 = vrcp.pop %v6878
    %v6883 = vmul.f32 1.0, %v6882
    %v6884 = vrcp.pop %v6879
    %v6885 = vmul.f32 1.0, %v6884
    %v6886 = vrcp.pop %v6880
    %v6887 = vmul.f32 1.0, %v6886
    %v6888 = vrcp.pop %v6881
    %v6889 = vmul.f32 1.0, %v6888
    %v6890 = vlaneseq
    %v6891 = vshrl.u32 %v6890, 7
    %v6892 = vsub.s32 0, %v6891
    %v6893 = vrot.slane %v6883, %v6892
    %v6894 = vlaneseq
    %v6895 = vshrl.u32 %v6894, 7
    %v6896 = vsub.s32 0, %v6895
    %v6897 = vrot.slane %v6885, %v6896
    %v6898 = vlaneseq
    %v6899 = vshrl.u32 %v6898, 7
    %v6900 = vsub.s32 0, %v6899
    %v6901 = vrot.slane %v6887, %v6900
    %v6902 = vlaneseq
    %v6903 = vshrl.u32 %v6902, 7
    %v6904 = vsub.s32 0, %v6903
    %v6905 = vrot.slane %v6889, %v6904
    %v6906 = vmul.f32 %v5166, %v6893
    %v6907 = vmul.f32 %v5167, %v6897
    %v6908 = vmul.f32 %v5190, %v6901
    %v6909 = vmul.f32 %v5191, %v6905
    %v6910 = vmul.f32 %v5168, %v6893
    %v6911 = vmul.f32 %v5169, %v6897
    %v6912 = vmul.f32 %v5192, %v6901
    %v6913 = vmul.f32 %v5193, %v6905
    %v6914 = vmul.f32 %v5170, %v6893
    %v6915 = vmul.f32 %v5171, %v6897
    %v6916 = vmul.f32 %v5194, %v6901
    %v6917 = vmul.f32 %v5195, %v6905
    %v6918 = vmul.f32 %v5172, %v6893
    %v6919 = vmul.f32 %v5173, %v6897
    %v6920 = vmul.f32 %v5196, %v6901
    %v6921 = vmul.f32 %v5197, %v6905
    %v6922 = vld [vmem:[#allocation2] sm:$0xff]
    %v6923 = vld [vmem:[#allocation2 + $0x8] sm:$0xff]
    %v6924 = vld [vmem:[#allocation2 + $0x10] sm:$0xff]
    %v6925 = vld [vmem:[#allocation2 + $0x18] sm:$0xff]
    %v6926 = vld [vmem:[#allocation2 + $0x20] sm:$0xff]
    %v6927 = vld [vmem:[#allocation2 + $0x28] sm:$0xff]
    %v6928 = vld [vmem:[#allocation2 + $0x30] sm:$0xff]
    %v6929 = vld [vmem:[#allocation2 + $0x38] sm:$0xff]
    %v6930 = vld [vmem:[#allocation2 + $0x40] sm:$0xff]
    %v6931 = vld [vmem:[#allocation2 + $0x48] sm:$0xff]
    %v6932 = vld [vmem:[#allocation2 + $0x50] sm:$0xff]
    %v6933 = vld [vmem:[#allocation2 + $0x58] sm:$0xff]
    %v6934 = vld [vmem:[#allocation2 + $0x60] sm:$0xff]
    %v6935 = vld [vmem:[#allocation2 + $0x68] sm:$0xff]
    %v6936 = vld [vmem:[#allocation2 + $0x70] sm:$0xff]
    %v6937 = vld [vmem:[#allocation2 + $0x78] sm:$0xff]
    %v6938 = vmul.f32 %v6922, 2.0
    %v6939 = vmul.f32 %v6923, 2.0
    %v6940 = vmul.f32 %v6924, 2.0
    %v6941 = vmul.f32 %v6925, 2.0
    %v6942 = vmul.f32 %v6926, 2.0
    %v6943 = vmul.f32 %v6927, 2.0
    %v6944 = vmul.f32 %v6928, 2.0
    %v6945 = vmul.f32 %v6929, 2.0
    %v6946 = vmul.f32 %v6930, 2.0
    %v6947 = vmul.f32 %v6931, 2.0
    %v6948 = vmul.f32 %v6932, 2.0
    %v6949 = vmul.f32 %v6933, 2.0
    %v6950 = vmul.f32 %v6934, 2.0
    %v6951 = vmul.f32 %v6935, 2.0
    %v6952 = vmul.f32 %v6936, 2.0
    %v6953 = vmul.f32 %v6937, 2.0
    %v6954 = vadd.f32 %v6938, %v6906
    %v6955 = vadd.f32 %v6939, %v6907
    %v6956 = vadd.f32 %v6940, %v6908
    %v6957 = vadd.f32 %v6941, %v6909
    %v6958 = vadd.f32 %v6942, %v6910
    %v6959 = vadd.f32 %v6943, %v6911
    %v6960 = vadd.f32 %v6944, %v6912
    %v6961 = vadd.f32 %v6945, %v6913
    %v6962 = vadd.f32 %v6946, %v6914
    %v6963 = vadd.f32 %v6947, %v6915
    %v6964 = vadd.f32 %v6948, %v6916
    %v6965 = vadd.f32 %v6949, %v6917
    %v6966 = vadd.f32 %v6950, %v6918
    %v6967 = vadd.f32 %v6951, %v6919
    %v6968 = vadd.f32 %v6952, %v6920
    %v6969 = vadd.f32 %v6953, %v6921
    %6970 = vst [vmem:[#allocation3] sm:$0xff] %v6954
    %6971 = vst [vmem:[#allocation3 + $0x8] sm:$0xff] %v6955
    %6972 = vst [vmem:[#allocation3 + $0x10] sm:$0xff] %v6956
    %6973 = vst [vmem:[#allocation3 + $0x18] sm:$0xff] %v6957
    %6974 = vst [vmem:[#allocation3 + $0x20] sm:$0xff] %v6958
    %6975 = vst [vmem:[#allocation3 + $0x28] sm:$0xff] %v6959
    %6976 = vst [vmem:[#allocation3 + $0x30] sm:$0xff] %v6960
    %6977 = vst [vmem:[#allocation3 + $0x38] sm:$0xff] %v6961
    %6978 = vst [vmem:[#allocation3 + $0x40] sm:$0xff] %v6962
    %6979 = vst [vmem:[#allocation3 + $0x48] sm:$0xff] %v6963
    %6980 = vst [vmem:[#allocation3 + $0x50] sm:$0xff] %v6964
    %6981 = vst [vmem:[#allocation3 + $0x58] sm:$0xff] %v6965
    %6982 = vst [vmem:[#allocation3 + $0x60] sm:$0xff] %v6966
    %6983 = vst [vmem:[#allocation3 + $0x68] sm:$0xff] %v6967
    %6984 = vst [vmem:[#allocation3 + $0x70] sm:$0xff] %v6968
    %6985 = vst [vmem:[#allocation3 + $0x78] sm:$0xff] %v6969
    // Predicated region
    $region34: #{tpu_custom_call.1} parent=1 // pred_check
      _
    $region35: #{tpu_custom_call.1} parent=1 // pred_check_branch
      %6987 = sbr.rel (0) target = $region37
    $region36: #{tpu_custom_call.1} parent=1 // pred_region
      %s6989 = ssub.s32 2048, 2048
      %6990 = vsyncadd [#allocation4], %s6989
      %s6991 = sshll.u32 [#allocation3], 4
      %s6992 = int_to_ptr.vmem [resolvable:$true] %s6991
      %6997 = dma.vmem_to_hbm [thread:$0]  %s6992, 2048, %s8, [#allocation4], 512, 512, 32
    $region37: #{tpu_custom_call.1} parent=1 // pred_fallthru
      _
    // Predicated region
    $region38: #{tpu_custom_call.1} parent=1 // pred_check
      _
    $region39: #{tpu_custom_call.1} parent=1 // pred_check_branch
      %6999 = sbr.rel (0) target = $region41
    $region40: #{tpu_custom_call.1} parent=1 // pred_region
      %7000 = dma.done [#allocation4], 2048
    $region41: #{tpu_custom_call.1} parent=1 // pred_fallthru
      _
    %7001 = vsyncpa [#allocation4], 1

</llo_original>
